<compile_context>
chip_gen: v7x
topology: tpu7x:2x2x1
jax: 0.10.0
libtpu: 0.0.40
codegen_flags: <defaults>
</compile_context>

<pallas_src>
import jax
import jax.numpy as jnp
from jax.experimental import pallas as pl
from jax.experimental.pallas import tpu as pltpu

HIDDEN_RAW = 750      # module's hidden width
HIDDEN = 768          # padded to 6*128 for clean lane/sublane + MXU tiling
IN_PAD = 128          # cat(state,action) / state / latent / action padded to 128 lanes
TB = 128              # batch tile (fills MXU M on v5e; safe on v6e/v7x)


# ----------------------------------------------------------------------------
# Kernel: encoder -> reparam -> decoder on one [TB, *] batch tile.
# Weight refs are bf16 (streamed half-width), activations f32, MXU accum f32.
# ----------------------------------------------------------------------------
def vae_kernel(
    sa_ref, s_ref, noise_ref,
    e1_w_ref, e1_b_ref,
    e2_w_ref, e2_b_ref,
    mean_w_ref, mean_b_ref,
    ls_w_ref, ls_b_ref,
    d1_ws_ref, d1_wz_ref, d1_b_ref,
    d2_w_ref, d2_b_ref,
    d3_w_ref, d3_b_ref,
    max_a_ref,
    u_ref, mean_ref, std_ref,
):
    def mm(x_f32, w_ref):
        # bf16 x bf16 MXU matmul with f32 accumulation.
        return jnp.dot(x_f32.astype(jnp.bfloat16), w_ref[...],
                       preferred_element_type=jnp.float32)

    sa = sa_ref[...]          # [TB, 128]  cat(state, action), zero-padded
    s = s_ref[...]            # [TB, 128]  state, zero-padded

    # --- encoder ---
    h = jnp.maximum(mm(sa, e1_w_ref) + e1_b_ref[...], 0.0)     # relu(e1)
    h = jnp.maximum(mm(h, e2_w_ref) + e2_b_ref[...], 0.0)      # relu(e2)

    mean = mm(h, mean_w_ref) + mean_b_ref[...]
    log_std = jnp.clip(mm(h, ls_w_ref) + ls_b_ref[...], -4.0, 15.0)
    std = jnp.exp(log_std)

    # --- reparameterization (noise supplied from host, deterministic) ---
    # TODO(synk): could use pltpu.prng_seed + pltpu.prng_random_bits on-chip.
    z = mean + std * noise_ref[...]

    # --- decoder (concat realized as split matmul: identical numerics) ---
    g = mm(s, d1_ws_ref) + mm(z, d1_wz_ref)
    g = jnp.maximum(g + d1_b_ref[...], 0.0)                     # relu(d1)
    g = jnp.maximum(mm(g, d2_w_ref) + d2_b_ref[...], 0.0)       # relu(d2)
    u = max_a_ref[...] * jnp.tanh(mm(g, d3_w_ref) + d3_b_ref[...])

    u_ref[...] = u
    mean_ref[...] = mean
    std_ref[...] = std


# ----------------------------------------------------------------------------
# Host-side padding / packing helpers.
# ----------------------------------------------------------------------------
def _pad_to(x, shape, dtype):
    pads = [(0, t - s) for s, t in zip(x.shape, shape)]
    return jnp.pad(x, pads).astype(dtype)


def _pack_inputs(state, action, noise, latent_dim, tb):
    B, S = state.shape
    A = action.shape[1]
    Bp = ((B + tb - 1) // tb) * tb
    sa = jnp.zeros((Bp, IN_PAD), jnp.float32)
    sa = sa.at[:B, :S].set(state)
    sa = sa.at[:B, S:S + A].set(action)
    s_in = jnp.zeros((Bp, IN_PAD), jnp.float32).at[:B, :S].set(state)
    nz = jnp.zeros((Bp, IN_PAD), jnp.float32).at[:B, :latent_dim].set(noise)
    return sa, s_in, nz, Bp


def pack_params(raw, state_dim, action_dim, latent_dim):
    """Pad to (128 / 768)-aligned shapes; weights -> bf16, biases stay f32."""
    S = state_dim
    wdt = jnp.bfloat16
    return {
        "e1_w": _pad_to(raw["e1_w"], (IN_PAD, HIDDEN), wdt),       # [S+A,750]->[128,768]
        "e1_b": _pad_to(raw["e1_b"], (1, HIDDEN), jnp.float32),
        "e2_w": _pad_to(raw["e2_w"], (HIDDEN, HIDDEN), wdt),
        "e2_b": _pad_to(raw["e2_b"], (1, HIDDEN), jnp.float32),
        "mean_w": _pad_to(raw["mean_w"], (HIDDEN, IN_PAD), wdt),
        "mean_b": _pad_to(raw["mean_b"], (1, IN_PAD), jnp.float32),
        "ls_w": _pad_to(raw["ls_w"], (HIDDEN, IN_PAD), wdt),
        "ls_b": _pad_to(raw["ls_b"], (1, IN_PAD), jnp.float32),
        "d1_ws": _pad_to(raw["d1_w"][:S], (IN_PAD, HIDDEN), wdt),  # state rows
        "d1_wz": _pad_to(raw["d1_w"][S:], (IN_PAD, HIDDEN), wdt),  # latent rows
        "d1_b": _pad_to(raw["d1_b"], (1, HIDDEN), jnp.float32),
        "d2_w": _pad_to(raw["d2_w"], (HIDDEN, HIDDEN), wdt),
        "d2_b": _pad_to(raw["d2_b"], (1, HIDDEN), jnp.float32),
        "d3_w": _pad_to(raw["d3_w"], (HIDDEN, IN_PAD), wdt),
        "d3_b": _pad_to(raw["d3_b"], (1, IN_PAD), jnp.float32),
    }


# ----------------------------------------------------------------------------
# Pallas wrapper: batch grid, resident weights, parallel batch axis.
# ----------------------------------------------------------------------------
def vae_forward(state, action, noise, packed, max_action,
                *, action_dim, latent_dim, tb=TB):
    sa, s_in, nz, Bp = _pack_inputs(state, action, noise, latent_dim, tb)
    B = state.shape[0]
    max_a_pad = _pad_to(max_action, (1, IN_PAD), jnp.float32)

    weights = (
        packed["e1_w"], packed["e1_b"],
        packed["e2_w"], packed["e2_b"],
        packed["mean_w"], packed["mean_b"],
        packed["ls_w"], packed["ls_b"],
        packed["d1_ws"], packed["d1_wz"], packed["d1_b"],
        packed["d2_w"], packed["d2_b"],
        packed["d3_w"], packed["d3_b"],
        max_a_pad,
    )

    row_spec = pl.BlockSpec((tb, IN_PAD), lambda i: (i, 0))

    def const_spec(arr):
        # Full-array block, constant index -> stays VMEM-resident across grid steps.
        return pl.BlockSpec(arr.shape, lambda i: (0, 0))

    in_specs = [row_spec, row_spec, row_spec] + [const_spec(w) for w in weights]
    out_spec = pl.BlockSpec((tb, IN_PAD), lambda i: (i, 0))

    u_p, mean_p, std_p = pl.pallas_call(
        vae_kernel,
        grid=(Bp // tb,),
        in_specs=in_specs,
        out_specs=(out_spec, out_spec, out_spec),
        out_shape=(
            jax.ShapeDtypeStruct((Bp, IN_PAD), jnp.float32),
            jax.ShapeDtypeStruct((Bp, IN_PAD), jnp.float32),
            jax.ShapeDtypeStruct((Bp, IN_PAD), jnp.float32),
        ),
        compiler_params=pltpu.CompilerParams(
            dimension_semantics=("parallel",),
            vmem_limit_bytes=32 << 20,   # well within v7x's 64 MiB physical VMEM
        ),
    )(sa, s_in, nz, *weights)

    return (u_p[:B, :action_dim], mean_p[:B, :latent_dim], std_p[:B, :latent_dim])


# ----------------------------------------------------------------------------
# Deterministic parameter init (shapes from the module's __init__).
# ----------------------------------------------------------------------------
def init_params(key, state_dim, action_dim, latent_dim, hidden=HIDDEN_RAW):
    keys = iter(jax.random.split(key, 14))

    def lin(fan_in, fan_out):
        lim = 1.0 / float(fan_in) ** 0.5
        w = jax.random.uniform(next(keys), (fan_in, fan_out), jnp.float32, -lim, lim)
        b = jax.random.uniform(next(keys), (1, fan_out), jnp.float32, -lim, lim)
        return w, b

    e1_w, e1_b = lin(state_dim + action_dim, hidden)
    e2_w, e2_b = lin(hidden, hidden)
    mean_w, mean_b = lin(hidden, latent_dim)
    ls_w, ls_b = lin(hidden, latent_dim)          # independent keys (fixed reuse bug)
    d1_w, d1_b = lin(state_dim + latent_dim, hidden)
    d2_w, d2_b = lin(hidden, hidden)
    d3_w, d3_b = lin(hidden, action_dim)
    return dict(e1_w=e1_w, e1_b=e1_b, e2_w=e2_w, e2_b=e2_b,
                mean_w=mean_w, mean_b=mean_b, ls_w=ls_w, ls_b=ls_b,
                d1_w=d1_w, d1_b=d1_b, d2_w=d2_w, d2_b=d2_b,
                d3_w=d3_w, d3_b=d3_b)


# ----------------------------------------------------------------------------
# Pure-JAX precision-matched reference (same padded params / cast pattern).
# ----------------------------------------------------------------------------
def vae_ref(sa, s_in, noise_pad, p, max_a_pad):
    def mm(x, w):
        return jnp.dot(x.astype(jnp.bfloat16), w, preferred_element_type=jnp.float32)

    h = jnp.maximum(mm(sa, p["e1_w"]) + p["e1_b"], 0.0)
    h = jnp.maximum(mm(h, p["e2_w"]) + p["e2_b"], 0.0)
    mean = mm(h, p["mean_w"]) + p["mean_b"]
    log_std = jnp.clip(mm(h, p["ls_w"]) + p["ls_b"], -4.0, 15.0)
    std = jnp.exp(log_std)
    z = mean + std * noise_pad
    g = jnp.maximum(mm(s_in, p["d1_ws"]) + mm(z, p["d1_wz"]) + p["d1_b"], 0.0)
    g = jnp.maximum(mm(g, p["d2_w"]) + p["d2_b"], 0.0)
    u = max_a_pad * jnp.tanh(mm(g, p["d3_w"]) + p["d3_b"])
    return u, mean, std


if __name__ == "__main__":
    B, STATE_DIM, ACTION_DIM, LATENT_DIM = 256, 16, 4, 8

    key = jax.random.PRNGKey(0)
    k_state, k_action, k_noise, k_params = jax.random.split(key, 4)

    state = jax.random.normal(k_state, (B, STATE_DIM), jnp.float32)
    action = jax.random.normal(k_action, (B, ACTION_DIM), jnp.float32)
    # The PyTorch module draws np.random.normal inside forward(); here the noise
    # is a deterministic kernel input to keep the computation pure.
    noise = jax.random.normal(k_noise, (B, LATENT_DIM), jnp.float32)

    raw = init_params(k_params, STATE_DIM, ACTION_DIM, LATENT_DIM)
    packed = pack_params(raw, STATE_DIM, ACTION_DIM, LATENT_DIM)
    max_action = jnp.full((1, ACTION_DIM), 2.0, jnp.float32)

    u, mean, std = vae_forward(state, action, noise, packed, max_action,
                               action_dim=ACTION_DIM, latent_dim=LATENT_DIM)
    jax.block_until_ready((u, mean, std))

    sa, s_in, nz, _ = _pack_inputs(state, action, noise, LATENT_DIM, TB)
    max_a_pad = _pad_to(max_action, (1, IN_PAD), jnp.float32)
    u_r, mean_r, std_r = vae_ref(sa, s_in, nz, packed, max_a_pad)
    u_r = u_r[:B, :ACTION_DIM]
    mean_r = mean_r[:B, :LATENT_DIM]
    std_r = std_r[:B, :LATENT_DIM]

    assert jnp.allclose(u, u_r, atol=2e-3, rtol=2e-3)
    assert jnp.allclose(mean, mean_r, atol=2e-3, rtol=2e-3)
    assert jnp.allclose(std, std_r, atol=2e-3, rtol=2e-3)

    print("KERNEL_OK")
</pallas_src>

<mosaic_0001>
module attributes {stable_mosaic.version = 11 : i64} {
  func.func @vae_kernel(%arg0: i32, %arg1: memref<128x128xf32, #tpu.memory_space<vmem>>, %arg2: memref<128x128xf32, #tpu.memory_space<vmem>>, %arg3: memref<128x128xf32, #tpu.memory_space<vmem>>, %arg4: memref<128x768xbf16, #tpu.memory_space<vmem>>, %arg5: memref<1x768xf32, #tpu.memory_space<vmem>>, %arg6: memref<768x768xbf16, #tpu.memory_space<vmem>>, %arg7: memref<1x768xf32, #tpu.memory_space<vmem>>, %arg8: memref<768x128xbf16, #tpu.memory_space<vmem>>, %arg9: memref<1x128xf32, #tpu.memory_space<vmem>>, %arg10: memref<768x128xbf16, #tpu.memory_space<vmem>>, %arg11: memref<1x128xf32, #tpu.memory_space<vmem>>, %arg12: memref<128x768xbf16, #tpu.memory_space<vmem>>, %arg13: memref<128x768xbf16, #tpu.memory_space<vmem>>, %arg14: memref<1x768xf32, #tpu.memory_space<vmem>>, %arg15: memref<768x768xbf16, #tpu.memory_space<vmem>>, %arg16: memref<1x768xf32, #tpu.memory_space<vmem>>, %arg17: memref<768x128xbf16, #tpu.memory_space<vmem>>, %arg18: memref<1x128xf32, #tpu.memory_space<vmem>>, %arg19: memref<1x128xf32, #tpu.memory_space<vmem>>, %arg20: memref<128x128xf32, #tpu.memory_space<vmem>>, %arg21: memref<128x128xf32, #tpu.memory_space<vmem>>, %arg22: memref<128x128xf32, #tpu.memory_space<vmem>>) attributes {dimension_semantics = [#tpu.dimension_semantics<parallel>], iteration_bounds = array<i64: 2>, scalar_prefetch = 0 : i64, scratch_operands = 0 : i64, tpu.core_type = #tpu.core_type<tc>, window_params = [{transform_indices = @transform_0, window_bounds = array<i64: 128, 128>}, {transform_indices = @transform_1, window_bounds = array<i64: 128, 128>}, {transform_indices = @transform_2, window_bounds = array<i64: 128, 128>}, {pipeline_mode = #tpu.pipeline_mode<synchronous>, transform_indices = @transform_3, window_bounds = array<i64: 128, 768>}, {pipeline_mode = #tpu.pipeline_mode<synchronous>, transform_indices = @transform_4, window_bounds = array<i64: 1, 768>}, {pipeline_mode = #tpu.pipeline_mode<synchronous>, transform_indices = @transform_5, window_bounds = array<i64: 768, 768>}, {pipeline_mode = #tpu.pipeline_mode<synchronous>, transform_indices = @transform_6, window_bounds = array<i64: 1, 768>}, {pipeline_mode = #tpu.pipeline_mode<synchronous>, transform_indices = @transform_7, window_bounds = array<i64: 768, 128>}, {pipeline_mode = #tpu.pipeline_mode<synchronous>, transform_indices = @transform_8, window_bounds = array<i64: 1, 128>}, {pipeline_mode = #tpu.pipeline_mode<synchronous>, transform_indices = @transform_9, window_bounds = array<i64: 768, 128>}, {pipeline_mode = #tpu.pipeline_mode<synchronous>, transform_indices = @transform_10, window_bounds = array<i64: 1, 128>}, {pipeline_mode = #tpu.pipeline_mode<synchronous>, transform_indices = @transform_11, window_bounds = array<i64: 128, 768>}, {pipeline_mode = #tpu.pipeline_mode<synchronous>, transform_indices = @transform_12, window_bounds = array<i64: 128, 768>}, {pipeline_mode = #tpu.pipeline_mode<synchronous>, transform_indices = @transform_13, window_bounds = array<i64: 1, 768>}, {pipeline_mode = #tpu.pipeline_mode<synchronous>, transform_indices = @transform_14, window_bounds = array<i64: 768, 768>}, {pipeline_mode = #tpu.pipeline_mode<synchronous>, transform_indices = @transform_15, window_bounds = array<i64: 1, 768>}, {pipeline_mode = #tpu.pipeline_mode<synchronous>, transform_indices = @transform_16, window_bounds = array<i64: 768, 128>}, {pipeline_mode = #tpu.pipeline_mode<synchronous>, transform_indices = @transform_17, window_bounds = array<i64: 1, 128>}, {pipeline_mode = #tpu.pipeline_mode<synchronous>, transform_indices = @transform_18, window_bounds = array<i64: 1, 128>}, {transform_indices = @transform_19, window_bounds = array<i64: 128, 128>}, {transform_indices = @transform_20, window_bounds = array<i64: 128, 128>}, {transform_indices = @transform_21, window_bounds = array<i64: 128, 128>}]} {
    %c0 = arith.constant 0 : index
    %c0_0 = arith.constant 0 : index
    %0 = vector.load %arg1[%c0, %c0_0] : memref<128x128xf32, #tpu.memory_space<vmem>>, vector<128x128xf32>
    %c0_1 = arith.constant 0 : index
    %c0_2 = arith.constant 0 : index
    %1 = vector.load %arg2[%c0_1, %c0_2] : memref<128x128xf32, #tpu.memory_space<vmem>>, vector<128x128xf32>
    %2 = arith.truncf %0 : vector<128x128xf32> to vector<128x128xbf16>
    %c0_3 = arith.constant 0 : index
    %c0_4 = arith.constant 0 : index
    %3 = vector.load %arg4[%c0_3, %c0_4] : memref<128x768xbf16, #tpu.memory_space<vmem>>, vector<128x768xbf16>
    %cst = arith.constant dense<0.000000e+00> : vector<128x768xf32>
    %4 = tpu.matmul %2, %3, %cst {dimension_numbers = #tpu.dot_dimension_numbers<[1], [0], [0], [1], [0, 0, 1, 1], [], []>} : vector<128x128xbf16>, vector<128x768xbf16>, vector<128x768xf32> -> vector<128x768xf32>
    %c0_5 = arith.constant 0 : index
    %c0_6 = arith.constant 0 : index
    %5 = vector.load %arg5[%c0_5, %c0_6] : memref<1x768xf32, #tpu.memory_space<vmem>>, vector<1x768xf32>
    %6 = vector.broadcast %5 : vector<1x768xf32> to vector<128x768xf32>
    %7 = arith.addf %4, %6 : vector<128x768xf32>
    %cst_7 = arith.constant 0.000000e+00 : f32
    %8 = vector.broadcast %cst_7 : f32 to vector<128x768xf32>
    %9 = arith.maximumf %7, %8 : vector<128x768xf32>
    %10 = arith.truncf %9 : vector<128x768xf32> to vector<128x768xbf16>
    %c0_8 = arith.constant 0 : index
    %c0_9 = arith.constant 0 : index
    %11 = vector.load %arg6[%c0_8, %c0_9] : memref<768x768xbf16, #tpu.memory_space<vmem>>, vector<768x768xbf16>
    %cst_10 = arith.constant dense<0.000000e+00> : vector<128x768xf32>
    %12 = tpu.matmul %10, %11, %cst_10 {dimension_numbers = #tpu.dot_dimension_numbers<[1], [0], [0], [1], [0, 0, 1, 1], [], []>} : vector<128x768xbf16>, vector<768x768xbf16>, vector<128x768xf32> -> vector<128x768xf32>
    %c0_11 = arith.constant 0 : index
    %c0_12 = arith.constant 0 : index
    %13 = vector.load %arg7[%c0_11, %c0_12] : memref<1x768xf32, #tpu.memory_space<vmem>>, vector<1x768xf32>
    %14 = vector.broadcast %13 : vector<1x768xf32> to vector<128x768xf32>
    %15 = arith.addf %12, %14 : vector<128x768xf32>
    %cst_13 = arith.constant 0.000000e+00 : f32
    %16 = vector.broadcast %cst_13 : f32 to vector<128x768xf32>
    %17 = arith.maximumf %15, %16 : vector<128x768xf32>
    %18 = arith.truncf %17 : vector<128x768xf32> to vector<128x768xbf16>
    %c0_14 = arith.constant 0 : index
    %c0_15 = arith.constant 0 : index
    %19 = vector.load %arg8[%c0_14, %c0_15] : memref<768x128xbf16, #tpu.memory_space<vmem>>, vector<768x128xbf16>
    %cst_16 = arith.constant dense<0.000000e+00> : vector<128x128xf32>
    %20 = tpu.matmul %18, %19, %cst_16 {dimension_numbers = #tpu.dot_dimension_numbers<[1], [0], [0], [1], [0, 0, 1, 1], [], []>} : vector<128x768xbf16>, vector<768x128xbf16>, vector<128x128xf32> -> vector<128x128xf32>
    %c0_17 = arith.constant 0 : index
    %c0_18 = arith.constant 0 : index
    %21 = vector.load %arg9[%c0_17, %c0_18] : memref<1x128xf32, #tpu.memory_space<vmem>>, vector<1x128xf32>
    %22 = vector.broadcast %21 : vector<1x128xf32> to vector<128x128xf32>
    %23 = arith.addf %20, %22 : vector<128x128xf32>
    %24 = arith.truncf %17 : vector<128x768xf32> to vector<128x768xbf16>
    %c0_19 = arith.constant 0 : index
    %c0_20 = arith.constant 0 : index
    %25 = vector.load %arg10[%c0_19, %c0_20] : memref<768x128xbf16, #tpu.memory_space<vmem>>, vector<768x128xbf16>
    %cst_21 = arith.constant dense<0.000000e+00> : vector<128x128xf32>
    %26 = tpu.matmul %24, %25, %cst_21 {dimension_numbers = #tpu.dot_dimension_numbers<[1], [0], [0], [1], [0, 0, 1, 1], [], []>} : vector<128x768xbf16>, vector<768x128xbf16>, vector<128x128xf32> -> vector<128x128xf32>
    %c0_22 = arith.constant 0 : index
    %c0_23 = arith.constant 0 : index
    %27 = vector.load %arg11[%c0_22, %c0_23] : memref<1x128xf32, #tpu.memory_space<vmem>>, vector<1x128xf32>
    %28 = vector.broadcast %27 : vector<1x128xf32> to vector<128x128xf32>
    %29 = arith.addf %26, %28 : vector<128x128xf32>
    %cst_24 = arith.constant -4.000000e+00 : f32
    %cst_25 = arith.constant 1.500000e+01 : f32
    %30 = vector.broadcast %cst_24 : f32 to vector<128x128xf32>
    %31 = arith.maximumf %30, %29 : vector<128x128xf32>
    %32 = vector.broadcast %cst_25 : f32 to vector<128x128xf32>
    %33 = arith.minimumf %32, %31 : vector<128x128xf32>
    %34 = math.exp %33 : vector<128x128xf32>
    %c0_26 = arith.constant 0 : index
    %c0_27 = arith.constant 0 : index
    %35 = vector.load %arg3[%c0_26, %c0_27] : memref<128x128xf32, #tpu.memory_space<vmem>>, vector<128x128xf32>
    %36 = arith.mulf %34, %35 : vector<128x128xf32>
    %37 = arith.addf %23, %36 : vector<128x128xf32>
    %38 = arith.truncf %1 : vector<128x128xf32> to vector<128x128xbf16>
    %c0_28 = arith.constant 0 : index
    %c0_29 = arith.constant 0 : index
    %39 = vector.load %arg12[%c0_28, %c0_29] : memref<128x768xbf16, #tpu.memory_space<vmem>>, vector<128x768xbf16>
    %cst_30 = arith.constant dense<0.000000e+00> : vector<128x768xf32>
    %40 = tpu.matmul %38, %39, %cst_30 {dimension_numbers = #tpu.dot_dimension_numbers<[1], [0], [0], [1], [0, 0, 1, 1], [], []>} : vector<128x128xbf16>, vector<128x768xbf16>, vector<128x768xf32> -> vector<128x768xf32>
    %41 = arith.truncf %37 : vector<128x128xf32> to vector<128x128xbf16>
    %c0_31 = arith.constant 0 : index
    %c0_32 = arith.constant 0 : index
    %42 = vector.load %arg13[%c0_31, %c0_32] : memref<128x768xbf16, #tpu.memory_space<vmem>>, vector<128x768xbf16>
    %cst_33 = arith.constant dense<0.000000e+00> : vector<128x768xf32>
    %43 = tpu.matmul %41, %42, %cst_33 {dimension_numbers = #tpu.dot_dimension_numbers<[1], [0], [0], [1], [0, 0, 1, 1], [], []>} : vector<128x128xbf16>, vector<128x768xbf16>, vector<128x768xf32> -> vector<128x768xf32>
    %44 = arith.addf %40, %43 : vector<128x768xf32>
    %c0_34 = arith.constant 0 : index
    %c0_35 = arith.constant 0 : index
    %45 = vector.load %arg14[%c0_34, %c0_35] : memref<1x768xf32, #tpu.memory_space<vmem>>, vector<1x768xf32>
    %46 = vector.broadcast %45 : vector<1x768xf32> to vector<128x768xf32>
    %47 = arith.addf %44, %46 : vector<128x768xf32>
    %cst_36 = arith.constant 0.000000e+00 : f32
    %48 = vector.broadcast %cst_36 : f32 to vector<128x768xf32>
    %49 = arith.maximumf %47, %48 : vector<128x768xf32>
    %50 = arith.truncf %49 : vector<128x768xf32> to vector<128x768xbf16>
    %c0_37 = arith.constant 0 : index
    %c0_38 = arith.constant 0 : index
    %51 = vector.load %arg15[%c0_37, %c0_38] : memref<768x768xbf16, #tpu.memory_space<vmem>>, vector<768x768xbf16>
    %cst_39 = arith.constant dense<0.000000e+00> : vector<128x768xf32>
    %52 = tpu.matmul %50, %51, %cst_39 {dimension_numbers = #tpu.dot_dimension_numbers<[1], [0], [0], [1], [0, 0, 1, 1], [], []>} : vector<128x768xbf16>, vector<768x768xbf16>, vector<128x768xf32> -> vector<128x768xf32>
    %c0_40 = arith.constant 0 : index
    %c0_41 = arith.constant 0 : index
    %53 = vector.load %arg16[%c0_40, %c0_41] : memref<1x768xf32, #tpu.memory_space<vmem>>, vector<1x768xf32>
    %54 = vector.broadcast %53 : vector<1x768xf32> to vector<128x768xf32>
    %55 = arith.addf %52, %54 : vector<128x768xf32>
    %cst_42 = arith.constant 0.000000e+00 : f32
    %56 = vector.broadcast %cst_42 : f32 to vector<128x768xf32>
    %57 = arith.maximumf %55, %56 : vector<128x768xf32>
    %c0_43 = arith.constant 0 : index
    %c0_44 = arith.constant 0 : index
    %58 = vector.load %arg19[%c0_43, %c0_44] : memref<1x128xf32, #tpu.memory_space<vmem>>, vector<1x128xf32>
    %59 = arith.truncf %57 : vector<128x768xf32> to vector<128x768xbf16>
    %c0_45 = arith.constant 0 : index
    %c0_46 = arith.constant 0 : index
    %60 = vector.load %arg17[%c0_45, %c0_46] : memref<768x128xbf16, #tpu.memory_space<vmem>>, vector<768x128xbf16>
    %cst_47 = arith.constant dense<0.000000e+00> : vector<128x128xf32>
    %61 = tpu.matmul %59, %60, %cst_47 {dimension_numbers = #tpu.dot_dimension_numbers<[1], [0], [0], [1], [0, 0, 1, 1], [], []>} : vector<128x768xbf16>, vector<768x128xbf16>, vector<128x128xf32> -> vector<128x128xf32>
    %c0_48 = arith.constant 0 : index
    %c0_49 = arith.constant 0 : index
    %62 = vector.load %arg18[%c0_48, %c0_49] : memref<1x128xf32, #tpu.memory_space<vmem>>, vector<1x128xf32>
    %63 = vector.broadcast %62 : vector<1x128xf32> to vector<128x128xf32>
    %64 = arith.addf %61, %63 : vector<128x128xf32>
    %65 = math.tanh %64 : vector<128x128xf32>
    %66 = vector.broadcast %58 : vector<1x128xf32> to vector<128x128xf32>
    %67 = arith.mulf %66, %65 : vector<128x128xf32>
    %c0_50 = arith.constant 0 : index
    %c0_51 = arith.constant 0 : index
    %68 = vector.load %arg20[%c0_50, %c0_51] : memref<128x128xf32, #tpu.memory_space<vmem>>, vector<128x128xf32>
    tpu.vector_store %arg20[%c0_50, %c0_51], %67 {strides = array<i32>} : memref<128x128xf32, #tpu.memory_space<vmem>>, vector<128x128xf32>,
    %c0_52 = arith.constant 0 : index
    %c0_53 = arith.constant 0 : index
    %69 = vector.load %arg21[%c0_52, %c0_53] : memref<128x128xf32, #tpu.memory_space<vmem>>, vector<128x128xf32>
    tpu.vector_store %arg21[%c0_52, %c0_53], %23 {strides = array<i32>} : memref<128x128xf32, #tpu.memory_space<vmem>>, vector<128x128xf32>,
    %c0_54 = arith.constant 0 : index
    %c0_55 = arith.constant 0 : index
    %70 = vector.load %arg22[%c0_54, %c0_55] : memref<128x128xf32, #tpu.memory_space<vmem>>, vector<128x128xf32>
    tpu.vector_store %arg22[%c0_54, %c0_55], %34 {strides = array<i32>} : memref<128x128xf32, #tpu.memory_space<vmem>>, vector<128x128xf32>,
    return
  }
  func.func @transform_0(%arg0: i32) -> (i32, i32) {
    %c0_i32 = arith.constant 0 : i32
    %c0_i32_0 = arith.constant 0 : i32
    return %arg0, %c0_i32 : i32, i32
  }
  func.func @transform_1(%arg0: i32) -> (i32, i32) {
    %c0_i32 = arith.constant 0 : i32
    %c0_i32_0 = arith.constant 0 : i32
    return %arg0, %c0_i32 : i32, i32
  }
  func.func @transform_2(%arg0: i32) -> (i32, i32) {
    %c0_i32 = arith.constant 0 : i32
    %c0_i32_0 = arith.constant 0 : i32
    return %arg0, %c0_i32 : i32, i32
  }
  func.func @transform_3(%arg0: i32) -> (i32, i32) {
    %c0_i32 = arith.constant 0 : i32
    %c0_i32_0 = arith.constant 0 : i32
    %c0_i32_1 = arith.constant 0 : i32
    return %c0_i32, %c0_i32_0 : i32, i32
  }
  func.func @transform_4(%arg0: i32) -> (i32, i32) {
    %c0_i32 = arith.constant 0 : i32
    %c0_i32_0 = arith.constant 0 : i32
    %c0_i32_1 = arith.constant 0 : i32
    return %c0_i32, %c0_i32_0 : i32, i32
  }
  func.func @transform_5(%arg0: i32) -> (i32, i32) {
    %c0_i32 = arith.constant 0 : i32
    %c0_i32_0 = arith.constant 0 : i32
    %c0_i32_1 = arith.constant 0 : i32
    return %c0_i32, %c0_i32_0 : i32, i32
  }
  func.func @transform_6(%arg0: i32) -> (i32, i32) {
    %c0_i32 = arith.constant 0 : i32
    %c0_i32_0 = arith.constant 0 : i32
    %c0_i32_1 = arith.constant 0 : i32
    return %c0_i32, %c0_i32_0 : i32, i32
  }
  func.func @transform_7(%arg0: i32) -> (i32, i32) {
    %c0_i32 = arith.constant 0 : i32
    %c0_i32_0 = arith.constant 0 : i32
    %c0_i32_1 = arith.constant 0 : i32
    return %c0_i32, %c0_i32_0 : i32, i32
  }
  func.func @transform_8(%arg0: i32) -> (i32, i32) {
    %c0_i32 = arith.constant 0 : i32
    %c0_i32_0 = arith.constant 0 : i32
    %c0_i32_1 = arith.constant 0 : i32
    return %c0_i32, %c0_i32_0 : i32, i32
  }
  func.func @transform_9(%arg0: i32) -> (i32, i32) {
    %c0_i32 = arith.constant 0 : i32
    %c0_i32_0 = arith.constant 0 : i32
    %c0_i32_1 = arith.constant 0 : i32
    return %c0_i32, %c0_i32_0 : i32, i32
  }
  func.func @transform_10(%arg0: i32) -> (i32, i32) {
    %c0_i32 = arith.constant 0 : i32
    %c0_i32_0 = arith.constant 0 : i32
    %c0_i32_1 = arith.constant 0 : i32
    return %c0_i32, %c0_i32_0 : i32, i32
  }
  func.func @transform_11(%arg0: i32) -> (i32, i32) {
    %c0_i32 = arith.constant 0 : i32
    %c0_i32_0 = arith.constant 0 : i32
    %c0_i32_1 = arith.constant 0 : i32
    return %c0_i32, %c0_i32_0 : i32, i32
  }
  func.func @transform_12(%arg0: i32) -> (i32, i32) {
    %c0_i32 = arith.constant 0 : i32
    %c0_i32_0 = arith.constant 0 : i32
    %c0_i32_1 = arith.constant 0 : i32
    return %c0_i32, %c0_i32_0 : i32, i32
  }
  func.func @transform_13(%arg0: i32) -> (i32, i32) {
    %c0_i32 = arith.constant 0 : i32
    %c0_i32_0 = arith.constant 0 : i32
    %c0_i32_1 = arith.constant 0 : i32
    return %c0_i32, %c0_i32_0 : i32, i32
  }
  func.func @transform_14(%arg0: i32) -> (i32, i32) {
    %c0_i32 = arith.constant 0 : i32
    %c0_i32_0 = arith.constant 0 : i32
    %c0_i32_1 = arith.constant 0 : i32
    return %c0_i32, %c0_i32_0 : i32, i32
  }
  func.func @transform_15(%arg0: i32) -> (i32, i32) {
    %c0_i32 = arith.constant 0 : i32
    %c0_i32_0 = arith.constant 0 : i32
    %c0_i32_1 = arith.constant 0 : i32
    return %c0_i32, %c0_i32_0 : i32, i32
  }
  func.func @transform_16(%arg0: i32) -> (i32, i32) {
    %c0_i32 = arith.constant 0 : i32
    %c0_i32_0 = arith.constant 0 : i32
    %c0_i32_1 = arith.constant 0 : i32
    return %c0_i32, %c0_i32_0 : i32, i32
  }
  func.func @transform_17(%arg0: i32) -> (i32, i32) {
    %c0_i32 = arith.constant 0 : i32
    %c0_i32_0 = arith.constant 0 : i32
    %c0_i32_1 = arith.constant 0 : i32
    return %c0_i32, %c0_i32_0 : i32, i32
  }
  func.func @transform_18(%arg0: i32) -> (i32, i32) {
    %c0_i32 = arith.constant 0 : i32
    %c0_i32_0 = arith.constant 0 : i32
    %c0_i32_1 = arith.constant 0 : i32
    return %c0_i32, %c0_i32_0 : i32, i32
  }
  func.func @transform_19(%arg0: i32) -> (i32, i32) {
    %c0_i32 = arith.constant 0 : i32
    %c0_i32_0 = arith.constant 0 : i32
    return %arg0, %c0_i32 : i32, i32
  }
  func.func @transform_20(%arg0: i32) -> (i32, i32) {
    %c0_i32 = arith.constant 0 : i32
    %c0_i32_0 = arith.constant 0 : i32
    return %arg0, %c0_i32 : i32, i32
  }
  func.func @transform_21(%arg0: i32) -> (i32, i32) {
    %c0_i32 = arith.constant 0 : i32
    %c0_i32_0 = arith.constant 0 : i32
    return %arg0, %c0_i32 : i32, i32
  }
}

</mosaic_0001>

<llo_original>
// kernel: tpu_custom_call.1
$region0: #{tpu_custom_call.1}
  #allocation0 [shape = 'u32[]', space=smem, size = 0x4, offset = 0x4, fixed_abs, tag = 'smem constant byte address 0x4 - core index']
  #allocation1 [shape = 'u32[144,128]{1,0:T(1,128)}', space=vmem, size = 0x12000, scoped, tag = 'internal scratch']
  %s0 = inlined_call_operand.hbm [shape: f32[256,128], index: 0, kind: input, shape index: {}]
  %s1 = inlined_call_operand.hbm [shape: f32[256,128], index: 1, kind: input, shape index: {}]
  %s2 = inlined_call_operand.hbm [shape: f32[256,128], index: 2, kind: input, shape index: {}]
  %s3 = inlined_call_operand.hbm [shape: bf16[128,768], index: 3, kind: input, shape index: {}]
  %s4 = inlined_call_operand.hbm [shape: f32[1,768], index: 4, kind: input, shape index: {}]
  %s5 = inlined_call_operand.hbm [shape: bf16[768,768], index: 5, kind: input, shape index: {}]
  %s6 = inlined_call_operand.hbm [shape: f32[1,768], index: 6, kind: input, shape index: {}]
  %s7 = inlined_call_operand.hbm [shape: bf16[768,128], index: 7, kind: input, shape index: {}]
  %s8 = inlined_call_operand.hbm [shape: f32[1,128], index: 8, kind: input, shape index: {}]
  %s9 = inlined_call_operand.hbm [shape: bf16[768,128], index: 9, kind: input, shape index: {}]
  %s10 = inlined_call_operand.hbm [shape: f32[1,128], index: 10, kind: input, shape index: {}]
  %s11 = inlined_call_operand.hbm [shape: bf16[128,768], index: 11, kind: input, shape index: {}]
  %s12 = inlined_call_operand.hbm [shape: bf16[128,768], index: 12, kind: input, shape index: {}]
  %s13 = inlined_call_operand.hbm [shape: f32[1,768], index: 13, kind: input, shape index: {}]
  %s14 = inlined_call_operand.hbm [shape: bf16[768,768], index: 14, kind: input, shape index: {}]
  %s15 = inlined_call_operand.hbm [shape: f32[1,768], index: 15, kind: input, shape index: {}]
  %s16 = inlined_call_operand.hbm [shape: bf16[768,128], index: 16, kind: input, shape index: {}]
  %s17 = inlined_call_operand.hbm [shape: f32[1,128], index: 17, kind: input, shape index: {}]
  %s18 = inlined_call_operand.hbm [shape: f32[1,128], index: 18, kind: input, shape index: {}]
  %s19 = inlined_call_operand.hbm [shape: f32[256,128], index: 19, kind: output, shape index: {0}]
  %s20 = inlined_call_operand.hbm [shape: f32[256,128], index: 20, kind: output, shape index: {1}]
  %s21 = inlined_call_operand.hbm [shape: f32[256,128], index: 21, kind: output, shape index: {2}]
  %22 = xla_tuple %s19, %s20, %s21
  %s23 = sld [smem:[#allocation0]]
  $region201: #{tpu_custom_call.1} parent=0
    _
  %s25 = ssub.s32 1, %s23
  %s26 = scalar_select 0, %s25, %s23
  $region1: #{tpu_custom_call.1} parent=0
    #allocation2 [shape = 'u8[131072]{0}', space=vmem, size = 0x20000, scoped, tag = 'input window, operand 0']
    #allocation3 [shape = 's32[2]{0}', space=sflag, size = 0x8, scoped, tag = 'scoped memory for tpu_custom_call.1']
    #allocation4 [shape = 's32[2]{0}', space=sflag, size = 0x8, scoped, tag = 'scoped memory for tpu_custom_call.1']
    #allocation5 [shape = 'u8[131072]{0}', space=vmem, size = 0x20000, scoped, tag = 'input window, operand 1']
    #allocation6 [shape = 's32[2]{0}', space=sflag, size = 0x8, scoped, tag = 'scoped memory for tpu_custom_call.1']
    #allocation7 [shape = 'u8[131072]{0}', space=vmem, size = 0x20000, scoped, tag = 'input window, operand 2']
    #allocation8 [shape = 'u8[196608]{0}', space=vmem, size = 0x30000, scoped, tag = 'input window, operand 3, single buffered']
    #allocation9 [shape = 's32[1]{0}', space=sflag, size = 0x4, scoped, tag = 'scoped memory for tpu_custom_call.1']
    #allocation10 [shape = 'u8[3072]{0}', space=vmem, size = 0xc00, scoped, tag = 'input window, operand 4, single buffered']
    #allocation11 [shape = 'u8[1179648]{0}', space=vmem, size = 0x120000, scoped, tag = 'input window, operand 5, single buffered']
    #allocation12 [shape = 's32[1]{0}', space=sflag, size = 0x4, scoped, tag = 'scoped memory for tpu_custom_call.1']
    #allocation13 [shape = 'u8[3072]{0}', space=vmem, size = 0xc00, scoped, tag = 'input window, operand 6, single buffered']
    #allocation14 [shape = 'u8[196608]{0}', space=vmem, size = 0x30000, scoped, tag = 'input window, operand 7, single buffered']
    #allocation15 [shape = 's32[1]{0}', space=sflag, size = 0x4, scoped, tag = 'scoped memory for tpu_custom_call.1']
    #allocation16 [shape = 'u8[512]{0}', space=vmem, size = 0x400, scoped, tag = 'input window, operand 8, single buffered']
    #allocation17 [shape = 'u8[196608]{0}', space=vmem, size = 0x30000, scoped, tag = 'input window, operand 9, single buffered']
    #allocation18 [shape = 's32[1]{0}', space=sflag, size = 0x4, scoped, tag = 'scoped memory for tpu_custom_call.1']
    #allocation19 [shape = 'u8[512]{0}', space=vmem, size = 0x400, scoped, tag = 'input window, operand 10, single buffered']
    #allocation20 [shape = 'u8[196608]{0}', space=vmem, size = 0x30000, scoped, tag = 'input window, operand 11, single buffered']
    #allocation21 [shape = 's32[1]{0}', space=sflag, size = 0x4, scoped, tag = 'scoped memory for tpu_custom_call.1']
    #allocation22 [shape = 'u8[196608]{0}', space=vmem, size = 0x30000, scoped, tag = 'input window, operand 12, single buffered']
    #allocation23 [shape = 'u8[3072]{0}', space=vmem, size = 0xc00, scoped, tag = 'input window, operand 13, single buffered']
    #allocation24 [shape = 's32[1]{0}', space=sflag, size = 0x4, scoped, tag = 'scoped memory for tpu_custom_call.1']
    #allocation25 [shape = 'u8[1179648]{0}', space=vmem, size = 0x120000, scoped, tag = 'input window, operand 14, single buffered']
    #allocation26 [shape = 'u8[3072]{0}', space=vmem, size = 0xc00, scoped, tag = 'input window, operand 15, single buffered']
    #allocation27 [shape = 's32[1]{0}', space=sflag, size = 0x4, scoped, tag = 'scoped memory for tpu_custom_call.1']
    #allocation28 [shape = 'u8[196608]{0}', space=vmem, size = 0x30000, scoped, tag = 'input window, operand 16, single buffered']
    #allocation29 [shape = 'u8[512]{0}', space=vmem, size = 0x400, scoped, tag = 'input window, operand 17, single buffered']
    #allocation30 [shape = 's32[1]{0}', space=sflag, size = 0x4, scoped, tag = 'scoped memory for tpu_custom_call.1']
    #allocation31 [shape = 'u8[512]{0}', space=vmem, size = 0x400, scoped, tag = 'input window, operand 18, single buffered']
    #allocation32 [shape = 'u8[131072]{0}', space=vmem, size = 0x20000, scoped, tag = 'output window, operand 0']
    #allocation33 [shape = 'u8[131072]{0}', space=vmem, size = 0x20000, scoped, tag = 'output window, operand 1']
    #allocation34 [shape = 's32[2]{0}', space=sflag, size = 0x8, scoped, tag = 'scoped memory for tpu_custom_call.1']
    #allocation35 [shape = 'u8[131072]{0}', space=vmem, size = 0x20000, scoped, tag = 'output window, operand 2']
    %27 = vsyncpa [#allocation3], 0
    %s28 = scalar_lea.sflag [#allocation3], 1
    %29 = vsyncpa %s28, 0
    %30 = vsyncpa [#allocation6], 0
    %s31 = scalar_lea.sflag [#allocation6], 1
    %32 = vsyncpa %s31, 0
    %33 = vsyncpa [#allocation9], 0
    %34 = vsyncpa [#allocation12], 0
    %35 = vsyncpa [#allocation15], 0
    %36 = vsyncpa [#allocation18], 0
    %37 = vsyncpa [#allocation21], 0
    %38 = vsyncpa [#allocation24], 0
    %39 = vsyncpa [#allocation27], 0
    %40 = vsyncpa [#allocation30], 0
    %41 = vsyncpa [#allocation4], 0
    %s42 = scalar_lea.sflag [#allocation4], 1
    %43 = vsyncpa %s42, 0
    %44 = vsyncpa [#allocation34], 0
    %s45 = scalar_lea.sflag [#allocation34], 1
    %46 = vsyncpa %s45, 0
    loop: start=0, step=1, limit=4
    $region2: #{tpu_custom_call.1} parent=1 // loop_pre_header
      _
    $region3: #{tpu_custom_call.1} parent=1 // loop_header
      %s48 = sphi 0, %s52
      %p49 = scmp.ge.s32.totalorder %s48, 4
      %s58 = sphi 0, %s60
      %s61 = sphi 0, %s58
      %s62 = sphi 0, %s61
      %s78 = sphi 0, %s62
      %s84 = sphi 0, %s86
      %s87 = sphi 0, %s84
      %s88 = sphi 0, %s87
      %s104 = sphi 0, %s88
      %s110 = sphi 0, %s112
      %s113 = sphi 0, %s110
      %s114 = sphi 0, %s113
      %s130 = sphi 0, %s114
      %s134 = sphi 0, %s134
      %s136 = sphi 0, %s134
      %s137 = sphi 0, %s136
      %s151 = sphi 0, %s137
      %s155 = sphi 0, %s155
      %s157 = sphi 0, %s155
      %s158 = sphi 0, %s157
      %s172 = sphi 0, %s158
      %s176 = sphi 0, %s176
      %s178 = sphi 0, %s176
      %s179 = sphi 0, %s178
      %s193 = sphi 0, %s179
      %s197 = sphi 0, %s197
      %s199 = sphi 0, %s197
      %s200 = sphi 0, %s199
      %s214 = sphi 0, %s200
      %s218 = sphi 0, %s218
      %s220 = sphi 0, %s218
      %s221 = sphi 0, %s220
      %s235 = sphi 0, %s221
      %s239 = sphi 0, %s239
      %s241 = sphi 0, %s239
      %s242 = sphi 0, %s241
      %s256 = sphi 0, %s242
      %s260 = sphi 0, %s260
      %s262 = sphi 0, %s260
      %s263 = sphi 0, %s262
      %s277 = sphi 0, %s263
      %s281 = sphi 0, %s281
      %s283 = sphi 0, %s281
      %s284 = sphi 0, %s283
      %s298 = sphi 0, %s284
      %s302 = sphi 0, %s302
      %s304 = sphi 0, %s302
      %s305 = sphi 0, %s304
      %s319 = sphi 0, %s305
      %s323 = sphi 0, %s323
      %s325 = sphi 0, %s323
      %s326 = sphi 0, %s325
      %s340 = sphi 0, %s326
      %s344 = sphi 0, %s344
      %s346 = sphi 0, %s344
      %s347 = sphi 0, %s346
      %s361 = sphi 0, %s347
      %s365 = sphi 0, %s365
      %s367 = sphi 0, %s365
      %s368 = sphi 0, %s367
      %s382 = sphi 0, %s368
      %s386 = sphi 0, %s386
      %s388 = sphi 0, %s386
      %s389 = sphi 0, %s388
      %s403 = sphi 0, %s389
      %s407 = sphi 0, %s407
      %s409 = sphi 0, %s407
      %s410 = sphi 0, %s409
      %s424 = sphi 0, %s410
      %s428 = sphi 0, %s428
      %s430 = sphi 0, %s428
      %s431 = sphi 0, %s430
      %s445 = sphi 0, %s431
      %s449 = sphi 0, %s449
      %s451 = sphi 0, %s449
      %s452 = sphi 0, %s451
      %s466 = sphi 0, %s452
      %s472 = sphi 0, %s474
      %s475 = sphi 0, %s472
      %s476 = sphi 0, %s475
      %s492 = sphi 0, %s476
      %s498 = sphi 0, %s500
      %s501 = sphi 0, %s498
      %s502 = sphi 0, %s501
      %s518 = sphi 0, %s502
      %s524 = sphi 0, %s526
      %s527 = sphi 0, %s524
      %s528 = sphi 0, %s527
      %s544 = sphi 0, %s528
    $region4: #{tpu_custom_call.1} parent=1 // loop_header_branch
      %51 = sbr.rel (%p49) target = $region8
    $region5: #{tpu_custom_call.1} parent=1 // loop_body
      %s53 = ssub.s32 %s48, 1
      %s54 = ssub.s32 %s48, 2
      %s55 = sadd.s32 %s48, 1
      %s56 = ssub.s32 %s48, %s55
      %p57 = scmp.eq.s32.totalorder %s56, 0
      %s59 = sadd.s32 %s58, 1
      %s60 = scalar_select %p57, %s58, %s59
      %p63 = pneg %p57
      %p64 = scmp.eq.s32.totalorder %s48, 1
      %p65 = por %p63, %p64
      %p66 = scmp.ne.s32.totalorder %s58, %s61
      %p67 = scmp.eq.s32.totalorder %s48, 0
      %p68 = por %p66, %p67
      %p69 = scmp.ne.s32.totalorder %s58, %s61
      %p70 = scmp.eq.s32.totalorder %s53, 1
      %p71 = por %p69, %p70
      %p72 = scmp.ne.s32.totalorder %s61, %s62
      %p73 = scmp.eq.s32.totalorder %s53, 0
      %p74 = por %p72, %p73
      %p75 = scmp.ne.s32.totalorder %s61, %s62
      %p76 = scmp.eq.s32.totalorder %s54, 1
      %p77 = por %p75, %p76
      %p79 = scmp.ne.s32.totalorder %s62, %s78
      %p80 = scmp.eq.s32.totalorder %s54, 0
      %p81 = por %p79, %p80
      %s82 = ssub.s32 %s48, %s55
      %p83 = scmp.eq.s32.totalorder %s82, 0
      %s85 = sadd.s32 %s84, 1
      %s86 = scalar_select %p83, %s84, %s85
      %p89 = pneg %p83
      %p90 = scmp.eq.s32.totalorder %s48, 1
      %p91 = por %p89, %p90
      %p92 = scmp.ne.s32.totalorder %s84, %s87
      %p93 = scmp.eq.s32.totalorder %s48, 0
      %p94 = por %p92, %p93
      %p95 = scmp.ne.s32.totalorder %s84, %s87
      %p96 = scmp.eq.s32.totalorder %s53, 1
      %p97 = por %p95, %p96
      %p98 = scmp.ne.s32.totalorder %s87, %s88
      %p99 = scmp.eq.s32.totalorder %s53, 0
      %p100 = por %p98, %p99
      %p101 = scmp.ne.s32.totalorder %s87, %s88
      %p102 = scmp.eq.s32.totalorder %s54, 1
      %p103 = por %p101, %p102
      %p105 = scmp.ne.s32.totalorder %s88, %s104
      %p106 = scmp.eq.s32.totalorder %s54, 0
      %p107 = por %p105, %p106
      %s108 = ssub.s32 %s48, %s55
      %p109 = scmp.eq.s32.totalorder %s108, 0
      %s111 = sadd.s32 %s110, 1
      %s112 = scalar_select %p109, %s110, %s111
      %p115 = pneg %p109
      %p116 = scmp.eq.s32.totalorder %s48, 1
      %p117 = por %p115, %p116
      %p118 = scmp.ne.s32.totalorder %s110, %s113
      %p119 = scmp.eq.s32.totalorder %s48, 0
      %p120 = por %p118, %p119
      %p121 = scmp.ne.s32.totalorder %s110, %s113
      %p122 = scmp.eq.s32.totalorder %s53, 1
      %p123 = por %p121, %p122
      %p124 = scmp.ne.s32.totalorder %s113, %s114
      %p125 = scmp.eq.s32.totalorder %s53, 0
      %p126 = por %p124, %p125
      %p127 = scmp.ne.s32.totalorder %s113, %s114
      %p128 = scmp.eq.s32.totalorder %s54, 1
      %p129 = por %p127, %p128
      %p131 = scmp.ne.s32.totalorder %s114, %s130
      %p132 = scmp.eq.s32.totalorder %s54, 0
      %p133 = por %p131, %p132
      %s135 = sadd.s32 %s134, 1
      %p138 = scmp.eq.s32.totalorder %s48, 1
      %p139 = scmp.ne.s32.totalorder %s134, %s136
      %p140 = scmp.eq.s32.totalorder %s48, 0
      %p141 = por %p139, %p140
      %p142 = scmp.ne.s32.totalorder %s134, %s136
      %p143 = scmp.eq.s32.totalorder %s53, 1
      %p144 = por %p142, %p143
      %p145 = scmp.ne.s32.totalorder %s136, %s137
      %p146 = scmp.eq.s32.totalorder %s53, 0
      %p147 = por %p145, %p146
      %p148 = scmp.ne.s32.totalorder %s136, %s137
      %p149 = scmp.eq.s32.totalorder %s54, 1
      %p150 = por %p148, %p149
      %p152 = scmp.ne.s32.totalorder %s137, %s151
      %p153 = scmp.eq.s32.totalorder %s54, 0
      %p154 = por %p152, %p153
      %s156 = sadd.s32 %s155, 1
      %p159 = scmp.eq.s32.totalorder %s48, 1
      %p160 = scmp.ne.s32.totalorder %s155, %s157
      %p161 = scmp.eq.s32.totalorder %s48, 0
      %p162 = por %p160, %p161
      %p163 = scmp.ne.s32.totalorder %s155, %s157
      %p164 = scmp.eq.s32.totalorder %s53, 1
      %p165 = por %p163, %p164
      %p166 = scmp.ne.s32.totalorder %s157, %s158
      %p167 = scmp.eq.s32.totalorder %s53, 0
      %p168 = por %p166, %p167
      %p169 = scmp.ne.s32.totalorder %s157, %s158
      %p170 = scmp.eq.s32.totalorder %s54, 1
      %p171 = por %p169, %p170
      %p173 = scmp.ne.s32.totalorder %s158, %s172
      %p174 = scmp.eq.s32.totalorder %s54, 0
      %p175 = por %p173, %p174
      %s177 = sadd.s32 %s176, 1
      %p180 = scmp.eq.s32.totalorder %s48, 1
      %p181 = scmp.ne.s32.totalorder %s176, %s178
      %p182 = scmp.eq.s32.totalorder %s48, 0
      %p183 = por %p181, %p182
      %p184 = scmp.ne.s32.totalorder %s176, %s178
      %p185 = scmp.eq.s32.totalorder %s53, 1
      %p186 = por %p184, %p185
      %p187 = scmp.ne.s32.totalorder %s178, %s179
      %p188 = scmp.eq.s32.totalorder %s53, 0
      %p189 = por %p187, %p188
      %p190 = scmp.ne.s32.totalorder %s178, %s179
      %p191 = scmp.eq.s32.totalorder %s54, 1
      %p192 = por %p190, %p191
      %p194 = scmp.ne.s32.totalorder %s179, %s193
      %p195 = scmp.eq.s32.totalorder %s54, 0
      %p196 = por %p194, %p195
      %s198 = sadd.s32 %s197, 1
      %p201 = scmp.eq.s32.totalorder %s48, 1
      %p202 = scmp.ne.s32.totalorder %s197, %s199
      %p203 = scmp.eq.s32.totalorder %s48, 0
      %p204 = por %p202, %p203
      %p205 = scmp.ne.s32.totalorder %s197, %s199
      %p206 = scmp.eq.s32.totalorder %s53, 1
      %p207 = por %p205, %p206
      %p208 = scmp.ne.s32.totalorder %s199, %s200
      %p209 = scmp.eq.s32.totalorder %s53, 0
      %p210 = por %p208, %p209
      %p211 = scmp.ne.s32.totalorder %s199, %s200
      %p212 = scmp.eq.s32.totalorder %s54, 1
      %p213 = por %p211, %p212
      %p215 = scmp.ne.s32.totalorder %s200, %s214
      %p216 = scmp.eq.s32.totalorder %s54, 0
      %p217 = por %p215, %p216
      %s219 = sadd.s32 %s218, 1
      %p222 = scmp.eq.s32.totalorder %s48, 1
      %p223 = scmp.ne.s32.totalorder %s218, %s220
      %p224 = scmp.eq.s32.totalorder %s48, 0
      %p225 = por %p223, %p224
      %p226 = scmp.ne.s32.totalorder %s218, %s220
      %p227 = scmp.eq.s32.totalorder %s53, 1
      %p228 = por %p226, %p227
      %p229 = scmp.ne.s32.totalorder %s220, %s221
      %p230 = scmp.eq.s32.totalorder %s53, 0
      %p231 = por %p229, %p230
      %p232 = scmp.ne.s32.totalorder %s220, %s221
      %p233 = scmp.eq.s32.totalorder %s54, 1
      %p234 = por %p232, %p233
      %p236 = scmp.ne.s32.totalorder %s221, %s235
      %p237 = scmp.eq.s32.totalorder %s54, 0
      %p238 = por %p236, %p237
      %s240 = sadd.s32 %s239, 1
      %p243 = scmp.eq.s32.totalorder %s48, 1
      %p244 = scmp.ne.s32.totalorder %s239, %s241
      %p245 = scmp.eq.s32.totalorder %s48, 0
      %p246 = por %p244, %p245
      %p247 = scmp.ne.s32.totalorder %s239, %s241
      %p248 = scmp.eq.s32.totalorder %s53, 1
      %p249 = por %p247, %p248
      %p250 = scmp.ne.s32.totalorder %s241, %s242
      %p251 = scmp.eq.s32.totalorder %s53, 0
      %p252 = por %p250, %p251
      %p253 = scmp.ne.s32.totalorder %s241, %s242
      %p254 = scmp.eq.s32.totalorder %s54, 1
      %p255 = por %p253, %p254
      %p257 = scmp.ne.s32.totalorder %s242, %s256
      %p258 = scmp.eq.s32.totalorder %s54, 0
      %p259 = por %p257, %p258
      %s261 = sadd.s32 %s260, 1
      %p264 = scmp.eq.s32.totalorder %s48, 1
      %p265 = scmp.ne.s32.totalorder %s260, %s262
      %p266 = scmp.eq.s32.totalorder %s48, 0
      %p267 = por %p265, %p266
      %p268 = scmp.ne.s32.totalorder %s260, %s262
      %p269 = scmp.eq.s32.totalorder %s53, 1
      %p270 = por %p268, %p269
      %p271 = scmp.ne.s32.totalorder %s262, %s263
      %p272 = scmp.eq.s32.totalorder %s53, 0
      %p273 = por %p271, %p272
      %p274 = scmp.ne.s32.totalorder %s262, %s263
      %p275 = scmp.eq.s32.totalorder %s54, 1
      %p276 = por %p274, %p275
      %p278 = scmp.ne.s32.totalorder %s263, %s277
      %p279 = scmp.eq.s32.totalorder %s54, 0
      %p280 = por %p278, %p279
      %s282 = sadd.s32 %s281, 1
      %p285 = scmp.eq.s32.totalorder %s48, 1
      %p286 = scmp.ne.s32.totalorder %s281, %s283
      %p287 = scmp.eq.s32.totalorder %s48, 0
      %p288 = por %p286, %p287
      %p289 = scmp.ne.s32.totalorder %s281, %s283
      %p290 = scmp.eq.s32.totalorder %s53, 1
      %p291 = por %p289, %p290
      %p292 = scmp.ne.s32.totalorder %s283, %s284
      %p293 = scmp.eq.s32.totalorder %s53, 0
      %p294 = por %p292, %p293
      %p295 = scmp.ne.s32.totalorder %s283, %s284
      %p296 = scmp.eq.s32.totalorder %s54, 1
      %p297 = por %p295, %p296
      %p299 = scmp.ne.s32.totalorder %s284, %s298
      %p300 = scmp.eq.s32.totalorder %s54, 0
      %p301 = por %p299, %p300
      %s303 = sadd.s32 %s302, 1
      %p306 = scmp.eq.s32.totalorder %s48, 1
      %p307 = scmp.ne.s32.totalorder %s302, %s304
      %p308 = scmp.eq.s32.totalorder %s48, 0
      %p309 = por %p307, %p308
      %p310 = scmp.ne.s32.totalorder %s302, %s304
      %p311 = scmp.eq.s32.totalorder %s53, 1
      %p312 = por %p310, %p311
      %p313 = scmp.ne.s32.totalorder %s304, %s305
      %p314 = scmp.eq.s32.totalorder %s53, 0
      %p315 = por %p313, %p314
      %p316 = scmp.ne.s32.totalorder %s304, %s305
      %p317 = scmp.eq.s32.totalorder %s54, 1
      %p318 = por %p316, %p317
      %p320 = scmp.ne.s32.totalorder %s305, %s319
      %p321 = scmp.eq.s32.totalorder %s54, 0
      %p322 = por %p320, %p321
      %s324 = sadd.s32 %s323, 1
      %p327 = scmp.eq.s32.totalorder %s48, 1
      %p328 = scmp.ne.s32.totalorder %s323, %s325
      %p329 = scmp.eq.s32.totalorder %s48, 0
      %p330 = por %p328, %p329
      %p331 = scmp.ne.s32.totalorder %s323, %s325
      %p332 = scmp.eq.s32.totalorder %s53, 1
      %p333 = por %p331, %p332
      %p334 = scmp.ne.s32.totalorder %s325, %s326
      %p335 = scmp.eq.s32.totalorder %s53, 0
      %p336 = por %p334, %p335
      %p337 = scmp.ne.s32.totalorder %s325, %s326
      %p338 = scmp.eq.s32.totalorder %s54, 1
      %p339 = por %p337, %p338
      %p341 = scmp.ne.s32.totalorder %s326, %s340
      %p342 = scmp.eq.s32.totalorder %s54, 0
      %p343 = por %p341, %p342
      %s345 = sadd.s32 %s344, 1
      %p348 = scmp.eq.s32.totalorder %s48, 1
      %p349 = scmp.ne.s32.totalorder %s344, %s346
      %p350 = scmp.eq.s32.totalorder %s48, 0
      %p351 = por %p349, %p350
      %p352 = scmp.ne.s32.totalorder %s344, %s346
      %p353 = scmp.eq.s32.totalorder %s53, 1
      %p354 = por %p352, %p353
      %p355 = scmp.ne.s32.totalorder %s346, %s347
      %p356 = scmp.eq.s32.totalorder %s53, 0
      %p357 = por %p355, %p356
      %p358 = scmp.ne.s32.totalorder %s346, %s347
      %p359 = scmp.eq.s32.totalorder %s54, 1
      %p360 = por %p358, %p359
      %p362 = scmp.ne.s32.totalorder %s347, %s361
      %p363 = scmp.eq.s32.totalorder %s54, 0
      %p364 = por %p362, %p363
      %s366 = sadd.s32 %s365, 1
      %p369 = scmp.eq.s32.totalorder %s48, 1
      %p370 = scmp.ne.s32.totalorder %s365, %s367
      %p371 = scmp.eq.s32.totalorder %s48, 0
      %p372 = por %p370, %p371
      %p373 = scmp.ne.s32.totalorder %s365, %s367
      %p374 = scmp.eq.s32.totalorder %s53, 1
      %p375 = por %p373, %p374
      %p376 = scmp.ne.s32.totalorder %s367, %s368
      %p377 = scmp.eq.s32.totalorder %s53, 0
      %p378 = por %p376, %p377
      %p379 = scmp.ne.s32.totalorder %s367, %s368
      %p380 = scmp.eq.s32.totalorder %s54, 1
      %p381 = por %p379, %p380
      %p383 = scmp.ne.s32.totalorder %s368, %s382
      %p384 = scmp.eq.s32.totalorder %s54, 0
      %p385 = por %p383, %p384
      %s387 = sadd.s32 %s386, 1
      %p390 = scmp.eq.s32.totalorder %s48, 1
      %p391 = scmp.ne.s32.totalorder %s386, %s388
      %p392 = scmp.eq.s32.totalorder %s48, 0
      %p393 = por %p391, %p392
      %p394 = scmp.ne.s32.totalorder %s386, %s388
      %p395 = scmp.eq.s32.totalorder %s53, 1
      %p396 = por %p394, %p395
      %p397 = scmp.ne.s32.totalorder %s388, %s389
      %p398 = scmp.eq.s32.totalorder %s53, 0
      %p399 = por %p397, %p398
      %p400 = scmp.ne.s32.totalorder %s388, %s389
      %p401 = scmp.eq.s32.totalorder %s54, 1
      %p402 = por %p400, %p401
      %p404 = scmp.ne.s32.totalorder %s389, %s403
      %p405 = scmp.eq.s32.totalorder %s54, 0
      %p406 = por %p404, %p405
      %s408 = sadd.s32 %s407, 1
      %p411 = scmp.eq.s32.totalorder %s48, 1
      %p412 = scmp.ne.s32.totalorder %s407, %s409
      %p413 = scmp.eq.s32.totalorder %s48, 0
      %p414 = por %p412, %p413
      %p415 = scmp.ne.s32.totalorder %s407, %s409
      %p416 = scmp.eq.s32.totalorder %s53, 1
      %p417 = por %p415, %p416
      %p418 = scmp.ne.s32.totalorder %s409, %s410
      %p419 = scmp.eq.s32.totalorder %s53, 0
      %p420 = por %p418, %p419
      %p421 = scmp.ne.s32.totalorder %s409, %s410
      %p422 = scmp.eq.s32.totalorder %s54, 1
      %p423 = por %p421, %p422
      %p425 = scmp.ne.s32.totalorder %s410, %s424
      %p426 = scmp.eq.s32.totalorder %s54, 0
      %p427 = por %p425, %p426
      %s429 = sadd.s32 %s428, 1
      %p432 = scmp.eq.s32.totalorder %s48, 1
      %p433 = scmp.ne.s32.totalorder %s428, %s430
      %p434 = scmp.eq.s32.totalorder %s48, 0
      %p435 = por %p433, %p434
      %p436 = scmp.ne.s32.totalorder %s428, %s430
      %p437 = scmp.eq.s32.totalorder %s53, 1
      %p438 = por %p436, %p437
      %p439 = scmp.ne.s32.totalorder %s430, %s431
      %p440 = scmp.eq.s32.totalorder %s53, 0
      %p441 = por %p439, %p440
      %p442 = scmp.ne.s32.totalorder %s430, %s431
      %p443 = scmp.eq.s32.totalorder %s54, 1
      %p444 = por %p442, %p443
      %p446 = scmp.ne.s32.totalorder %s431, %s445
      %p447 = scmp.eq.s32.totalorder %s54, 0
      %p448 = por %p446, %p447
      %s450 = sadd.s32 %s449, 1
      %p453 = scmp.eq.s32.totalorder %s48, 1
      %p454 = scmp.ne.s32.totalorder %s449, %s451
      %p455 = scmp.eq.s32.totalorder %s48, 0
      %p456 = por %p454, %p455
      %p457 = scmp.ne.s32.totalorder %s449, %s451
      %p458 = scmp.eq.s32.totalorder %s53, 1
      %p459 = por %p457, %p458
      %p460 = scmp.ne.s32.totalorder %s451, %s452
      %p461 = scmp.eq.s32.totalorder %s53, 0
      %p462 = por %p460, %p461
      %p463 = scmp.ne.s32.totalorder %s451, %s452
      %p464 = scmp.eq.s32.totalorder %s54, 1
      %p465 = por %p463, %p464
      %p467 = scmp.ne.s32.totalorder %s452, %s466
      %p468 = scmp.eq.s32.totalorder %s54, 0
      %p469 = por %p467, %p468
      %s470 = ssub.s32 %s48, %s55
      %p471 = scmp.eq.s32.totalorder %s470, 0
      %s473 = sadd.s32 %s472, 1
      %s474 = scalar_select %p471, %s472, %s473
      %p477 = pneg %p471
      %p478 = scmp.eq.s32.totalorder %s48, 1
      %p479 = por %p477, %p478
      %p480 = scmp.ne.s32.totalorder %s472, %s475
      %p481 = scmp.eq.s32.totalorder %s48, 0
      %p482 = por %p480, %p481
      %p483 = scmp.ne.s32.totalorder %s472, %s475
      %p484 = scmp.eq.s32.totalorder %s53, 1
      %p485 = por %p483, %p484
      %p486 = scmp.ne.s32.totalorder %s475, %s476
      %p487 = scmp.eq.s32.totalorder %s53, 0
      %p488 = por %p486, %p487
      %p489 = scmp.ne.s32.totalorder %s475, %s476
      %p490 = scmp.eq.s32.totalorder %s54, 1
      %p491 = por %p489, %p490
      %p493 = scmp.ne.s32.totalorder %s476, %s492
      %p494 = scmp.eq.s32.totalorder %s54, 0
      %p495 = por %p493, %p494
      %s496 = ssub.s32 %s48, %s55
      %p497 = scmp.eq.s32.totalorder %s496, 0
      %s499 = sadd.s32 %s498, 1
      %s500 = scalar_select %p497, %s498, %s499
      %p503 = pneg %p497
      %p504 = scmp.eq.s32.totalorder %s48, 1
      %p505 = por %p503, %p504
      %p506 = scmp.ne.s32.totalorder %s498, %s501
      %p507 = scmp.eq.s32.totalorder %s48, 0
      %p508 = por %p506, %p507
      %p509 = scmp.ne.s32.totalorder %s498, %s501
      %p510 = scmp.eq.s32.totalorder %s53, 1
      %p511 = por %p509, %p510
      %p512 = scmp.ne.s32.totalorder %s501, %s502
      %p513 = scmp.eq.s32.totalorder %s53, 0
      %p514 = por %p512, %p513
      %p515 = scmp.ne.s32.totalorder %s501, %s502
      %p516 = scmp.eq.s32.totalorder %s54, 1
      %p517 = por %p515, %p516
      %p519 = scmp.ne.s32.totalorder %s502, %s518
      %p520 = scmp.eq.s32.totalorder %s54, 0
      %p521 = por %p519, %p520
      %s522 = ssub.s32 %s48, %s55
      %p523 = scmp.eq.s32.totalorder %s522, 0
      %s525 = sadd.s32 %s524, 1
      %s526 = scalar_select %p523, %s524, %s525
      %p529 = pneg %p523
      %p530 = scmp.eq.s32.totalorder %s48, 1
      %p531 = por %p529, %p530
      %p532 = scmp.ne.s32.totalorder %s524, %s527
      %p533 = scmp.eq.s32.totalorder %s48, 0
      %p534 = por %p532, %p533
      %p535 = scmp.ne.s32.totalorder %s524, %s527
      %p536 = scmp.eq.s32.totalorder %s53, 1
      %p537 = por %p535, %p536
      %p538 = scmp.ne.s32.totalorder %s527, %s528
      %p539 = scmp.eq.s32.totalorder %s53, 0
      %p540 = por %p538, %p539
      %p541 = scmp.ne.s32.totalorder %s527, %s528
      %p542 = scmp.eq.s32.totalorder %s54, 1
      %p543 = por %p541, %p542
      %p545 = scmp.ne.s32.totalorder %s528, %s544
      %p546 = scmp.eq.s32.totalorder %s54, 0
      %p547 = por %p545, %p546
      %p548 = scmp.le.s32.totalorder 1, %s48
      %p549 = scmp.lt.s32.totalorder %s48, 3
      %p550 = pnand %p548, %p549
      %p551 = pneg %p550
      // Predicated region
      $region9: #{tpu_custom_call.1} parent=5 // pred_check
        _
      $region10: #{tpu_custom_call.1} parent=5 // pred_check_branch
        %553 = sbr.rel (%p550) target = $region12
      $region11: #{tpu_custom_call.1} parent=5 // pred_region
        %s554 = ssub.s32 %s48, 1
        // Predicated region
        $region13: #{tpu_custom_call.1} parent=11 // pred_check
          %p555 = pneg %p147
        $region14: #{tpu_custom_call.1} parent=11 // pred_check_branch
          %557 = sbr.rel (%p555) target = $region16
        $region15: #{tpu_custom_call.1} parent=11 // pred_region
          %s559 = ssub.s32 6144, 6144
          %560 = vsyncadd [#allocation9], %s559
          %s561 = sshll.u32 [#allocation8], 4
          %s562 = int_to_ptr.vmem [resolvable:$true] %s561
          %567 = dma.hbm_to_vmem [thread:$0]  %s3, 6144, %s562, [#allocation9], 384, 384, 24
        $region16: #{tpu_custom_call.1} parent=11 // pred_fallthru
          _
        // Predicated region
        $region17: #{tpu_custom_call.1} parent=11 // pred_check
          %p568 = pneg %p168
        $region18: #{tpu_custom_call.1} parent=11 // pred_check_branch
          %570 = sbr.rel (%p568) target = $region20
        $region19: #{tpu_custom_call.1} parent=11 // pred_region
          %s572 = ssub.s32 96, 96
          %573 = vsyncadd [#allocation9], %s572
          %s575 = sshll.u32 [#allocation10], 4
          %s576 = int_to_ptr.vmem [resolvable:$true] %s575
          %578 = dma.hbm_to_vmem [thread:$0]  %s4, 96, %s576, [#allocation9]
        $region20: #{tpu_custom_call.1} parent=11 // pred_fallthru
          _
        // Predicated region
        $region21: #{tpu_custom_call.1} parent=11 // pred_check
          %p579 = pneg %p189
        $region22: #{tpu_custom_call.1} parent=11 // pred_check_branch
          %581 = sbr.rel (%p579) target = $region24
        $region23: #{tpu_custom_call.1} parent=11 // pred_region
          %s583 = ssub.s32 36864, 36864
          %584 = vsyncadd [#allocation12], %s583
          %s585 = sshll.u32 [#allocation11], 4
          %s586 = int_to_ptr.vmem [resolvable:$true] %s585
          %591 = dma.hbm_to_vmem [thread:$0]  %s5, 36864, %s586, [#allocation12], 384, 384, 24
        $region24: #{tpu_custom_call.1} parent=11 // pred_fallthru
          _
        // Predicated region
        $region25: #{tpu_custom_call.1} parent=11 // pred_check
          %p592 = pneg %p210
        $region26: #{tpu_custom_call.1} parent=11 // pred_check_branch
          %594 = sbr.rel (%p592) target = $region28
        $region27: #{tpu_custom_call.1} parent=11 // pred_region
          %s596 = ssub.s32 96, 96
          %597 = vsyncadd [#allocation12], %s596
          %s599 = sshll.u32 [#allocation13], 4
          %s600 = int_to_ptr.vmem [resolvable:$true] %s599
          %602 = dma.hbm_to_vmem [thread:$0]  %s6, 96, %s600, [#allocation12]
        $region28: #{tpu_custom_call.1} parent=11 // pred_fallthru
          _
        // Predicated region
        $region29: #{tpu_custom_call.1} parent=11 // pred_check
          %p603 = pneg %p231
        $region30: #{tpu_custom_call.1} parent=11 // pred_check_branch
          %605 = sbr.rel (%p603) target = $region32
        $region31: #{tpu_custom_call.1} parent=11 // pred_region
          %s607 = ssub.s32 6144, 6144
          %608 = vsyncadd [#allocation15], %s607
          %s609 = sshll.u32 [#allocation14], 4
          %s610 = int_to_ptr.vmem [resolvable:$true] %s609
          %615 = dma.hbm_to_vmem [thread:$0]  %s7, 6144, %s610, [#allocation15], 64, 64, 4
        $region32: #{tpu_custom_call.1} parent=11 // pred_fallthru
          _
        // Predicated region
        $region33: #{tpu_custom_call.1} parent=11 // pred_check
          %p616 = pneg %p252
        $region34: #{tpu_custom_call.1} parent=11 // pred_check_branch
          %618 = sbr.rel (%p616) target = $region36
        $region35: #{tpu_custom_call.1} parent=11 // pred_region
          %s620 = ssub.s32 16, 16
          %621 = vsyncadd [#allocation15], %s620
          %s623 = sshll.u32 [#allocation16], 4
          %s624 = int_to_ptr.vmem [resolvable:$true] %s623
          %626 = dma.hbm_to_vmem [thread:$0]  %s8, 16, %s624, [#allocation15]
        $region36: #{tpu_custom_call.1} parent=11 // pred_fallthru
          _
        // Predicated region
        $region37: #{tpu_custom_call.1} parent=11 // pred_check
          %p627 = pneg %p273
        $region38: #{tpu_custom_call.1} parent=11 // pred_check_branch
          %629 = sbr.rel (%p627) target = $region40
        $region39: #{tpu_custom_call.1} parent=11 // pred_region
          %s631 = ssub.s32 6144, 6144
          %632 = vsyncadd [#allocation18], %s631
          %s633 = sshll.u32 [#allocation17], 4
          %s634 = int_to_ptr.vmem [resolvable:$true] %s633
          %639 = dma.hbm_to_vmem [thread:$0]  %s9, 6144, %s634, [#allocation18], 64, 64, 4
        $region40: #{tpu_custom_call.1} parent=11 // pred_fallthru
          _
        // Predicated region
        $region41: #{tpu_custom_call.1} parent=11 // pred_check
          %p640 = pneg %p294
        $region42: #{tpu_custom_call.1} parent=11 // pred_check_branch
          %642 = sbr.rel (%p640) target = $region44
        $region43: #{tpu_custom_call.1} parent=11 // pred_region
          %s644 = ssub.s32 16, 16
          %645 = vsyncadd [#allocation18], %s644
          %s647 = sshll.u32 [#allocation19], 4
          %s648 = int_to_ptr.vmem [resolvable:$true] %s647
          %650 = dma.hbm_to_vmem [thread:$0]  %s10, 16, %s648, [#allocation18]
        $region44: #{tpu_custom_call.1} parent=11 // pred_fallthru
          _
        // Predicated region
        $region45: #{tpu_custom_call.1} parent=11 // pred_check
          %p651 = pneg %p315
        $region46: #{tpu_custom_call.1} parent=11 // pred_check_branch
          %653 = sbr.rel (%p651) target = $region48
        $region47: #{tpu_custom_call.1} parent=11 // pred_region
          %s655 = ssub.s32 6144, 6144
          %656 = vsyncadd [#allocation21], %s655
          %s657 = sshll.u32 [#allocation20], 4
          %s658 = int_to_ptr.vmem [resolvable:$true] %s657
          %663 = dma.hbm_to_vmem [thread:$0]  %s11, 6144, %s658, [#allocation21], 384, 384, 24
        $region48: #{tpu_custom_call.1} parent=11 // pred_fallthru
          _
        // Predicated region
        $region49: #{tpu_custom_call.1} parent=11 // pred_check
          %p664 = pneg %p336
        $region50: #{tpu_custom_call.1} parent=11 // pred_check_branch
          %666 = sbr.rel (%p664) target = $region52
        $region51: #{tpu_custom_call.1} parent=11 // pred_region
          %s668 = ssub.s32 6144, 6144
          %669 = vsyncadd [#allocation21], %s668
          %s670 = sshll.u32 [#allocation22], 4
          %s671 = int_to_ptr.vmem [resolvable:$true] %s670
          %676 = dma.hbm_to_vmem [thread:$0]  %s12, 6144, %s671, [#allocation21], 384, 384, 24
        $region52: #{tpu_custom_call.1} parent=11 // pred_fallthru
          _
        // Predicated region
        $region53: #{tpu_custom_call.1} parent=11 // pred_check
          %p677 = pneg %p357
        $region54: #{tpu_custom_call.1} parent=11 // pred_check_branch
          %679 = sbr.rel (%p677) target = $region56
        $region55: #{tpu_custom_call.1} parent=11 // pred_region
          %s681 = ssub.s32 96, 96
          %682 = vsyncadd [#allocation24], %s681
          %s684 = sshll.u32 [#allocation23], 4
          %s685 = int_to_ptr.vmem [resolvable:$true] %s684
          %687 = dma.hbm_to_vmem [thread:$0]  %s13, 96, %s685, [#allocation24]
        $region56: #{tpu_custom_call.1} parent=11 // pred_fallthru
          _
        // Predicated region
        $region57: #{tpu_custom_call.1} parent=11 // pred_check
          %p688 = pneg %p378
        $region58: #{tpu_custom_call.1} parent=11 // pred_check_branch
          %690 = sbr.rel (%p688) target = $region60
        $region59: #{tpu_custom_call.1} parent=11 // pred_region
          %s692 = ssub.s32 36864, 36864
          %693 = vsyncadd [#allocation24], %s692
          %s694 = sshll.u32 [#allocation25], 4
          %s695 = int_to_ptr.vmem [resolvable:$true] %s694
          %700 = dma.hbm_to_vmem [thread:$0]  %s14, 36864, %s695, [#allocation24], 384, 384, 24
        $region60: #{tpu_custom_call.1} parent=11 // pred_fallthru
          _
        // Predicated region
        $region61: #{tpu_custom_call.1} parent=11 // pred_check
          %p701 = pneg %p399
        $region62: #{tpu_custom_call.1} parent=11 // pred_check_branch
          %703 = sbr.rel (%p701) target = $region64
        $region63: #{tpu_custom_call.1} parent=11 // pred_region
          %s705 = ssub.s32 96, 96
          %706 = vsyncadd [#allocation27], %s705
          %s708 = sshll.u32 [#allocation26], 4
          %s709 = int_to_ptr.vmem [resolvable:$true] %s708
          %711 = dma.hbm_to_vmem [thread:$0]  %s15, 96, %s709, [#allocation27]
        $region64: #{tpu_custom_call.1} parent=11 // pred_fallthru
          _
        // Predicated region
        $region65: #{tpu_custom_call.1} parent=11 // pred_check
          %p712 = pneg %p420
        $region66: #{tpu_custom_call.1} parent=11 // pred_check_branch
          %714 = sbr.rel (%p712) target = $region68
        $region67: #{tpu_custom_call.1} parent=11 // pred_region
          %s716 = ssub.s32 6144, 6144
          %717 = vsyncadd [#allocation27], %s716
          %s718 = sshll.u32 [#allocation28], 4
          %s719 = int_to_ptr.vmem [resolvable:$true] %s718
          %724 = dma.hbm_to_vmem [thread:$0]  %s16, 6144, %s719, [#allocation27], 64, 64, 4
        $region68: #{tpu_custom_call.1} parent=11 // pred_fallthru
          _
        // Predicated region
        $region69: #{tpu_custom_call.1} parent=11 // pred_check
          %p725 = pneg %p441
        $region70: #{tpu_custom_call.1} parent=11 // pred_check_branch
          %727 = sbr.rel (%p725) target = $region72
        $region71: #{tpu_custom_call.1} parent=11 // pred_region
          %s729 = ssub.s32 16, 16
          %730 = vsyncadd [#allocation30], %s729
          %s732 = sshll.u32 [#allocation29], 4
          %s733 = int_to_ptr.vmem [resolvable:$true] %s732
          %735 = dma.hbm_to_vmem [thread:$0]  %s17, 16, %s733, [#allocation30]
        $region72: #{tpu_custom_call.1} parent=11 // pred_fallthru
          _
        // Predicated region
        $region73: #{tpu_custom_call.1} parent=11 // pred_check
          %p736 = pneg %p462
        $region74: #{tpu_custom_call.1} parent=11 // pred_check_branch
          %738 = sbr.rel (%p736) target = $region76
        $region75: #{tpu_custom_call.1} parent=11 // pred_region
          %s740 = ssub.s32 16, 16
          %741 = vsyncadd [#allocation30], %s740
          %s743 = sshll.u32 [#allocation31], 4
          %s744 = int_to_ptr.vmem [resolvable:$true] %s743
          %746 = dma.hbm_to_vmem [thread:$0]  %s18, 16, %s744, [#allocation30]
        $region76: #{tpu_custom_call.1} parent=11 // pred_fallthru
          _
      $region12: #{tpu_custom_call.1} parent=5 // pred_fallthru
        _
      %p747 = scmp.lt.s32.totalorder %s48, 2
      // Predicated region
      $region77: #{tpu_custom_call.1} parent=5 // pred_check
        %p748 = pneg %p747
      $region78: #{tpu_custom_call.1} parent=5 // pred_check_branch
        %750 = sbr.rel (%p748) target = $region80
      $region79: #{tpu_custom_call.1} parent=5 // pred_region
        // Predicated region
        $region81: #{tpu_custom_call.1} parent=79 // pred_check
          %p751 = pneg %p68
        $region82: #{tpu_custom_call.1} parent=79 // pred_check_branch
          %753 = sbr.rel (%p751) target = $region84
        $region83: #{tpu_custom_call.1} parent=79 // pred_region
          %s754 = sand.u32 %s58, 1
          %s755 = scalar_lea.sflag [#allocation3], %s754
          %s756 = sand.u32 %s58, 1
          %s757 = smul.addr %s756, 128
          %s758 = scalar_lea.vmem [#allocation2], %s757
          %s759 = smul.u32 16, %s48
          %s761 = ssub.s32 2048, 2048
          %762 = vsyncadd %s755, %s761
          %s763 = smul.addr %s759, 128
          %s764 = scalar_lea.hbm %s0, %s763
          %s765 = sshll.u32 %s758, 4
          %s766 = int_to_ptr.vmem [resolvable:$true] %s765
          %771 = dma.hbm_to_vmem [thread:$0]  %s764, 2048, %s766, %s755, 128, 128, 8
        $region84: #{tpu_custom_call.1} parent=79 // pred_fallthru
          _
        // Predicated region
        $region85: #{tpu_custom_call.1} parent=79 // pred_check
          %p772 = pneg %p94
        $region86: #{tpu_custom_call.1} parent=79 // pred_check_branch
          %774 = sbr.rel (%p772) target = $region88
        $region87: #{tpu_custom_call.1} parent=79 // pred_region
          %s775 = sand.u32 %s48, 1
          %s776 = scalar_lea.sflag [#allocation6], %s775
          %s777 = sand.u32 %s84, 1
          %s778 = smul.addr %s777, 128
          %s779 = scalar_lea.vmem [#allocation5], %s778
          %s780 = smul.u32 16, %s48
          %s782 = ssub.s32 2048, 2048
          %783 = vsyncadd %s776, %s782
          %s784 = smul.addr %s780, 128
          %s785 = scalar_lea.hbm %s1, %s784
          %s786 = sshll.u32 %s779, 4
          %s787 = int_to_ptr.vmem [resolvable:$true] %s786
          %792 = dma.hbm_to_vmem [thread:$0]  %s785, 2048, %s787, %s776, 128, 128, 8
        $region88: #{tpu_custom_call.1} parent=79 // pred_fallthru
          _
        // Predicated region
        $region89: #{tpu_custom_call.1} parent=79 // pred_check
          %p793 = pneg %p120
        $region90: #{tpu_custom_call.1} parent=79 // pred_check_branch
          %795 = sbr.rel (%p793) target = $region92
        $region91: #{tpu_custom_call.1} parent=79 // pred_region
          %s796 = sand.u32 %s48, 1
          %s797 = scalar_lea.sflag [#allocation6], %s796
          %s798 = sand.u32 %s110, 1
          %s799 = smul.addr %s798, 128
          %s800 = scalar_lea.vmem [#allocation7], %s799
          %s801 = smul.u32 16, %s48
          %s803 = ssub.s32 2048, 2048
          %804 = vsyncadd %s797, %s803
          %s805 = smul.addr %s801, 128
          %s806 = scalar_lea.hbm %s2, %s805
          %s807 = sshll.u32 %s800, 4
          %s808 = int_to_ptr.vmem [resolvable:$true] %s807
          %813 = dma.hbm_to_vmem [thread:$0]  %s806, 2048, %s808, %s797, 128, 128, 8
        $region92: #{tpu_custom_call.1} parent=79 // pred_fallthru
          _
      $region80: #{tpu_custom_call.1} parent=5 // pred_fallthru
        _
      %p814 = scmp.le.s32.totalorder 1, %s48
      %p815 = scmp.lt.s32.totalorder %s48, 3
      %p816 = pnand %p814, %p815
      %p817 = pneg %p816
      // Predicated region
      $region93: #{tpu_custom_call.1} parent=5 // pred_check
        _
      $region94: #{tpu_custom_call.1} parent=5 // pred_check_branch
        %819 = sbr.rel (%p816) target = $region96
      $region95: #{tpu_custom_call.1} parent=5 // pred_region
        %s820 = ssub.s32 %s48, 1
        %s821 = sand.u32 %s61, 1
        %s822 = scalar_lea.sflag [#allocation3], %s821
        %s823 = sand.u32 %s61, 1
        %s824 = smul.addr %s823, 128
        %s825 = scalar_lea.vmem [#allocation2], %s824
        // Predicated region
        $region97: #{tpu_custom_call.1} parent=95 // pred_check
          %p826 = pneg %p74
        $region98: #{tpu_custom_call.1} parent=95 // pred_check_branch
          %828 = sbr.rel (%p826) target = $region100
        $region99: #{tpu_custom_call.1} parent=95 // pred_region
          %829 = dma.done %s822, 2048
        $region100: #{tpu_custom_call.1} parent=95 // pred_fallthru
          _
        %s830 = sand.u32 %s53, 1
        %s831 = scalar_lea.sflag [#allocation6], %s830
        %s832 = sand.u32 %s87, 1
        %s833 = smul.addr %s832, 128
        %s834 = scalar_lea.vmem [#allocation5], %s833
        // Predicated region
        $region101: #{tpu_custom_call.1} parent=95 // pred_check
          %p835 = pneg %p100
        $region102: #{tpu_custom_call.1} parent=95 // pred_check_branch
          %837 = sbr.rel (%p835) target = $region104
        $region103: #{tpu_custom_call.1} parent=95 // pred_region
          %838 = dma.done %s831, 2048
        $region104: #{tpu_custom_call.1} parent=95 // pred_fallthru
          _
        %s839 = sand.u32 %s53, 1
        %s840 = scalar_lea.sflag [#allocation6], %s839
        %s841 = sand.u32 %s113, 1
        %s842 = smul.addr %s841, 128
        %s843 = scalar_lea.vmem [#allocation7], %s842
        // Predicated region
        $region105: #{tpu_custom_call.1} parent=95 // pred_check
          %p844 = pneg %p126
        $region106: #{tpu_custom_call.1} parent=95 // pred_check_branch
          %846 = sbr.rel (%p844) target = $region108
        $region107: #{tpu_custom_call.1} parent=95 // pred_region
          %847 = dma.done %s840, 2048
        $region108: #{tpu_custom_call.1} parent=95 // pred_fallthru
          _
        // Predicated region
        $region109: #{tpu_custom_call.1} parent=95 // pred_check
          %p848 = pneg %p147
        $region110: #{tpu_custom_call.1} parent=95 // pred_check_branch
          %850 = sbr.rel (%p848) target = $region112
        $region111: #{tpu_custom_call.1} parent=95 // pred_region
          %851 = dma.done [#allocation9], 6144
        $region112: #{tpu_custom_call.1} parent=95 // pred_fallthru
          _
        // Predicated region
        $region113: #{tpu_custom_call.1} parent=95 // pred_check
          %p852 = pneg %p168
        $region114: #{tpu_custom_call.1} parent=95 // pred_check_branch
          %854 = sbr.rel (%p852) target = $region116
        $region115: #{tpu_custom_call.1} parent=95 // pred_region
          %855 = dma.done [#allocation9], 96
        $region116: #{tpu_custom_call.1} parent=95 // pred_fallthru
          _
        // Predicated region
        $region117: #{tpu_custom_call.1} parent=95 // pred_check
          %p856 = pneg %p189
        $region118: #{tpu_custom_call.1} parent=95 // pred_check_branch
          %858 = sbr.rel (%p856) target = $region120
        $region119: #{tpu_custom_call.1} parent=95 // pred_region
          %859 = dma.done [#allocation12], 36864
        $region120: #{tpu_custom_call.1} parent=95 // pred_fallthru
          _
        // Predicated region
        $region121: #{tpu_custom_call.1} parent=95 // pred_check
          %p860 = pneg %p210
        $region122: #{tpu_custom_call.1} parent=95 // pred_check_branch
          %862 = sbr.rel (%p860) target = $region124
        $region123: #{tpu_custom_call.1} parent=95 // pred_region
          %863 = dma.done [#allocation12], 96
        $region124: #{tpu_custom_call.1} parent=95 // pred_fallthru
          _
        // Predicated region
        $region125: #{tpu_custom_call.1} parent=95 // pred_check
          %p864 = pneg %p231
        $region126: #{tpu_custom_call.1} parent=95 // pred_check_branch
          %866 = sbr.rel (%p864) target = $region128
        $region127: #{tpu_custom_call.1} parent=95 // pred_region
          %867 = dma.done [#allocation15], 6144
        $region128: #{tpu_custom_call.1} parent=95 // pred_fallthru
          _
        // Predicated region
        $region129: #{tpu_custom_call.1} parent=95 // pred_check
          %p868 = pneg %p252
        $region130: #{tpu_custom_call.1} parent=95 // pred_check_branch
          %870 = sbr.rel (%p868) target = $region132
        $region131: #{tpu_custom_call.1} parent=95 // pred_region
          %871 = dma.done [#allocation15], 16
        $region132: #{tpu_custom_call.1} parent=95 // pred_fallthru
          _
        // Predicated region
        $region133: #{tpu_custom_call.1} parent=95 // pred_check
          %p872 = pneg %p273
        $region134: #{tpu_custom_call.1} parent=95 // pred_check_branch
          %874 = sbr.rel (%p872) target = $region136
        $region135: #{tpu_custom_call.1} parent=95 // pred_region
          %875 = dma.done [#allocation18], 6144
        $region136: #{tpu_custom_call.1} parent=95 // pred_fallthru
          _
        // Predicated region
        $region137: #{tpu_custom_call.1} parent=95 // pred_check
          %p876 = pneg %p294
        $region138: #{tpu_custom_call.1} parent=95 // pred_check_branch
          %878 = sbr.rel (%p876) target = $region140
        $region139: #{tpu_custom_call.1} parent=95 // pred_region
          %879 = dma.done [#allocation18], 16
        $region140: #{tpu_custom_call.1} parent=95 // pred_fallthru
          _
        // Predicated region
        $region141: #{tpu_custom_call.1} parent=95 // pred_check
          %p880 = pneg %p315
        $region142: #{tpu_custom_call.1} parent=95 // pred_check_branch
          %882 = sbr.rel (%p880) target = $region144
        $region143: #{tpu_custom_call.1} parent=95 // pred_region
          %883 = dma.done [#allocation21], 6144
        $region144: #{tpu_custom_call.1} parent=95 // pred_fallthru
          _
        // Predicated region
        $region145: #{tpu_custom_call.1} parent=95 // pred_check
          %p884 = pneg %p336
        $region146: #{tpu_custom_call.1} parent=95 // pred_check_branch
          %886 = sbr.rel (%p884) target = $region148
        $region147: #{tpu_custom_call.1} parent=95 // pred_region
          %887 = dma.done [#allocation21], 6144
        $region148: #{tpu_custom_call.1} parent=95 // pred_fallthru
          _
        // Predicated region
        $region149: #{tpu_custom_call.1} parent=95 // pred_check
          %p888 = pneg %p357
        $region150: #{tpu_custom_call.1} parent=95 // pred_check_branch
          %890 = sbr.rel (%p888) target = $region152
        $region151: #{tpu_custom_call.1} parent=95 // pred_region
          %891 = dma.done [#allocation24], 96
        $region152: #{tpu_custom_call.1} parent=95 // pred_fallthru
          _
        // Predicated region
        $region153: #{tpu_custom_call.1} parent=95 // pred_check
          %p892 = pneg %p378
        $region154: #{tpu_custom_call.1} parent=95 // pred_check_branch
          %894 = sbr.rel (%p892) target = $region156
        $region155: #{tpu_custom_call.1} parent=95 // pred_region
          %895 = dma.done [#allocation24], 36864
        $region156: #{tpu_custom_call.1} parent=95 // pred_fallthru
          _
        // Predicated region
        $region157: #{tpu_custom_call.1} parent=95 // pred_check
          %p896 = pneg %p399
        $region158: #{tpu_custom_call.1} parent=95 // pred_check_branch
          %898 = sbr.rel (%p896) target = $region160
        $region159: #{tpu_custom_call.1} parent=95 // pred_region
          %899 = dma.done [#allocation27], 96
        $region160: #{tpu_custom_call.1} parent=95 // pred_fallthru
          _
        // Predicated region
        $region161: #{tpu_custom_call.1} parent=95 // pred_check
          %p900 = pneg %p420
        $region162: #{tpu_custom_call.1} parent=95 // pred_check_branch
          %902 = sbr.rel (%p900) target = $region164
        $region163: #{tpu_custom_call.1} parent=95 // pred_region
          %903 = dma.done [#allocation27], 6144
        $region164: #{tpu_custom_call.1} parent=95 // pred_fallthru
          _
        // Predicated region
        $region165: #{tpu_custom_call.1} parent=95 // pred_check
          %p904 = pneg %p441
        $region166: #{tpu_custom_call.1} parent=95 // pred_check_branch
          %906 = sbr.rel (%p904) target = $region168
        $region167: #{tpu_custom_call.1} parent=95 // pred_region
          %907 = dma.done [#allocation30], 16
        $region168: #{tpu_custom_call.1} parent=95 // pred_fallthru
          _
        // Predicated region
        $region169: #{tpu_custom_call.1} parent=95 // pred_check
          %p908 = pneg %p462
        $region170: #{tpu_custom_call.1} parent=95 // pred_check_branch
          %910 = sbr.rel (%p908) target = $region172
        $region171: #{tpu_custom_call.1} parent=95 // pred_region
          %911 = dma.done [#allocation30], 16
        $region172: #{tpu_custom_call.1} parent=95 // pred_fallthru
          _
        %s912 = sand.u32 %s61, 1
        %s913 = scalar_lea.sflag [#allocation3], %s912
        %s914 = sand.u32 %s61, 1
        %s915 = smul.addr %s914, 128
        %s916 = scalar_lea.vmem [#allocation2], %s915
        %p917 = pneg %p74
        %p918 = pneg %p71
        %s919 = sand.u32 %s53, 1
        %s920 = scalar_lea.sflag [#allocation6], %s919
        %s921 = sand.u32 %s87, 1
        %s922 = smul.addr %s921, 128
        %s923 = scalar_lea.vmem [#allocation5], %s922
        %p924 = pneg %p100
        %p925 = pneg %p97
        %s926 = sand.u32 %s53, 1
        %s927 = scalar_lea.sflag [#allocation6], %s926
        %s928 = sand.u32 %s113, 1
        %s929 = smul.addr %s928, 128
        %s930 = scalar_lea.vmem [#allocation7], %s929
        %p931 = pneg %p126
        %p932 = pneg %p123
        %p933 = pneg %p147
        %p934 = pneg %p144
        %p935 = pneg %p168
        %p936 = pneg %p165
        %p937 = pneg %p189
        %p938 = pneg %p186
        %p939 = pneg %p210
        %p940 = pneg %p207
        %p941 = pneg %p231
        %p942 = pneg %p228
        %p943 = pneg %p252
        %p944 = pneg %p249
        %p945 = pneg %p273
        %p946 = pneg %p270
        %p947 = pneg %p294
        %p948 = pneg %p291
        %p949 = pneg %p315
        %p950 = pneg %p312
        %p951 = pneg %p336
        %p952 = pneg %p333
        %p953 = pneg %p357
        %p954 = pneg %p354
        %p955 = pneg %p378
        %p956 = pneg %p375
        %p957 = pneg %p399
        %p958 = pneg %p396
        %p959 = pneg %p420
        %p960 = pneg %p417
        %p961 = pneg %p441
        %p962 = pneg %p438
        %p963 = pneg %p462
        %p964 = pneg %p459
        %p965 = pneg %p488
        %p966 = pneg %p485
        %s967 = sand.u32 %s475, 1
        %s968 = scalar_lea.sflag [#allocation4], %s967
        %s969 = sand.u32 %s475, 1
        %s970 = smul.addr %s969, 128
        %s971 = scalar_lea.vmem [#allocation32], %s970
        %p972 = pneg %p514
        %p973 = pneg %p511
        %s974 = sand.u32 %s53, 1
        %s975 = scalar_lea.sflag [#allocation34], %s974
        %s976 = sand.u32 %s501, 1
        %s977 = smul.addr %s976, 128
        %s978 = scalar_lea.vmem [#allocation33], %s977
        %p979 = pneg %p540
        %p980 = pneg %p537
        %s981 = sand.u32 %s53, 1
        %s982 = scalar_lea.sflag [#allocation34], %s981
        %s983 = sand.u32 %s527, 1
        %s984 = smul.addr %s983, 128
        %s985 = scalar_lea.vmem [#allocation35], %s984
        %s986 = smul.u32 16, %s53
        %s987 = smul.u32 16, %s53
        %s988 = smul.u32 16, %s53
        %s989 = smul.u32 16, %s53
        %s990 = smul.u32 16, %s53
        %s991 = smul.u32 16, %s53
        %v993 = vld [vmem:[%s825] sm:$0xff]
        %v994 = vld [vmem:[%s825 + $0x8] sm:$0xff]
        %v995 = vld [vmem:[%s825 + $0x10] sm:$0xff]
        %v996 = vld [vmem:[%s825 + $0x18] sm:$0xff]
        %v997 = vld [vmem:[%s825 + $0x20] sm:$0xff]
        %v998 = vld [vmem:[%s825 + $0x28] sm:$0xff]
        %v999 = vld [vmem:[%s825 + $0x30] sm:$0xff]
        %v1000 = vld [vmem:[%s825 + $0x38] sm:$0xff]
        %v1001 = vld [vmem:[%s825 + $0x40] sm:$0xff]
        %v1002 = vld [vmem:[%s825 + $0x48] sm:$0xff]
        %v1003 = vld [vmem:[%s825 + $0x50] sm:$0xff]
        %v1004 = vld [vmem:[%s825 + $0x58] sm:$0xff]
        %v1005 = vld [vmem:[%s825 + $0x60] sm:$0xff]
        %v1006 = vld [vmem:[%s825 + $0x68] sm:$0xff]
        %v1007 = vld [vmem:[%s825 + $0x70] sm:$0xff]
        %v1008 = vld [vmem:[%s825 + $0x78] sm:$0xff]
        %v1009 = vld [vmem:[%s834] sm:$0xff]
        %v1010 = vld [vmem:[%s834 + $0x8] sm:$0xff]
        %v1011 = vld [vmem:[%s834 + $0x10] sm:$0xff]
        %v1012 = vld [vmem:[%s834 + $0x18] sm:$0xff]
        %v1013 = vld [vmem:[%s834 + $0x20] sm:$0xff]
        %v1014 = vld [vmem:[%s834 + $0x28] sm:$0xff]
        %v1015 = vld [vmem:[%s834 + $0x30] sm:$0xff]
        %v1016 = vld [vmem:[%s834 + $0x38] sm:$0xff]
        %v1017 = vld [vmem:[%s834 + $0x40] sm:$0xff]
        %v1018 = vld [vmem:[%s834 + $0x48] sm:$0xff]
        %v1019 = vld [vmem:[%s834 + $0x50] sm:$0xff]
        %v1020 = vld [vmem:[%s834 + $0x58] sm:$0xff]
        %v1021 = vld [vmem:[%s834 + $0x60] sm:$0xff]
        %v1022 = vld [vmem:[%s834 + $0x68] sm:$0xff]
        %v1023 = vld [vmem:[%s834 + $0x70] sm:$0xff]
        %v1024 = vld [vmem:[%s834 + $0x78] sm:$0xff]
        %v1025 = vpack.c.bf16 %v994, %v993
        %v1026 = vpack.c.bf16 %v996, %v995
        %v1027 = vpack.c.bf16 %v998, %v997
        %v1028 = vpack.c.bf16 %v1000, %v999
        %v1029 = vpack.c.bf16 %v1002, %v1001
        %v1030 = vpack.c.bf16 %v1004, %v1003
        %v1031 = vpack.c.bf16 %v1006, %v1005
        %v1032 = vpack.c.bf16 %v1008, %v1007
        %v1033 = vld [vmem:[#allocation8] sm:$0xff]
        %v1034 = vld [vmem:[#allocation8 + $0x8] sm:$0xff]
        %v1035 = vld [vmem:[#allocation8 + $0x10] sm:$0xff]
        %v1036 = vld [vmem:[#allocation8 + $0x18] sm:$0xff]
        %v1037 = vld [vmem:[#allocation8 + $0x20] sm:$0xff]
        %v1038 = vld [vmem:[#allocation8 + $0x28] sm:$0xff]
        %v1039 = vld [vmem:[#allocation8 + $0x30] sm:$0xff]
        %v1040 = vld [vmem:[#allocation8 + $0x38] sm:$0xff]
        %v1041 = vld [vmem:[#allocation8 + $0x40] sm:$0xff]
        %v1042 = vld [vmem:[#allocation8 + $0x48] sm:$0xff]
        %v1043 = vld [vmem:[#allocation8 + $0x50] sm:$0xff]
        %v1044 = vld [vmem:[#allocation8 + $0x58] sm:$0xff]
        %v1045 = vld [vmem:[#allocation8 + $0x60] sm:$0xff]
        %v1046 = vld [vmem:[#allocation8 + $0x68] sm:$0xff]
        %v1047 = vld [vmem:[#allocation8 + $0x70] sm:$0xff]
        %v1048 = vld [vmem:[#allocation8 + $0x78] sm:$0xff]
        %v1049 = vld [vmem:[#allocation8 + $0x80] sm:$0xff]
        %v1050 = vld [vmem:[#allocation8 + $0x88] sm:$0xff]
        %v1051 = vld [vmem:[#allocation8 + $0x90] sm:$0xff]
        %v1052 = vld [vmem:[#allocation8 + $0x98] sm:$0xff]
        %v1053 = vld [vmem:[#allocation8 + $0xa0] sm:$0xff]
        %v1054 = vld [vmem:[#allocation8 + $0xa8] sm:$0xff]
        %v1055 = vld [vmem:[#allocation8 + $0xb0] sm:$0xff]
        %v1056 = vld [vmem:[#allocation8 + $0xb8] sm:$0xff]
        %v1057 = vld [vmem:[#allocation8 + $0xc0] sm:$0xff]
        %v1058 = vld [vmem:[#allocation8 + $0xc8] sm:$0xff]
        %v1059 = vld [vmem:[#allocation8 + $0xd0] sm:$0xff]
        %v1060 = vld [vmem:[#allocation8 + $0xd8] sm:$0xff]
        %v1061 = vld [vmem:[#allocation8 + $0xe0] sm:$0xff]
        %v1062 = vld [vmem:[#allocation8 + $0xe8] sm:$0xff]
        %v1063 = vld [vmem:[#allocation8 + $0xf0] sm:$0xff]
        %v1064 = vld [vmem:[#allocation8 + $0xf8] sm:$0xff]
        %v1065 = vld [vmem:[#allocation8 + $0x100] sm:$0xff]
        %v1066 = vld [vmem:[#allocation8 + $0x108] sm:$0xff]
        %v1067 = vld [vmem:[#allocation8 + $0x110] sm:$0xff]
        %v1068 = vld [vmem:[#allocation8 + $0x118] sm:$0xff]
        %v1069 = vld [vmem:[#allocation8 + $0x120] sm:$0xff]
        %v1070 = vld [vmem:[#allocation8 + $0x128] sm:$0xff]
        %v1071 = vld [vmem:[#allocation8 + $0x130] sm:$0xff]
        %v1072 = vld [vmem:[#allocation8 + $0x138] sm:$0xff]
        %v1073 = vld [vmem:[#allocation8 + $0x140] sm:$0xff]
        %v1074 = vld [vmem:[#allocation8 + $0x148] sm:$0xff]
        %v1075 = vld [vmem:[#allocation8 + $0x150] sm:$0xff]
        %v1076 = vld [vmem:[#allocation8 + $0x158] sm:$0xff]
        %v1077 = vld [vmem:[#allocation8 + $0x160] sm:$0xff]
        %v1078 = vld [vmem:[#allocation8 + $0x168] sm:$0xff]
        %v1079 = vld [vmem:[#allocation8 + $0x170] sm:$0xff]
        %v1080 = vld [vmem:[#allocation8 + $0x178] sm:$0xff]
        %v1081 = vld [vmem:[#allocation10] sm:$0x3f]
        %v1083 = vlaneseq
        %v1084 = vshrl.u32 %v1083, 7
        %v1085 = vsub.s32 0, %v1084
        %v1086 = vrot.slane %v1081, %v1085
        %v1087 = vlaneseq
        %v1088 = vshrl.u32 %v1087, 7
        %v1089 = vsub.s32 1, %v1088
        %v1090 = vrot.slane %v1081, %v1089
        %v1091 = vlaneseq
        %v1092 = vshrl.u32 %v1091, 7
        %v1093 = vsub.s32 2, %v1092
        %v1094 = vrot.slane %v1081, %v1093
        %v1095 = vlaneseq
        %v1096 = vshrl.u32 %v1095, 7
        %v1097 = vsub.s32 3, %v1096
        %v1098 = vrot.slane %v1081, %v1097
        %v1099 = vlaneseq
        %v1100 = vshrl.u32 %v1099, 7
        %v1101 = vsub.s32 4, %v1100
        %v1102 = vrot.slane %v1081, %v1101
        %v1103 = vlaneseq
        %v1104 = vshrl.u32 %v1103, 7
        %v1105 = vsub.s32 5, %v1104
        %v1106 = vrot.slane %v1081, %v1105
        %v1161 = vunpack.c.l.b16 %v1033
        %v1162 = vunpack.c.h.b16 %v1033
        %v1163 = vunpack.c.l.b16 %v1034
        %v1164 = vunpack.c.h.b16 %v1034
        %v1165 = vunpack.c.l.b16 %v1035
        %v1166 = vunpack.c.h.b16 %v1035
        %v1167 = vunpack.c.l.b16 %v1036
        %v1168 = vunpack.c.h.b16 %v1036
        %v1169 = vunpack.c.l.b16 %v1037
        %v1170 = vunpack.c.h.b16 %v1037
        %v1171 = vunpack.c.l.b16 %v1038
        %v1172 = vunpack.c.h.b16 %v1038
        %v1173 = vunpack.c.l.b16 %v1039
        %v1174 = vunpack.c.h.b16 %v1039
        %v1175 = vunpack.c.l.b16 %v1040
        %v1176 = vunpack.c.h.b16 %v1040
        %v1177 = vunpack.c.l.b16 %v1041
        %v1178 = vunpack.c.h.b16 %v1041
        %v1179 = vunpack.c.l.b16 %v1042
        %v1180 = vunpack.c.h.b16 %v1042
        %v1181 = vunpack.c.l.b16 %v1043
        %v1182 = vunpack.c.h.b16 %v1043
        %v1183 = vunpack.c.l.b16 %v1044
        %v1184 = vunpack.c.h.b16 %v1044
        %v1185 = vunpack.c.l.b16 %v1045
        %v1186 = vunpack.c.h.b16 %v1045
        %v1187 = vunpack.c.l.b16 %v1046
        %v1188 = vunpack.c.h.b16 %v1046
        %v1189 = vunpack.c.l.b16 %v1047
        %v1190 = vunpack.c.h.b16 %v1047
        %v1191 = vunpack.c.l.b16 %v1048
        %v1192 = vunpack.c.h.b16 %v1048
        %v1193 = vunpack.c.l.b16 %v1049
        %v1194 = vunpack.c.h.b16 %v1049
        %v1195 = vunpack.c.l.b16 %v1050
        %v1196 = vunpack.c.h.b16 %v1050
        %v1197 = vunpack.c.l.b16 %v1051
        %v1198 = vunpack.c.h.b16 %v1051
        %v1199 = vunpack.c.l.b16 %v1052
        %v1200 = vunpack.c.h.b16 %v1052
        %v1201 = vunpack.c.l.b16 %v1053
        %v1202 = vunpack.c.h.b16 %v1053
        %v1203 = vunpack.c.l.b16 %v1054
        %v1204 = vunpack.c.h.b16 %v1054
        %v1205 = vunpack.c.l.b16 %v1055
        %v1206 = vunpack.c.h.b16 %v1055
        %v1207 = vunpack.c.l.b16 %v1056
        %v1208 = vunpack.c.h.b16 %v1056
        %v1209 = vunpack.c.l.b16 %v1057
        %v1210 = vunpack.c.h.b16 %v1057
        %v1211 = vunpack.c.l.b16 %v1058
        %v1212 = vunpack.c.h.b16 %v1058
        %v1213 = vunpack.c.l.b16 %v1059
        %v1214 = vunpack.c.h.b16 %v1059
        %v1215 = vunpack.c.l.b16 %v1060
        %v1216 = vunpack.c.h.b16 %v1060
        %v1217 = vunpack.c.l.b16 %v1061
        %v1218 = vunpack.c.h.b16 %v1061
        %v1219 = vunpack.c.l.b16 %v1062
        %v1220 = vunpack.c.h.b16 %v1062
        %v1221 = vunpack.c.l.b16 %v1063
        %v1222 = vunpack.c.h.b16 %v1063
        %v1223 = vunpack.c.l.b16 %v1064
        %v1224 = vunpack.c.h.b16 %v1064
        %v1225 = vunpack.c.l.b16 %v1065
        %v1226 = vunpack.c.h.b16 %v1065
        %v1227 = vunpack.c.l.b16 %v1066
        %v1228 = vunpack.c.h.b16 %v1066
        %v1229 = vunpack.c.l.b16 %v1067
        %v1230 = vunpack.c.h.b16 %v1067
        %v1231 = vunpack.c.l.b16 %v1068
        %v1232 = vunpack.c.h.b16 %v1068
        %v1233 = vunpack.c.l.b16 %v1069
        %v1234 = vunpack.c.h.b16 %v1069
        %v1235 = vunpack.c.l.b16 %v1070
        %v1236 = vunpack.c.h.b16 %v1070
        %v1237 = vunpack.c.l.b16 %v1071
        %v1238 = vunpack.c.h.b16 %v1071
        %v1239 = vunpack.c.l.b16 %v1072
        %v1240 = vunpack.c.h.b16 %v1072
        %v1241 = vunpack.c.l.b16 %v1073
        %v1242 = vunpack.c.h.b16 %v1073
        %v1243 = vunpack.c.l.b16 %v1074
        %v1244 = vunpack.c.h.b16 %v1074
        %v1245 = vunpack.c.l.b16 %v1075
        %v1246 = vunpack.c.h.b16 %v1075
        %v1247 = vunpack.c.l.b16 %v1076
        %v1248 = vunpack.c.h.b16 %v1076
        %v1249 = vunpack.c.l.b16 %v1077
        %v1250 = vunpack.c.h.b16 %v1077
        %v1251 = vunpack.c.l.b16 %v1078
        %v1252 = vunpack.c.h.b16 %v1078
        %v1253 = vunpack.c.l.b16 %v1079
        %v1254 = vunpack.c.h.b16 %v1079
        %v1255 = vunpack.c.l.b16 %v1080
        %v1256 = vunpack.c.h.b16 %v1080
        %v1257 = vpack.c.b16 %v1167, %v1161
        %v1258 = vpack.c.b16 %v1168, %v1162
        %v1259 = vpack.c.b16 %v1169, %v1163
        %v1260 = vpack.c.b16 %v1170, %v1164
        %v1261 = vpack.c.b16 %v1171, %v1165
        %v1262 = vpack.c.b16 %v1172, %v1166
        %v1263 = vpack.c.b16 %v1179, %v1173
        %v1264 = vpack.c.b16 %v1180, %v1174
        %v1265 = vpack.c.b16 %v1181, %v1175
        %v1266 = vpack.c.b16 %v1182, %v1176
        %v1267 = vpack.c.b16 %v1183, %v1177
        %v1268 = vpack.c.b16 %v1184, %v1178
        %v1269 = vpack.c.b16 %v1191, %v1185
        %v1270 = vpack.c.b16 %v1192, %v1186
        %v1271 = vpack.c.b16 %v1193, %v1187
        %v1272 = vpack.c.b16 %v1194, %v1188
        %v1273 = vpack.c.b16 %v1195, %v1189
        %v1274 = vpack.c.b16 %v1196, %v1190
        %v1275 = vpack.c.b16 %v1203, %v1197
        %v1276 = vpack.c.b16 %v1204, %v1198
        %v1277 = vpack.c.b16 %v1205, %v1199
        %v1278 = vpack.c.b16 %v1206, %v1200
        %v1279 = vpack.c.b16 %v1207, %v1201
        %v1280 = vpack.c.b16 %v1208, %v1202
        %v1281 = vpack.c.b16 %v1215, %v1209
        %v1282 = vpack.c.b16 %v1216, %v1210
        %v1283 = vpack.c.b16 %v1217, %v1211
        %v1284 = vpack.c.b16 %v1218, %v1212
        %v1285 = vpack.c.b16 %v1219, %v1213
        %v1286 = vpack.c.b16 %v1220, %v1214
        %v1287 = vpack.c.b16 %v1227, %v1221
        %v1288 = vpack.c.b16 %v1228, %v1222
        %v1289 = vpack.c.b16 %v1229, %v1223
        %v1290 = vpack.c.b16 %v1230, %v1224
        %v1291 = vpack.c.b16 %v1231, %v1225
        %v1292 = vpack.c.b16 %v1232, %v1226
        %v1293 = vpack.c.b16 %v1239, %v1233
        %v1294 = vpack.c.b16 %v1240, %v1234
        %v1295 = vpack.c.b16 %v1241, %v1235
        %v1296 = vpack.c.b16 %v1242, %v1236
        %v1297 = vpack.c.b16 %v1243, %v1237
        %v1298 = vpack.c.b16 %v1244, %v1238
        %v1299 = vpack.c.b16 %v1251, %v1245
        %v1300 = vpack.c.b16 %v1252, %v1246
        %v1301 = vpack.c.b16 %v1253, %v1247
        %v1302 = vpack.c.b16 %v1254, %v1248
        %v1303 = vpack.c.b16 %v1255, %v1249
        %v1304 = vpack.c.b16 %v1256, %v1250
        %1353 = vmatprep.subr.bf16.mxu0 %v1258
        %1354 = vmatpush1.bf16.msra.mxu0 %v1257
        %1355 = vmatprep.subr.bf16.mxu0 %v1264
        %1356 = vmatpush1.bf16.msra.mxu0 %v1263
        %1357 = vmatprep.subr.bf16.mxu0 %v1270
        %1358 = vmatpush1.bf16.msra.mxu0 %v1269
        %1359 = vmatprep.subr.bf16.mxu0 %v1276
        %1360 = vmatpush1.bf16.msra.mxu0 %v1275
        %1361 = vmatprep.subr.bf16.mxu0 %v1282
        %1362 = vmatpush1.bf16.msra.mxu0 %v1281
        %1363 = vmatprep.subr.bf16.mxu0 %v1288
        %1364 = vmatpush1.bf16.msra.mxu0 %v1287
        %1365 = vmatprep.subr.bf16.mxu0 %v1294
        %1366 = vmatpush1.bf16.msra.mxu0 %v1293
        %1367 = vmatprep.subr.bf16.mxu0 %v1300
        %1368 = vmatpush1.bf16.msra.mxu0 %v1299
        %1369 = vmatprep.subr.bf16.mxu0 0
        %1370 = vmatpush1.bf16.msra.mxu0 0
        %1371 = vmatprep.subr.bf16.mxu0 0
        %1372 = vmatpush1.bf16.msra.mxu0 0
        %1373 = vmatprep.subr.bf16.mxu0 0
        %1374 = vmatpush1.bf16.msra.mxu0 0
        %1375 = vmatprep.subr.bf16.mxu0 0
        %1376 = vmatpush1.bf16.msra.mxu0 0
        %1377 = vmatprep.subr.bf16.mxu0 0
        %1378 = vmatpush1.bf16.msra.mxu0 0
        %1379 = vmatprep.subr.bf16.mxu0 0
        %1380 = vmatpush1.bf16.msra.mxu0 0
        %1381 = vmatprep.subr.bf16.mxu0 0
        %1382 = vmatpush1.bf16.msra.mxu0 0
        %1383 = vmatprep.subr.bf16.mxu0 0
        %1384 = vmatpush1.bf16.msra.mxu0 0
        %1385 = vmatprep.mubr.bf16.mxu0 0
        %1386 = vmatmul.mubr.bf16.gmra.mrb[0].mxu0 %v1025
        %v1387 = vpop.f32.mrb[0].mxu0
        %v1388 = vadd.f32 %v1086, %v1387
        %v1389 = vpop.f32.mrb[0].mxu0
        %v1390 = vadd.f32 %v1090, %v1389
        %v1391 = vpop.f32.mrb[0].mxu0
        %v1392 = vadd.f32 %v1086, %v1391
        %v1393 = vpop.f32.mrb[0].mxu0
        %v1394 = vadd.f32 %v1090, %v1393
        %1395 = vmatprep.mubr.bf16.mxu0 0
        %1396 = vmatmul.mubr.bf16.gmra.mrb[0].mxu0 %v1026
        %v1397 = vpop.f32.mrb[0].mxu0
        %v1398 = vadd.f32 %v1086, %v1397
        %v1399 = vpop.f32.mrb[0].mxu0
        %v1400 = vadd.f32 %v1090, %v1399
        %v1401 = vpop.f32.mrb[0].mxu0
        %v1402 = vadd.f32 %v1086, %v1401
        %v1403 = vpop.f32.mrb[0].mxu0
        %v1404 = vadd.f32 %v1090, %v1403
        %1405 = vmatprep.mubr.bf16.mxu0 0
        %1406 = vmatmul.mubr.bf16.gmra.mrb[0].mxu0 %v1027
        %v1407 = vpop.f32.mrb[0].mxu0
        %v1408 = vadd.f32 %v1086, %v1407
        %v1409 = vpop.f32.mrb[0].mxu0
        %v1410 = vadd.f32 %v1090, %v1409
        %v1411 = vpop.f32.mrb[0].mxu0
        %v1412 = vadd.f32 %v1086, %v1411
        %v1413 = vpop.f32.mrb[0].mxu0
        %v1414 = vadd.f32 %v1090, %v1413
        %1415 = vmatprep.mubr.bf16.mxu0 0
        %1416 = vmatmul.mubr.bf16.gmra.mrb[0].mxu0 %v1028
        %v1417 = vpop.f32.mrb[0].mxu0
        %v1418 = vadd.f32 %v1086, %v1417
        %v1419 = vpop.f32.mrb[0].mxu0
        %v1420 = vadd.f32 %v1090, %v1419
        %v1421 = vpop.f32.mrb[0].mxu0
        %v1422 = vadd.f32 %v1086, %v1421
        %v1423 = vpop.f32.mrb[0].mxu0
        %v1424 = vadd.f32 %v1090, %v1423
        %1425 = vmatprep.mubr.bf16.mxu0 0
        %1426 = vmatmul.mubr.bf16.gmra.mrb[0].mxu0 %v1029
        %v1427 = vpop.f32.mrb[0].mxu0
        %v1428 = vadd.f32 %v1086, %v1427
        %v1429 = vpop.f32.mrb[0].mxu0
        %v1430 = vadd.f32 %v1090, %v1429
        %v1431 = vpop.f32.mrb[0].mxu0
        %v1432 = vadd.f32 %v1086, %v1431
        %v1433 = vpop.f32.mrb[0].mxu0
        %v1434 = vadd.f32 %v1090, %v1433
        %1435 = vmatprep.mubr.bf16.mxu0 0
        %1436 = vmatmul.mubr.bf16.gmra.mrb[0].mxu0 %v1030
        %v1437 = vpop.f32.mrb[0].mxu0
        %v1438 = vadd.f32 %v1086, %v1437
        %v1439 = vpop.f32.mrb[0].mxu0
        %v1440 = vadd.f32 %v1090, %v1439
        %v1441 = vpop.f32.mrb[0].mxu0
        %v1442 = vadd.f32 %v1086, %v1441
        %v1443 = vpop.f32.mrb[0].mxu0
        %v1444 = vadd.f32 %v1090, %v1443
        %1445 = vmatprep.mubr.bf16.mxu0 0
        %1446 = vmatmul.mubr.bf16.gmra.mrb[0].mxu0 %v1031
        %v1447 = vpop.f32.mrb[0].mxu0
        %v1448 = vadd.f32 %v1086, %v1447
        %v1449 = vpop.f32.mrb[0].mxu0
        %v1450 = vadd.f32 %v1090, %v1449
        %v1451 = vpop.f32.mrb[0].mxu0
        %v1452 = vadd.f32 %v1086, %v1451
        %v1453 = vpop.f32.mrb[0].mxu0
        %v1454 = vadd.f32 %v1090, %v1453
        %1455 = vmatprep.mubr.bf16.mxu0 0
        %1456 = vmatmul.mubr.bf16.gmra.mrb[0].mxu0 %v1032
        %v1457 = vpop.f32.mrb[0].mxu0
        %v1458 = vadd.f32 %v1086, %v1457
        %v1459 = vpop.f32.mrb[0].mxu0
        %v1460 = vadd.f32 %v1090, %v1459
        %v1461 = vpop.f32.mrb[0].mxu0
        %v1462 = vadd.f32 %v1086, %v1461
        %v1463 = vpop.f32.mrb[0].mxu0
        %v1464 = vadd.f32 %v1090, %v1463
        %1465 = vdwg.mxu0
        %1466 = vmatprep.subr.bf16.mxu0 %v1260
        %1467 = vmatpush1.bf16.msra.mxu0 %v1259
        %1468 = vmatprep.subr.bf16.mxu0 %v1266
        %1469 = vmatpush1.bf16.msra.mxu0 %v1265
        %1470 = vmatprep.subr.bf16.mxu0 %v1272
        %1471 = vmatpush1.bf16.msra.mxu0 %v1271
        %1472 = vmatprep.subr.bf16.mxu0 %v1278
        %1473 = vmatpush1.bf16.msra.mxu0 %v1277
        %1474 = vmatprep.subr.bf16.mxu0 %v1284
        %1475 = vmatpush1.bf16.msra.mxu0 %v1283
        %1476 = vmatprep.subr.bf16.mxu0 %v1290
        %1477 = vmatpush1.bf16.msra.mxu0 %v1289
        %1478 = vmatprep.subr.bf16.mxu0 %v1296
        %1479 = vmatpush1.bf16.msra.mxu0 %v1295
        %1480 = vmatprep.subr.bf16.mxu0 %v1302
        %1481 = vmatpush1.bf16.msra.mxu0 %v1301
        %1482 = vmatprep.subr.bf16.mxu0 0
        %1483 = vmatpush1.bf16.msra.mxu0 0
        %1484 = vmatprep.subr.bf16.mxu0 0
        %1485 = vmatpush1.bf16.msra.mxu0 0
        %1486 = vmatprep.subr.bf16.mxu0 0
        %1487 = vmatpush1.bf16.msra.mxu0 0
        %1488 = vmatprep.subr.bf16.mxu0 0
        %1489 = vmatpush1.bf16.msra.mxu0 0
        %1490 = vmatprep.subr.bf16.mxu0 0
        %1491 = vmatpush1.bf16.msra.mxu0 0
        %1492 = vmatprep.subr.bf16.mxu0 0
        %1493 = vmatpush1.bf16.msra.mxu0 0
        %1494 = vmatprep.subr.bf16.mxu0 0
        %1495 = vmatpush1.bf16.msra.mxu0 0
        %1496 = vmatprep.subr.bf16.mxu0 0
        %1497 = vmatpush1.bf16.msra.mxu0 0
        %1498 = vmatprep.mubr.bf16.mxu0 0
        %1499 = vmatmul.mubr.bf16.gmra.mrb[0].mxu0 %v1025
        %v1500 = vpop.f32.mrb[0].mxu0
        %v1501 = vadd.f32 %v1094, %v1500
        %v1502 = vpop.f32.mrb[0].mxu0
        %v1503 = vadd.f32 %v1098, %v1502
        %v1504 = vpop.f32.mrb[0].mxu0
        %v1505 = vadd.f32 %v1094, %v1504
        %v1506 = vpop.f32.mrb[0].mxu0
        %v1507 = vadd.f32 %v1098, %v1506
        %1508 = vmatprep.mubr.bf16.mxu0 0
        %1509 = vmatmul.mubr.bf16.gmra.mrb[0].mxu0 %v1026
        %v1510 = vpop.f32.mrb[0].mxu0
        %v1511 = vadd.f32 %v1094, %v1510
        %v1512 = vpop.f32.mrb[0].mxu0
        %v1513 = vadd.f32 %v1098, %v1512
        %v1514 = vpop.f32.mrb[0].mxu0
        %v1515 = vadd.f32 %v1094, %v1514
        %v1516 = vpop.f32.mrb[0].mxu0
        %v1517 = vadd.f32 %v1098, %v1516
        %1518 = vmatprep.mubr.bf16.mxu0 0
        %1519 = vmatmul.mubr.bf16.gmra.mrb[0].mxu0 %v1027
        %v1520 = vpop.f32.mrb[0].mxu0
        %v1521 = vadd.f32 %v1094, %v1520
        %v1522 = vpop.f32.mrb[0].mxu0
        %v1523 = vadd.f32 %v1098, %v1522
        %v1524 = vpop.f32.mrb[0].mxu0
        %v1525 = vadd.f32 %v1094, %v1524
        %v1526 = vpop.f32.mrb[0].mxu0
        %v1527 = vadd.f32 %v1098, %v1526
        %1528 = vmatprep.mubr.bf16.mxu0 0
        %1529 = vmatmul.mubr.bf16.gmra.mrb[0].mxu0 %v1028
        %v1530 = vpop.f32.mrb[0].mxu0
        %v1531 = vadd.f32 %v1094, %v1530
        %v1532 = vpop.f32.mrb[0].mxu0
        %v1533 = vadd.f32 %v1098, %v1532
        %v1534 = vpop.f32.mrb[0].mxu0
        %v1535 = vadd.f32 %v1094, %v1534
        %v1536 = vpop.f32.mrb[0].mxu0
        %v1537 = vadd.f32 %v1098, %v1536
        %1538 = vmatprep.mubr.bf16.mxu0 0
        %1539 = vmatmul.mubr.bf16.gmra.mrb[0].mxu0 %v1029
        %v1540 = vpop.f32.mrb[0].mxu0
        %v1541 = vadd.f32 %v1094, %v1540
        %v1542 = vpop.f32.mrb[0].mxu0
        %v1543 = vadd.f32 %v1098, %v1542
        %v1544 = vpop.f32.mrb[0].mxu0
        %v1545 = vadd.f32 %v1094, %v1544
        %v1546 = vpop.f32.mrb[0].mxu0
        %v1547 = vadd.f32 %v1098, %v1546
        %1548 = vmatprep.mubr.bf16.mxu0 0
        %1549 = vmatmul.mubr.bf16.gmra.mrb[0].mxu0 %v1030
        %v1550 = vpop.f32.mrb[0].mxu0
        %v1551 = vadd.f32 %v1094, %v1550
        %v1552 = vpop.f32.mrb[0].mxu0
        %v1553 = vadd.f32 %v1098, %v1552
        %v1554 = vpop.f32.mrb[0].mxu0
        %v1555 = vadd.f32 %v1094, %v1554
        %v1556 = vpop.f32.mrb[0].mxu0
        %v1557 = vadd.f32 %v1098, %v1556
        %1558 = vmatprep.mubr.bf16.mxu0 0
        %1559 = vmatmul.mubr.bf16.gmra.mrb[0].mxu0 %v1031
        %v1560 = vpop.f32.mrb[0].mxu0
        %v1561 = vadd.f32 %v1094, %v1560
        %v1562 = vpop.f32.mrb[0].mxu0
        %v1563 = vadd.f32 %v1098, %v1562
        %v1564 = vpop.f32.mrb[0].mxu0
        %v1565 = vadd.f32 %v1094, %v1564
        %v1566 = vpop.f32.mrb[0].mxu0
        %v1567 = vadd.f32 %v1098, %v1566
        %1568 = vmatprep.mubr.bf16.mxu0 0
        %1569 = vmatmul.mubr.bf16.gmra.mrb[0].mxu0 %v1032
        %v1570 = vpop.f32.mrb[0].mxu0
        %v1571 = vadd.f32 %v1094, %v1570
        %v1572 = vpop.f32.mrb[0].mxu0
        %v1573 = vadd.f32 %v1098, %v1572
        %v1574 = vpop.f32.mrb[0].mxu0
        %v1575 = vadd.f32 %v1094, %v1574
        %v1576 = vpop.f32.mrb[0].mxu0
        %v1577 = vadd.f32 %v1098, %v1576
        %1578 = vdwg.mxu0
        %1579 = vmatprep.subr.bf16.mxu0 %v1262
        %1580 = vmatpush1.bf16.msra.mxu0 %v1261
        %1581 = vmatprep.subr.bf16.mxu0 %v1268
        %1582 = vmatpush1.bf16.msra.mxu0 %v1267
        %1583 = vmatprep.subr.bf16.mxu0 %v1274
        %1584 = vmatpush1.bf16.msra.mxu0 %v1273
        %1585 = vmatprep.subr.bf16.mxu0 %v1280
        %1586 = vmatpush1.bf16.msra.mxu0 %v1279
        %1587 = vmatprep.subr.bf16.mxu0 %v1286
        %1588 = vmatpush1.bf16.msra.mxu0 %v1285
        %1589 = vmatprep.subr.bf16.mxu0 %v1292
        %1590 = vmatpush1.bf16.msra.mxu0 %v1291
        %1591 = vmatprep.subr.bf16.mxu0 %v1298
        %1592 = vmatpush1.bf16.msra.mxu0 %v1297
        %1593 = vmatprep.subr.bf16.mxu0 %v1304
        %1594 = vmatpush1.bf16.msra.mxu0 %v1303
        %1595 = vmatprep.subr.bf16.mxu0 0
        %1596 = vmatpush1.bf16.msra.mxu0 0
        %1597 = vmatprep.subr.bf16.mxu0 0
        %1598 = vmatpush1.bf16.msra.mxu0 0
        %1599 = vmatprep.subr.bf16.mxu0 0
        %1600 = vmatpush1.bf16.msra.mxu0 0
        %1601 = vmatprep.subr.bf16.mxu0 0
        %1602 = vmatpush1.bf16.msra.mxu0 0
        %1603 = vmatprep.subr.bf16.mxu0 0
        %1604 = vmatpush1.bf16.msra.mxu0 0
        %1605 = vmatprep.subr.bf16.mxu0 0
        %1606 = vmatpush1.bf16.msra.mxu0 0
        %1607 = vmatprep.subr.bf16.mxu0 0
        %1608 = vmatpush1.bf16.msra.mxu0 0
        %1609 = vmatprep.subr.bf16.mxu0 0
        %1610 = vmatpush1.bf16.msra.mxu0 0
        %1611 = vmatprep.mubr.bf16.mxu0 0
        %1612 = vmatmul.mubr.bf16.gmra.mrb[0].mxu0 %v1025
        %v1613 = vpop.f32.mrb[0].mxu0
        %v1614 = vadd.f32 %v1102, %v1613
        %v1615 = vpop.f32.mrb[0].mxu0
        %v1616 = vadd.f32 %v1106, %v1615
        %v1617 = vpop.f32.mrb[0].mxu0
        %v1618 = vadd.f32 %v1102, %v1617
        %v1619 = vpop.f32.mrb[0].mxu0
        %v1620 = vadd.f32 %v1106, %v1619
        %1621 = vmatprep.mubr.bf16.mxu0 0
        %1622 = vmatmul.mubr.bf16.gmra.mrb[0].mxu0 %v1026
        %v1623 = vpop.f32.mrb[0].mxu0
        %v1624 = vadd.f32 %v1102, %v1623
        %v1625 = vpop.f32.mrb[0].mxu0
        %v1626 = vadd.f32 %v1106, %v1625
        %v1627 = vpop.f32.mrb[0].mxu0
        %v1628 = vadd.f32 %v1102, %v1627
        %v1629 = vpop.f32.mrb[0].mxu0
        %v1630 = vadd.f32 %v1106, %v1629
        %1631 = vmatprep.mubr.bf16.mxu0 0
        %1632 = vmatmul.mubr.bf16.gmra.mrb[0].mxu0 %v1027
        %v1633 = vpop.f32.mrb[0].mxu0
        %v1634 = vadd.f32 %v1102, %v1633
        %v1635 = vpop.f32.mrb[0].mxu0
        %v1636 = vadd.f32 %v1106, %v1635
        %v1637 = vpop.f32.mrb[0].mxu0
        %v1638 = vadd.f32 %v1102, %v1637
        %v1639 = vpop.f32.mrb[0].mxu0
        %v1640 = vadd.f32 %v1106, %v1639
        %1641 = vmatprep.mubr.bf16.mxu0 0
        %1642 = vmatmul.mubr.bf16.gmra.mrb[0].mxu0 %v1028
        %v1643 = vpop.f32.mrb[0].mxu0
        %v1644 = vadd.f32 %v1102, %v1643
        %v1645 = vpop.f32.mrb[0].mxu0
        %v1646 = vadd.f32 %v1106, %v1645
        %v1647 = vpop.f32.mrb[0].mxu0
        %v1648 = vadd.f32 %v1102, %v1647
        %v1649 = vpop.f32.mrb[0].mxu0
        %v1650 = vadd.f32 %v1106, %v1649
        %1651 = vmatprep.mubr.bf16.mxu0 0
        %1652 = vmatmul.mubr.bf16.gmra.mrb[0].mxu0 %v1029
        %v1653 = vpop.f32.mrb[0].mxu0
        %v1654 = vadd.f32 %v1102, %v1653
        %v1655 = vpop.f32.mrb[0].mxu0
        %v1656 = vadd.f32 %v1106, %v1655
        %v1657 = vpop.f32.mrb[0].mxu0
        %v1658 = vadd.f32 %v1102, %v1657
        %v1659 = vpop.f32.mrb[0].mxu0
        %v1660 = vadd.f32 %v1106, %v1659
        %1661 = vmatprep.mubr.bf16.mxu0 0
        %1662 = vmatmul.mubr.bf16.gmra.mrb[0].mxu0 %v1030
        %v1663 = vpop.f32.mrb[0].mxu0
        %v1664 = vadd.f32 %v1102, %v1663
        %v1665 = vpop.f32.mrb[0].mxu0
        %v1666 = vadd.f32 %v1106, %v1665
        %v1667 = vpop.f32.mrb[0].mxu0
        %v1668 = vadd.f32 %v1102, %v1667
        %v1669 = vpop.f32.mrb[0].mxu0
        %v1670 = vadd.f32 %v1106, %v1669
        %1671 = vmatprep.mubr.bf16.mxu0 0
        %1672 = vmatmul.mubr.bf16.gmra.mrb[0].mxu0 %v1031
        %v1673 = vpop.f32.mrb[0].mxu0
        %v1674 = vadd.f32 %v1102, %v1673
        %v1675 = vpop.f32.mrb[0].mxu0
        %v1676 = vadd.f32 %v1106, %v1675
        %v1677 = vpop.f32.mrb[0].mxu0
        %v1678 = vadd.f32 %v1102, %v1677
        %v1679 = vpop.f32.mrb[0].mxu0
        %v1680 = vadd.f32 %v1106, %v1679
        %1681 = vmatprep.mubr.bf16.mxu0 0
        %1682 = vmatmul.mubr.bf16.gmra.mrb[0].mxu0 %v1032
        %v1683 = vpop.f32.mrb[0].mxu0
        %v1684 = vadd.f32 %v1102, %v1683
        %v1685 = vpop.f32.mrb[0].mxu0
        %v1686 = vadd.f32 %v1106, %v1685
        %v1687 = vpop.f32.mrb[0].mxu0
        %v1688 = vadd.f32 %v1102, %v1687
        %v1689 = vpop.f32.mrb[0].mxu0
        %v1690 = vadd.f32 %v1106, %v1689
        %1691 = vdwg.mxu0
        %v1692 = vmax.f32 %v1388, 0.0
        %v1693 = vmax.f32 %v1390, 0.0
        %v1694 = vmax.f32 %v1501, 0.0
        %v1695 = vmax.f32 %v1503, 0.0
        %v1696 = vmax.f32 %v1614, 0.0
        %v1697 = vmax.f32 %v1616, 0.0
        %v1698 = vmax.f32 %v1392, 0.0
        %v1699 = vmax.f32 %v1394, 0.0
        %v1700 = vmax.f32 %v1505, 0.0
        %v1701 = vmax.f32 %v1507, 0.0
        %v1702 = vmax.f32 %v1618, 0.0
        %v1703 = vmax.f32 %v1620, 0.0
        %v1704 = vmax.f32 %v1398, 0.0
        %v1705 = vmax.f32 %v1400, 0.0
        %v1706 = vmax.f32 %v1511, 0.0
        %v1707 = vmax.f32 %v1513, 0.0
        %v1708 = vmax.f32 %v1624, 0.0
        %v1709 = vmax.f32 %v1626, 0.0
        %v1710 = vmax.f32 %v1402, 0.0
        %v1711 = vmax.f32 %v1404, 0.0
        %v1712 = vmax.f32 %v1515, 0.0
        %v1713 = vmax.f32 %v1517, 0.0
        %v1714 = vmax.f32 %v1628, 0.0
        %v1715 = vmax.f32 %v1630, 0.0
        %v1716 = vmax.f32 %v1408, 0.0
        %v1717 = vmax.f32 %v1410, 0.0
        %v1718 = vmax.f32 %v1521, 0.0
        %v1719 = vmax.f32 %v1523, 0.0
        %v1720 = vmax.f32 %v1634, 0.0
        %v1721 = vmax.f32 %v1636, 0.0
        %v1722 = vmax.f32 %v1412, 0.0
        %v1723 = vmax.f32 %v1414, 0.0
        %v1724 = vmax.f32 %v1525, 0.0
        %v1725 = vmax.f32 %v1527, 0.0
        %v1726 = vmax.f32 %v1638, 0.0
        %v1727 = vmax.f32 %v1640, 0.0
        %v1728 = vmax.f32 %v1418, 0.0
        %v1729 = vmax.f32 %v1420, 0.0
        %v1730 = vmax.f32 %v1531, 0.0
        %v1731 = vmax.f32 %v1533, 0.0
        %v1732 = vmax.f32 %v1644, 0.0
        %v1733 = vmax.f32 %v1646, 0.0
        %v1734 = vmax.f32 %v1422, 0.0
        %v1735 = vmax.f32 %v1424, 0.0
        %v1736 = vmax.f32 %v1535, 0.0
        %v1737 = vmax.f32 %v1537, 0.0
        %v1738 = vmax.f32 %v1648, 0.0
        %v1739 = vmax.f32 %v1650, 0.0
        %v1740 = vmax.f32 %v1428, 0.0
        %v1741 = vmax.f32 %v1430, 0.0
        %v1742 = vmax.f32 %v1541, 0.0
        %v1743 = vmax.f32 %v1543, 0.0
        %v1744 = vmax.f32 %v1654, 0.0
        %v1745 = vmax.f32 %v1656, 0.0
        %v1746 = vmax.f32 %v1432, 0.0
        %v1747 = vmax.f32 %v1434, 0.0
        %v1748 = vmax.f32 %v1545, 0.0
        %v1749 = vmax.f32 %v1547, 0.0
        %v1750 = vmax.f32 %v1658, 0.0
        %v1751 = vmax.f32 %v1660, 0.0
        %v1752 = vmax.f32 %v1438, 0.0
        %v1753 = vmax.f32 %v1440, 0.0
        %v1754 = vmax.f32 %v1551, 0.0
        %v1755 = vmax.f32 %v1553, 0.0
        %v1756 = vmax.f32 %v1664, 0.0
        %v1757 = vmax.f32 %v1666, 0.0
        %v1758 = vmax.f32 %v1442, 0.0
        %v1759 = vmax.f32 %v1444, 0.0
        %v1760 = vmax.f32 %v1555, 0.0
        %v1761 = vmax.f32 %v1557, 0.0
        %v1762 = vmax.f32 %v1668, 0.0
        %v1763 = vmax.f32 %v1670, 0.0
        %v1764 = vmax.f32 %v1448, 0.0
        %v1765 = vmax.f32 %v1450, 0.0
        %v1766 = vmax.f32 %v1561, 0.0
        %v1767 = vmax.f32 %v1563, 0.0
        %v1768 = vmax.f32 %v1674, 0.0
        %v1769 = vmax.f32 %v1676, 0.0
        %v1770 = vmax.f32 %v1452, 0.0
        %v1771 = vmax.f32 %v1454, 0.0
        %v1772 = vmax.f32 %v1565, 0.0
        %v1773 = vmax.f32 %v1567, 0.0
        %v1774 = vmax.f32 %v1678, 0.0
        %v1775 = vmax.f32 %v1680, 0.0
        %v1776 = vmax.f32 %v1458, 0.0
        %v1777 = vmax.f32 %v1460, 0.0
        %v1778 = vmax.f32 %v1571, 0.0
        %v1779 = vmax.f32 %v1573, 0.0
        %v1780 = vmax.f32 %v1684, 0.0
        %v1781 = vmax.f32 %v1686, 0.0
        %v1782 = vmax.f32 %v1462, 0.0
        %v1783 = vmax.f32 %v1464, 0.0
        %v1784 = vmax.f32 %v1575, 0.0
        %v1785 = vmax.f32 %v1577, 0.0
        %v1786 = vmax.f32 %v1688, 0.0
        %v1787 = vmax.f32 %v1690, 0.0
        %v1788 = vpack.c.bf16 %v1698, %v1692
        %v1789 = vpack.c.bf16 %v1699, %v1693
        %v1790 = vpack.c.bf16 %v1700, %v1694
        %v1791 = vpack.c.bf16 %v1701, %v1695
        %v1792 = vpack.c.bf16 %v1702, %v1696
        %v1793 = vpack.c.bf16 %v1703, %v1697
        %v1794 = vpack.c.bf16 %v1710, %v1704
        %v1795 = vpack.c.bf16 %v1711, %v1705
        %v1796 = vpack.c.bf16 %v1712, %v1706
        %v1797 = vpack.c.bf16 %v1713, %v1707
        %v1798 = vpack.c.bf16 %v1714, %v1708
        %v1799 = vpack.c.bf16 %v1715, %v1709
        %v1800 = vpack.c.bf16 %v1722, %v1716
        %v1801 = vpack.c.bf16 %v1723, %v1717
        %v1802 = vpack.c.bf16 %v1724, %v1718
        %v1803 = vpack.c.bf16 %v1725, %v1719
        %v1804 = vpack.c.bf16 %v1726, %v1720
        %v1805 = vpack.c.bf16 %v1727, %v1721
        %v1806 = vpack.c.bf16 %v1734, %v1728
        %v1807 = vpack.c.bf16 %v1735, %v1729
        %v1808 = vpack.c.bf16 %v1736, %v1730
        %v1809 = vpack.c.bf16 %v1737, %v1731
        %v1810 = vpack.c.bf16 %v1738, %v1732
        %v1811 = vpack.c.bf16 %v1739, %v1733
        %v1812 = vpack.c.bf16 %v1746, %v1740
        %v1813 = vpack.c.bf16 %v1747, %v1741
        %v1814 = vpack.c.bf16 %v1748, %v1742
        %v1815 = vpack.c.bf16 %v1749, %v1743
        %v1816 = vpack.c.bf16 %v1750, %v1744
        %v1817 = vpack.c.bf16 %v1751, %v1745
        %v1818 = vpack.c.bf16 %v1758, %v1752
        %v1819 = vpack.c.bf16 %v1759, %v1753
        %v1820 = vpack.c.bf16 %v1760, %v1754
        %v1821 = vpack.c.bf16 %v1761, %v1755
        %v1822 = vpack.c.bf16 %v1762, %v1756
        %v1823 = vpack.c.bf16 %v1763, %v1757
        %v1824 = vpack.c.bf16 %v1770, %v1764
        %v1825 = vpack.c.bf16 %v1771, %v1765
        %v1826 = vpack.c.bf16 %v1772, %v1766
        %v1827 = vpack.c.bf16 %v1773, %v1767
        %v1828 = vpack.c.bf16 %v1774, %v1768
        %v1829 = vpack.c.bf16 %v1775, %v1769
        %v1830 = vpack.c.bf16 %v1782, %v1776
        %v1831 = vpack.c.bf16 %v1783, %v1777
        %v1832 = vpack.c.bf16 %v1784, %v1778
        %v1833 = vpack.c.bf16 %v1785, %v1779
        %v1834 = vpack.c.bf16 %v1786, %v1780
        %v1835 = vpack.c.bf16 %v1787, %v1781
        %v1836 = vld [vmem:[#allocation11] sm:$0xff]
        %v1837 = vld [vmem:[#allocation11 + $0x8] sm:$0xff]
        %v1838 = vld [vmem:[#allocation11 + $0x10] sm:$0xff]
        %v1839 = vld [vmem:[#allocation11 + $0x18] sm:$0xff]
        %v1840 = vld [vmem:[#allocation11 + $0x20] sm:$0xff]
        %v1841 = vld [vmem:[#allocation11 + $0x28] sm:$0xff]
        %v1842 = vld [vmem:[#allocation11 + $0x30] sm:$0xff]
        %v1843 = vld [vmem:[#allocation11 + $0x38] sm:$0xff]
        %v1844 = vld [vmem:[#allocation11 + $0x40] sm:$0xff]
        %v1845 = vld [vmem:[#allocation11 + $0x48] sm:$0xff]
        %v1846 = vld [vmem:[#allocation11 + $0x50] sm:$0xff]
        %v1847 = vld [vmem:[#allocation11 + $0x58] sm:$0xff]
        %v1848 = vld [vmem:[#allocation11 + $0x60] sm:$0xff]
        %v1849 = vld [vmem:[#allocation11 + $0x68] sm:$0xff]
        %v1850 = vld [vmem:[#allocation11 + $0x70] sm:$0xff]
        %v1851 = vld [vmem:[#allocation11 + $0x78] sm:$0xff]
        %v1852 = vld [vmem:[#allocation11 + $0x80] sm:$0xff]
        %v1853 = vld [vmem:[#allocation11 + $0x88] sm:$0xff]
        %v1854 = vld [vmem:[#allocation11 + $0x90] sm:$0xff]
        %v1855 = vld [vmem:[#allocation11 + $0x98] sm:$0xff]
        %v1856 = vld [vmem:[#allocation11 + $0xa0] sm:$0xff]
        %v1857 = vld [vmem:[#allocation11 + $0xa8] sm:$0xff]
        %v1858 = vld [vmem:[#allocation11 + $0xb0] sm:$0xff]
        %v1859 = vld [vmem:[#allocation11 + $0xb8] sm:$0xff]
        %v1860 = vld [vmem:[#allocation11 + $0xc0] sm:$0xff]
        %v1861 = vld [vmem:[#allocation11 + $0xc8] sm:$0xff]
        %v1862 = vld [vmem:[#allocation11 + $0xd0] sm:$0xff]
        %v1863 = vld [vmem:[#allocation11 + $0xd8] sm:$0xff]
        %v1864 = vld [vmem:[#allocation11 + $0xe0] sm:$0xff]
        %v1865 = vld [vmem:[#allocation11 + $0xe8] sm:$0xff]
        %v1866 = vld [vmem:[#allocation11 + $0xf0] sm:$0xff]
        %v1867 = vld [vmem:[#allocation11 + $0xf8] sm:$0xff]
        %v1868 = vld [vmem:[#allocation11 + $0x100] sm:$0xff]
        %v1869 = vld [vmem:[#allocation11 + $0x108] sm:$0xff]
        %v1870 = vld [vmem:[#allocation11 + $0x110] sm:$0xff]
        %v1871 = vld [vmem:[#allocation11 + $0x118] sm:$0xff]
        %v1872 = vld [vmem:[#allocation11 + $0x120] sm:$0xff]
        %v1873 = vld [vmem:[#allocation11 + $0x128] sm:$0xff]
        %v1874 = vld [vmem:[#allocation11 + $0x130] sm:$0xff]
        %v1875 = vld [vmem:[#allocation11 + $0x138] sm:$0xff]
        %v1876 = vld [vmem:[#allocation11 + $0x140] sm:$0xff]
        %v1877 = vld [vmem:[#allocation11 + $0x148] sm:$0xff]
        %v1878 = vld [vmem:[#allocation11 + $0x150] sm:$0xff]
        %v1879 = vld [vmem:[#allocation11 + $0x158] sm:$0xff]
        %v1880 = vld [vmem:[#allocation11 + $0x160] sm:$0xff]
        %v1881 = vld [vmem:[#allocation11 + $0x168] sm:$0xff]
        %v1882 = vld [vmem:[#allocation11 + $0x170] sm:$0xff]
        %v1883 = vld [vmem:[#allocation11 + $0x178] sm:$0xff]
        %v1884 = vld [vmem:[#allocation11 + $0x180] sm:$0xff]
        %v1885 = vld [vmem:[#allocation11 + $0x188] sm:$0xff]
        %v1886 = vld [vmem:[#allocation11 + $0x190] sm:$0xff]
        %v1887 = vld [vmem:[#allocation11 + $0x198] sm:$0xff]
        %v1888 = vld [vmem:[#allocation11 + $0x1a0] sm:$0xff]
        %v1889 = vld [vmem:[#allocation11 + $0x1a8] sm:$0xff]
        %v1890 = vld [vmem:[#allocation11 + $0x1b0] sm:$0xff]
        %v1891 = vld [vmem:[#allocation11 + $0x1b8] sm:$0xff]
        %v1892 = vld [vmem:[#allocation11 + $0x1c0] sm:$0xff]
        %v1893 = vld [vmem:[#allocation11 + $0x1c8] sm:$0xff]
        %v1894 = vld [vmem:[#allocation11 + $0x1d0] sm:$0xff]
        %v1895 = vld [vmem:[#allocation11 + $0x1d8] sm:$0xff]
        %v1896 = vld [vmem:[#allocation11 + $0x1e0] sm:$0xff]
        %v1897 = vld [vmem:[#allocation11 + $0x1e8] sm:$0xff]
        %v1898 = vld [vmem:[#allocation11 + $0x1f0] sm:$0xff]
        %v1899 = vld [vmem:[#allocation11 + $0x1f8] sm:$0xff]
        %v1900 = vld [vmem:[#allocation11 + $0x200] sm:$0xff]
        %v1901 = vld [vmem:[#allocation11 + $0x208] sm:$0xff]
        %v1902 = vld [vmem:[#allocation11 + $0x210] sm:$0xff]
        %v1903 = vld [vmem:[#allocation11 + $0x218] sm:$0xff]
        %v1904 = vld [vmem:[#allocation11 + $0x220] sm:$0xff]
        %v1905 = vld [vmem:[#allocation11 + $0x228] sm:$0xff]
        %v1906 = vld [vmem:[#allocation11 + $0x230] sm:$0xff]
        %v1907 = vld [vmem:[#allocation11 + $0x238] sm:$0xff]
        %v1908 = vld [vmem:[#allocation11 + $0x240] sm:$0xff]
        %v1909 = vld [vmem:[#allocation11 + $0x248] sm:$0xff]
        %v1910 = vld [vmem:[#allocation11 + $0x250] sm:$0xff]
        %v1911 = vld [vmem:[#allocation11 + $0x258] sm:$0xff]
        %v1912 = vld [vmem:[#allocation11 + $0x260] sm:$0xff]
        %v1913 = vld [vmem:[#allocation11 + $0x268] sm:$0xff]
        %v1914 = vld [vmem:[#allocation11 + $0x270] sm:$0xff]
        %v1915 = vld [vmem:[#allocation11 + $0x278] sm:$0xff]
        %v1916 = vld [vmem:[#allocation11 + $0x280] sm:$0xff]
        %v1917 = vld [vmem:[#allocation11 + $0x288] sm:$0xff]
        %v1918 = vld [vmem:[#allocation11 + $0x290] sm:$0xff]
        %v1919 = vld [vmem:[#allocation11 + $0x298] sm:$0xff]
        %v1920 = vld [vmem:[#allocation11 + $0x2a0] sm:$0xff]
        %v1921 = vld [vmem:[#allocation11 + $0x2a8] sm:$0xff]
        %v1922 = vld [vmem:[#allocation11 + $0x2b0] sm:$0xff]
        %v1923 = vld [vmem:[#allocation11 + $0x2b8] sm:$0xff]
        %v1924 = vld [vmem:[#allocation11 + $0x2c0] sm:$0xff]
        %v1925 = vld [vmem:[#allocation11 + $0x2c8] sm:$0xff]
        %v1926 = vld [vmem:[#allocation11 + $0x2d0] sm:$0xff]
        %v1927 = vld [vmem:[#allocation11 + $0x2d8] sm:$0xff]
        %v1928 = vld [vmem:[#allocation11 + $0x2e0] sm:$0xff]
        %v1929 = vld [vmem:[#allocation11 + $0x2e8] sm:$0xff]
        %v1930 = vld [vmem:[#allocation11 + $0x2f0] sm:$0xff]
        %v1931 = vld [vmem:[#allocation11 + $0x2f8] sm:$0xff]
        %v1932 = vld [vmem:[#allocation11 + $0x300] sm:$0xff]
        %v1933 = vld [vmem:[#allocation11 + $0x308] sm:$0xff]
        %v1934 = vld [vmem:[#allocation11 + $0x310] sm:$0xff]
        %v1935 = vld [vmem:[#allocation11 + $0x318] sm:$0xff]
        %v1936 = vld [vmem:[#allocation11 + $0x320] sm:$0xff]
        %v1937 = vld [vmem:[#allocation11 + $0x328] sm:$0xff]
        %v1938 = vld [vmem:[#allocation11 + $0x330] sm:$0xff]
        %v1939 = vld [vmem:[#allocation11 + $0x338] sm:$0xff]
        %v1940 = vld [vmem:[#allocation11 + $0x340] sm:$0xff]
        %v1941 = vld [vmem:[#allocation11 + $0x348] sm:$0xff]
        %v1942 = vld [vmem:[#allocation11 + $0x350] sm:$0xff]
        %v1943 = vld [vmem:[#allocation11 + $0x358] sm:$0xff]
        %v1944 = vld [vmem:[#allocation11 + $0x360] sm:$0xff]
        %v1945 = vld [vmem:[#allocation11 + $0x368] sm:$0xff]
        %v1946 = vld [vmem:[#allocation11 + $0x370] sm:$0xff]
        %v1947 = vld [vmem:[#allocation11 + $0x378] sm:$0xff]
        %v1948 = vld [vmem:[#allocation11 + $0x380] sm:$0xff]
        %v1949 = vld [vmem:[#allocation11 + $0x388] sm:$0xff]
        %v1950 = vld [vmem:[#allocation11 + $0x390] sm:$0xff]
        %v1951 = vld [vmem:[#allocation11 + $0x398] sm:$0xff]
        %v1952 = vld [vmem:[#allocation11 + $0x3a0] sm:$0xff]
        %v1953 = vld [vmem:[#allocation11 + $0x3a8] sm:$0xff]
        %v1954 = vld [vmem:[#allocation11 + $0x3b0] sm:$0xff]
        %v1955 = vld [vmem:[#allocation11 + $0x3b8] sm:$0xff]
        %v1956 = vld [vmem:[#allocation11 + $0x3c0] sm:$0xff]
        %v1957 = vld [vmem:[#allocation11 + $0x3c8] sm:$0xff]
        %v1958 = vld [vmem:[#allocation11 + $0x3d0] sm:$0xff]
        %v1959 = vld [vmem:[#allocation11 + $0x3d8] sm:$0xff]
        %v1960 = vld [vmem:[#allocation11 + $0x3e0] sm:$0xff]
        %v1961 = vld [vmem:[#allocation11 + $0x3e8] sm:$0xff]
        %v1962 = vld [vmem:[#allocation11 + $0x3f0] sm:$0xff]
        %v1963 = vld [vmem:[#allocation11 + $0x3f8] sm:$0xff]
        %v1964 = vld [vmem:[#allocation11 + $0x400] sm:$0xff]
        %v1965 = vld [vmem:[#allocation11 + $0x408] sm:$0xff]
        %v1966 = vld [vmem:[#allocation11 + $0x410] sm:$0xff]
        %v1967 = vld [vmem:[#allocation11 + $0x418] sm:$0xff]
        %v1968 = vld [vmem:[#allocation11 + $0x420] sm:$0xff]
        %v1969 = vld [vmem:[#allocation11 + $0x428] sm:$0xff]
        %v1970 = vld [vmem:[#allocation11 + $0x430] sm:$0xff]
        %v1971 = vld [vmem:[#allocation11 + $0x438] sm:$0xff]
        %v1972 = vld [vmem:[#allocation11 + $0x440] sm:$0xff]
        %v1973 = vld [vmem:[#allocation11 + $0x448] sm:$0xff]
        %v1974 = vld [vmem:[#allocation11 + $0x450] sm:$0xff]
        %v1975 = vld [vmem:[#allocation11 + $0x458] sm:$0xff]
        %v1976 = vld [vmem:[#allocation11 + $0x460] sm:$0xff]
        %v1977 = vld [vmem:[#allocation11 + $0x468] sm:$0xff]
        %v1978 = vld [vmem:[#allocation11 + $0x470] sm:$0xff]
        %v1979 = vld [vmem:[#allocation11 + $0x478] sm:$0xff]
        %v1980 = vld [vmem:[#allocation11 + $0x480] sm:$0xff]
        %v1981 = vld [vmem:[#allocation11 + $0x488] sm:$0xff]
        %v1982 = vld [vmem:[#allocation11 + $0x490] sm:$0xff]
        %v1983 = vld [vmem:[#allocation11 + $0x498] sm:$0xff]
        %v1984 = vld [vmem:[#allocation11 + $0x4a0] sm:$0xff]
        %v1985 = vld [vmem:[#allocation11 + $0x4a8] sm:$0xff]
        %v1986 = vld [vmem:[#allocation11 + $0x4b0] sm:$0xff]
        %v1987 = vld [vmem:[#allocation11 + $0x4b8] sm:$0xff]
        %v1988 = vld [vmem:[#allocation11 + $0x4c0] sm:$0xff]
        %v1989 = vld [vmem:[#allocation11 + $0x4c8] sm:$0xff]
        %v1990 = vld [vmem:[#allocation11 + $0x4d0] sm:$0xff]
        %v1991 = vld [vmem:[#allocation11 + $0x4d8] sm:$0xff]
        %v1992 = vld [vmem:[#allocation11 + $0x4e0] sm:$0xff]
        %v1993 = vld [vmem:[#allocation11 + $0x4e8] sm:$0xff]
        %v1994 = vld [vmem:[#allocation11 + $0x4f0] sm:$0xff]
        %v1995 = vld [vmem:[#allocation11 + $0x4f8] sm:$0xff]
        %v1996 = vld [vmem:[#allocation11 + $0x500] sm:$0xff]
        %v1997 = vld [vmem:[#allocation11 + $0x508] sm:$0xff]
        %v1998 = vld [vmem:[#allocation11 + $0x510] sm:$0xff]
        %v1999 = vld [vmem:[#allocation11 + $0x518] sm:$0xff]
        %v2000 = vld [vmem:[#allocation11 + $0x520] sm:$0xff]
        %v2001 = vld [vmem:[#allocation11 + $0x528] sm:$0xff]
        %v2002 = vld [vmem:[#allocation11 + $0x530] sm:$0xff]
        %v2003 = vld [vmem:[#allocation11 + $0x538] sm:$0xff]
        %v2004 = vld [vmem:[#allocation11 + $0x540] sm:$0xff]
        %v2005 = vld [vmem:[#allocation11 + $0x548] sm:$0xff]
        %v2006 = vld [vmem:[#allocation11 + $0x550] sm:$0xff]
        %v2007 = vld [vmem:[#allocation11 + $0x558] sm:$0xff]
        %v2008 = vld [vmem:[#allocation11 + $0x560] sm:$0xff]
        %v2009 = vld [vmem:[#allocation11 + $0x568] sm:$0xff]
        %v2010 = vld [vmem:[#allocation11 + $0x570] sm:$0xff]
        %v2011 = vld [vmem:[#allocation11 + $0x578] sm:$0xff]
        %v2012 = vld [vmem:[#allocation11 + $0x580] sm:$0xff]
        %v2013 = vld [vmem:[#allocation11 + $0x588] sm:$0xff]
        %v2014 = vld [vmem:[#allocation11 + $0x590] sm:$0xff]
        %v2015 = vld [vmem:[#allocation11 + $0x598] sm:$0xff]
        %v2016 = vld [vmem:[#allocation11 + $0x5a0] sm:$0xff]
        %v2017 = vld [vmem:[#allocation11 + $0x5a8] sm:$0xff]
        %v2018 = vld [vmem:[#allocation11 + $0x5b0] sm:$0xff]
        %v2019 = vld [vmem:[#allocation11 + $0x5b8] sm:$0xff]
        %v2020 = vld [vmem:[#allocation11 + $0x5c0] sm:$0xff]
        %v2021 = vld [vmem:[#allocation11 + $0x5c8] sm:$0xff]
        %v2022 = vld [vmem:[#allocation11 + $0x5d0] sm:$0xff]
        %v2023 = vld [vmem:[#allocation11 + $0x5d8] sm:$0xff]
        %v2024 = vld [vmem:[#allocation11 + $0x5e0] sm:$0xff]
        %v2025 = vld [vmem:[#allocation11 + $0x5e8] sm:$0xff]
        %v2026 = vld [vmem:[#allocation11 + $0x5f0] sm:$0xff]
        %v2027 = vld [vmem:[#allocation11 + $0x5f8] sm:$0xff]
        %v2028 = vld [vmem:[#allocation11 + $0x600] sm:$0xff]
        %v2029 = vld [vmem:[#allocation11 + $0x608] sm:$0xff]
        %v2030 = vld [vmem:[#allocation11 + $0x610] sm:$0xff]
        %v2031 = vld [vmem:[#allocation11 + $0x618] sm:$0xff]
        %v2032 = vld [vmem:[#allocation11 + $0x620] sm:$0xff]
        %v2033 = vld [vmem:[#allocation11 + $0x628] sm:$0xff]
        %v2034 = vld [vmem:[#allocation11 + $0x630] sm:$0xff]
        %v2035 = vld [vmem:[#allocation11 + $0x638] sm:$0xff]
        %v2036 = vld [vmem:[#allocation11 + $0x640] sm:$0xff]
        %v2037 = vld [vmem:[#allocation11 + $0x648] sm:$0xff]
        %v2038 = vld [vmem:[#allocation11 + $0x650] sm:$0xff]
        %v2039 = vld [vmem:[#allocation11 + $0x658] sm:$0xff]
        %v2040 = vld [vmem:[#allocation11 + $0x660] sm:$0xff]
        %v2041 = vld [vmem:[#allocation11 + $0x668] sm:$0xff]
        %v2042 = vld [vmem:[#allocation11 + $0x670] sm:$0xff]
        %v2043 = vld [vmem:[#allocation11 + $0x678] sm:$0xff]
        %v2044 = vld [vmem:[#allocation11 + $0x680] sm:$0xff]
        %v2045 = vld [vmem:[#allocation11 + $0x688] sm:$0xff]
        %v2046 = vld [vmem:[#allocation11 + $0x690] sm:$0xff]
        %v2047 = vld [vmem:[#allocation11 + $0x698] sm:$0xff]
        %v2048 = vld [vmem:[#allocation11 + $0x6a0] sm:$0xff]
        %v2049 = vld [vmem:[#allocation11 + $0x6a8] sm:$0xff]
        %v2050 = vld [vmem:[#allocation11 + $0x6b0] sm:$0xff]
        %v2051 = vld [vmem:[#allocation11 + $0x6b8] sm:$0xff]
        %v2052 = vld [vmem:[#allocation11 + $0x6c0] sm:$0xff]
        %v2053 = vld [vmem:[#allocation11 + $0x6c8] sm:$0xff]
        %v2054 = vld [vmem:[#allocation11 + $0x6d0] sm:$0xff]
        %v2055 = vld [vmem:[#allocation11 + $0x6d8] sm:$0xff]
        %v2056 = vld [vmem:[#allocation11 + $0x6e0] sm:$0xff]
        %v2057 = vld [vmem:[#allocation11 + $0x6e8] sm:$0xff]
        %v2058 = vld [vmem:[#allocation11 + $0x6f0] sm:$0xff]
        %v2059 = vld [vmem:[#allocation11 + $0x6f8] sm:$0xff]
        %v2060 = vld [vmem:[#allocation11 + $0x700] sm:$0xff]
        %v2061 = vld [vmem:[#allocation11 + $0x708] sm:$0xff]
        %v2062 = vld [vmem:[#allocation11 + $0x710] sm:$0xff]
        %v2063 = vld [vmem:[#allocation11 + $0x718] sm:$0xff]
        %v2064 = vld [vmem:[#allocation11 + $0x720] sm:$0xff]
        %v2065 = vld [vmem:[#allocation11 + $0x728] sm:$0xff]
        %v2066 = vld [vmem:[#allocation11 + $0x730] sm:$0xff]
        %v2067 = vld [vmem:[#allocation11 + $0x738] sm:$0xff]
        %v2068 = vld [vmem:[#allocation11 + $0x740] sm:$0xff]
        %v2069 = vld [vmem:[#allocation11 + $0x748] sm:$0xff]
        %v2070 = vld [vmem:[#allocation11 + $0x750] sm:$0xff]
        %v2071 = vld [vmem:[#allocation11 + $0x758] sm:$0xff]
        %v2072 = vld [vmem:[#allocation11 + $0x760] sm:$0xff]
        %v2073 = vld [vmem:[#allocation11 + $0x768] sm:$0xff]
        %v2074 = vld [vmem:[#allocation11 + $0x770] sm:$0xff]
        %v2075 = vld [vmem:[#allocation11 + $0x778] sm:$0xff]
        %v2076 = vld [vmem:[#allocation11 + $0x780] sm:$0xff]
        %v2077 = vld [vmem:[#allocation11 + $0x788] sm:$0xff]
        %v2078 = vld [vmem:[#allocation11 + $0x790] sm:$0xff]
        %v2079 = vld [vmem:[#allocation11 + $0x798] sm:$0xff]
        %v2080 = vld [vmem:[#allocation11 + $0x7a0] sm:$0xff]
        %v2081 = vld [vmem:[#allocation11 + $0x7a8] sm:$0xff]
        %v2082 = vld [vmem:[#allocation11 + $0x7b0] sm:$0xff]
        %v2083 = vld [vmem:[#allocation11 + $0x7b8] sm:$0xff]
        %v2084 = vld [vmem:[#allocation11 + $0x7c0] sm:$0xff]
        %v2085 = vld [vmem:[#allocation11 + $0x7c8] sm:$0xff]
        %v2086 = vld [vmem:[#allocation11 + $0x7d0] sm:$0xff]
        %v2087 = vld [vmem:[#allocation11 + $0x7d8] sm:$0xff]
        %v2088 = vld [vmem:[#allocation11 + $0x7e0] sm:$0xff]
        %v2089 = vld [vmem:[#allocation11 + $0x7e8] sm:$0xff]
        %v2090 = vld [vmem:[#allocation11 + $0x7f0] sm:$0xff]
        %v2091 = vld [vmem:[#allocation11 + $0x7f8] sm:$0xff]
        %v2092 = vld [vmem:[#allocation11 + $0x800] sm:$0xff]
        %v2093 = vld [vmem:[#allocation11 + $0x808] sm:$0xff]
        %v2094 = vld [vmem:[#allocation11 + $0x810] sm:$0xff]
        %v2095 = vld [vmem:[#allocation11 + $0x818] sm:$0xff]
        %v2096 = vld [vmem:[#allocation11 + $0x820] sm:$0xff]
        %v2097 = vld [vmem:[#allocation11 + $0x828] sm:$0xff]
        %v2098 = vld [vmem:[#allocation11 + $0x830] sm:$0xff]
        %v2099 = vld [vmem:[#allocation11 + $0x838] sm:$0xff]
        %v2100 = vld [vmem:[#allocation11 + $0x840] sm:$0xff]
        %v2101 = vld [vmem:[#allocation11 + $0x848] sm:$0xff]
        %v2102 = vld [vmem:[#allocation11 + $0x850] sm:$0xff]
        %v2103 = vld [vmem:[#allocation11 + $0x858] sm:$0xff]
        %v2104 = vld [vmem:[#allocation11 + $0x860] sm:$0xff]
        %v2105 = vld [vmem:[#allocation11 + $0x868] sm:$0xff]
        %v2106 = vld [vmem:[#allocation11 + $0x870] sm:$0xff]
        %v2107 = vld [vmem:[#allocation11 + $0x878] sm:$0xff]
        %v2108 = vld [vmem:[#allocation11 + $0x880] sm:$0xff]
        %v2109 = vld [vmem:[#allocation11 + $0x888] sm:$0xff]
        %v2110 = vld [vmem:[#allocation11 + $0x890] sm:$0xff]
        %v2111 = vld [vmem:[#allocation11 + $0x898] sm:$0xff]
        %v2112 = vld [vmem:[#allocation11 + $0x8a0] sm:$0xff]
        %v2113 = vld [vmem:[#allocation11 + $0x8a8] sm:$0xff]
        %v2114 = vld [vmem:[#allocation11 + $0x8b0] sm:$0xff]
        %v2115 = vld [vmem:[#allocation11 + $0x8b8] sm:$0xff]
        %v2116 = vld [vmem:[#allocation11 + $0x8c0] sm:$0xff]
        %v2117 = vld [vmem:[#allocation11 + $0x8c8] sm:$0xff]
        %v2118 = vld [vmem:[#allocation11 + $0x8d0] sm:$0xff]
        %v2119 = vld [vmem:[#allocation11 + $0x8d8] sm:$0xff]
        %v2120 = vld [vmem:[#allocation11 + $0x8e0] sm:$0xff]
        %v2121 = vld [vmem:[#allocation11 + $0x8e8] sm:$0xff]
        %v2122 = vld [vmem:[#allocation11 + $0x8f0] sm:$0xff]
        %v2123 = vld [vmem:[#allocation11 + $0x8f8] sm:$0xff]
        %v2124 = vld [vmem:[#allocation13] sm:$0x3f]
        %v2126 = vlaneseq
        %v2127 = vshrl.u32 %v2126, 7
        %v2128 = vsub.s32 0, %v2127
        %v2129 = vrot.slane %v2124, %v2128
        %v2130 = vlaneseq
        %v2131 = vshrl.u32 %v2130, 7
        %v2132 = vsub.s32 1, %v2131
        %v2133 = vrot.slane %v2124, %v2132
        %v2134 = vlaneseq
        %v2135 = vshrl.u32 %v2134, 7
        %v2136 = vsub.s32 2, %v2135
        %v2137 = vrot.slane %v2124, %v2136
        %v2138 = vlaneseq
        %v2139 = vshrl.u32 %v2138, 7
        %v2140 = vsub.s32 3, %v2139
        %v2141 = vrot.slane %v2124, %v2140
        %v2142 = vlaneseq
        %v2143 = vshrl.u32 %v2142, 7
        %v2144 = vsub.s32 4, %v2143
        %v2145 = vrot.slane %v2124, %v2144
        %v2146 = vlaneseq
        %v2147 = vshrl.u32 %v2146, 7
        %v2148 = vsub.s32 5, %v2147
        %v2149 = vrot.slane %v2124, %v2148
        %v2444 = vunpack.c.l.b16 %v1836
        %v2445 = vunpack.c.h.b16 %v1836
        %v2446 = vunpack.c.l.b16 %v1837
        %v2447 = vunpack.c.h.b16 %v1837
        %v2448 = vunpack.c.l.b16 %v1838
        %v2449 = vunpack.c.h.b16 %v1838
        %v2450 = vunpack.c.l.b16 %v1839
        %v2451 = vunpack.c.h.b16 %v1839
        %v2452 = vunpack.c.l.b16 %v1840
        %v2453 = vunpack.c.h.b16 %v1840
        %v2454 = vunpack.c.l.b16 %v1841
        %v2455 = vunpack.c.h.b16 %v1841
        %v2456 = vunpack.c.l.b16 %v1842
        %v2457 = vunpack.c.h.b16 %v1842
        %v2458 = vunpack.c.l.b16 %v1843
        %v2459 = vunpack.c.h.b16 %v1843
        %v2460 = vunpack.c.l.b16 %v1844
        %v2461 = vunpack.c.h.b16 %v1844
        %v2462 = vunpack.c.l.b16 %v1845
        %v2463 = vunpack.c.h.b16 %v1845
        %v2464 = vunpack.c.l.b16 %v1846
        %v2465 = vunpack.c.h.b16 %v1846
        %v2466 = vunpack.c.l.b16 %v1847
        %v2467 = vunpack.c.h.b16 %v1847
        %v2468 = vunpack.c.l.b16 %v1848
        %v2469 = vunpack.c.h.b16 %v1848
        %v2470 = vunpack.c.l.b16 %v1849
        %v2471 = vunpack.c.h.b16 %v1849
        %v2472 = vunpack.c.l.b16 %v1850
        %v2473 = vunpack.c.h.b16 %v1850
        %v2474 = vunpack.c.l.b16 %v1851
        %v2475 = vunpack.c.h.b16 %v1851
        %v2476 = vunpack.c.l.b16 %v1852
        %v2477 = vunpack.c.h.b16 %v1852
        %v2478 = vunpack.c.l.b16 %v1853
        %v2479 = vunpack.c.h.b16 %v1853
        %v2480 = vunpack.c.l.b16 %v1854
        %v2481 = vunpack.c.h.b16 %v1854
        %v2482 = vunpack.c.l.b16 %v1855
        %v2483 = vunpack.c.h.b16 %v1855
        %v2484 = vunpack.c.l.b16 %v1856
        %v2485 = vunpack.c.h.b16 %v1856
        %v2486 = vunpack.c.l.b16 %v1857
        %v2487 = vunpack.c.h.b16 %v1857
        %v2488 = vunpack.c.l.b16 %v1858
        %v2489 = vunpack.c.h.b16 %v1858
        %v2490 = vunpack.c.l.b16 %v1859
        %v2491 = vunpack.c.h.b16 %v1859
        %v2492 = vunpack.c.l.b16 %v1860
        %v2493 = vunpack.c.h.b16 %v1860
        %v2494 = vunpack.c.l.b16 %v1861
        %v2495 = vunpack.c.h.b16 %v1861
        %v2496 = vunpack.c.l.b16 %v1862
        %v2497 = vunpack.c.h.b16 %v1862
        %v2498 = vunpack.c.l.b16 %v1863
        %v2499 = vunpack.c.h.b16 %v1863
        %v2500 = vunpack.c.l.b16 %v1864
        %v2501 = vunpack.c.h.b16 %v1864
        %v2502 = vunpack.c.l.b16 %v1865
        %v2503 = vunpack.c.h.b16 %v1865
        %v2504 = vunpack.c.l.b16 %v1866
        %v2505 = vunpack.c.h.b16 %v1866
        %v2506 = vunpack.c.l.b16 %v1867
        %v2507 = vunpack.c.h.b16 %v1867
        %v2508 = vunpack.c.l.b16 %v1868
        %v2509 = vunpack.c.h.b16 %v1868
        %v2510 = vunpack.c.l.b16 %v1869
        %v2511 = vunpack.c.h.b16 %v1869
        %v2512 = vunpack.c.l.b16 %v1870
        %v2513 = vunpack.c.h.b16 %v1870
        %v2514 = vunpack.c.l.b16 %v1871
        %v2515 = vunpack.c.h.b16 %v1871
        %v2516 = vunpack.c.l.b16 %v1872
        %v2517 = vunpack.c.h.b16 %v1872
        %v2518 = vunpack.c.l.b16 %v1873
        %v2519 = vunpack.c.h.b16 %v1873
        %v2520 = vunpack.c.l.b16 %v1874
        %v2521 = vunpack.c.h.b16 %v1874
        %v2522 = vunpack.c.l.b16 %v1875
        %v2523 = vunpack.c.h.b16 %v1875
        %v2524 = vunpack.c.l.b16 %v1876
        %v2525 = vunpack.c.h.b16 %v1876
        %v2526 = vunpack.c.l.b16 %v1877
        %v2527 = vunpack.c.h.b16 %v1877
        %v2528 = vunpack.c.l.b16 %v1878
        %v2529 = vunpack.c.h.b16 %v1878
        %v2530 = vunpack.c.l.b16 %v1879
        %v2531 = vunpack.c.h.b16 %v1879
        %v2532 = vunpack.c.l.b16 %v1880
        %v2533 = vunpack.c.h.b16 %v1880
        %v2534 = vunpack.c.l.b16 %v1881
        %v2535 = vunpack.c.h.b16 %v1881
        %v2536 = vunpack.c.l.b16 %v1882
        %v2537 = vunpack.c.h.b16 %v1882
        %v2538 = vunpack.c.l.b16 %v1883
        %v2539 = vunpack.c.h.b16 %v1883
        %v2540 = vunpack.c.l.b16 %v1884
        %v2541 = vunpack.c.h.b16 %v1884
        %v2542 = vunpack.c.l.b16 %v1885
        %v2543 = vunpack.c.h.b16 %v1885
        %v2544 = vunpack.c.l.b16 %v1886
        %v2545 = vunpack.c.h.b16 %v1886
        %v2546 = vunpack.c.l.b16 %v1887
        %v2547 = vunpack.c.h.b16 %v1887
        %v2548 = vunpack.c.l.b16 %v1888
        %v2549 = vunpack.c.h.b16 %v1888
        %v2550 = vunpack.c.l.b16 %v1889
        %v2551 = vunpack.c.h.b16 %v1889
        %v2552 = vunpack.c.l.b16 %v1890
        %v2553 = vunpack.c.h.b16 %v1890
        %v2554 = vunpack.c.l.b16 %v1891
        %v2555 = vunpack.c.h.b16 %v1891
        %v2556 = vunpack.c.l.b16 %v1892
        %v2557 = vunpack.c.h.b16 %v1892
        %v2558 = vunpack.c.l.b16 %v1893
        %v2559 = vunpack.c.h.b16 %v1893
        %v2560 = vunpack.c.l.b16 %v1894
        %v2561 = vunpack.c.h.b16 %v1894
        %v2562 = vunpack.c.l.b16 %v1895
        %v2563 = vunpack.c.h.b16 %v1895
        %v2564 = vunpack.c.l.b16 %v1896
        %v2565 = vunpack.c.h.b16 %v1896
        %v2566 = vunpack.c.l.b16 %v1897
        %v2567 = vunpack.c.h.b16 %v1897
        %v2568 = vunpack.c.l.b16 %v1898
        %v2569 = vunpack.c.h.b16 %v1898
        %v2570 = vunpack.c.l.b16 %v1899
        %v2571 = vunpack.c.h.b16 %v1899
        %v2572 = vunpack.c.l.b16 %v1900
        %v2573 = vunpack.c.h.b16 %v1900
        %v2574 = vunpack.c.l.b16 %v1901
        %v2575 = vunpack.c.h.b16 %v1901
        %v2576 = vunpack.c.l.b16 %v1902
        %v2577 = vunpack.c.h.b16 %v1902
        %v2578 = vunpack.c.l.b16 %v1903
        %v2579 = vunpack.c.h.b16 %v1903
        %v2580 = vunpack.c.l.b16 %v1904
        %v2581 = vunpack.c.h.b16 %v1904
        %v2582 = vunpack.c.l.b16 %v1905
        %v2583 = vunpack.c.h.b16 %v1905
        %v2584 = vunpack.c.l.b16 %v1906
        %v2585 = vunpack.c.h.b16 %v1906
        %v2586 = vunpack.c.l.b16 %v1907
        %v2587 = vunpack.c.h.b16 %v1907
        %v2588 = vunpack.c.l.b16 %v1908
        %v2589 = vunpack.c.h.b16 %v1908
        %v2590 = vunpack.c.l.b16 %v1909
        %v2591 = vunpack.c.h.b16 %v1909
        %v2592 = vunpack.c.l.b16 %v1910
        %v2593 = vunpack.c.h.b16 %v1910
        %v2594 = vunpack.c.l.b16 %v1911
        %v2595 = vunpack.c.h.b16 %v1911
        %v2596 = vunpack.c.l.b16 %v1912
        %v2597 = vunpack.c.h.b16 %v1912
        %v2598 = vunpack.c.l.b16 %v1913
        %v2599 = vunpack.c.h.b16 %v1913
        %v2600 = vunpack.c.l.b16 %v1914
        %v2601 = vunpack.c.h.b16 %v1914
        %v2602 = vunpack.c.l.b16 %v1915
        %v2603 = vunpack.c.h.b16 %v1915
        %v2604 = vunpack.c.l.b16 %v1916
        %v2605 = vunpack.c.h.b16 %v1916
        %v2606 = vunpack.c.l.b16 %v1917
        %v2607 = vunpack.c.h.b16 %v1917
        %v2608 = vunpack.c.l.b16 %v1918
        %v2609 = vunpack.c.h.b16 %v1918
        %v2610 = vunpack.c.l.b16 %v1919
        %v2611 = vunpack.c.h.b16 %v1919
        %v2612 = vunpack.c.l.b16 %v1920
        %v2613 = vunpack.c.h.b16 %v1920
        %v2614 = vunpack.c.l.b16 %v1921
        %v2615 = vunpack.c.h.b16 %v1921
        %v2616 = vunpack.c.l.b16 %v1922
        %v2617 = vunpack.c.h.b16 %v1922
        %v2618 = vunpack.c.l.b16 %v1923
        %v2619 = vunpack.c.h.b16 %v1923
        %v2620 = vunpack.c.l.b16 %v1924
        %v2621 = vunpack.c.h.b16 %v1924
        %v2622 = vunpack.c.l.b16 %v1925
        %v2623 = vunpack.c.h.b16 %v1925
        %v2624 = vunpack.c.l.b16 %v1926
        %v2625 = vunpack.c.h.b16 %v1926
        %v2626 = vunpack.c.l.b16 %v1927
        %v2627 = vunpack.c.h.b16 %v1927
        %v2628 = vunpack.c.l.b16 %v1928
        %v2629 = vunpack.c.h.b16 %v1928
        %v2630 = vunpack.c.l.b16 %v1929
        %v2631 = vunpack.c.h.b16 %v1929
        %v2632 = vunpack.c.l.b16 %v1930
        %v2633 = vunpack.c.h.b16 %v1930
        %v2634 = vunpack.c.l.b16 %v1931
        %v2635 = vunpack.c.h.b16 %v1931
        %v2636 = vunpack.c.l.b16 %v1932
        %v2637 = vunpack.c.h.b16 %v1932
        %v2638 = vunpack.c.l.b16 %v1933
        %v2639 = vunpack.c.h.b16 %v1933
        %v2640 = vunpack.c.l.b16 %v1934
        %v2641 = vunpack.c.h.b16 %v1934
        %v2642 = vunpack.c.l.b16 %v1935
        %v2643 = vunpack.c.h.b16 %v1935
        %v2644 = vunpack.c.l.b16 %v1936
        %v2645 = vunpack.c.h.b16 %v1936
        %v2646 = vunpack.c.l.b16 %v1937
        %v2647 = vunpack.c.h.b16 %v1937
        %v2648 = vunpack.c.l.b16 %v1938
        %v2649 = vunpack.c.h.b16 %v1938
        %v2650 = vunpack.c.l.b16 %v1939
        %v2651 = vunpack.c.h.b16 %v1939
        %v2652 = vunpack.c.l.b16 %v1940
        %v2653 = vunpack.c.h.b16 %v1940
        %v2654 = vunpack.c.l.b16 %v1941
        %v2655 = vunpack.c.h.b16 %v1941
        %v2656 = vunpack.c.l.b16 %v1942
        %v2657 = vunpack.c.h.b16 %v1942
        %v2658 = vunpack.c.l.b16 %v1943
        %v2659 = vunpack.c.h.b16 %v1943
        %v2660 = vunpack.c.l.b16 %v1944
        %v2661 = vunpack.c.h.b16 %v1944
        %v2662 = vunpack.c.l.b16 %v1945
        %v2663 = vunpack.c.h.b16 %v1945
        %v2664 = vunpack.c.l.b16 %v1946
        %v2665 = vunpack.c.h.b16 %v1946
        %v2666 = vunpack.c.l.b16 %v1947
        %v2667 = vunpack.c.h.b16 %v1947
        %v2668 = vunpack.c.l.b16 %v1948
        %v2669 = vunpack.c.h.b16 %v1948
        %v2670 = vunpack.c.l.b16 %v1949
        %v2671 = vunpack.c.h.b16 %v1949
        %v2672 = vunpack.c.l.b16 %v1950
        %v2673 = vunpack.c.h.b16 %v1950
        %v2674 = vunpack.c.l.b16 %v1951
        %v2675 = vunpack.c.h.b16 %v1951
        %v2676 = vunpack.c.l.b16 %v1952
        %v2677 = vunpack.c.h.b16 %v1952
        %v2678 = vunpack.c.l.b16 %v1953
        %v2679 = vunpack.c.h.b16 %v1953
        %v2680 = vunpack.c.l.b16 %v1954
        %v2681 = vunpack.c.h.b16 %v1954
        %v2682 = vunpack.c.l.b16 %v1955
        %v2683 = vunpack.c.h.b16 %v1955
        %v2684 = vunpack.c.l.b16 %v1956
        %v2685 = vunpack.c.h.b16 %v1956
        %v2686 = vunpack.c.l.b16 %v1957
        %v2687 = vunpack.c.h.b16 %v1957
        %v2688 = vunpack.c.l.b16 %v1958
        %v2689 = vunpack.c.h.b16 %v1958
        %v2690 = vunpack.c.l.b16 %v1959
        %v2691 = vunpack.c.h.b16 %v1959
        %v2692 = vunpack.c.l.b16 %v1960
        %v2693 = vunpack.c.h.b16 %v1960
        %v2694 = vunpack.c.l.b16 %v1961
        %v2695 = vunpack.c.h.b16 %v1961
        %v2696 = vunpack.c.l.b16 %v1962
        %v2697 = vunpack.c.h.b16 %v1962
        %v2698 = vunpack.c.l.b16 %v1963
        %v2699 = vunpack.c.h.b16 %v1963
        %v2700 = vunpack.c.l.b16 %v1964
        %v2701 = vunpack.c.h.b16 %v1964
        %v2702 = vunpack.c.l.b16 %v1965
        %v2703 = vunpack.c.h.b16 %v1965
        %v2704 = vunpack.c.l.b16 %v1966
        %v2705 = vunpack.c.h.b16 %v1966
        %v2706 = vunpack.c.l.b16 %v1967
        %v2707 = vunpack.c.h.b16 %v1967
        %v2708 = vunpack.c.l.b16 %v1968
        %v2709 = vunpack.c.h.b16 %v1968
        %v2710 = vunpack.c.l.b16 %v1969
        %v2711 = vunpack.c.h.b16 %v1969
        %v2712 = vunpack.c.l.b16 %v1970
        %v2713 = vunpack.c.h.b16 %v1970
        %v2714 = vunpack.c.l.b16 %v1971
        %v2715 = vunpack.c.h.b16 %v1971
        %v2716 = vunpack.c.l.b16 %v1972
        %v2717 = vunpack.c.h.b16 %v1972
        %v2718 = vunpack.c.l.b16 %v1973
        %v2719 = vunpack.c.h.b16 %v1973
        %v2720 = vunpack.c.l.b16 %v1974
        %v2721 = vunpack.c.h.b16 %v1974
        %v2722 = vunpack.c.l.b16 %v1975
        %v2723 = vunpack.c.h.b16 %v1975
        %v2724 = vunpack.c.l.b16 %v1976
        %v2725 = vunpack.c.h.b16 %v1976
        %v2726 = vunpack.c.l.b16 %v1977
        %v2727 = vunpack.c.h.b16 %v1977
        %v2728 = vunpack.c.l.b16 %v1978
        %v2729 = vunpack.c.h.b16 %v1978
        %v2730 = vunpack.c.l.b16 %v1979
        %v2731 = vunpack.c.h.b16 %v1979
        %v2732 = vunpack.c.l.b16 %v1980
        %v2733 = vunpack.c.h.b16 %v1980
        %v2734 = vunpack.c.l.b16 %v1981
        %v2735 = vunpack.c.h.b16 %v1981
        %v2736 = vunpack.c.l.b16 %v1982
        %v2737 = vunpack.c.h.b16 %v1982
        %v2738 = vunpack.c.l.b16 %v1983
        %v2739 = vunpack.c.h.b16 %v1983
        %v2740 = vunpack.c.l.b16 %v1984
        %v2741 = vunpack.c.h.b16 %v1984
        %v2742 = vunpack.c.l.b16 %v1985
        %v2743 = vunpack.c.h.b16 %v1985
        %v2744 = vunpack.c.l.b16 %v1986
        %v2745 = vunpack.c.h.b16 %v1986
        %v2746 = vunpack.c.l.b16 %v1987
        %v2747 = vunpack.c.h.b16 %v1987
        %v2748 = vunpack.c.l.b16 %v1988
        %v2749 = vunpack.c.h.b16 %v1988
        %v2750 = vunpack.c.l.b16 %v1989
        %v2751 = vunpack.c.h.b16 %v1989
        %v2752 = vunpack.c.l.b16 %v1990
        %v2753 = vunpack.c.h.b16 %v1990
        %v2754 = vunpack.c.l.b16 %v1991
        %v2755 = vunpack.c.h.b16 %v1991
        %v2756 = vunpack.c.l.b16 %v1992
        %v2757 = vunpack.c.h.b16 %v1992
        %v2758 = vunpack.c.l.b16 %v1993
        %v2759 = vunpack.c.h.b16 %v1993
        %v2760 = vunpack.c.l.b16 %v1994
        %v2761 = vunpack.c.h.b16 %v1994
        %v2762 = vunpack.c.l.b16 %v1995
        %v2763 = vunpack.c.h.b16 %v1995
        %v2764 = vunpack.c.l.b16 %v1996
        %v2765 = vunpack.c.h.b16 %v1996
        %v2766 = vunpack.c.l.b16 %v1997
        %v2767 = vunpack.c.h.b16 %v1997
        %v2768 = vunpack.c.l.b16 %v1998
        %v2769 = vunpack.c.h.b16 %v1998
        %v2770 = vunpack.c.l.b16 %v1999
        %v2771 = vunpack.c.h.b16 %v1999
        %v2772 = vunpack.c.l.b16 %v2000
        %v2773 = vunpack.c.h.b16 %v2000
        %v2774 = vunpack.c.l.b16 %v2001
        %v2775 = vunpack.c.h.b16 %v2001
        %v2776 = vunpack.c.l.b16 %v2002
        %v2777 = vunpack.c.h.b16 %v2002
        %v2778 = vunpack.c.l.b16 %v2003
        %v2779 = vunpack.c.h.b16 %v2003
        %v2780 = vunpack.c.l.b16 %v2004
        %v2781 = vunpack.c.h.b16 %v2004
        %v2782 = vunpack.c.l.b16 %v2005
        %v2783 = vunpack.c.h.b16 %v2005
        %v2784 = vunpack.c.l.b16 %v2006
        %v2785 = vunpack.c.h.b16 %v2006
        %v2786 = vunpack.c.l.b16 %v2007
        %v2787 = vunpack.c.h.b16 %v2007
        %v2788 = vunpack.c.l.b16 %v2008
        %v2789 = vunpack.c.h.b16 %v2008
        %v2790 = vunpack.c.l.b16 %v2009
        %v2791 = vunpack.c.h.b16 %v2009
        %v2792 = vunpack.c.l.b16 %v2010
        %v2793 = vunpack.c.h.b16 %v2010
        %v2794 = vunpack.c.l.b16 %v2011
        %v2795 = vunpack.c.h.b16 %v2011
        %v2796 = vunpack.c.l.b16 %v2012
        %v2797 = vunpack.c.h.b16 %v2012
        %v2798 = vunpack.c.l.b16 %v2013
        %v2799 = vunpack.c.h.b16 %v2013
        %v2800 = vunpack.c.l.b16 %v2014
        %v2801 = vunpack.c.h.b16 %v2014
        %v2802 = vunpack.c.l.b16 %v2015
        %v2803 = vunpack.c.h.b16 %v2015
        %v2804 = vunpack.c.l.b16 %v2016
        %v2805 = vunpack.c.h.b16 %v2016
        %v2806 = vunpack.c.l.b16 %v2017
        %v2807 = vunpack.c.h.b16 %v2017
        %v2808 = vunpack.c.l.b16 %v2018
        %v2809 = vunpack.c.h.b16 %v2018
        %v2810 = vunpack.c.l.b16 %v2019
        %v2811 = vunpack.c.h.b16 %v2019
        %v2812 = vunpack.c.l.b16 %v2020
        %v2813 = vunpack.c.h.b16 %v2020
        %v2814 = vunpack.c.l.b16 %v2021
        %v2815 = vunpack.c.h.b16 %v2021
        %v2816 = vunpack.c.l.b16 %v2022
        %v2817 = vunpack.c.h.b16 %v2022
        %v2818 = vunpack.c.l.b16 %v2023
        %v2819 = vunpack.c.h.b16 %v2023
        %v2820 = vunpack.c.l.b16 %v2024
        %v2821 = vunpack.c.h.b16 %v2024
        %v2822 = vunpack.c.l.b16 %v2025
        %v2823 = vunpack.c.h.b16 %v2025
        %v2824 = vunpack.c.l.b16 %v2026
        %v2825 = vunpack.c.h.b16 %v2026
        %v2826 = vunpack.c.l.b16 %v2027
        %v2827 = vunpack.c.h.b16 %v2027
        %v2828 = vunpack.c.l.b16 %v2028
        %v2829 = vunpack.c.h.b16 %v2028
        %v2830 = vunpack.c.l.b16 %v2029
        %v2831 = vunpack.c.h.b16 %v2029
        %v2832 = vunpack.c.l.b16 %v2030
        %v2833 = vunpack.c.h.b16 %v2030
        %v2834 = vunpack.c.l.b16 %v2031
        %v2835 = vunpack.c.h.b16 %v2031
        %v2836 = vunpack.c.l.b16 %v2032
        %v2837 = vunpack.c.h.b16 %v2032
        %v2838 = vunpack.c.l.b16 %v2033
        %v2839 = vunpack.c.h.b16 %v2033
        %v2840 = vunpack.c.l.b16 %v2034
        %v2841 = vunpack.c.h.b16 %v2034
        %v2842 = vunpack.c.l.b16 %v2035
        %v2843 = vunpack.c.h.b16 %v2035
        %v2844 = vunpack.c.l.b16 %v2036
        %v2845 = vunpack.c.h.b16 %v2036
        %v2846 = vunpack.c.l.b16 %v2037
        %v2847 = vunpack.c.h.b16 %v2037
        %v2848 = vunpack.c.l.b16 %v2038
        %v2849 = vunpack.c.h.b16 %v2038
        %v2850 = vunpack.c.l.b16 %v2039
        %v2851 = vunpack.c.h.b16 %v2039
        %v2852 = vunpack.c.l.b16 %v2040
        %v2853 = vunpack.c.h.b16 %v2040
        %v2854 = vunpack.c.l.b16 %v2041
        %v2855 = vunpack.c.h.b16 %v2041
        %v2856 = vunpack.c.l.b16 %v2042
        %v2857 = vunpack.c.h.b16 %v2042
        %v2858 = vunpack.c.l.b16 %v2043
        %v2859 = vunpack.c.h.b16 %v2043
        %v2860 = vunpack.c.l.b16 %v2044
        %v2861 = vunpack.c.h.b16 %v2044
        %v2862 = vunpack.c.l.b16 %v2045
        %v2863 = vunpack.c.h.b16 %v2045
        %v2864 = vunpack.c.l.b16 %v2046
        %v2865 = vunpack.c.h.b16 %v2046
        %v2866 = vunpack.c.l.b16 %v2047
        %v2867 = vunpack.c.h.b16 %v2047
        %v2868 = vunpack.c.l.b16 %v2048
        %v2869 = vunpack.c.h.b16 %v2048
        %v2870 = vunpack.c.l.b16 %v2049
        %v2871 = vunpack.c.h.b16 %v2049
        %v2872 = vunpack.c.l.b16 %v2050
        %v2873 = vunpack.c.h.b16 %v2050
        %v2874 = vunpack.c.l.b16 %v2051
        %v2875 = vunpack.c.h.b16 %v2051
        %v2876 = vunpack.c.l.b16 %v2052
        %v2877 = vunpack.c.h.b16 %v2052
        %v2878 = vunpack.c.l.b16 %v2053
        %v2879 = vunpack.c.h.b16 %v2053
        %v2880 = vunpack.c.l.b16 %v2054
        %v2881 = vunpack.c.h.b16 %v2054
        %v2882 = vunpack.c.l.b16 %v2055
        %v2883 = vunpack.c.h.b16 %v2055
        %v2884 = vunpack.c.l.b16 %v2056
        %v2885 = vunpack.c.h.b16 %v2056
        %v2886 = vunpack.c.l.b16 %v2057
        %v2887 = vunpack.c.h.b16 %v2057
        %v2888 = vunpack.c.l.b16 %v2058
        %v2889 = vunpack.c.h.b16 %v2058
        %v2890 = vunpack.c.l.b16 %v2059
        %v2891 = vunpack.c.h.b16 %v2059
        %v2892 = vunpack.c.l.b16 %v2060
        %v2893 = vunpack.c.h.b16 %v2060
        %v2894 = vunpack.c.l.b16 %v2061
        %v2895 = vunpack.c.h.b16 %v2061
        %v2896 = vunpack.c.l.b16 %v2062
        %v2897 = vunpack.c.h.b16 %v2062
        %v2898 = vunpack.c.l.b16 %v2063
        %v2899 = vunpack.c.h.b16 %v2063
        %v2900 = vunpack.c.l.b16 %v2064
        %v2901 = vunpack.c.h.b16 %v2064
        %v2902 = vunpack.c.l.b16 %v2065
        %v2903 = vunpack.c.h.b16 %v2065
        %v2904 = vunpack.c.l.b16 %v2066
        %v2905 = vunpack.c.h.b16 %v2066
        %v2906 = vunpack.c.l.b16 %v2067
        %v2907 = vunpack.c.h.b16 %v2067
        %v2908 = vunpack.c.l.b16 %v2068
        %v2909 = vunpack.c.h.b16 %v2068
        %v2910 = vunpack.c.l.b16 %v2069
        %v2911 = vunpack.c.h.b16 %v2069
        %v2912 = vunpack.c.l.b16 %v2070
        %v2913 = vunpack.c.h.b16 %v2070
        %v2914 = vunpack.c.l.b16 %v2071
        %v2915 = vunpack.c.h.b16 %v2071
        %v2916 = vunpack.c.l.b16 %v2072
        %v2917 = vunpack.c.h.b16 %v2072
        %v2918 = vunpack.c.l.b16 %v2073
        %v2919 = vunpack.c.h.b16 %v2073
        %v2920 = vunpack.c.l.b16 %v2074
        %v2921 = vunpack.c.h.b16 %v2074
        %v2922 = vunpack.c.l.b16 %v2075
        %v2923 = vunpack.c.h.b16 %v2075
        %v2924 = vunpack.c.l.b16 %v2076
        %v2925 = vunpack.c.h.b16 %v2076
        %v2926 = vunpack.c.l.b16 %v2077
        %v2927 = vunpack.c.h.b16 %v2077
        %v2928 = vunpack.c.l.b16 %v2078
        %v2929 = vunpack.c.h.b16 %v2078
        %v2930 = vunpack.c.l.b16 %v2079
        %v2931 = vunpack.c.h.b16 %v2079
        %v2932 = vunpack.c.l.b16 %v2080
        %v2933 = vunpack.c.h.b16 %v2080
        %v2934 = vunpack.c.l.b16 %v2081
        %v2935 = vunpack.c.h.b16 %v2081
        %v2936 = vunpack.c.l.b16 %v2082
        %v2937 = vunpack.c.h.b16 %v2082
        %v2938 = vunpack.c.l.b16 %v2083
        %v2939 = vunpack.c.h.b16 %v2083
        %v2940 = vunpack.c.l.b16 %v2084
        %v2941 = vunpack.c.h.b16 %v2084
        %v2942 = vunpack.c.l.b16 %v2085
        %v2943 = vunpack.c.h.b16 %v2085
        %v2944 = vunpack.c.l.b16 %v2086
        %v2945 = vunpack.c.h.b16 %v2086
        %v2946 = vunpack.c.l.b16 %v2087
        %v2947 = vunpack.c.h.b16 %v2087
        %v2948 = vunpack.c.l.b16 %v2088
        %v2949 = vunpack.c.h.b16 %v2088
        %v2950 = vunpack.c.l.b16 %v2089
        %v2951 = vunpack.c.h.b16 %v2089
        %v2952 = vunpack.c.l.b16 %v2090
        %v2953 = vunpack.c.h.b16 %v2090
        %v2954 = vunpack.c.l.b16 %v2091
        %v2955 = vunpack.c.h.b16 %v2091
        %v2956 = vunpack.c.l.b16 %v2092
        %v2957 = vunpack.c.h.b16 %v2092
        %v2958 = vunpack.c.l.b16 %v2093
        %v2959 = vunpack.c.h.b16 %v2093
        %v2960 = vunpack.c.l.b16 %v2094
        %v2961 = vunpack.c.h.b16 %v2094
        %v2962 = vunpack.c.l.b16 %v2095
        %v2963 = vunpack.c.h.b16 %v2095
        %v2964 = vunpack.c.l.b16 %v2096
        %v2965 = vunpack.c.h.b16 %v2096
        %v2966 = vunpack.c.l.b16 %v2097
        %v2967 = vunpack.c.h.b16 %v2097
        %v2968 = vunpack.c.l.b16 %v2098
        %v2969 = vunpack.c.h.b16 %v2098
        %v2970 = vunpack.c.l.b16 %v2099
        %v2971 = vunpack.c.h.b16 %v2099
        %v2972 = vunpack.c.l.b16 %v2100
        %v2973 = vunpack.c.h.b16 %v2100
        %v2974 = vunpack.c.l.b16 %v2101
        %v2975 = vunpack.c.h.b16 %v2101
        %v2976 = vunpack.c.l.b16 %v2102
        %v2977 = vunpack.c.h.b16 %v2102
        %v2978 = vunpack.c.l.b16 %v2103
        %v2979 = vunpack.c.h.b16 %v2103
        %v2980 = vunpack.c.l.b16 %v2104
        %v2981 = vunpack.c.h.b16 %v2104
        %v2982 = vunpack.c.l.b16 %v2105
        %v2983 = vunpack.c.h.b16 %v2105
        %v2984 = vunpack.c.l.b16 %v2106
        %v2985 = vunpack.c.h.b16 %v2106
        %v2986 = vunpack.c.l.b16 %v2107
        %v2987 = vunpack.c.h.b16 %v2107
        %v2988 = vunpack.c.l.b16 %v2108
        %v2989 = vunpack.c.h.b16 %v2108
        %v2990 = vunpack.c.l.b16 %v2109
        %v2991 = vunpack.c.h.b16 %v2109
        %v2992 = vunpack.c.l.b16 %v2110
        %v2993 = vunpack.c.h.b16 %v2110
        %v2994 = vunpack.c.l.b16 %v2111
        %v2995 = vunpack.c.h.b16 %v2111
        %v2996 = vunpack.c.l.b16 %v2112
        %v2997 = vunpack.c.h.b16 %v2112
        %v2998 = vunpack.c.l.b16 %v2113
        %v2999 = vunpack.c.h.b16 %v2113
        %v3000 = vunpack.c.l.b16 %v2114
        %v3001 = vunpack.c.h.b16 %v2114
        %v3002 = vunpack.c.l.b16 %v2115
        %v3003 = vunpack.c.h.b16 %v2115
        %v3004 = vunpack.c.l.b16 %v2116
        %v3005 = vunpack.c.h.b16 %v2116
        %v3006 = vunpack.c.l.b16 %v2117
        %v3007 = vunpack.c.h.b16 %v2117
        %v3008 = vunpack.c.l.b16 %v2118
        %v3009 = vunpack.c.h.b16 %v2118
        %v3010 = vunpack.c.l.b16 %v2119
        %v3011 = vunpack.c.h.b16 %v2119
        %v3012 = vunpack.c.l.b16 %v2120
        %v3013 = vunpack.c.h.b16 %v2120
        %v3014 = vunpack.c.l.b16 %v2121
        %v3015 = vunpack.c.h.b16 %v2121
        %v3016 = vunpack.c.l.b16 %v2122
        %v3017 = vunpack.c.h.b16 %v2122
        %v3018 = vunpack.c.l.b16 %v2123
        %v3019 = vunpack.c.h.b16 %v2123
        %v3020 = vpack.c.b16 %v2450, %v2444
        %v3021 = vpack.c.b16 %v2451, %v2445
        %v3022 = vpack.c.b16 %v2452, %v2446
        %v3023 = vpack.c.b16 %v2453, %v2447
        %v3024 = vpack.c.b16 %v2454, %v2448
        %v3025 = vpack.c.b16 %v2455, %v2449
        %v3026 = vpack.c.b16 %v2462, %v2456
        %v3027 = vpack.c.b16 %v2463, %v2457
        %v3028 = vpack.c.b16 %v2464, %v2458
        %v3029 = vpack.c.b16 %v2465, %v2459
        %v3030 = vpack.c.b16 %v2466, %v2460
        %v3031 = vpack.c.b16 %v2467, %v2461
        %v3032 = vpack.c.b16 %v2474, %v2468
        %v3033 = vpack.c.b16 %v2475, %v2469
        %v3034 = vpack.c.b16 %v2476, %v2470
        %v3035 = vpack.c.b16 %v2477, %v2471
        %v3036 = vpack.c.b16 %v2478, %v2472
        %v3037 = vpack.c.b16 %v2479, %v2473
        %v3038 = vpack.c.b16 %v2486, %v2480
        %v3039 = vpack.c.b16 %v2487, %v2481
        %v3040 = vpack.c.b16 %v2488, %v2482
        %v3041 = vpack.c.b16 %v2489, %v2483
        %v3042 = vpack.c.b16 %v2490, %v2484
        %v3043 = vpack.c.b16 %v2491, %v2485
        %v3044 = vpack.c.b16 %v2498, %v2492
        %v3045 = vpack.c.b16 %v2499, %v2493
        %v3046 = vpack.c.b16 %v2500, %v2494
        %v3047 = vpack.c.b16 %v2501, %v2495
        %v3048 = vpack.c.b16 %v2502, %v2496
        %v3049 = vpack.c.b16 %v2503, %v2497
        %v3050 = vpack.c.b16 %v2510, %v2504
        %v3051 = vpack.c.b16 %v2511, %v2505
        %v3052 = vpack.c.b16 %v2512, %v2506
        %v3053 = vpack.c.b16 %v2513, %v2507
        %v3054 = vpack.c.b16 %v2514, %v2508
        %v3055 = vpack.c.b16 %v2515, %v2509
        %v3056 = vpack.c.b16 %v2522, %v2516
        %v3057 = vpack.c.b16 %v2523, %v2517
        %v3058 = vpack.c.b16 %v2524, %v2518
        %v3059 = vpack.c.b16 %v2525, %v2519
        %v3060 = vpack.c.b16 %v2526, %v2520
        %v3061 = vpack.c.b16 %v2527, %v2521
        %v3062 = vpack.c.b16 %v2534, %v2528
        %v3063 = vpack.c.b16 %v2535, %v2529
        %v3064 = vpack.c.b16 %v2536, %v2530
        %v3065 = vpack.c.b16 %v2537, %v2531
        %v3066 = vpack.c.b16 %v2538, %v2532
        %v3067 = vpack.c.b16 %v2539, %v2533
        %v3068 = vpack.c.b16 %v2546, %v2540
        %v3069 = vpack.c.b16 %v2547, %v2541
        %v3070 = vpack.c.b16 %v2548, %v2542
        %v3071 = vpack.c.b16 %v2549, %v2543
        %v3072 = vpack.c.b16 %v2550, %v2544
        %v3073 = vpack.c.b16 %v2551, %v2545
        %v3074 = vpack.c.b16 %v2558, %v2552
        %v3075 = vpack.c.b16 %v2559, %v2553
        %v3076 = vpack.c.b16 %v2560, %v2554
        %v3077 = vpack.c.b16 %v2561, %v2555
        %v3078 = vpack.c.b16 %v2562, %v2556
        %v3079 = vpack.c.b16 %v2563, %v2557
        %v3080 = vpack.c.b16 %v2570, %v2564
        %v3081 = vpack.c.b16 %v2571, %v2565
        %v3082 = vpack.c.b16 %v2572, %v2566
        %v3083 = vpack.c.b16 %v2573, %v2567
        %v3084 = vpack.c.b16 %v2574, %v2568
        %v3085 = vpack.c.b16 %v2575, %v2569
        %v3086 = vpack.c.b16 %v2582, %v2576
        %v3087 = vpack.c.b16 %v2583, %v2577
        %v3088 = vpack.c.b16 %v2584, %v2578
        %v3089 = vpack.c.b16 %v2585, %v2579
        %v3090 = vpack.c.b16 %v2586, %v2580
        %v3091 = vpack.c.b16 %v2587, %v2581
        %v3092 = vpack.c.b16 %v2594, %v2588
        %v3093 = vpack.c.b16 %v2595, %v2589
        %v3094 = vpack.c.b16 %v2596, %v2590
        %v3095 = vpack.c.b16 %v2597, %v2591
        %v3096 = vpack.c.b16 %v2598, %v2592
        %v3097 = vpack.c.b16 %v2599, %v2593
        %v3098 = vpack.c.b16 %v2606, %v2600
        %v3099 = vpack.c.b16 %v2607, %v2601
        %v3100 = vpack.c.b16 %v2608, %v2602
        %v3101 = vpack.c.b16 %v2609, %v2603
        %v3102 = vpack.c.b16 %v2610, %v2604
        %v3103 = vpack.c.b16 %v2611, %v2605
        %v3104 = vpack.c.b16 %v2618, %v2612
        %v3105 = vpack.c.b16 %v2619, %v2613
        %v3106 = vpack.c.b16 %v2620, %v2614
        %v3107 = vpack.c.b16 %v2621, %v2615
        %v3108 = vpack.c.b16 %v2622, %v2616
        %v3109 = vpack.c.b16 %v2623, %v2617
        %v3110 = vpack.c.b16 %v2630, %v2624
        %v3111 = vpack.c.b16 %v2631, %v2625
        %v3112 = vpack.c.b16 %v2632, %v2626
        %v3113 = vpack.c.b16 %v2633, %v2627
        %v3114 = vpack.c.b16 %v2634, %v2628
        %v3115 = vpack.c.b16 %v2635, %v2629
        %v3116 = vpack.c.b16 %v2642, %v2636
        %v3117 = vpack.c.b16 %v2643, %v2637
        %v3118 = vpack.c.b16 %v2644, %v2638
        %v3119 = vpack.c.b16 %v2645, %v2639
        %v3120 = vpack.c.b16 %v2646, %v2640
        %v3121 = vpack.c.b16 %v2647, %v2641
        %v3122 = vpack.c.b16 %v2654, %v2648
        %v3123 = vpack.c.b16 %v2655, %v2649
        %v3124 = vpack.c.b16 %v2656, %v2650
        %v3125 = vpack.c.b16 %v2657, %v2651
        %v3126 = vpack.c.b16 %v2658, %v2652
        %v3127 = vpack.c.b16 %v2659, %v2653
        %v3128 = vpack.c.b16 %v2666, %v2660
        %v3129 = vpack.c.b16 %v2667, %v2661
        %v3130 = vpack.c.b16 %v2668, %v2662
        %v3131 = vpack.c.b16 %v2669, %v2663
        %v3132 = vpack.c.b16 %v2670, %v2664
        %v3133 = vpack.c.b16 %v2671, %v2665
        %v3134 = vpack.c.b16 %v2678, %v2672
        %v3135 = vpack.c.b16 %v2679, %v2673
        %v3136 = vpack.c.b16 %v2680, %v2674
        %v3137 = vpack.c.b16 %v2681, %v2675
        %v3138 = vpack.c.b16 %v2682, %v2676
        %v3139 = vpack.c.b16 %v2683, %v2677
        %v3140 = vpack.c.b16 %v2690, %v2684
        %v3141 = vpack.c.b16 %v2691, %v2685
        %v3142 = vpack.c.b16 %v2692, %v2686
        %v3143 = vpack.c.b16 %v2693, %v2687
        %v3144 = vpack.c.b16 %v2694, %v2688
        %v3145 = vpack.c.b16 %v2695, %v2689
        %v3146 = vpack.c.b16 %v2702, %v2696
        %v3147 = vpack.c.b16 %v2703, %v2697
        %v3148 = vpack.c.b16 %v2704, %v2698
        %v3149 = vpack.c.b16 %v2705, %v2699
        %v3150 = vpack.c.b16 %v2706, %v2700
        %v3151 = vpack.c.b16 %v2707, %v2701
        %v3152 = vpack.c.b16 %v2714, %v2708
        %v3153 = vpack.c.b16 %v2715, %v2709
        %v3154 = vpack.c.b16 %v2716, %v2710
        %v3155 = vpack.c.b16 %v2717, %v2711
        %v3156 = vpack.c.b16 %v2718, %v2712
        %v3157 = vpack.c.b16 %v2719, %v2713
        %v3158 = vpack.c.b16 %v2726, %v2720
        %v3159 = vpack.c.b16 %v2727, %v2721
        %v3160 = vpack.c.b16 %v2728, %v2722
        %v3161 = vpack.c.b16 %v2729, %v2723
        %v3162 = vpack.c.b16 %v2730, %v2724
        %v3163 = vpack.c.b16 %v2731, %v2725
        %v3164 = vpack.c.b16 %v2738, %v2732
        %v3165 = vpack.c.b16 %v2739, %v2733
        %v3166 = vpack.c.b16 %v2740, %v2734
        %v3167 = vpack.c.b16 %v2741, %v2735
        %v3168 = vpack.c.b16 %v2742, %v2736
        %v3169 = vpack.c.b16 %v2743, %v2737
        %v3170 = vpack.c.b16 %v2750, %v2744
        %v3171 = vpack.c.b16 %v2751, %v2745
        %v3172 = vpack.c.b16 %v2752, %v2746
        %v3173 = vpack.c.b16 %v2753, %v2747
        %v3174 = vpack.c.b16 %v2754, %v2748
        %v3175 = vpack.c.b16 %v2755, %v2749
        %v3176 = vpack.c.b16 %v2762, %v2756
        %v3177 = vpack.c.b16 %v2763, %v2757
        %v3178 = vpack.c.b16 %v2764, %v2758
        %v3179 = vpack.c.b16 %v2765, %v2759
        %v3180 = vpack.c.b16 %v2766, %v2760
        %v3181 = vpack.c.b16 %v2767, %v2761
        %v3182 = vpack.c.b16 %v2774, %v2768
        %v3183 = vpack.c.b16 %v2775, %v2769
        %v3184 = vpack.c.b16 %v2776, %v2770
        %v3185 = vpack.c.b16 %v2777, %v2771
        %v3186 = vpack.c.b16 %v2778, %v2772
        %v3187 = vpack.c.b16 %v2779, %v2773
        %v3188 = vpack.c.b16 %v2786, %v2780
        %v3189 = vpack.c.b16 %v2787, %v2781
        %v3190 = vpack.c.b16 %v2788, %v2782
        %v3191 = vpack.c.b16 %v2789, %v2783
        %v3192 = vpack.c.b16 %v2790, %v2784
        %v3193 = vpack.c.b16 %v2791, %v2785
        %v3194 = vpack.c.b16 %v2798, %v2792
        %v3195 = vpack.c.b16 %v2799, %v2793
        %v3196 = vpack.c.b16 %v2800, %v2794
        %v3197 = vpack.c.b16 %v2801, %v2795
        %v3198 = vpack.c.b16 %v2802, %v2796
        %v3199 = vpack.c.b16 %v2803, %v2797
        %v3200 = vpack.c.b16 %v2810, %v2804
        %v3201 = vpack.c.b16 %v2811, %v2805
        %v3202 = vpack.c.b16 %v2812, %v2806
        %v3203 = vpack.c.b16 %v2813, %v2807
        %v3204 = vpack.c.b16 %v2814, %v2808
        %v3205 = vpack.c.b16 %v2815, %v2809
        %v3206 = vpack.c.b16 %v2822, %v2816
        %v3207 = vpack.c.b16 %v2823, %v2817
        %v3208 = vpack.c.b16 %v2824, %v2818
        %v3209 = vpack.c.b16 %v2825, %v2819
        %v3210 = vpack.c.b16 %v2826, %v2820
        %v3211 = vpack.c.b16 %v2827, %v2821
        %v3212 = vpack.c.b16 %v2834, %v2828
        %v3213 = vpack.c.b16 %v2835, %v2829
        %v3214 = vpack.c.b16 %v2836, %v2830
        %v3215 = vpack.c.b16 %v2837, %v2831
        %v3216 = vpack.c.b16 %v2838, %v2832
        %v3217 = vpack.c.b16 %v2839, %v2833
        %v3218 = vpack.c.b16 %v2846, %v2840
        %v3219 = vpack.c.b16 %v2847, %v2841
        %v3220 = vpack.c.b16 %v2848, %v2842
        %v3221 = vpack.c.b16 %v2849, %v2843
        %v3222 = vpack.c.b16 %v2850, %v2844
        %v3223 = vpack.c.b16 %v2851, %v2845
        %v3224 = vpack.c.b16 %v2858, %v2852
        %v3225 = vpack.c.b16 %v2859, %v2853
        %v3226 = vpack.c.b16 %v2860, %v2854
        %v3227 = vpack.c.b16 %v2861, %v2855
        %v3228 = vpack.c.b16 %v2862, %v2856
        %v3229 = vpack.c.b16 %v2863, %v2857
        %v3230 = vpack.c.b16 %v2870, %v2864
        %v3231 = vpack.c.b16 %v2871, %v2865
        %v3232 = vpack.c.b16 %v2872, %v2866
        %v3233 = vpack.c.b16 %v2873, %v2867
        %v3234 = vpack.c.b16 %v2874, %v2868
        %v3235 = vpack.c.b16 %v2875, %v2869
        %v3236 = vpack.c.b16 %v2882, %v2876
        %v3237 = vpack.c.b16 %v2883, %v2877
        %v3238 = vpack.c.b16 %v2884, %v2878
        %v3239 = vpack.c.b16 %v2885, %v2879
        %v3240 = vpack.c.b16 %v2886, %v2880
        %v3241 = vpack.c.b16 %v2887, %v2881
        %v3242 = vpack.c.b16 %v2894, %v2888
        %v3243 = vpack.c.b16 %v2895, %v2889
        %v3244 = vpack.c.b16 %v2896, %v2890
        %v3245 = vpack.c.b16 %v2897, %v2891
        %v3246 = vpack.c.b16 %v2898, %v2892
        %v3247 = vpack.c.b16 %v2899, %v2893
        %v3248 = vpack.c.b16 %v2906, %v2900
        %v3249 = vpack.c.b16 %v2907, %v2901
        %v3250 = vpack.c.b16 %v2908, %v2902
        %v3251 = vpack.c.b16 %v2909, %v2903
        %v3252 = vpack.c.b16 %v2910, %v2904
        %v3253 = vpack.c.b16 %v2911, %v2905
        %v3254 = vpack.c.b16 %v2918, %v2912
        %v3255 = vpack.c.b16 %v2919, %v2913
        %v3256 = vpack.c.b16 %v2920, %v2914
        %v3257 = vpack.c.b16 %v2921, %v2915
        %v3258 = vpack.c.b16 %v2922, %v2916
        %v3259 = vpack.c.b16 %v2923, %v2917
        %v3260 = vpack.c.b16 %v2930, %v2924
        %v3261 = vpack.c.b16 %v2931, %v2925
        %v3262 = vpack.c.b16 %v2932, %v2926
        %v3263 = vpack.c.b16 %v2933, %v2927
        %v3264 = vpack.c.b16 %v2934, %v2928
        %v3265 = vpack.c.b16 %v2935, %v2929
        %v3266 = vpack.c.b16 %v2942, %v2936
        %v3267 = vpack.c.b16 %v2943, %v2937
        %v3268 = vpack.c.b16 %v2944, %v2938
        %v3269 = vpack.c.b16 %v2945, %v2939
        %v3270 = vpack.c.b16 %v2946, %v2940
        %v3271 = vpack.c.b16 %v2947, %v2941
        %v3272 = vpack.c.b16 %v2954, %v2948
        %v3273 = vpack.c.b16 %v2955, %v2949
        %v3274 = vpack.c.b16 %v2956, %v2950
        %v3275 = vpack.c.b16 %v2957, %v2951
        %v3276 = vpack.c.b16 %v2958, %v2952
        %v3277 = vpack.c.b16 %v2959, %v2953
        %v3278 = vpack.c.b16 %v2966, %v2960
        %v3279 = vpack.c.b16 %v2967, %v2961
        %v3280 = vpack.c.b16 %v2968, %v2962
        %v3281 = vpack.c.b16 %v2969, %v2963
        %v3282 = vpack.c.b16 %v2970, %v2964
        %v3283 = vpack.c.b16 %v2971, %v2965
        %v3284 = vpack.c.b16 %v2978, %v2972
        %v3285 = vpack.c.b16 %v2979, %v2973
        %v3286 = vpack.c.b16 %v2980, %v2974
        %v3287 = vpack.c.b16 %v2981, %v2975
        %v3288 = vpack.c.b16 %v2982, %v2976
        %v3289 = vpack.c.b16 %v2983, %v2977
        %v3290 = vpack.c.b16 %v2990, %v2984
        %v3291 = vpack.c.b16 %v2991, %v2985
        %v3292 = vpack.c.b16 %v2992, %v2986
        %v3293 = vpack.c.b16 %v2993, %v2987
        %v3294 = vpack.c.b16 %v2994, %v2988
        %v3295 = vpack.c.b16 %v2995, %v2989
        %v3296 = vpack.c.b16 %v3002, %v2996
        %v3297 = vpack.c.b16 %v3003, %v2997
        %v3298 = vpack.c.b16 %v3004, %v2998
        %v3299 = vpack.c.b16 %v3005, %v2999
        %v3300 = vpack.c.b16 %v3006, %v3000
        %v3301 = vpack.c.b16 %v3007, %v3001
        %v3302 = vpack.c.b16 %v3014, %v3008
        %v3303 = vpack.c.b16 %v3015, %v3009
        %v3304 = vpack.c.b16 %v3016, %v3010
        %v3305 = vpack.c.b16 %v3017, %v3011
        %v3306 = vpack.c.b16 %v3018, %v3012
        %v3307 = vpack.c.b16 %v3019, %v3013
        %3596 = vmatprep.subr.bf16.mxu0 %v3021
        %3597 = vmatpush1.bf16.msra.mxu0 %v3020
        %3598 = vmatprep.subr.bf16.mxu0 %v3027
        %3599 = vmatpush1.bf16.msra.mxu0 %v3026
        %3600 = vmatprep.subr.bf16.mxu0 %v3033
        %3601 = vmatpush1.bf16.msra.mxu0 %v3032
        %3602 = vmatprep.subr.bf16.mxu0 %v3039
        %3603 = vmatpush1.bf16.msra.mxu0 %v3038
        %3604 = vmatprep.subr.bf16.mxu0 %v3045
        %3605 = vmatpush1.bf16.msra.mxu0 %v3044
        %3606 = vmatprep.subr.bf16.mxu0 %v3051
        %3607 = vmatpush1.bf16.msra.mxu0 %v3050
        %3608 = vmatprep.subr.bf16.mxu0 %v3057
        %3609 = vmatpush1.bf16.msra.mxu0 %v3056
        %3610 = vmatprep.subr.bf16.mxu0 %v3063
        %3611 = vmatpush1.bf16.msra.mxu0 %v3062
        %3612 = vmatprep.subr.bf16.mxu0 %v3069
        %3613 = vmatpush1.bf16.msra.mxu0 %v3068
        %3614 = vmatprep.subr.bf16.mxu0 %v3075
        %3615 = vmatpush1.bf16.msra.mxu0 %v3074
        %3616 = vmatprep.subr.bf16.mxu0 %v3081
        %3617 = vmatpush1.bf16.msra.mxu0 %v3080
        %3618 = vmatprep.subr.bf16.mxu0 %v3087
        %3619 = vmatpush1.bf16.msra.mxu0 %v3086
        %3620 = vmatprep.subr.bf16.mxu0 %v3093
        %3621 = vmatpush1.bf16.msra.mxu0 %v3092
        %3622 = vmatprep.subr.bf16.mxu0 %v3099
        %3623 = vmatpush1.bf16.msra.mxu0 %v3098
        %3624 = vmatprep.subr.bf16.mxu0 %v3105
        %3625 = vmatpush1.bf16.msra.mxu0 %v3104
        %3626 = vmatprep.subr.bf16.mxu0 %v3111
        %3627 = vmatpush1.bf16.msra.mxu0 %v3110
        %3628 = vmatprep.mubr.bf16.mxu0 %v1789
        %3629 = vmatmul.mubr.bf16.gmra.mrb[0].mxu0 %v1788
        %v3630 = vpop.f32.mrb[0].mxu0
        %v3631 = vadd.f32 %v2129, %v3630
        %v3632 = vpop.f32.mrb[0].mxu0
        %v3633 = vadd.f32 %v2133, %v3632
        %v3634 = vpop.f32.mrb[0].mxu0
        %v3635 = vadd.f32 %v2129, %v3634
        %v3636 = vpop.f32.mrb[0].mxu0
        %v3637 = vadd.f32 %v2133, %v3636
        %3638 = vmatprep.mubr.bf16.mxu0 %v1795
        %3639 = vmatmul.mubr.bf16.gmra.mrb[0].mxu0 %v1794
        %v3640 = vpop.f32.mrb[0].mxu0
        %v3641 = vadd.f32 %v2129, %v3640
        %v3642 = vpop.f32.mrb[0].mxu0
        %v3643 = vadd.f32 %v2133, %v3642
        %v3644 = vpop.f32.mrb[0].mxu0
        %v3645 = vadd.f32 %v2129, %v3644
        %v3646 = vpop.f32.mrb[0].mxu0
        %v3647 = vadd.f32 %v2133, %v3646
        %3648 = vmatprep.mubr.bf16.mxu0 %v1801
        %3649 = vmatmul.mubr.bf16.gmra.mrb[0].mxu0 %v1800
        %v3650 = vpop.f32.mrb[0].mxu0
        %v3651 = vadd.f32 %v2129, %v3650
        %v3652 = vpop.f32.mrb[0].mxu0
        %v3653 = vadd.f32 %v2133, %v3652
        %v3654 = vpop.f32.mrb[0].mxu0
        %v3655 = vadd.f32 %v2129, %v3654
        %v3656 = vpop.f32.mrb[0].mxu0
        %v3657 = vadd.f32 %v2133, %v3656
        %3658 = vmatprep.mubr.bf16.mxu0 %v1807
        %3659 = vmatmul.mubr.bf16.gmra.mrb[0].mxu0 %v1806
        %v3660 = vpop.f32.mrb[0].mxu0
        %v3661 = vadd.f32 %v2129, %v3660
        %v3662 = vpop.f32.mrb[0].mxu0
        %v3663 = vadd.f32 %v2133, %v3662
        %v3664 = vpop.f32.mrb[0].mxu0
        %v3665 = vadd.f32 %v2129, %v3664
        %v3666 = vpop.f32.mrb[0].mxu0
        %v3667 = vadd.f32 %v2133, %v3666
        %3668 = vmatprep.mubr.bf16.mxu0 %v1813
        %3669 = vmatmul.mubr.bf16.gmra.mrb[0].mxu0 %v1812
        %v3670 = vpop.f32.mrb[0].mxu0
        %v3671 = vadd.f32 %v2129, %v3670
        %v3672 = vpop.f32.mrb[0].mxu0
        %v3673 = vadd.f32 %v2133, %v3672
        %v3674 = vpop.f32.mrb[0].mxu0
        %v3675 = vadd.f32 %v2129, %v3674
        %v3676 = vpop.f32.mrb[0].mxu0
        %v3677 = vadd.f32 %v2133, %v3676
        %3678 = vmatprep.mubr.bf16.mxu0 %v1819
        %3679 = vmatmul.mubr.bf16.gmra.mrb[0].mxu0 %v1818
        %v3680 = vpop.f32.mrb[0].mxu0
        %v3681 = vadd.f32 %v2129, %v3680
        %v3682 = vpop.f32.mrb[0].mxu0
        %v3683 = vadd.f32 %v2133, %v3682
        %v3684 = vpop.f32.mrb[0].mxu0
        %v3685 = vadd.f32 %v2129, %v3684
        %v3686 = vpop.f32.mrb[0].mxu0
        %v3687 = vadd.f32 %v2133, %v3686
        %3688 = vmatprep.mubr.bf16.mxu0 %v1825
        %3689 = vmatmul.mubr.bf16.gmra.mrb[0].mxu0 %v1824
        %v3690 = vpop.f32.mrb[0].mxu0
        %v3691 = vadd.f32 %v2129, %v3690
        %v3692 = vpop.f32.mrb[0].mxu0
        %v3693 = vadd.f32 %v2133, %v3692
        %v3694 = vpop.f32.mrb[0].mxu0
        %v3695 = vadd.f32 %v2129, %v3694
        %v3696 = vpop.f32.mrb[0].mxu0
        %v3697 = vadd.f32 %v2133, %v3696
        %3698 = vmatprep.mubr.bf16.mxu0 %v1831
        %3699 = vmatmul.mubr.bf16.gmra.mrb[0].mxu0 %v1830
        %v3700 = vpop.f32.mrb[0].mxu0
        %v3701 = vadd.f32 %v2129, %v3700
        %v3702 = vpop.f32.mrb[0].mxu0
        %v3703 = vadd.f32 %v2133, %v3702
        %v3704 = vpop.f32.mrb[0].mxu0
        %v3705 = vadd.f32 %v2129, %v3704
        %v3706 = vpop.f32.mrb[0].mxu0
        %v3707 = vadd.f32 %v2133, %v3706
        %3708 = vdwg.mxu0
        %3709 = vmatprep.subr.bf16.mxu0 %v3117
        %3710 = vmatpush1.bf16.msra.mxu0 %v3116
        %3711 = vmatprep.subr.bf16.mxu0 %v3123
        %3712 = vmatpush1.bf16.msra.mxu0 %v3122
        %3713 = vmatprep.subr.bf16.mxu0 %v3129
        %3714 = vmatpush1.bf16.msra.mxu0 %v3128
        %3715 = vmatprep.subr.bf16.mxu0 %v3135
        %3716 = vmatpush1.bf16.msra.mxu0 %v3134
        %3717 = vmatprep.subr.bf16.mxu0 %v3141
        %3718 = vmatpush1.bf16.msra.mxu0 %v3140
        %3719 = vmatprep.subr.bf16.mxu0 %v3147
        %3720 = vmatpush1.bf16.msra.mxu0 %v3146
        %3721 = vmatprep.subr.bf16.mxu0 %v3153
        %3722 = vmatpush1.bf16.msra.mxu0 %v3152
        %3723 = vmatprep.subr.bf16.mxu0 %v3159
        %3724 = vmatpush1.bf16.msra.mxu0 %v3158
        %3725 = vmatprep.subr.bf16.mxu0 %v3165
        %3726 = vmatpush1.bf16.msra.mxu0 %v3164
        %3727 = vmatprep.subr.bf16.mxu0 %v3171
        %3728 = vmatpush1.bf16.msra.mxu0 %v3170
        %3729 = vmatprep.subr.bf16.mxu0 %v3177
        %3730 = vmatpush1.bf16.msra.mxu0 %v3176
        %3731 = vmatprep.subr.bf16.mxu0 %v3183
        %3732 = vmatpush1.bf16.msra.mxu0 %v3182
        %3733 = vmatprep.subr.bf16.mxu0 %v3189
        %3734 = vmatpush1.bf16.msra.mxu0 %v3188
        %3735 = vmatprep.subr.bf16.mxu0 %v3195
        %3736 = vmatpush1.bf16.msra.mxu0 %v3194
        %3737 = vmatprep.subr.bf16.mxu0 %v3201
        %3738 = vmatpush1.bf16.msra.mxu0 %v3200
        %3739 = vmatprep.subr.bf16.mxu0 %v3207
        %3740 = vmatpush1.bf16.msra.mxu0 %v3206
        %3741 = vmatprep.mubr.bf16.mxu0 %v1791
        %3742 = vmatmul.mubr.bf16.gmra.mrb[0].mxu0 %v1790
        %v3743 = vpop.f32.mrb[0].mxu0
        %v3744 = vadd.f32 %v3631, %v3743
        %v3745 = vpop.f32.mrb[0].mxu0
        %v3746 = vadd.f32 %v3633, %v3745
        %v3747 = vpop.f32.mrb[0].mxu0
        %v3748 = vadd.f32 %v3635, %v3747
        %v3749 = vpop.f32.mrb[0].mxu0
        %v3750 = vadd.f32 %v3637, %v3749
        %3751 = vmatprep.mubr.bf16.mxu0 %v1797
        %3752 = vmatmul.mubr.bf16.gmra.mrb[0].mxu0 %v1796
        %v3753 = vpop.f32.mrb[0].mxu0
        %v3754 = vadd.f32 %v3641, %v3753
        %v3755 = vpop.f32.mrb[0].mxu0
        %v3756 = vadd.f32 %v3643, %v3755
        %v3757 = vpop.f32.mrb[0].mxu0
        %v3758 = vadd.f32 %v3645, %v3757
        %v3759 = vpop.f32.mrb[0].mxu0
        %v3760 = vadd.f32 %v3647, %v3759
        %3761 = vmatprep.mubr.bf16.mxu0 %v1803
        %3762 = vmatmul.mubr.bf16.gmra.mrb[0].mxu0 %v1802
        %v3763 = vpop.f32.mrb[0].mxu0
        %v3764 = vadd.f32 %v3651, %v3763
        %v3765 = vpop.f32.mrb[0].mxu0
        %v3766 = vadd.f32 %v3653, %v3765
        %v3767 = vpop.f32.mrb[0].mxu0
        %v3768 = vadd.f32 %v3655, %v3767
        %v3769 = vpop.f32.mrb[0].mxu0
        %v3770 = vadd.f32 %v3657, %v3769
        %3771 = vmatprep.mubr.bf16.mxu0 %v1809
        %3772 = vmatmul.mubr.bf16.gmra.mrb[0].mxu0 %v1808
        %v3773 = vpop.f32.mrb[0].mxu0
        %v3774 = vadd.f32 %v3661, %v3773
        %v3775 = vpop.f32.mrb[0].mxu0
        %v3776 = vadd.f32 %v3663, %v3775
        %v3777 = vpop.f32.mrb[0].mxu0
        %v3778 = vadd.f32 %v3665, %v3777
        %v3779 = vpop.f32.mrb[0].mxu0
        %v3780 = vadd.f32 %v3667, %v3779
        %3781 = vmatprep.mubr.bf16.mxu0 %v1815
        %3782 = vmatmul.mubr.bf16.gmra.mrb[0].mxu0 %v1814
        %v3783 = vpop.f32.mrb[0].mxu0
        %v3784 = vadd.f32 %v3671, %v3783
        %v3785 = vpop.f32.mrb[0].mxu0
        %v3786 = vadd.f32 %v3673, %v3785
        %v3787 = vpop.f32.mrb[0].mxu0
        %v3788 = vadd.f32 %v3675, %v3787
        %v3789 = vpop.f32.mrb[0].mxu0
        %v3790 = vadd.f32 %v3677, %v3789
        %3791 = vmatprep.mubr.bf16.mxu0 %v1821
        %3792 = vmatmul.mubr.bf16.gmra.mrb[0].mxu0 %v1820
        %v3793 = vpop.f32.mrb[0].mxu0
        %v3794 = vadd.f32 %v3681, %v3793
        %v3795 = vpop.f32.mrb[0].mxu0
        %v3796 = vadd.f32 %v3683, %v3795
        %v3797 = vpop.f32.mrb[0].mxu0
        %v3798 = vadd.f32 %v3685, %v3797
        %v3799 = vpop.f32.mrb[0].mxu0
        %v3800 = vadd.f32 %v3687, %v3799
        %3801 = vmatprep.mubr.bf16.mxu0 %v1827
        %3802 = vmatmul.mubr.bf16.gmra.mrb[0].mxu0 %v1826
        %v3803 = vpop.f32.mrb[0].mxu0
        %v3804 = vadd.f32 %v3691, %v3803
        %v3805 = vpop.f32.mrb[0].mxu0
        %v3806 = vadd.f32 %v3693, %v3805
        %v3807 = vpop.f32.mrb[0].mxu0
        %v3808 = vadd.f32 %v3695, %v3807
        %v3809 = vpop.f32.mrb[0].mxu0
        %v3810 = vadd.f32 %v3697, %v3809
        %3811 = vmatprep.mubr.bf16.mxu0 %v1833
        %3812 = vmatmul.mubr.bf16.gmra.mrb[0].mxu0 %v1832
        %v3813 = vpop.f32.mrb[0].mxu0
        %v3814 = vadd.f32 %v3701, %v3813
        %v3815 = vpop.f32.mrb[0].mxu0
        %v3816 = vadd.f32 %v3703, %v3815
        %v3817 = vpop.f32.mrb[0].mxu0
        %v3818 = vadd.f32 %v3705, %v3817
        %v3819 = vpop.f32.mrb[0].mxu0
        %v3820 = vadd.f32 %v3707, %v3819
        %3821 = vdwg.mxu0
        %3822 = vmatprep.subr.bf16.mxu0 %v3213
        %3823 = vmatpush1.bf16.msra.mxu0 %v3212
        %3824 = vmatprep.subr.bf16.mxu0 %v3219
        %3825 = vmatpush1.bf16.msra.mxu0 %v3218
        %3826 = vmatprep.subr.bf16.mxu0 %v3225
        %3827 = vmatpush1.bf16.msra.mxu0 %v3224
        %3828 = vmatprep.subr.bf16.mxu0 %v3231
        %3829 = vmatpush1.bf16.msra.mxu0 %v3230
        %3830 = vmatprep.subr.bf16.mxu0 %v3237
        %3831 = vmatpush1.bf16.msra.mxu0 %v3236
        %3832 = vmatprep.subr.bf16.mxu0 %v3243
        %3833 = vmatpush1.bf16.msra.mxu0 %v3242
        %3834 = vmatprep.subr.bf16.mxu0 %v3249
        %3835 = vmatpush1.bf16.msra.mxu0 %v3248
        %3836 = vmatprep.subr.bf16.mxu0 %v3255
        %3837 = vmatpush1.bf16.msra.mxu0 %v3254
        %3838 = vmatprep.subr.bf16.mxu0 %v3261
        %3839 = vmatpush1.bf16.msra.mxu0 %v3260
        %3840 = vmatprep.subr.bf16.mxu0 %v3267
        %3841 = vmatpush1.bf16.msra.mxu0 %v3266
        %3842 = vmatprep.subr.bf16.mxu0 %v3273
        %3843 = vmatpush1.bf16.msra.mxu0 %v3272
        %3844 = vmatprep.subr.bf16.mxu0 %v3279
        %3845 = vmatpush1.bf16.msra.mxu0 %v3278
        %3846 = vmatprep.subr.bf16.mxu0 %v3285
        %3847 = vmatpush1.bf16.msra.mxu0 %v3284
        %3848 = vmatprep.subr.bf16.mxu0 %v3291
        %3849 = vmatpush1.bf16.msra.mxu0 %v3290
        %3850 = vmatprep.subr.bf16.mxu0 %v3297
        %3851 = vmatpush1.bf16.msra.mxu0 %v3296
        %3852 = vmatprep.subr.bf16.mxu0 %v3303
        %3853 = vmatpush1.bf16.msra.mxu0 %v3302
        %3854 = vmatprep.mubr.bf16.mxu0 %v1793
        %3855 = vmatmul.mubr.bf16.gmra.mrb[0].mxu0 %v1792
        %v3856 = vpop.f32.mrb[0].mxu0
        %v3857 = vadd.f32 %v3744, %v3856
        %v3858 = vpop.f32.mrb[0].mxu0
        %v3859 = vadd.f32 %v3746, %v3858
        %v3860 = vpop.f32.mrb[0].mxu0
        %v3861 = vadd.f32 %v3748, %v3860
        %v3862 = vpop.f32.mrb[0].mxu0
        %v3863 = vadd.f32 %v3750, %v3862
        %3864 = vmatprep.mubr.bf16.mxu0 %v1799
        %3865 = vmatmul.mubr.bf16.gmra.mrb[0].mxu0 %v1798
        %v3866 = vpop.f32.mrb[0].mxu0
        %v3867 = vadd.f32 %v3754, %v3866
        %v3868 = vpop.f32.mrb[0].mxu0
        %v3869 = vadd.f32 %v3756, %v3868
        %v3870 = vpop.f32.mrb[0].mxu0
        %v3871 = vadd.f32 %v3758, %v3870
        %v3872 = vpop.f32.mrb[0].mxu0
        %v3873 = vadd.f32 %v3760, %v3872
        %3874 = vmatprep.mubr.bf16.mxu0 %v1805
        %3875 = vmatmul.mubr.bf16.gmra.mrb[0].mxu0 %v1804
        %v3876 = vpop.f32.mrb[0].mxu0
        %v3877 = vadd.f32 %v3764, %v3876
        %v3878 = vpop.f32.mrb[0].mxu0
        %v3879 = vadd.f32 %v3766, %v3878
        %v3880 = vpop.f32.mrb[0].mxu0
        %v3881 = vadd.f32 %v3768, %v3880
        %v3882 = vpop.f32.mrb[0].mxu0
        %v3883 = vadd.f32 %v3770, %v3882
        %3884 = vmatprep.mubr.bf16.mxu0 %v1811
        %3885 = vmatmul.mubr.bf16.gmra.mrb[0].mxu0 %v1810
        %v3886 = vpop.f32.mrb[0].mxu0
        %v3887 = vadd.f32 %v3774, %v3886
        %v3888 = vpop.f32.mrb[0].mxu0
        %v3889 = vadd.f32 %v3776, %v3888
        %v3890 = vpop.f32.mrb[0].mxu0
        %v3891 = vadd.f32 %v3778, %v3890
        %v3892 = vpop.f32.mrb[0].mxu0
        %v3893 = vadd.f32 %v3780, %v3892
        %3894 = vmatprep.mubr.bf16.mxu0 %v1817
        %3895 = vmatmul.mubr.bf16.gmra.mrb[0].mxu0 %v1816
        %v3896 = vpop.f32.mrb[0].mxu0
        %v3897 = vadd.f32 %v3784, %v3896
        %v3898 = vpop.f32.mrb[0].mxu0
        %v3899 = vadd.f32 %v3786, %v3898
        %v3900 = vpop.f32.mrb[0].mxu0
        %v3901 = vadd.f32 %v3788, %v3900
        %v3902 = vpop.f32.mrb[0].mxu0
        %v3903 = vadd.f32 %v3790, %v3902
        %3904 = vmatprep.mubr.bf16.mxu0 %v1823
        %3905 = vmatmul.mubr.bf16.gmra.mrb[0].mxu0 %v1822
        %v3906 = vpop.f32.mrb[0].mxu0
        %v3907 = vadd.f32 %v3794, %v3906
        %v3908 = vpop.f32.mrb[0].mxu0
        %v3909 = vadd.f32 %v3796, %v3908
        %v3910 = vpop.f32.mrb[0].mxu0
        %v3911 = vadd.f32 %v3798, %v3910
        %v3912 = vpop.f32.mrb[0].mxu0
        %v3913 = vadd.f32 %v3800, %v3912
        %3914 = vmatprep.mubr.bf16.mxu0 %v1829
        %3915 = vmatmul.mubr.bf16.gmra.mrb[0].mxu0 %v1828
        %v3916 = vpop.f32.mrb[0].mxu0
        %v3917 = vadd.f32 %v3804, %v3916
        %v3918 = vpop.f32.mrb[0].mxu0
        %v3919 = vadd.f32 %v3806, %v3918
        %v3920 = vpop.f32.mrb[0].mxu0
        %v3921 = vadd.f32 %v3808, %v3920
        %v3922 = vpop.f32.mrb[0].mxu0
        %v3923 = vadd.f32 %v3810, %v3922
        %3924 = vmatprep.mubr.bf16.mxu0 %v1835
        %3925 = vmatmul.mubr.bf16.gmra.mrb[0].mxu0 %v1834
        %v3926 = vpop.f32.mrb[0].mxu0
        %v3927 = vadd.f32 %v3814, %v3926
        %v3928 = vpop.f32.mrb[0].mxu0
        %v3929 = vadd.f32 %v3816, %v3928
        %v3930 = vpop.f32.mrb[0].mxu0
        %v3931 = vadd.f32 %v3818, %v3930
        %v3932 = vpop.f32.mrb[0].mxu0
        %v3933 = vadd.f32 %v3820, %v3932
        %3934 = vdwg.mxu0
        %3935 = vmatprep.subr.bf16.mxu0 %v3023
        %3936 = vmatpush1.bf16.msra.mxu0 %v3022
        %3937 = vmatprep.subr.bf16.mxu0 %v3029
        %3938 = vmatpush1.bf16.msra.mxu0 %v3028
        %3939 = vmatprep.subr.bf16.mxu0 %v3035
        %3940 = vmatpush1.bf16.msra.mxu0 %v3034
        %3941 = vmatprep.subr.bf16.mxu0 %v3041
        %3942 = vmatpush1.bf16.msra.mxu0 %v3040
        %3943 = vmatprep.subr.bf16.mxu0 %v3047
        %3944 = vmatpush1.bf16.msra.mxu0 %v3046
        %3945 = vmatprep.subr.bf16.mxu0 %v3053
        %3946 = vmatpush1.bf16.msra.mxu0 %v3052
        %3947 = vmatprep.subr.bf16.mxu0 %v3059
        %3948 = vmatpush1.bf16.msra.mxu0 %v3058
        %3949 = vmatprep.subr.bf16.mxu0 %v3065
        %3950 = vmatpush1.bf16.msra.mxu0 %v3064
        %3951 = vmatprep.subr.bf16.mxu0 %v3071
        %3952 = vmatpush1.bf16.msra.mxu0 %v3070
        %3953 = vmatprep.subr.bf16.mxu0 %v3077
        %3954 = vmatpush1.bf16.msra.mxu0 %v3076
        %3955 = vmatprep.subr.bf16.mxu0 %v3083
        %3956 = vmatpush1.bf16.msra.mxu0 %v3082
        %3957 = vmatprep.subr.bf16.mxu0 %v3089
        %3958 = vmatpush1.bf16.msra.mxu0 %v3088
        %3959 = vmatprep.subr.bf16.mxu0 %v3095
        %3960 = vmatpush1.bf16.msra.mxu0 %v3094
        %3961 = vmatprep.subr.bf16.mxu0 %v3101
        %3962 = vmatpush1.bf16.msra.mxu0 %v3100
        %3963 = vmatprep.subr.bf16.mxu0 %v3107
        %3964 = vmatpush1.bf16.msra.mxu0 %v3106
        %3965 = vmatprep.subr.bf16.mxu0 %v3113
        %3966 = vmatpush1.bf16.msra.mxu0 %v3112
        %3967 = vmatprep.mubr.bf16.mxu0 %v1789
        %3968 = vmatmul.mubr.bf16.gmra.mrb[0].mxu0 %v1788
        %v3969 = vpop.f32.mrb[0].mxu0
        %v3970 = vadd.f32 %v2137, %v3969
        %v3971 = vpop.f32.mrb[0].mxu0
        %v3972 = vadd.f32 %v2141, %v3971
        %v3973 = vpop.f32.mrb[0].mxu0
        %v3974 = vadd.f32 %v2137, %v3973
        %v3975 = vpop.f32.mrb[0].mxu0
        %v3976 = vadd.f32 %v2141, %v3975
        %3977 = vmatprep.mubr.bf16.mxu0 %v1795
        %3978 = vmatmul.mubr.bf16.gmra.mrb[0].mxu0 %v1794
        %v3979 = vpop.f32.mrb[0].mxu0
        %v3980 = vadd.f32 %v2137, %v3979
        %v3981 = vpop.f32.mrb[0].mxu0
        %v3982 = vadd.f32 %v2141, %v3981
        %v3983 = vpop.f32.mrb[0].mxu0
        %v3984 = vadd.f32 %v2137, %v3983
        %v3985 = vpop.f32.mrb[0].mxu0
        %v3986 = vadd.f32 %v2141, %v3985
        %3987 = vmatprep.mubr.bf16.mxu0 %v1801
        %3988 = vmatmul.mubr.bf16.gmra.mrb[0].mxu0 %v1800
        %v3989 = vpop.f32.mrb[0].mxu0
        %v3990 = vadd.f32 %v2137, %v3989
        %v3991 = vpop.f32.mrb[0].mxu0
        %v3992 = vadd.f32 %v2141, %v3991
        %v3993 = vpop.f32.mrb[0].mxu0
        %v3994 = vadd.f32 %v2137, %v3993
        %v3995 = vpop.f32.mrb[0].mxu0
        %v3996 = vadd.f32 %v2141, %v3995
        %3997 = vmatprep.mubr.bf16.mxu0 %v1807
        %3998 = vmatmul.mubr.bf16.gmra.mrb[0].mxu0 %v1806
        %v3999 = vpop.f32.mrb[0].mxu0
        %v4000 = vadd.f32 %v2137, %v3999
        %v4001 = vpop.f32.mrb[0].mxu0
        %v4002 = vadd.f32 %v2141, %v4001
        %v4003 = vpop.f32.mrb[0].mxu0
        %v4004 = vadd.f32 %v2137, %v4003
        %v4005 = vpop.f32.mrb[0].mxu0
        %v4006 = vadd.f32 %v2141, %v4005
        %4007 = vmatprep.mubr.bf16.mxu0 %v1813
        %4008 = vmatmul.mubr.bf16.gmra.mrb[0].mxu0 %v1812
        %v4009 = vpop.f32.mrb[0].mxu0
        %v4010 = vadd.f32 %v2137, %v4009
        %v4011 = vpop.f32.mrb[0].mxu0
        %v4012 = vadd.f32 %v2141, %v4011
        %v4013 = vpop.f32.mrb[0].mxu0
        %v4014 = vadd.f32 %v2137, %v4013
        %v4015 = vpop.f32.mrb[0].mxu0
        %v4016 = vadd.f32 %v2141, %v4015
        %4017 = vmatprep.mubr.bf16.mxu0 %v1819
        %4018 = vmatmul.mubr.bf16.gmra.mrb[0].mxu0 %v1818
        %v4019 = vpop.f32.mrb[0].mxu0
        %v4020 = vadd.f32 %v2137, %v4019
        %v4021 = vpop.f32.mrb[0].mxu0
        %v4022 = vadd.f32 %v2141, %v4021
        %v4023 = vpop.f32.mrb[0].mxu0
        %v4024 = vadd.f32 %v2137, %v4023
        %v4025 = vpop.f32.mrb[0].mxu0
        %v4026 = vadd.f32 %v2141, %v4025
        %4027 = vmatprep.mubr.bf16.mxu0 %v1825
        %4028 = vmatmul.mubr.bf16.gmra.mrb[0].mxu0 %v1824
        %v4029 = vpop.f32.mrb[0].mxu0
        %v4030 = vadd.f32 %v2137, %v4029
        %v4031 = vpop.f32.mrb[0].mxu0
        %v4032 = vadd.f32 %v2141, %v4031
        %v4033 = vpop.f32.mrb[0].mxu0
        %v4034 = vadd.f32 %v2137, %v4033
        %v4035 = vpop.f32.mrb[0].mxu0
        %v4036 = vadd.f32 %v2141, %v4035
        %4037 = vmatprep.mubr.bf16.mxu0 %v1831
        %4038 = vmatmul.mubr.bf16.gmra.mrb[0].mxu0 %v1830
        %v4039 = vpop.f32.mrb[0].mxu0
        %v4040 = vadd.f32 %v2137, %v4039
        %v4041 = vpop.f32.mrb[0].mxu0
        %v4042 = vadd.f32 %v2141, %v4041
        %v4043 = vpop.f32.mrb[0].mxu0
        %v4044 = vadd.f32 %v2137, %v4043
        %v4045 = vpop.f32.mrb[0].mxu0
        %v4046 = vadd.f32 %v2141, %v4045
        %4047 = vdwg.mxu0
        %4048 = vmatprep.subr.bf16.mxu0 %v3119
        %4049 = vmatpush1.bf16.msra.mxu0 %v3118
        %4050 = vmatprep.subr.bf16.mxu0 %v3125
        %4051 = vmatpush1.bf16.msra.mxu0 %v3124
        %4052 = vmatprep.subr.bf16.mxu0 %v3131
        %4053 = vmatpush1.bf16.msra.mxu0 %v3130
        %4054 = vmatprep.subr.bf16.mxu0 %v3137
        %4055 = vmatpush1.bf16.msra.mxu0 %v3136
        %4056 = vmatprep.subr.bf16.mxu0 %v3143
        %4057 = vmatpush1.bf16.msra.mxu0 %v3142
        %4058 = vmatprep.subr.bf16.mxu0 %v3149
        %4059 = vmatpush1.bf16.msra.mxu0 %v3148
        %4060 = vmatprep.subr.bf16.mxu0 %v3155
        %4061 = vmatpush1.bf16.msra.mxu0 %v3154
        %4062 = vmatprep.subr.bf16.mxu0 %v3161
        %4063 = vmatpush1.bf16.msra.mxu0 %v3160
        %4064 = vmatprep.subr.bf16.mxu0 %v3167
        %4065 = vmatpush1.bf16.msra.mxu0 %v3166
        %4066 = vmatprep.subr.bf16.mxu0 %v3173
        %4067 = vmatpush1.bf16.msra.mxu0 %v3172
        %4068 = vmatprep.subr.bf16.mxu0 %v3179
        %4069 = vmatpush1.bf16.msra.mxu0 %v3178
        %4070 = vmatprep.subr.bf16.mxu0 %v3185
        %4071 = vmatpush1.bf16.msra.mxu0 %v3184
        %4072 = vmatprep.subr.bf16.mxu0 %v3191
        %4073 = vmatpush1.bf16.msra.mxu0 %v3190
        %4074 = vmatprep.subr.bf16.mxu0 %v3197
        %4075 = vmatpush1.bf16.msra.mxu0 %v3196
        %4076 = vmatprep.subr.bf16.mxu0 %v3203
        %4077 = vmatpush1.bf16.msra.mxu0 %v3202
        %4078 = vmatprep.subr.bf16.mxu0 %v3209
        %4079 = vmatpush1.bf16.msra.mxu0 %v3208
        %4080 = vmatprep.mubr.bf16.mxu0 %v1791
        %4081 = vmatmul.mubr.bf16.gmra.mrb[0].mxu0 %v1790
        %v4082 = vpop.f32.mrb[0].mxu0
        %v4083 = vadd.f32 %v3970, %v4082
        %v4084 = vpop.f32.mrb[0].mxu0
        %v4085 = vadd.f32 %v3972, %v4084
        %v4086 = vpop.f32.mrb[0].mxu0
        %v4087 = vadd.f32 %v3974, %v4086
        %v4088 = vpop.f32.mrb[0].mxu0
        %v4089 = vadd.f32 %v3976, %v4088
        %4090 = vmatprep.mubr.bf16.mxu0 %v1797
        %4091 = vmatmul.mubr.bf16.gmra.mrb[0].mxu0 %v1796
        %v4092 = vpop.f32.mrb[0].mxu0
        %v4093 = vadd.f32 %v3980, %v4092
        %v4094 = vpop.f32.mrb[0].mxu0
        %v4095 = vadd.f32 %v3982, %v4094
        %v4096 = vpop.f32.mrb[0].mxu0
        %v4097 = vadd.f32 %v3984, %v4096
        %v4098 = vpop.f32.mrb[0].mxu0
        %v4099 = vadd.f32 %v3986, %v4098
        %4100 = vmatprep.mubr.bf16.mxu0 %v1803
        %4101 = vmatmul.mubr.bf16.gmra.mrb[0].mxu0 %v1802
        %v4102 = vpop.f32.mrb[0].mxu0
        %v4103 = vadd.f32 %v3990, %v4102
        %v4104 = vpop.f32.mrb[0].mxu0
        %v4105 = vadd.f32 %v3992, %v4104
        %v4106 = vpop.f32.mrb[0].mxu0
        %v4107 = vadd.f32 %v3994, %v4106
        %v4108 = vpop.f32.mrb[0].mxu0
        %v4109 = vadd.f32 %v3996, %v4108
        %4110 = vmatprep.mubr.bf16.mxu0 %v1809
        %4111 = vmatmul.mubr.bf16.gmra.mrb[0].mxu0 %v1808
        %v4112 = vpop.f32.mrb[0].mxu0
        %v4113 = vadd.f32 %v4000, %v4112
        %v4114 = vpop.f32.mrb[0].mxu0
        %v4115 = vadd.f32 %v4002, %v4114
        %v4116 = vpop.f32.mrb[0].mxu0
        %v4117 = vadd.f32 %v4004, %v4116
        %v4118 = vpop.f32.mrb[0].mxu0
        %v4119 = vadd.f32 %v4006, %v4118
        %4120 = vmatprep.mubr.bf16.mxu0 %v1815
        %4121 = vmatmul.mubr.bf16.gmra.mrb[0].mxu0 %v1814
        %v4122 = vpop.f32.mrb[0].mxu0
        %v4123 = vadd.f32 %v4010, %v4122
        %v4124 = vpop.f32.mrb[0].mxu0
        %v4125 = vadd.f32 %v4012, %v4124
        %v4126 = vpop.f32.mrb[0].mxu0
        %v4127 = vadd.f32 %v4014, %v4126
        %v4128 = vpop.f32.mrb[0].mxu0
        %v4129 = vadd.f32 %v4016, %v4128
        %4130 = vmatprep.mubr.bf16.mxu0 %v1821
        %4131 = vmatmul.mubr.bf16.gmra.mrb[0].mxu0 %v1820
        %v4132 = vpop.f32.mrb[0].mxu0
        %v4133 = vadd.f32 %v4020, %v4132
        %v4134 = vpop.f32.mrb[0].mxu0
        %v4135 = vadd.f32 %v4022, %v4134
        %v4136 = vpop.f32.mrb[0].mxu0
        %v4137 = vadd.f32 %v4024, %v4136
        %v4138 = vpop.f32.mrb[0].mxu0
        %v4139 = vadd.f32 %v4026, %v4138
        %4140 = vmatprep.mubr.bf16.mxu0 %v1827
        %4141 = vmatmul.mubr.bf16.gmra.mrb[0].mxu0 %v1826
        %v4142 = vpop.f32.mrb[0].mxu0
        %v4143 = vadd.f32 %v4030, %v4142
        %v4144 = vpop.f32.mrb[0].mxu0
        %v4145 = vadd.f32 %v4032, %v4144
        %v4146 = vpop.f32.mrb[0].mxu0
        %v4147 = vadd.f32 %v4034, %v4146
        %v4148 = vpop.f32.mrb[0].mxu0
        %v4149 = vadd.f32 %v4036, %v4148
        %4150 = vmatprep.mubr.bf16.mxu0 %v1833
        %4151 = vmatmul.mubr.bf16.gmra.mrb[0].mxu0 %v1832
        %v4152 = vpop.f32.mrb[0].mxu0
        %v4153 = vadd.f32 %v4040, %v4152
        %v4154 = vpop.f32.mrb[0].mxu0
        %v4155 = vadd.f32 %v4042, %v4154
        %v4156 = vpop.f32.mrb[0].mxu0
        %v4157 = vadd.f32 %v4044, %v4156
        %v4158 = vpop.f32.mrb[0].mxu0
        %v4159 = vadd.f32 %v4046, %v4158
        %4160 = vdwg.mxu0
        %4161 = vmatprep.subr.bf16.mxu0 %v3215
        %4162 = vmatpush1.bf16.msra.mxu0 %v3214
        %4163 = vmatprep.subr.bf16.mxu0 %v3221
        %4164 = vmatpush1.bf16.msra.mxu0 %v3220
        %4165 = vmatprep.subr.bf16.mxu0 %v3227
        %4166 = vmatpush1.bf16.msra.mxu0 %v3226
        %4167 = vmatprep.subr.bf16.mxu0 %v3233
        %4168 = vmatpush1.bf16.msra.mxu0 %v3232
        %4169 = vmatprep.subr.bf16.mxu0 %v3239
        %4170 = vmatpush1.bf16.msra.mxu0 %v3238
        %4171 = vmatprep.subr.bf16.mxu0 %v3245
        %4172 = vmatpush1.bf16.msra.mxu0 %v3244
        %4173 = vmatprep.subr.bf16.mxu0 %v3251
        %4174 = vmatpush1.bf16.msra.mxu0 %v3250
        %4175 = vmatprep.subr.bf16.mxu0 %v3257
        %4176 = vmatpush1.bf16.msra.mxu0 %v3256
        %4177 = vmatprep.subr.bf16.mxu0 %v3263
        %4178 = vmatpush1.bf16.msra.mxu0 %v3262
        %4179 = vmatprep.subr.bf16.mxu0 %v3269
        %4180 = vmatpush1.bf16.msra.mxu0 %v3268
        %4181 = vmatprep.subr.bf16.mxu0 %v3275
        %4182 = vmatpush1.bf16.msra.mxu0 %v3274
        %4183 = vmatprep.subr.bf16.mxu0 %v3281
        %4184 = vmatpush1.bf16.msra.mxu0 %v3280
        %4185 = vmatprep.subr.bf16.mxu0 %v3287
        %4186 = vmatpush1.bf16.msra.mxu0 %v3286
        %4187 = vmatprep.subr.bf16.mxu0 %v3293
        %4188 = vmatpush1.bf16.msra.mxu0 %v3292
        %4189 = vmatprep.subr.bf16.mxu0 %v3299
        %4190 = vmatpush1.bf16.msra.mxu0 %v3298
        %4191 = vmatprep.subr.bf16.mxu0 %v3305
        %4192 = vmatpush1.bf16.msra.mxu0 %v3304
        %4193 = vmatprep.mubr.bf16.mxu0 %v1793
        %4194 = vmatmul.mubr.bf16.gmra.mrb[0].mxu0 %v1792
        %v4195 = vpop.f32.mrb[0].mxu0
        %v4196 = vadd.f32 %v4083, %v4195
        %v4197 = vpop.f32.mrb[0].mxu0
        %v4198 = vadd.f32 %v4085, %v4197
        %v4199 = vpop.f32.mrb[0].mxu0
        %v4200 = vadd.f32 %v4087, %v4199
        %v4201 = vpop.f32.mrb[0].mxu0
        %v4202 = vadd.f32 %v4089, %v4201
        %4203 = vmatprep.mubr.bf16.mxu0 %v1799
        %4204 = vmatmul.mubr.bf16.gmra.mrb[0].mxu0 %v1798
        %v4205 = vpop.f32.mrb[0].mxu0
        %v4206 = vadd.f32 %v4093, %v4205
        %v4207 = vpop.f32.mrb[0].mxu0
        %v4208 = vadd.f32 %v4095, %v4207
        %v4209 = vpop.f32.mrb[0].mxu0
        %v4210 = vadd.f32 %v4097, %v4209
        %v4211 = vpop.f32.mrb[0].mxu0
        %v4212 = vadd.f32 %v4099, %v4211
        %4213 = vmatprep.mubr.bf16.mxu0 %v1805
        %4214 = vmatmul.mubr.bf16.gmra.mrb[0].mxu0 %v1804
        %v4215 = vpop.f32.mrb[0].mxu0
        %v4216 = vadd.f32 %v4103, %v4215
        %v4217 = vpop.f32.mrb[0].mxu0
        %v4218 = vadd.f32 %v4105, %v4217
        %v4219 = vpop.f32.mrb[0].mxu0
        %v4220 = vadd.f32 %v4107, %v4219
        %v4221 = vpop.f32.mrb[0].mxu0
        %v4222 = vadd.f32 %v4109, %v4221
        %4223 = vmatprep.mubr.bf16.mxu0 %v1811
        %4224 = vmatmul.mubr.bf16.gmra.mrb[0].mxu0 %v1810
        %v4225 = vpop.f32.mrb[0].mxu0
        %v4226 = vadd.f32 %v4113, %v4225
        %v4227 = vpop.f32.mrb[0].mxu0
        %v4228 = vadd.f32 %v4115, %v4227
        %v4229 = vpop.f32.mrb[0].mxu0
        %v4230 = vadd.f32 %v4117, %v4229
        %v4231 = vpop.f32.mrb[0].mxu0
        %v4232 = vadd.f32 %v4119, %v4231
        %4233 = vmatprep.mubr.bf16.mxu0 %v1817
        %4234 = vmatmul.mubr.bf16.gmra.mrb[0].mxu0 %v1816
        %v4235 = vpop.f32.mrb[0].mxu0
        %v4236 = vadd.f32 %v4123, %v4235
        %v4237 = vpop.f32.mrb[0].mxu0
        %v4238 = vadd.f32 %v4125, %v4237
        %v4239 = vpop.f32.mrb[0].mxu0
        %v4240 = vadd.f32 %v4127, %v4239
        %v4241 = vpop.f32.mrb[0].mxu0
        %v4242 = vadd.f32 %v4129, %v4241
        %4243 = vmatprep.mubr.bf16.mxu0 %v1823
        %4244 = vmatmul.mubr.bf16.gmra.mrb[0].mxu0 %v1822
        %v4245 = vpop.f32.mrb[0].mxu0
        %v4246 = vadd.f32 %v4133, %v4245
        %v4247 = vpop.f32.mrb[0].mxu0
        %v4248 = vadd.f32 %v4135, %v4247
        %v4249 = vpop.f32.mrb[0].mxu0
        %v4250 = vadd.f32 %v4137, %v4249
        %v4251 = vpop.f32.mrb[0].mxu0
        %v4252 = vadd.f32 %v4139, %v4251
        %4253 = vmatprep.mubr.bf16.mxu0 %v1829
        %4254 = vmatmul.mubr.bf16.gmra.mrb[0].mxu0 %v1828
        %v4255 = vpop.f32.mrb[0].mxu0
        %v4256 = vadd.f32 %v4143, %v4255
        %v4257 = vpop.f32.mrb[0].mxu0
        %v4258 = vadd.f32 %v4145, %v4257
        %v4259 = vpop.f32.mrb[0].mxu0
        %v4260 = vadd.f32 %v4147, %v4259
        %v4261 = vpop.f32.mrb[0].mxu0
        %v4262 = vadd.f32 %v4149, %v4261
        %4263 = vmatprep.mubr.bf16.mxu0 %v1835
        %4264 = vmatmul.mubr.bf16.gmra.mrb[0].mxu0 %v1834
        %v4265 = vpop.f32.mrb[0].mxu0
        %v4266 = vadd.f32 %v4153, %v4265
        %v4267 = vpop.f32.mrb[0].mxu0
        %v4268 = vadd.f32 %v4155, %v4267
        %v4269 = vpop.f32.mrb[0].mxu0
        %v4270 = vadd.f32 %v4157, %v4269
        %v4271 = vpop.f32.mrb[0].mxu0
        %v4272 = vadd.f32 %v4159, %v4271
        %4273 = vdwg.mxu0
        %4274 = vmatprep.subr.bf16.mxu0 %v3025
        %4275 = vmatpush1.bf16.msra.mxu0 %v3024
        %4276 = vmatprep.subr.bf16.mxu0 %v3031
        %4277 = vmatpush1.bf16.msra.mxu0 %v3030
        %4278 = vmatprep.subr.bf16.mxu0 %v3037
        %4279 = vmatpush1.bf16.msra.mxu0 %v3036
        %4280 = vmatprep.subr.bf16.mxu0 %v3043
        %4281 = vmatpush1.bf16.msra.mxu0 %v3042
        %4282 = vmatprep.subr.bf16.mxu0 %v3049
        %4283 = vmatpush1.bf16.msra.mxu0 %v3048
        %4284 = vmatprep.subr.bf16.mxu0 %v3055
        %4285 = vmatpush1.bf16.msra.mxu0 %v3054
        %4286 = vmatprep.subr.bf16.mxu0 %v3061
        %4287 = vmatpush1.bf16.msra.mxu0 %v3060
        %4288 = vmatprep.subr.bf16.mxu0 %v3067
        %4289 = vmatpush1.bf16.msra.mxu0 %v3066
        %4290 = vmatprep.subr.bf16.mxu0 %v3073
        %4291 = vmatpush1.bf16.msra.mxu0 %v3072
        %4292 = vmatprep.subr.bf16.mxu0 %v3079
        %4293 = vmatpush1.bf16.msra.mxu0 %v3078
        %4294 = vmatprep.subr.bf16.mxu0 %v3085
        %4295 = vmatpush1.bf16.msra.mxu0 %v3084
        %4296 = vmatprep.subr.bf16.mxu0 %v3091
        %4297 = vmatpush1.bf16.msra.mxu0 %v3090
        %4298 = vmatprep.subr.bf16.mxu0 %v3097
        %4299 = vmatpush1.bf16.msra.mxu0 %v3096
        %4300 = vmatprep.subr.bf16.mxu0 %v3103
        %4301 = vmatpush1.bf16.msra.mxu0 %v3102
        %4302 = vmatprep.subr.bf16.mxu0 %v3109
        %4303 = vmatpush1.bf16.msra.mxu0 %v3108
        %4304 = vmatprep.subr.bf16.mxu0 %v3115
        %4305 = vmatpush1.bf16.msra.mxu0 %v3114
        %4306 = vmatprep.mubr.bf16.mxu0 %v1789
        %4307 = vmatmul.mubr.bf16.gmra.mrb[0].mxu0 %v1788
        %v4308 = vpop.f32.mrb[0].mxu0
        %v4309 = vadd.f32 %v2145, %v4308
        %v4310 = vpop.f32.mrb[0].mxu0
        %v4311 = vadd.f32 %v2149, %v4310
        %v4312 = vpop.f32.mrb[0].mxu0
        %v4313 = vadd.f32 %v2145, %v4312
        %v4314 = vpop.f32.mrb[0].mxu0
        %v4315 = vadd.f32 %v2149, %v4314
        %4316 = vmatprep.mubr.bf16.mxu0 %v1795
        %4317 = vmatmul.mubr.bf16.gmra.mrb[0].mxu0 %v1794
        %v4318 = vpop.f32.mrb[0].mxu0
        %v4319 = vadd.f32 %v2145, %v4318
        %v4320 = vpop.f32.mrb[0].mxu0
        %v4321 = vadd.f32 %v2149, %v4320
        %v4322 = vpop.f32.mrb[0].mxu0
        %v4323 = vadd.f32 %v2145, %v4322
        %v4324 = vpop.f32.mrb[0].mxu0
        %v4325 = vadd.f32 %v2149, %v4324
        %4326 = vmatprep.mubr.bf16.mxu0 %v1801
        %4327 = vmatmul.mubr.bf16.gmra.mrb[0].mxu0 %v1800
        %v4328 = vpop.f32.mrb[0].mxu0
        %v4329 = vadd.f32 %v2145, %v4328
        %v4330 = vpop.f32.mrb[0].mxu0
        %v4331 = vadd.f32 %v2149, %v4330
        %v4332 = vpop.f32.mrb[0].mxu0
        %v4333 = vadd.f32 %v2145, %v4332
        %v4334 = vpop.f32.mrb[0].mxu0
        %v4335 = vadd.f32 %v2149, %v4334
        %4336 = vmatprep.mubr.bf16.mxu0 %v1807
        %4337 = vmatmul.mubr.bf16.gmra.mrb[0].mxu0 %v1806
        %v4338 = vpop.f32.mrb[0].mxu0
        %v4339 = vadd.f32 %v2145, %v4338
        %v4340 = vpop.f32.mrb[0].mxu0
        %v4341 = vadd.f32 %v2149, %v4340
        %v4342 = vpop.f32.mrb[0].mxu0
        %v4343 = vadd.f32 %v2145, %v4342
        %v4344 = vpop.f32.mrb[0].mxu0
        %v4345 = vadd.f32 %v2149, %v4344
        %4346 = vmatprep.mubr.bf16.mxu0 %v1813
        %4347 = vmatmul.mubr.bf16.gmra.mrb[0].mxu0 %v1812
        %v4348 = vpop.f32.mrb[0].mxu0
        %v4349 = vadd.f32 %v2145, %v4348
        %v4350 = vpop.f32.mrb[0].mxu0
        %v4351 = vadd.f32 %v2149, %v4350
        %v4352 = vpop.f32.mrb[0].mxu0
        %v4353 = vadd.f32 %v2145, %v4352
        %v4354 = vpop.f32.mrb[0].mxu0
        %v4355 = vadd.f32 %v2149, %v4354
        %4356 = vmatprep.mubr.bf16.mxu0 %v1819
        %4357 = vmatmul.mubr.bf16.gmra.mrb[0].mxu0 %v1818
        %v4358 = vpop.f32.mrb[0].mxu0
        %v4359 = vadd.f32 %v2145, %v4358
        %v4360 = vpop.f32.mrb[0].mxu0
        %v4361 = vadd.f32 %v2149, %v4360
        %v4362 = vpop.f32.mrb[0].mxu0
        %v4363 = vadd.f32 %v2145, %v4362
        %v4364 = vpop.f32.mrb[0].mxu0
        %v4365 = vadd.f32 %v2149, %v4364
        %4366 = vmatprep.mubr.bf16.mxu0 %v1825
        %4367 = vmatmul.mubr.bf16.gmra.mrb[0].mxu0 %v1824
        %v4368 = vpop.f32.mrb[0].mxu0
        %v4369 = vadd.f32 %v2145, %v4368
        %v4370 = vpop.f32.mrb[0].mxu0
        %v4371 = vadd.f32 %v2149, %v4370
        %v4372 = vpop.f32.mrb[0].mxu0
        %v4373 = vadd.f32 %v2145, %v4372
        %v4374 = vpop.f32.mrb[0].mxu0
        %v4375 = vadd.f32 %v2149, %v4374
        %4376 = vmatprep.mubr.bf16.mxu0 %v1831
        %4377 = vmatmul.mubr.bf16.gmra.mrb[0].mxu0 %v1830
        %v4378 = vpop.f32.mrb[0].mxu0
        %v4379 = vadd.f32 %v2145, %v4378
        %v4380 = vpop.f32.mrb[0].mxu0
        %v4381 = vadd.f32 %v2149, %v4380
        %v4382 = vpop.f32.mrb[0].mxu0
        %v4383 = vadd.f32 %v2145, %v4382
        %v4384 = vpop.f32.mrb[0].mxu0
        %v4385 = vadd.f32 %v2149, %v4384
        %4386 = vdwg.mxu0
        %4387 = vmatprep.subr.bf16.mxu0 %v3121
        %4388 = vmatpush1.bf16.msra.mxu0 %v3120
        %4389 = vmatprep.subr.bf16.mxu0 %v3127
        %4390 = vmatpush1.bf16.msra.mxu0 %v3126
        %4391 = vmatprep.subr.bf16.mxu0 %v3133
        %4392 = vmatpush1.bf16.msra.mxu0 %v3132
        %4393 = vmatprep.subr.bf16.mxu0 %v3139
        %4394 = vmatpush1.bf16.msra.mxu0 %v3138
        %4395 = vmatprep.subr.bf16.mxu0 %v3145
        %4396 = vmatpush1.bf16.msra.mxu0 %v3144
        %4397 = vmatprep.subr.bf16.mxu0 %v3151
        %4398 = vmatpush1.bf16.msra.mxu0 %v3150
        %4399 = vmatprep.subr.bf16.mxu0 %v3157
        %4400 = vmatpush1.bf16.msra.mxu0 %v3156
        %4401 = vmatprep.subr.bf16.mxu0 %v3163
        %4402 = vmatpush1.bf16.msra.mxu0 %v3162
        %4403 = vmatprep.subr.bf16.mxu0 %v3169
        %4404 = vmatpush1.bf16.msra.mxu0 %v3168
        %4405 = vmatprep.subr.bf16.mxu0 %v3175
        %4406 = vmatpush1.bf16.msra.mxu0 %v3174
        %4407 = vmatprep.subr.bf16.mxu0 %v3181
        %4408 = vmatpush1.bf16.msra.mxu0 %v3180
        %4409 = vmatprep.subr.bf16.mxu0 %v3187
        %4410 = vmatpush1.bf16.msra.mxu0 %v3186
        %4411 = vmatprep.subr.bf16.mxu0 %v3193
        %4412 = vmatpush1.bf16.msra.mxu0 %v3192
        %4413 = vmatprep.subr.bf16.mxu0 %v3199
        %4414 = vmatpush1.bf16.msra.mxu0 %v3198
        %4415 = vmatprep.subr.bf16.mxu0 %v3205
        %4416 = vmatpush1.bf16.msra.mxu0 %v3204
        %4417 = vmatprep.subr.bf16.mxu0 %v3211
        %4418 = vmatpush1.bf16.msra.mxu0 %v3210
        %4419 = vmatprep.mubr.bf16.mxu0 %v1791
        %4420 = vmatmul.mubr.bf16.gmra.mrb[0].mxu0 %v1790
        %v4421 = vpop.f32.mrb[0].mxu0
        %v4422 = vadd.f32 %v4309, %v4421
        %v4423 = vpop.f32.mrb[0].mxu0
        %v4424 = vadd.f32 %v4311, %v4423
        %v4425 = vpop.f32.mrb[0].mxu0
        %v4426 = vadd.f32 %v4313, %v4425
        %v4427 = vpop.f32.mrb[0].mxu0
        %v4428 = vadd.f32 %v4315, %v4427
        %4429 = vmatprep.mubr.bf16.mxu0 %v1797
        %4430 = vmatmul.mubr.bf16.gmra.mrb[0].mxu0 %v1796
        %v4431 = vpop.f32.mrb[0].mxu0
        %v4432 = vadd.f32 %v4319, %v4431
        %v4433 = vpop.f32.mrb[0].mxu0
        %v4434 = vadd.f32 %v4321, %v4433
        %v4435 = vpop.f32.mrb[0].mxu0
        %v4436 = vadd.f32 %v4323, %v4435
        %v4437 = vpop.f32.mrb[0].mxu0
        %v4438 = vadd.f32 %v4325, %v4437
        %4439 = vmatprep.mubr.bf16.mxu0 %v1803
        %4440 = vmatmul.mubr.bf16.gmra.mrb[0].mxu0 %v1802
        %v4441 = vpop.f32.mrb[0].mxu0
        %v4442 = vadd.f32 %v4329, %v4441
        %v4443 = vpop.f32.mrb[0].mxu0
        %v4444 = vadd.f32 %v4331, %v4443
        %v4445 = vpop.f32.mrb[0].mxu0
        %v4446 = vadd.f32 %v4333, %v4445
        %v4447 = vpop.f32.mrb[0].mxu0
        %v4448 = vadd.f32 %v4335, %v4447
        %4449 = vmatprep.mubr.bf16.mxu0 %v1809
        %4450 = vmatmul.mubr.bf16.gmra.mrb[0].mxu0 %v1808
        %v4451 = vpop.f32.mrb[0].mxu0
        %v4452 = vadd.f32 %v4339, %v4451
        %v4453 = vpop.f32.mrb[0].mxu0
        %v4454 = vadd.f32 %v4341, %v4453
        %v4455 = vpop.f32.mrb[0].mxu0
        %v4456 = vadd.f32 %v4343, %v4455
        %v4457 = vpop.f32.mrb[0].mxu0
        %v4458 = vadd.f32 %v4345, %v4457
        %4459 = vmatprep.mubr.bf16.mxu0 %v1815
        %4460 = vmatmul.mubr.bf16.gmra.mrb[0].mxu0 %v1814
        %v4461 = vpop.f32.mrb[0].mxu0
        %v4462 = vadd.f32 %v4349, %v4461
        %v4463 = vpop.f32.mrb[0].mxu0
        %v4464 = vadd.f32 %v4351, %v4463
        %v4465 = vpop.f32.mrb[0].mxu0
        %v4466 = vadd.f32 %v4353, %v4465
        %v4467 = vpop.f32.mrb[0].mxu0
        %v4468 = vadd.f32 %v4355, %v4467
        %4469 = vmatprep.mubr.bf16.mxu0 %v1821
        %4470 = vmatmul.mubr.bf16.gmra.mrb[0].mxu0 %v1820
        %v4471 = vpop.f32.mrb[0].mxu0
        %v4472 = vadd.f32 %v4359, %v4471
        %v4473 = vpop.f32.mrb[0].mxu0
        %v4474 = vadd.f32 %v4361, %v4473
        %v4475 = vpop.f32.mrb[0].mxu0
        %v4476 = vadd.f32 %v4363, %v4475
        %v4477 = vpop.f32.mrb[0].mxu0
        %v4478 = vadd.f32 %v4365, %v4477
        %4479 = vmatprep.mubr.bf16.mxu0 %v1827
        %4480 = vmatmul.mubr.bf16.gmra.mrb[0].mxu0 %v1826
        %v4481 = vpop.f32.mrb[0].mxu0
        %v4482 = vadd.f32 %v4369, %v4481
        %v4483 = vpop.f32.mrb[0].mxu0
        %v4484 = vadd.f32 %v4371, %v4483
        %v4485 = vpop.f32.mrb[0].mxu0
        %v4486 = vadd.f32 %v4373, %v4485
        %v4487 = vpop.f32.mrb[0].mxu0
        %v4488 = vadd.f32 %v4375, %v4487
        %4489 = vmatprep.mubr.bf16.mxu0 %v1833
        %4490 = vmatmul.mubr.bf16.gmra.mrb[0].mxu0 %v1832
        %v4491 = vpop.f32.mrb[0].mxu0
        %v4492 = vadd.f32 %v4379, %v4491
        %v4493 = vpop.f32.mrb[0].mxu0
        %v4494 = vadd.f32 %v4381, %v4493
        %v4495 = vpop.f32.mrb[0].mxu0
        %v4496 = vadd.f32 %v4383, %v4495
        %v4497 = vpop.f32.mrb[0].mxu0
        %v4498 = vadd.f32 %v4385, %v4497
        %4499 = vdwg.mxu0
        %4500 = vmatprep.subr.bf16.mxu0 %v3217
        %4501 = vmatpush1.bf16.msra.mxu0 %v3216
        %4502 = vmatprep.subr.bf16.mxu0 %v3223
        %4503 = vmatpush1.bf16.msra.mxu0 %v3222
        %4504 = vmatprep.subr.bf16.mxu0 %v3229
        %4505 = vmatpush1.bf16.msra.mxu0 %v3228
        %4506 = vmatprep.subr.bf16.mxu0 %v3235
        %4507 = vmatpush1.bf16.msra.mxu0 %v3234
        %4508 = vmatprep.subr.bf16.mxu0 %v3241
        %4509 = vmatpush1.bf16.msra.mxu0 %v3240
        %4510 = vmatprep.subr.bf16.mxu0 %v3247
        %4511 = vmatpush1.bf16.msra.mxu0 %v3246
        %4512 = vmatprep.subr.bf16.mxu0 %v3253
        %4513 = vmatpush1.bf16.msra.mxu0 %v3252
        %4514 = vmatprep.subr.bf16.mxu0 %v3259
        %4515 = vmatpush1.bf16.msra.mxu0 %v3258
        %4516 = vmatprep.subr.bf16.mxu0 %v3265
        %4517 = vmatpush1.bf16.msra.mxu0 %v3264
        %4518 = vmatprep.subr.bf16.mxu0 %v3271
        %4519 = vmatpush1.bf16.msra.mxu0 %v3270
        %4520 = vmatprep.subr.bf16.mxu0 %v3277
        %4521 = vmatpush1.bf16.msra.mxu0 %v3276
        %4522 = vmatprep.subr.bf16.mxu0 %v3283
        %4523 = vmatpush1.bf16.msra.mxu0 %v3282
        %4524 = vmatprep.subr.bf16.mxu0 %v3289
        %4525 = vmatpush1.bf16.msra.mxu0 %v3288
        %4526 = vmatprep.subr.bf16.mxu0 %v3295
        %4527 = vmatpush1.bf16.msra.mxu0 %v3294
        %4528 = vmatprep.subr.bf16.mxu0 %v3301
        %4529 = vmatpush1.bf16.msra.mxu0 %v3300
        %4530 = vmatprep.subr.bf16.mxu0 %v3307
        %4531 = vmatpush1.bf16.msra.mxu0 %v3306
        %4532 = vmatprep.mubr.bf16.mxu0 %v1793
        %4533 = vmatmul.mubr.bf16.gmra.mrb[0].mxu0 %v1792
        %v4534 = vpop.f32.mrb[0].mxu0
        %v4535 = vadd.f32 %v4422, %v4534
        %v4536 = vpop.f32.mrb[0].mxu0
        %v4537 = vadd.f32 %v4424, %v4536
        %v4538 = vpop.f32.mrb[0].mxu0
        %v4539 = vadd.f32 %v4426, %v4538
        %v4540 = vpop.f32.mrb[0].mxu0
        %v4541 = vadd.f32 %v4428, %v4540
        %4542 = vmatprep.mubr.bf16.mxu0 %v1799
        %4543 = vmatmul.mubr.bf16.gmra.mrb[0].mxu0 %v1798
        %v4544 = vpop.f32.mrb[0].mxu0
        %v4545 = vadd.f32 %v4432, %v4544
        %v4546 = vpop.f32.mrb[0].mxu0
        %v4547 = vadd.f32 %v4434, %v4546
        %v4548 = vpop.f32.mrb[0].mxu0
        %v4549 = vadd.f32 %v4436, %v4548
        %v4550 = vpop.f32.mrb[0].mxu0
        %v4551 = vadd.f32 %v4438, %v4550
        %4552 = vmatprep.mubr.bf16.mxu0 %v1805
        %4553 = vmatmul.mubr.bf16.gmra.mrb[0].mxu0 %v1804
        %v4554 = vpop.f32.mrb[0].mxu0
        %v4555 = vadd.f32 %v4442, %v4554
        %v4556 = vpop.f32.mrb[0].mxu0
        %v4557 = vadd.f32 %v4444, %v4556
        %v4558 = vpop.f32.mrb[0].mxu0
        %v4559 = vadd.f32 %v4446, %v4558
        %v4560 = vpop.f32.mrb[0].mxu0
        %v4561 = vadd.f32 %v4448, %v4560
        %4562 = vmatprep.mubr.bf16.mxu0 %v1811
        %4563 = vmatmul.mubr.bf16.gmra.mrb[0].mxu0 %v1810
        %v4564 = vpop.f32.mrb[0].mxu0
        %v4565 = vadd.f32 %v4452, %v4564
        %v4566 = vpop.f32.mrb[0].mxu0
        %v4567 = vadd.f32 %v4454, %v4566
        %v4568 = vpop.f32.mrb[0].mxu0
        %v4569 = vadd.f32 %v4456, %v4568
        %v4570 = vpop.f32.mrb[0].mxu0
        %v4571 = vadd.f32 %v4458, %v4570
        %4572 = vmatprep.mubr.bf16.mxu0 %v1817
        %4573 = vmatmul.mubr.bf16.gmra.mrb[0].mxu0 %v1816
        %v4574 = vpop.f32.mrb[0].mxu0
        %v4575 = vadd.f32 %v4462, %v4574
        %v4576 = vpop.f32.mrb[0].mxu0
        %v4577 = vadd.f32 %v4464, %v4576
        %v4578 = vpop.f32.mrb[0].mxu0
        %v4579 = vadd.f32 %v4466, %v4578
        %v4580 = vpop.f32.mrb[0].mxu0
        %v4581 = vadd.f32 %v4468, %v4580
        %4582 = vmatprep.mubr.bf16.mxu0 %v1823
        %4583 = vmatmul.mubr.bf16.gmra.mrb[0].mxu0 %v1822
        %v4584 = vpop.f32.mrb[0].mxu0
        %v4585 = vadd.f32 %v4472, %v4584
        %v4586 = vpop.f32.mrb[0].mxu0
        %v4587 = vadd.f32 %v4474, %v4586
        %v4588 = vpop.f32.mrb[0].mxu0
        %v4589 = vadd.f32 %v4476, %v4588
        %v4590 = vpop.f32.mrb[0].mxu0
        %v4591 = vadd.f32 %v4478, %v4590
        %4592 = vmatprep.mubr.bf16.mxu0 %v1829
        %4593 = vmatmul.mubr.bf16.gmra.mrb[0].mxu0 %v1828
        %v4594 = vpop.f32.mrb[0].mxu0
        %v4595 = vadd.f32 %v4482, %v4594
        %v4596 = vpop.f32.mrb[0].mxu0
        %v4597 = vadd.f32 %v4484, %v4596
        %v4598 = vpop.f32.mrb[0].mxu0
        %v4599 = vadd.f32 %v4486, %v4598
        %v4600 = vpop.f32.mrb[0].mxu0
        %v4601 = vadd.f32 %v4488, %v4600
        %4602 = vmatprep.mubr.bf16.mxu0 %v1835
        %4603 = vmatmul.mubr.bf16.gmra.mrb[0].mxu0 %v1834
        %v4604 = vpop.f32.mrb[0].mxu0
        %v4605 = vadd.f32 %v4492, %v4604
        %v4606 = vpop.f32.mrb[0].mxu0
        %v4607 = vadd.f32 %v4494, %v4606
        %v4608 = vpop.f32.mrb[0].mxu0
        %v4609 = vadd.f32 %v4496, %v4608
        %v4610 = vpop.f32.mrb[0].mxu0
        %v4611 = vadd.f32 %v4498, %v4610
        %4612 = vdwg.mxu0
        %v4613 = vmax.f32 %v3857, 0.0
        %v4614 = vmax.f32 %v3859, 0.0
        %v4615 = vmax.f32 %v4196, 0.0
        %v4616 = vmax.f32 %v4198, 0.0
        %v4617 = vmax.f32 %v4535, 0.0
        %v4618 = vmax.f32 %v4537, 0.0
        %v4619 = vmax.f32 %v3861, 0.0
        %v4620 = vmax.f32 %v3863, 0.0
        %v4621 = vmax.f32 %v4200, 0.0
        %v4622 = vmax.f32 %v4202, 0.0
        %v4623 = vmax.f32 %v4539, 0.0
        %v4624 = vmax.f32 %v4541, 0.0
        %v4625 = vmax.f32 %v3867, 0.0
        %v4626 = vmax.f32 %v3869, 0.0
        %v4627 = vmax.f32 %v4206, 0.0
        %v4628 = vmax.f32 %v4208, 0.0
        %v4629 = vmax.f32 %v4545, 0.0
        %v4630 = vmax.f32 %v4547, 0.0
        %v4631 = vmax.f32 %v3871, 0.0
        %v4632 = vmax.f32 %v3873, 0.0
        %v4633 = vmax.f32 %v4210, 0.0
        %v4634 = vmax.f32 %v4212, 0.0
        %v4635 = vmax.f32 %v4549, 0.0
        %v4636 = vmax.f32 %v4551, 0.0
        %v4637 = vmax.f32 %v3877, 0.0
        %v4638 = vmax.f32 %v3879, 0.0
        %v4639 = vmax.f32 %v4216, 0.0
        %v4640 = vmax.f32 %v4218, 0.0
        %v4641 = vmax.f32 %v4555, 0.0
        %v4642 = vmax.f32 %v4557, 0.0
        %v4643 = vmax.f32 %v3881, 0.0
        %v4644 = vmax.f32 %v3883, 0.0
        %v4645 = vmax.f32 %v4220, 0.0
        %v4646 = vmax.f32 %v4222, 0.0
        %v4647 = vmax.f32 %v4559, 0.0
        %v4648 = vmax.f32 %v4561, 0.0
        %v4649 = vmax.f32 %v3887, 0.0
        %v4650 = vmax.f32 %v3889, 0.0
        %v4651 = vmax.f32 %v4226, 0.0
        %v4652 = vmax.f32 %v4228, 0.0
        %v4653 = vmax.f32 %v4565, 0.0
        %v4654 = vmax.f32 %v4567, 0.0
        %v4655 = vmax.f32 %v3891, 0.0
        %v4656 = vmax.f32 %v3893, 0.0
        %v4657 = vmax.f32 %v4230, 0.0
        %v4658 = vmax.f32 %v4232, 0.0
        %v4659 = vmax.f32 %v4569, 0.0
        %v4660 = vmax.f32 %v4571, 0.0
        %v4661 = vmax.f32 %v3897, 0.0
        %v4662 = vmax.f32 %v3899, 0.0
        %v4663 = vmax.f32 %v4236, 0.0
        %v4664 = vmax.f32 %v4238, 0.0
        %v4665 = vmax.f32 %v4575, 0.0
        %v4666 = vmax.f32 %v4577, 0.0
        %v4667 = vmax.f32 %v3901, 0.0
        %v4668 = vmax.f32 %v3903, 0.0
        %v4669 = vmax.f32 %v4240, 0.0
        %v4670 = vmax.f32 %v4242, 0.0
        %v4671 = vmax.f32 %v4579, 0.0
        %v4672 = vmax.f32 %v4581, 0.0
        %v4673 = vmax.f32 %v3907, 0.0
        %v4674 = vmax.f32 %v3909, 0.0
        %v4675 = vmax.f32 %v4246, 0.0
        %v4676 = vmax.f32 %v4248, 0.0
        %v4677 = vmax.f32 %v4585, 0.0
        %v4678 = vmax.f32 %v4587, 0.0
        %v4679 = vmax.f32 %v3911, 0.0
        %v4680 = vmax.f32 %v3913, 0.0
        %v4681 = vmax.f32 %v4250, 0.0
        %v4682 = vmax.f32 %v4252, 0.0
        %v4683 = vmax.f32 %v4589, 0.0
        %v4684 = vmax.f32 %v4591, 0.0
        %v4685 = vmax.f32 %v3917, 0.0
        %v4686 = vmax.f32 %v3919, 0.0
        %v4687 = vmax.f32 %v4256, 0.0
        %v4688 = vmax.f32 %v4258, 0.0
        %v4689 = vmax.f32 %v4595, 0.0
        %v4690 = vmax.f32 %v4597, 0.0
        %v4691 = vmax.f32 %v3921, 0.0
        %v4692 = vmax.f32 %v3923, 0.0
        %v4693 = vmax.f32 %v4260, 0.0
        %v4694 = vmax.f32 %v4262, 0.0
        %v4695 = vmax.f32 %v4599, 0.0
        %v4696 = vmax.f32 %v4601, 0.0
        %v4697 = vmax.f32 %v3927, 0.0
        %v4698 = vmax.f32 %v3929, 0.0
        %v4699 = vmax.f32 %v4266, 0.0
        %v4700 = vmax.f32 %v4268, 0.0
        %v4701 = vmax.f32 %v4605, 0.0
        %v4702 = vmax.f32 %v4607, 0.0
        %v4703 = vmax.f32 %v3931, 0.0
        %v4704 = vmax.f32 %v3933, 0.0
        %v4705 = vmax.f32 %v4270, 0.0
        %v4706 = vmax.f32 %v4272, 0.0
        %v4707 = vmax.f32 %v4609, 0.0
        %v4708 = vmax.f32 %v4611, 0.0
        %v4709 = vpack.c.bf16 %v4619, %v4613
        %v4710 = vpack.c.bf16 %v4620, %v4614
        %v4711 = vpack.c.bf16 %v4621, %v4615
        %v4712 = vpack.c.bf16 %v4622, %v4616
        %v4713 = vpack.c.bf16 %v4623, %v4617
        %v4714 = vpack.c.bf16 %v4624, %v4618
        %v4715 = vpack.c.bf16 %v4631, %v4625
        %v4716 = vpack.c.bf16 %v4632, %v4626
        %v4717 = vpack.c.bf16 %v4633, %v4627
        %v4718 = vpack.c.bf16 %v4634, %v4628
        %v4719 = vpack.c.bf16 %v4635, %v4629
        %v4720 = vpack.c.bf16 %v4636, %v4630
        %v4721 = vpack.c.bf16 %v4643, %v4637
        %v4722 = vpack.c.bf16 %v4644, %v4638
        %v4723 = vpack.c.bf16 %v4645, %v4639
        %v4724 = vpack.c.bf16 %v4646, %v4640
        %v4725 = vpack.c.bf16 %v4647, %v4641
        %v4726 = vpack.c.bf16 %v4648, %v4642
        %v4727 = vpack.c.bf16 %v4655, %v4649
        %v4728 = vpack.c.bf16 %v4656, %v4650
        %v4729 = vpack.c.bf16 %v4657, %v4651
        %v4730 = vpack.c.bf16 %v4658, %v4652
        %v4731 = vpack.c.bf16 %v4659, %v4653
        %v4732 = vpack.c.bf16 %v4660, %v4654
        %v4733 = vpack.c.bf16 %v4667, %v4661
        %v4734 = vpack.c.bf16 %v4668, %v4662
        %v4735 = vpack.c.bf16 %v4669, %v4663
        %v4736 = vpack.c.bf16 %v4670, %v4664
        %v4737 = vpack.c.bf16 %v4671, %v4665
        %v4738 = vpack.c.bf16 %v4672, %v4666
        %v4739 = vpack.c.bf16 %v4679, %v4673
        %v4740 = vpack.c.bf16 %v4680, %v4674
        %v4741 = vpack.c.bf16 %v4681, %v4675
        %v4742 = vpack.c.bf16 %v4682, %v4676
        %v4743 = vpack.c.bf16 %v4683, %v4677
        %v4744 = vpack.c.bf16 %v4684, %v4678
        %v4745 = vpack.c.bf16 %v4691, %v4685
        %v4746 = vpack.c.bf16 %v4692, %v4686
        %v4747 = vpack.c.bf16 %v4693, %v4687
        %v4748 = vpack.c.bf16 %v4694, %v4688
        %v4749 = vpack.c.bf16 %v4695, %v4689
        %v4750 = vpack.c.bf16 %v4696, %v4690
        %v4751 = vpack.c.bf16 %v4703, %v4697
        %v4752 = vpack.c.bf16 %v4704, %v4698
        %v4753 = vpack.c.bf16 %v4705, %v4699
        %v4754 = vpack.c.bf16 %v4706, %v4700
        %v4755 = vpack.c.bf16 %v4707, %v4701
        %v4756 = vpack.c.bf16 %v4708, %v4702
        %v4757 = vld [vmem:[#allocation14] sm:$0xf]
        %v4758 = vld [vmem:[#allocation14 + $0x4] sm:$0xf]
        %v4759 = vld [vmem:[#allocation14 + $0x8] sm:$0xf]
        %v4760 = vld [vmem:[#allocation14 + $0xc] sm:$0xf]
        %v4761 = vld [vmem:[#allocation14 + $0x10] sm:$0xf]
        %v4762 = vld [vmem:[#allocation14 + $0x14] sm:$0xf]
        %v4763 = vld [vmem:[#allocation14 + $0x18] sm:$0xf]
        %v4764 = vld [vmem:[#allocation14 + $0x1c] sm:$0xf]
        %v4765 = vld [vmem:[#allocation14 + $0x20] sm:$0xf]
        %v4766 = vld [vmem:[#allocation14 + $0x24] sm:$0xf]
        %v4767 = vld [vmem:[#allocation14 + $0x28] sm:$0xf]
        %v4768 = vld [vmem:[#allocation14 + $0x2c] sm:$0xf]
        %v4769 = vld [vmem:[#allocation14 + $0x30] sm:$0xf]
        %v4770 = vld [vmem:[#allocation14 + $0x34] sm:$0xf]
        %v4771 = vld [vmem:[#allocation14 + $0x38] sm:$0xf]
        %v4772 = vld [vmem:[#allocation14 + $0x3c] sm:$0xf]
        %v4773 = vld [vmem:[#allocation14 + $0x40] sm:$0xf]
        %v4774 = vld [vmem:[#allocation14 + $0x44] sm:$0xf]
        %v4775 = vld [vmem:[#allocation14 + $0x48] sm:$0xf]
        %v4776 = vld [vmem:[#allocation14 + $0x4c] sm:$0xf]
        %v4777 = vld [vmem:[#allocation14 + $0x50] sm:$0xf]
        %v4778 = vld [vmem:[#allocation14 + $0x54] sm:$0xf]
        %v4779 = vld [vmem:[#allocation14 + $0x58] sm:$0xf]
        %v4780 = vld [vmem:[#allocation14 + $0x5c] sm:$0xf]
        %v4781 = vld [vmem:[#allocation14 + $0x60] sm:$0xf]
        %v4782 = vld [vmem:[#allocation14 + $0x64] sm:$0xf]
        %v4783 = vld [vmem:[#allocation14 + $0x68] sm:$0xf]
        %v4784 = vld [vmem:[#allocation14 + $0x6c] sm:$0xf]
        %v4785 = vld [vmem:[#allocation14 + $0x70] sm:$0xf]
        %v4786 = vld [vmem:[#allocation14 + $0x74] sm:$0xf]
        %v4787 = vld [vmem:[#allocation14 + $0x78] sm:$0xf]
        %v4788 = vld [vmem:[#allocation14 + $0x7c] sm:$0xf]
        %v4789 = vld [vmem:[#allocation14 + $0x80] sm:$0xf]
        %v4790 = vld [vmem:[#allocation14 + $0x84] sm:$0xf]
        %v4791 = vld [vmem:[#allocation14 + $0x88] sm:$0xf]
        %v4792 = vld [vmem:[#allocation14 + $0x8c] sm:$0xf]
        %v4793 = vld [vmem:[#allocation14 + $0x90] sm:$0xf]
        %v4794 = vld [vmem:[#allocation14 + $0x94] sm:$0xf]
        %v4795 = vld [vmem:[#allocation14 + $0x98] sm:$0xf]
        %v4796 = vld [vmem:[#allocation14 + $0x9c] sm:$0xf]
        %v4797 = vld [vmem:[#allocation14 + $0xa0] sm:$0xf]
        %v4798 = vld [vmem:[#allocation14 + $0xa4] sm:$0xf]
        %v4799 = vld [vmem:[#allocation14 + $0xa8] sm:$0xf]
        %v4800 = vld [vmem:[#allocation14 + $0xac] sm:$0xf]
        %v4801 = vld [vmem:[#allocation14 + $0xb0] sm:$0xf]
        %v4802 = vld [vmem:[#allocation14 + $0xb4] sm:$0xf]
        %v4803 = vld [vmem:[#allocation14 + $0xb8] sm:$0xf]
        %v4804 = vld [vmem:[#allocation14 + $0xbc] sm:$0xf]
        %v4805 = vld [vmem:[#allocation14 + $0xc0] sm:$0xf]
        %v4806 = vld [vmem:[#allocation14 + $0xc4] sm:$0xf]
        %v4807 = vld [vmem:[#allocation14 + $0xc8] sm:$0xf]
        %v4808 = vld [vmem:[#allocation14 + $0xcc] sm:$0xf]
        %v4809 = vld [vmem:[#allocation14 + $0xd0] sm:$0xf]
        %v4810 = vld [vmem:[#allocation14 + $0xd4] sm:$0xf]
        %v4811 = vld [vmem:[#allocation14 + $0xd8] sm:$0xf]
        %v4812 = vld [vmem:[#allocation14 + $0xdc] sm:$0xf]
        %v4813 = vld [vmem:[#allocation14 + $0xe0] sm:$0xf]
        %v4814 = vld [vmem:[#allocation14 + $0xe4] sm:$0xf]
        %v4815 = vld [vmem:[#allocation14 + $0xe8] sm:$0xf]
        %v4816 = vld [vmem:[#allocation14 + $0xec] sm:$0xf]
        %v4817 = vld [vmem:[#allocation14 + $0xf0] sm:$0xf]
        %v4818 = vld [vmem:[#allocation14 + $0xf4] sm:$0xf]
        %v4819 = vld [vmem:[#allocation14 + $0xf8] sm:$0xf]
        %v4820 = vld [vmem:[#allocation14 + $0xfc] sm:$0xf]
        %v4821 = vld [vmem:[#allocation14 + $0x100] sm:$0xf]
        %v4822 = vld [vmem:[#allocation14 + $0x104] sm:$0xf]
        %v4823 = vld [vmem:[#allocation14 + $0x108] sm:$0xf]
        %v4824 = vld [vmem:[#allocation14 + $0x10c] sm:$0xf]
        %v4825 = vld [vmem:[#allocation14 + $0x110] sm:$0xf]
        %v4826 = vld [vmem:[#allocation14 + $0x114] sm:$0xf]
        %v4827 = vld [vmem:[#allocation14 + $0x118] sm:$0xf]
        %v4828 = vld [vmem:[#allocation14 + $0x11c] sm:$0xf]
        %v4829 = vld [vmem:[#allocation14 + $0x120] sm:$0xf]
        %v4830 = vld [vmem:[#allocation14 + $0x124] sm:$0xf]
        %v4831 = vld [vmem:[#allocation14 + $0x128] sm:$0xf]
        %v4832 = vld [vmem:[#allocation14 + $0x12c] sm:$0xf]
        %v4833 = vld [vmem:[#allocation14 + $0x130] sm:$0xf]
        %v4834 = vld [vmem:[#allocation14 + $0x134] sm:$0xf]
        %v4835 = vld [vmem:[#allocation14 + $0x138] sm:$0xf]
        %v4836 = vld [vmem:[#allocation14 + $0x13c] sm:$0xf]
        %v4837 = vld [vmem:[#allocation14 + $0x140] sm:$0xf]
        %v4838 = vld [vmem:[#allocation14 + $0x144] sm:$0xf]
        %v4839 = vld [vmem:[#allocation14 + $0x148] sm:$0xf]
        %v4840 = vld [vmem:[#allocation14 + $0x14c] sm:$0xf]
        %v4841 = vld [vmem:[#allocation14 + $0x150] sm:$0xf]
        %v4842 = vld [vmem:[#allocation14 + $0x154] sm:$0xf]
        %v4843 = vld [vmem:[#allocation14 + $0x158] sm:$0xf]
        %v4844 = vld [vmem:[#allocation14 + $0x15c] sm:$0xf]
        %v4845 = vld [vmem:[#allocation14 + $0x160] sm:$0xf]
        %v4846 = vld [vmem:[#allocation14 + $0x164] sm:$0xf]
        %v4847 = vld [vmem:[#allocation14 + $0x168] sm:$0xf]
        %v4848 = vld [vmem:[#allocation14 + $0x16c] sm:$0xf]
        %v4849 = vld [vmem:[#allocation14 + $0x170] sm:$0xf]
        %v4850 = vld [vmem:[#allocation14 + $0x174] sm:$0xf]
        %v4851 = vld [vmem:[#allocation14 + $0x178] sm:$0xf]
        %v4852 = vld [vmem:[#allocation14 + $0x17c] sm:$0xf]
        %v4853 = vld [vmem:[#allocation16] sm:$0x1]
        %v4855 = vlaneseq
        %v4856 = vshrl.u32 %v4855, 7
        %v4857 = vsub.s32 0, %v4856
        %v4858 = vrot.slane %v4853, %v4857
        %v4956 = vunpack.c.l.b16 %v4757
        %v4957 = vunpack.c.l.b16 %v4758
        %v4958 = vunpack.c.l.b16 %v4759
        %v4959 = vunpack.c.l.b16 %v4760
        %v4960 = vunpack.c.l.b16 %v4761
        %v4961 = vunpack.c.l.b16 %v4762
        %v4962 = vunpack.c.l.b16 %v4763
        %v4963 = vunpack.c.l.b16 %v4764
        %v4964 = vunpack.c.l.b16 %v4765
        %v4965 = vunpack.c.l.b16 %v4766
        %v4966 = vunpack.c.l.b16 %v4767
        %v4967 = vunpack.c.l.b16 %v4768
        %v4968 = vunpack.c.l.b16 %v4769
        %v4969 = vunpack.c.l.b16 %v4770
        %v4970 = vunpack.c.l.b16 %v4771
        %v4971 = vunpack.c.l.b16 %v4772
        %v4972 = vunpack.c.l.b16 %v4773
        %v4973 = vunpack.c.l.b16 %v4774
        %v4974 = vunpack.c.l.b16 %v4775
        %v4975 = vunpack.c.l.b16 %v4776
        %v4976 = vunpack.c.l.b16 %v4777
        %v4977 = vunpack.c.l.b16 %v4778
        %v4978 = vunpack.c.l.b16 %v4779
        %v4979 = vunpack.c.l.b16 %v4780
        %v4980 = vunpack.c.l.b16 %v4781
        %v4981 = vunpack.c.l.b16 %v4782
        %v4982 = vunpack.c.l.b16 %v4783
        %v4983 = vunpack.c.l.b16 %v4784
        %v4984 = vunpack.c.l.b16 %v4785
        %v4985 = vunpack.c.l.b16 %v4786
        %v4986 = vunpack.c.l.b16 %v4787
        %v4987 = vunpack.c.l.b16 %v4788
        %v4988 = vunpack.c.l.b16 %v4789
        %v4989 = vunpack.c.l.b16 %v4790
        %v4990 = vunpack.c.l.b16 %v4791
        %v4991 = vunpack.c.l.b16 %v4792
        %v4992 = vunpack.c.l.b16 %v4793
        %v4993 = vunpack.c.l.b16 %v4794
        %v4994 = vunpack.c.l.b16 %v4795
        %v4995 = vunpack.c.l.b16 %v4796
        %v4996 = vunpack.c.l.b16 %v4797
        %v4997 = vunpack.c.l.b16 %v4798
        %v4998 = vunpack.c.l.b16 %v4799
        %v4999 = vunpack.c.l.b16 %v4800
        %v5000 = vunpack.c.l.b16 %v4801
        %v5001 = vunpack.c.l.b16 %v4802
        %v5002 = vunpack.c.l.b16 %v4803
        %v5003 = vunpack.c.l.b16 %v4804
        %v5004 = vunpack.c.l.b16 %v4805
        %v5005 = vunpack.c.l.b16 %v4806
        %v5006 = vunpack.c.l.b16 %v4807
        %v5007 = vunpack.c.l.b16 %v4808
        %v5008 = vunpack.c.l.b16 %v4809
        %v5009 = vunpack.c.l.b16 %v4810
        %v5010 = vunpack.c.l.b16 %v4811
        %v5011 = vunpack.c.l.b16 %v4812
        %v5012 = vunpack.c.l.b16 %v4813
        %v5013 = vunpack.c.l.b16 %v4814
        %v5014 = vunpack.c.l.b16 %v4815
        %v5015 = vunpack.c.l.b16 %v4816
        %v5016 = vunpack.c.l.b16 %v4817
        %v5017 = vunpack.c.l.b16 %v4818
        %v5018 = vunpack.c.l.b16 %v4819
        %v5019 = vunpack.c.l.b16 %v4820
        %v5020 = vunpack.c.l.b16 %v4821
        %v5021 = vunpack.c.l.b16 %v4822
        %v5022 = vunpack.c.l.b16 %v4823
        %v5023 = vunpack.c.l.b16 %v4824
        %v5024 = vunpack.c.l.b16 %v4825
        %v5025 = vunpack.c.l.b16 %v4826
        %v5026 = vunpack.c.l.b16 %v4827
        %v5027 = vunpack.c.l.b16 %v4828
        %v5028 = vunpack.c.l.b16 %v4829
        %v5029 = vunpack.c.l.b16 %v4830
        %v5030 = vunpack.c.l.b16 %v4831
        %v5031 = vunpack.c.l.b16 %v4832
        %v5032 = vunpack.c.l.b16 %v4833
        %v5033 = vunpack.c.l.b16 %v4834
        %v5034 = vunpack.c.l.b16 %v4835
        %v5035 = vunpack.c.l.b16 %v4836
        %v5036 = vunpack.c.l.b16 %v4837
        %v5037 = vunpack.c.l.b16 %v4838
        %v5038 = vunpack.c.l.b16 %v4839
        %v5039 = vunpack.c.l.b16 %v4840
        %v5040 = vunpack.c.l.b16 %v4841
        %v5041 = vunpack.c.l.b16 %v4842
        %v5042 = vunpack.c.l.b16 %v4843
        %v5043 = vunpack.c.l.b16 %v4844
        %v5044 = vunpack.c.l.b16 %v4845
        %v5045 = vunpack.c.l.b16 %v4846
        %v5046 = vunpack.c.l.b16 %v4847
        %v5047 = vunpack.c.l.b16 %v4848
        %v5048 = vunpack.c.l.b16 %v4849
        %v5049 = vunpack.c.l.b16 %v4850
        %v5050 = vunpack.c.l.b16 %v4851
        %v5051 = vunpack.c.l.b16 %v4852
        %v5052 = vpack.c.b16 %v4957, %v4956
        %v5053 = vpack.c.b16 %v4959, %v4958
        %v5054 = vpack.c.b16 %v4961, %v4960
        %v5055 = vpack.c.b16 %v4963, %v4962
        %v5056 = vpack.c.b16 %v4965, %v4964
        %v5057 = vpack.c.b16 %v4967, %v4966
        %v5058 = vpack.c.b16 %v4969, %v4968
        %v5059 = vpack.c.b16 %v4971, %v4970
        %v5060 = vpack.c.b16 %v4973, %v4972
        %v5061 = vpack.c.b16 %v4975, %v4974
        %v5062 = vpack.c.b16 %v4977, %v4976
        %v5063 = vpack.c.b16 %v4979, %v4978
        %v5064 = vpack.c.b16 %v4981, %v4980
        %v5065 = vpack.c.b16 %v4983, %v4982
        %v5066 = vpack.c.b16 %v4985, %v4984
        %v5067 = vpack.c.b16 %v4987, %v4986
        %v5068 = vpack.c.b16 %v4989, %v4988
        %v5069 = vpack.c.b16 %v4991, %v4990
        %v5070 = vpack.c.b16 %v4993, %v4992
        %v5071 = vpack.c.b16 %v4995, %v4994
        %v5072 = vpack.c.b16 %v4997, %v4996
        %v5073 = vpack.c.b16 %v4999, %v4998
        %v5074 = vpack.c.b16 %v5001, %v5000
        %v5075 = vpack.c.b16 %v5003, %v5002
        %v5076 = vpack.c.b16 %v5005, %v5004
        %v5077 = vpack.c.b16 %v5007, %v5006
        %v5078 = vpack.c.b16 %v5009, %v5008
        %v5079 = vpack.c.b16 %v5011, %v5010
        %v5080 = vpack.c.b16 %v5013, %v5012
        %v5081 = vpack.c.b16 %v5015, %v5014
        %v5082 = vpack.c.b16 %v5017, %v5016
        %v5083 = vpack.c.b16 %v5019, %v5018
        %v5084 = vpack.c.b16 %v5021, %v5020
        %v5085 = vpack.c.b16 %v5023, %v5022
        %v5086 = vpack.c.b16 %v5025, %v5024
        %v5087 = vpack.c.b16 %v5027, %v5026
        %v5088 = vpack.c.b16 %v5029, %v5028
        %v5089 = vpack.c.b16 %v5031, %v5030
        %v5090 = vpack.c.b16 %v5033, %v5032
        %v5091 = vpack.c.b16 %v5035, %v5034
        %v5092 = vpack.c.b16 %v5037, %v5036
        %v5093 = vpack.c.b16 %v5039, %v5038
        %v5094 = vpack.c.b16 %v5041, %v5040
        %v5095 = vpack.c.b16 %v5043, %v5042
        %v5096 = vpack.c.b16 %v5045, %v5044
        %v5097 = vpack.c.b16 %v5047, %v5046
        %v5098 = vpack.c.b16 %v5049, %v5048
        %v5099 = vpack.c.b16 %v5051, %v5050
        %5148 = vmatprep.subr.bf16.mxu0 0
        %5149 = vmatpush1.bf16.msra.mxu0 %v5052
        %5150 = vmatprep.subr.bf16.mxu0 0
        %5151 = vmatpush1.bf16.msra.mxu0 %v5053
        %5152 = vmatprep.subr.bf16.mxu0 0
        %5153 = vmatpush1.bf16.msra.mxu0 %v5054
        %5154 = vmatprep.subr.bf16.mxu0 0
        %5155 = vmatpush1.bf16.msra.mxu0 %v5055
        %5156 = vmatprep.subr.bf16.mxu0 0
        %5157 = vmatpush1.bf16.msra.mxu0 %v5056
        %5158 = vmatprep.subr.bf16.mxu0 0
        %5159 = vmatpush1.bf16.msra.mxu0 %v5057
        %5160 = vmatprep.subr.bf16.mxu0 0
        %5161 = vmatpush1.bf16.msra.mxu0 %v5058
        %5162 = vmatprep.subr.bf16.mxu0 0
        %5163 = vmatpush1.bf16.msra.mxu0 %v5059
        %5164 = vmatprep.subr.bf16.mxu0 0
        %5165 = vmatpush1.bf16.msra.mxu0 %v5060
        %5166 = vmatprep.subr.bf16.mxu0 0
        %5167 = vmatpush1.bf16.msra.mxu0 %v5061
        %5168 = vmatprep.subr.bf16.mxu0 0
        %5169 = vmatpush1.bf16.msra.mxu0 %v5062
        %5170 = vmatprep.subr.bf16.mxu0 0
        %5171 = vmatpush1.bf16.msra.mxu0 %v5063
        %5172 = vmatprep.subr.bf16.mxu0 0
        %5173 = vmatpush1.bf16.msra.mxu0 %v5064
        %5174 = vmatprep.subr.bf16.mxu0 0
        %5175 = vmatpush1.bf16.msra.mxu0 %v5065
        %5176 = vmatprep.subr.bf16.mxu0 0
        %5177 = vmatpush1.bf16.msra.mxu0 %v5066
        %5178 = vmatprep.subr.bf16.mxu0 0
        %5179 = vmatpush1.bf16.msra.mxu0 %v5067
        %5180 = vmatprep.mubr.bf16.mxu0 %v4710
        %5181 = vmatmul.mubr.bf16.gmra.mrb[0].mxu0 %v4709
        %v5182 = vpop.f32.mrb[0].mxu0
        %v5183 = vadd.f32 %v4858, %v5182
        %v5184 = vpop.f32.mrb[0].mxu0
        %v5185 = vpop.f32.mrb[0].mxu0
        %v5186 = vadd.f32 %v4858, %v5185
        %v5187 = vpop.f32.mrb[0].mxu0
        %5188 = vmatprep.mubr.bf16.mxu0 %v4716
        %5189 = vmatmul.mubr.bf16.gmra.mrb[0].mxu0 %v4715
        %v5190 = vpop.f32.mrb[0].mxu0
        %v5191 = vadd.f32 %v4858, %v5190
        %v5192 = vpop.f32.mrb[0].mxu0
        %v5193 = vpop.f32.mrb[0].mxu0
        %v5194 = vadd.f32 %v4858, %v5193
        %v5195 = vpop.f32.mrb[0].mxu0
        %5196 = vmatprep.mubr.bf16.mxu0 %v4722
        %5197 = vmatmul.mubr.bf16.gmra.mrb[0].mxu0 %v4721
        %v5198 = vpop.f32.mrb[0].mxu0
        %v5199 = vadd.f32 %v4858, %v5198
        %v5200 = vpop.f32.mrb[0].mxu0
        %v5201 = vpop.f32.mrb[0].mxu0
        %v5202 = vadd.f32 %v4858, %v5201
        %v5203 = vpop.f32.mrb[0].mxu0
        %5204 = vmatprep.mubr.bf16.mxu0 %v4728
        %5205 = vmatmul.mubr.bf16.gmra.mrb[0].mxu0 %v4727
        %v5206 = vpop.f32.mrb[0].mxu0
        %v5207 = vadd.f32 %v4858, %v5206
        %v5208 = vpop.f32.mrb[0].mxu0
        %v5209 = vpop.f32.mrb[0].mxu0
        %v5210 = vadd.f32 %v4858, %v5209
        %v5211 = vpop.f32.mrb[0].mxu0
        %5212 = vmatprep.mubr.bf16.mxu0 %v4734
        %5213 = vmatmul.mubr.bf16.gmra.mrb[0].mxu0 %v4733
        %v5214 = vpop.f32.mrb[0].mxu0
        %v5215 = vadd.f32 %v4858, %v5214
        %v5216 = vpop.f32.mrb[0].mxu0
        %v5217 = vpop.f32.mrb[0].mxu0
        %v5218 = vadd.f32 %v4858, %v5217
        %v5219 = vpop.f32.mrb[0].mxu0
        %5220 = vmatprep.mubr.bf16.mxu0 %v4740
        %5221 = vmatmul.mubr.bf16.gmra.mrb[0].mxu0 %v4739
        %v5222 = vpop.f32.mrb[0].mxu0
        %v5223 = vadd.f32 %v4858, %v5222
        %v5224 = vpop.f32.mrb[0].mxu0
        %v5225 = vpop.f32.mrb[0].mxu0
        %v5226 = vadd.f32 %v4858, %v5225
        %v5227 = vpop.f32.mrb[0].mxu0
        %5228 = vmatprep.mubr.bf16.mxu0 %v4746
        %5229 = vmatmul.mubr.bf16.gmra.mrb[0].mxu0 %v4745
        %v5230 = vpop.f32.mrb[0].mxu0
        %v5231 = vadd.f32 %v4858, %v5230
        %v5232 = vpop.f32.mrb[0].mxu0
        %v5233 = vpop.f32.mrb[0].mxu0
        %v5234 = vadd.f32 %v4858, %v5233
        %v5235 = vpop.f32.mrb[0].mxu0
        %5236 = vmatprep.mubr.bf16.mxu0 %v4752
        %5237 = vmatmul.mubr.bf16.gmra.mrb[0].mxu0 %v4751
        %v5238 = vpop.f32.mrb[0].mxu0
        %v5239 = vadd.f32 %v4858, %v5238
        %v5240 = vpop.f32.mrb[0].mxu0
        %v5241 = vpop.f32.mrb[0].mxu0
        %v5242 = vadd.f32 %v4858, %v5241
        %v5243 = vpop.f32.mrb[0].mxu0
        %5244 = vdwg.mxu0
        %5245 = vmatprep.subr.bf16.mxu0 0
        %5246 = vmatpush1.bf16.msra.mxu0 %v5068
        %5247 = vmatprep.subr.bf16.mxu0 0
        %5248 = vmatpush1.bf16.msra.mxu0 %v5069
        %5249 = vmatprep.subr.bf16.mxu0 0
        %5250 = vmatpush1.bf16.msra.mxu0 %v5070
        %5251 = vmatprep.subr.bf16.mxu0 0
        %5252 = vmatpush1.bf16.msra.mxu0 %v5071
        %5253 = vmatprep.subr.bf16.mxu0 0
        %5254 = vmatpush1.bf16.msra.mxu0 %v5072
        %5255 = vmatprep.subr.bf16.mxu0 0
        %5256 = vmatpush1.bf16.msra.mxu0 %v5073
        %5257 = vmatprep.subr.bf16.mxu0 0
        %5258 = vmatpush1.bf16.msra.mxu0 %v5074
        %5259 = vmatprep.subr.bf16.mxu0 0
        %5260 = vmatpush1.bf16.msra.mxu0 %v5075
        %5261 = vmatprep.subr.bf16.mxu0 0
        %5262 = vmatpush1.bf16.msra.mxu0 %v5076
        %5263 = vmatprep.subr.bf16.mxu0 0
        %5264 = vmatpush1.bf16.msra.mxu0 %v5077
        %5265 = vmatprep.subr.bf16.mxu0 0
        %5266 = vmatpush1.bf16.msra.mxu0 %v5078
        %5267 = vmatprep.subr.bf16.mxu0 0
        %5268 = vmatpush1.bf16.msra.mxu0 %v5079
        %5269 = vmatprep.subr.bf16.mxu0 0
        %5270 = vmatpush1.bf16.msra.mxu0 %v5080
        %5271 = vmatprep.subr.bf16.mxu0 0
        %5272 = vmatpush1.bf16.msra.mxu0 %v5081
        %5273 = vmatprep.subr.bf16.mxu0 0
        %5274 = vmatpush1.bf16.msra.mxu0 %v5082
        %5275 = vmatprep.subr.bf16.mxu0 0
        %5276 = vmatpush1.bf16.msra.mxu0 %v5083
        %5277 = vmatprep.mubr.bf16.mxu0 %v4712
        %5278 = vmatmul.mubr.bf16.gmra.mrb[0].mxu0 %v4711
        %v5279 = vpop.f32.mrb[0].mxu0
        %v5280 = vadd.f32 %v5183, %v5279
        %v5281 = vpop.f32.mrb[0].mxu0
        %v5282 = vpop.f32.mrb[0].mxu0
        %v5283 = vadd.f32 %v5186, %v5282
        %v5284 = vpop.f32.mrb[0].mxu0
        %5285 = vmatprep.mubr.bf16.mxu0 %v4718
        %5286 = vmatmul.mubr.bf16.gmra.mrb[0].mxu0 %v4717
        %v5287 = vpop.f32.mrb[0].mxu0
        %v5288 = vadd.f32 %v5191, %v5287
        %v5289 = vpop.f32.mrb[0].mxu0
        %v5290 = vpop.f32.mrb[0].mxu0
        %v5291 = vadd.f32 %v5194, %v5290
        %v5292 = vpop.f32.mrb[0].mxu0
        %5293 = vmatprep.mubr.bf16.mxu0 %v4724
        %5294 = vmatmul.mubr.bf16.gmra.mrb[0].mxu0 %v4723
        %v5295 = vpop.f32.mrb[0].mxu0
        %v5296 = vadd.f32 %v5199, %v5295
        %v5297 = vpop.f32.mrb[0].mxu0
        %v5298 = vpop.f32.mrb[0].mxu0
        %v5299 = vadd.f32 %v5202, %v5298
        %v5300 = vpop.f32.mrb[0].mxu0
        %5301 = vmatprep.mubr.bf16.mxu0 %v4730
        %5302 = vmatmul.mubr.bf16.gmra.mrb[0].mxu0 %v4729
        %v5303 = vpop.f32.mrb[0].mxu0
        %v5304 = vadd.f32 %v5207, %v5303
        %v5305 = vpop.f32.mrb[0].mxu0
        %v5306 = vpop.f32.mrb[0].mxu0
        %v5307 = vadd.f32 %v5210, %v5306
        %v5308 = vpop.f32.mrb[0].mxu0
        %5309 = vmatprep.mubr.bf16.mxu0 %v4736
        %5310 = vmatmul.mubr.bf16.gmra.mrb[0].mxu0 %v4735
        %v5311 = vpop.f32.mrb[0].mxu0
        %v5312 = vadd.f32 %v5215, %v5311
        %v5313 = vpop.f32.mrb[0].mxu0
        %v5314 = vpop.f32.mrb[0].mxu0
        %v5315 = vadd.f32 %v5218, %v5314
        %v5316 = vpop.f32.mrb[0].mxu0
        %5317 = vmatprep.mubr.bf16.mxu0 %v4742
        %5318 = vmatmul.mubr.bf16.gmra.mrb[0].mxu0 %v4741
        %v5319 = vpop.f32.mrb[0].mxu0
        %v5320 = vadd.f32 %v5223, %v5319
        %v5321 = vpop.f32.mrb[0].mxu0
        %v5322 = vpop.f32.mrb[0].mxu0
        %v5323 = vadd.f32 %v5226, %v5322
        %v5324 = vpop.f32.mrb[0].mxu0
        %5325 = vmatprep.mubr.bf16.mxu0 %v4748
        %5326 = vmatmul.mubr.bf16.gmra.mrb[0].mxu0 %v4747
        %v5327 = vpop.f32.mrb[0].mxu0
        %v5328 = vadd.f32 %v5231, %v5327
        %v5329 = vpop.f32.mrb[0].mxu0
        %v5330 = vpop.f32.mrb[0].mxu0
        %v5331 = vadd.f32 %v5234, %v5330
        %v5332 = vpop.f32.mrb[0].mxu0
        %5333 = vmatprep.mubr.bf16.mxu0 %v4754
        %5334 = vmatmul.mubr.bf16.gmra.mrb[0].mxu0 %v4753
        %v5335 = vpop.f32.mrb[0].mxu0
        %v5336 = vadd.f32 %v5239, %v5335
        %v5337 = vpop.f32.mrb[0].mxu0
        %v5338 = vpop.f32.mrb[0].mxu0
        %v5339 = vadd.f32 %v5242, %v5338
        %v5340 = vpop.f32.mrb[0].mxu0
        %5341 = vdwg.mxu0
        %5342 = vmatprep.subr.bf16.mxu0 0
        %5343 = vmatpush1.bf16.msra.mxu0 %v5084
        %5344 = vmatprep.subr.bf16.mxu0 0
        %5345 = vmatpush1.bf16.msra.mxu0 %v5085
        %5346 = vmatprep.subr.bf16.mxu0 0
        %5347 = vmatpush1.bf16.msra.mxu0 %v5086
        %5348 = vmatprep.subr.bf16.mxu0 0
        %5349 = vmatpush1.bf16.msra.mxu0 %v5087
        %5350 = vmatprep.subr.bf16.mxu0 0
        %5351 = vmatpush1.bf16.msra.mxu0 %v5088
        %5352 = vmatprep.subr.bf16.mxu0 0
        %5353 = vmatpush1.bf16.msra.mxu0 %v5089
        %5354 = vmatprep.subr.bf16.mxu0 0
        %5355 = vmatpush1.bf16.msra.mxu0 %v5090
        %5356 = vmatprep.subr.bf16.mxu0 0
        %5357 = vmatpush1.bf16.msra.mxu0 %v5091
        %5358 = vmatprep.subr.bf16.mxu0 0
        %5359 = vmatpush1.bf16.msra.mxu0 %v5092
        %5360 = vmatprep.subr.bf16.mxu0 0
        %5361 = vmatpush1.bf16.msra.mxu0 %v5093
        %5362 = vmatprep.subr.bf16.mxu0 0
        %5363 = vmatpush1.bf16.msra.mxu0 %v5094
        %5364 = vmatprep.subr.bf16.mxu0 0
        %5365 = vmatpush1.bf16.msra.mxu0 %v5095
        %5366 = vmatprep.subr.bf16.mxu0 0
        %5367 = vmatpush1.bf16.msra.mxu0 %v5096
        %5368 = vmatprep.subr.bf16.mxu0 0
        %5369 = vmatpush1.bf16.msra.mxu0 %v5097
        %5370 = vmatprep.subr.bf16.mxu0 0
        %5371 = vmatpush1.bf16.msra.mxu0 %v5098
        %5372 = vmatprep.subr.bf16.mxu0 0
        %5373 = vmatpush1.bf16.msra.mxu0 %v5099
        %5374 = vmatprep.mubr.bf16.mxu0 %v4714
        %5375 = vmatmul.mubr.bf16.gmra.mrb[0].mxu0 %v4713
        %v5376 = vpop.f32.mrb[0].mxu0
        %v5377 = vadd.f32 %v5280, %v5376
        %v5378 = vpop.f32.mrb[0].mxu0
        %v5379 = vpop.f32.mrb[0].mxu0
        %v5380 = vadd.f32 %v5283, %v5379
        %v5381 = vpop.f32.mrb[0].mxu0
        %5382 = vmatprep.mubr.bf16.mxu0 %v4720
        %5383 = vmatmul.mubr.bf16.gmra.mrb[0].mxu0 %v4719
        %v5384 = vpop.f32.mrb[0].mxu0
        %v5385 = vadd.f32 %v5288, %v5384
        %v5386 = vpop.f32.mrb[0].mxu0
        %v5387 = vpop.f32.mrb[0].mxu0
        %v5388 = vadd.f32 %v5291, %v5387
        %v5389 = vpop.f32.mrb[0].mxu0
        %5390 = vmatprep.mubr.bf16.mxu0 %v4726
        %5391 = vmatmul.mubr.bf16.gmra.mrb[0].mxu0 %v4725
        %v5392 = vpop.f32.mrb[0].mxu0
        %v5393 = vadd.f32 %v5296, %v5392
        %v5394 = vpop.f32.mrb[0].mxu0
        %v5395 = vpop.f32.mrb[0].mxu0
        %v5396 = vadd.f32 %v5299, %v5395
        %v5397 = vpop.f32.mrb[0].mxu0
        %5398 = vmatprep.mubr.bf16.mxu0 %v4732
        %5399 = vmatmul.mubr.bf16.gmra.mrb[0].mxu0 %v4731
        %v5400 = vpop.f32.mrb[0].mxu0
        %v5401 = vadd.f32 %v5304, %v5400
        %v5402 = vpop.f32.mrb[0].mxu0
        %v5403 = vpop.f32.mrb[0].mxu0
        %v5404 = vadd.f32 %v5307, %v5403
        %v5405 = vpop.f32.mrb[0].mxu0
        %5406 = vmatprep.mubr.bf16.mxu0 %v4738
        %5407 = vmatmul.mubr.bf16.gmra.mrb[0].mxu0 %v4737
        %v5408 = vpop.f32.mrb[0].mxu0
        %v5409 = vadd.f32 %v5312, %v5408
        %v5410 = vpop.f32.mrb[0].mxu0
        %v5411 = vpop.f32.mrb[0].mxu0
        %v5412 = vadd.f32 %v5315, %v5411
        %v5413 = vpop.f32.mrb[0].mxu0
        %5414 = vmatprep.mubr.bf16.mxu0 %v4744
        %5415 = vmatmul.mubr.bf16.gmra.mrb[0].mxu0 %v4743
        %v5416 = vpop.f32.mrb[0].mxu0
        %v5417 = vadd.f32 %v5320, %v5416
        %v5418 = vpop.f32.mrb[0].mxu0
        %v5419 = vpop.f32.mrb[0].mxu0
        %v5420 = vadd.f32 %v5323, %v5419
        %v5421 = vpop.f32.mrb[0].mxu0
        %5422 = vmatprep.mubr.bf16.mxu0 %v4750
        %5423 = vmatmul.mubr.bf16.gmra.mrb[0].mxu0 %v4749
        %v5424 = vpop.f32.mrb[0].mxu0
        %v5425 = vadd.f32 %v5328, %v5424
        %v5426 = vpop.f32.mrb[0].mxu0
        %v5427 = vpop.f32.mrb[0].mxu0
        %v5428 = vadd.f32 %v5331, %v5427
        %v5429 = vpop.f32.mrb[0].mxu0
        %5430 = vmatprep.mubr.bf16.mxu0 %v4756
        %5431 = vmatmul.mubr.bf16.gmra.mrb[0].mxu0 %v4755
        %v5432 = vpop.f32.mrb[0].mxu0
        %v5433 = vadd.f32 %v5336, %v5432
        %v5434 = vpop.f32.mrb[0].mxu0
        %v5435 = vpop.f32.mrb[0].mxu0
        %v5436 = vadd.f32 %v5339, %v5435
        %v5437 = vpop.f32.mrb[0].mxu0
        %5438 = vdwg.mxu0
        %v5439 = vld [vmem:[#allocation17] sm:$0xf]
        %v5440 = vld [vmem:[#allocation17 + $0x4] sm:$0xf]
        %v5441 = vld [vmem:[#allocation17 + $0x8] sm:$0xf]
        %v5442 = vld [vmem:[#allocation17 + $0xc] sm:$0xf]
        %v5443 = vld [vmem:[#allocation17 + $0x10] sm:$0xf]
        %v5444 = vld [vmem:[#allocation17 + $0x14] sm:$0xf]
        %v5445 = vld [vmem:[#allocation17 + $0x18] sm:$0xf]
        %v5446 = vld [vmem:[#allocation17 + $0x1c] sm:$0xf]
        %v5447 = vld [vmem:[#allocation17 + $0x20] sm:$0xf]
        %v5448 = vld [vmem:[#allocation17 + $0x24] sm:$0xf]
        %v5449 = vld [vmem:[#allocation17 + $0x28] sm:$0xf]
        %v5450 = vld [vmem:[#allocation17 + $0x2c] sm:$0xf]
        %v5451 = vld [vmem:[#allocation17 + $0x30] sm:$0xf]
        %v5452 = vld [vmem:[#allocation17 + $0x34] sm:$0xf]
        %v5453 = vld [vmem:[#allocation17 + $0x38] sm:$0xf]
        %v5454 = vld [vmem:[#allocation17 + $0x3c] sm:$0xf]
        %v5455 = vld [vmem:[#allocation17 + $0x40] sm:$0xf]
        %v5456 = vld [vmem:[#allocation17 + $0x44] sm:$0xf]
        %v5457 = vld [vmem:[#allocation17 + $0x48] sm:$0xf]
        %v5458 = vld [vmem:[#allocation17 + $0x4c] sm:$0xf]
        %v5459 = vld [vmem:[#allocation17 + $0x50] sm:$0xf]
        %v5460 = vld [vmem:[#allocation17 + $0x54] sm:$0xf]
        %v5461 = vld [vmem:[#allocation17 + $0x58] sm:$0xf]
        %v5462 = vld [vmem:[#allocation17 + $0x5c] sm:$0xf]
        %v5463 = vld [vmem:[#allocation17 + $0x60] sm:$0xf]
        %v5464 = vld [vmem:[#allocation17 + $0x64] sm:$0xf]
        %v5465 = vld [vmem:[#allocation17 + $0x68] sm:$0xf]
        %v5466 = vld [vmem:[#allocation17 + $0x6c] sm:$0xf]
        %v5467 = vld [vmem:[#allocation17 + $0x70] sm:$0xf]
        %v5468 = vld [vmem:[#allocation17 + $0x74] sm:$0xf]
        %v5469 = vld [vmem:[#allocation17 + $0x78] sm:$0xf]
        %v5470 = vld [vmem:[#allocation17 + $0x7c] sm:$0xf]
        %v5471 = vld [vmem:[#allocation17 + $0x80] sm:$0xf]
        %v5472 = vld [vmem:[#allocation17 + $0x84] sm:$0xf]
        %v5473 = vld [vmem:[#allocation17 + $0x88] sm:$0xf]
        %v5474 = vld [vmem:[#allocation17 + $0x8c] sm:$0xf]
        %v5475 = vld [vmem:[#allocation17 + $0x90] sm:$0xf]
        %v5476 = vld [vmem:[#allocation17 + $0x94] sm:$0xf]
        %v5477 = vld [vmem:[#allocation17 + $0x98] sm:$0xf]
        %v5478 = vld [vmem:[#allocation17 + $0x9c] sm:$0xf]
        %v5479 = vld [vmem:[#allocation17 + $0xa0] sm:$0xf]
        %v5480 = vld [vmem:[#allocation17 + $0xa4] sm:$0xf]
        %v5481 = vld [vmem:[#allocation17 + $0xa8] sm:$0xf]
        %v5482 = vld [vmem:[#allocation17 + $0xac] sm:$0xf]
        %v5483 = vld [vmem:[#allocation17 + $0xb0] sm:$0xf]
        %v5484 = vld [vmem:[#allocation17 + $0xb4] sm:$0xf]
        %v5485 = vld [vmem:[#allocation17 + $0xb8] sm:$0xf]
        %v5486 = vld [vmem:[#allocation17 + $0xbc] sm:$0xf]
        %v5487 = vld [vmem:[#allocation17 + $0xc0] sm:$0xf]
        %v5488 = vld [vmem:[#allocation17 + $0xc4] sm:$0xf]
        %v5489 = vld [vmem:[#allocation17 + $0xc8] sm:$0xf]
        %v5490 = vld [vmem:[#allocation17 + $0xcc] sm:$0xf]
        %v5491 = vld [vmem:[#allocation17 + $0xd0] sm:$0xf]
        %v5492 = vld [vmem:[#allocation17 + $0xd4] sm:$0xf]
        %v5493 = vld [vmem:[#allocation17 + $0xd8] sm:$0xf]
        %v5494 = vld [vmem:[#allocation17 + $0xdc] sm:$0xf]
        %v5495 = vld [vmem:[#allocation17 + $0xe0] sm:$0xf]
        %v5496 = vld [vmem:[#allocation17 + $0xe4] sm:$0xf]
        %v5497 = vld [vmem:[#allocation17 + $0xe8] sm:$0xf]
        %v5498 = vld [vmem:[#allocation17 + $0xec] sm:$0xf]
        %v5499 = vld [vmem:[#allocation17 + $0xf0] sm:$0xf]
        %v5500 = vld [vmem:[#allocation17 + $0xf4] sm:$0xf]
        %v5501 = vld [vmem:[#allocation17 + $0xf8] sm:$0xf]
        %v5502 = vld [vmem:[#allocation17 + $0xfc] sm:$0xf]
        %v5503 = vld [vmem:[#allocation17 + $0x100] sm:$0xf]
        %v5504 = vld [vmem:[#allocation17 + $0x104] sm:$0xf]
        %v5505 = vld [vmem:[#allocation17 + $0x108] sm:$0xf]
        %v5506 = vld [vmem:[#allocation17 + $0x10c] sm:$0xf]
        %v5507 = vld [vmem:[#allocation17 + $0x110] sm:$0xf]
        %v5508 = vld [vmem:[#allocation17 + $0x114] sm:$0xf]
        %v5509 = vld [vmem:[#allocation17 + $0x118] sm:$0xf]
        %v5510 = vld [vmem:[#allocation17 + $0x11c] sm:$0xf]
        %v5511 = vld [vmem:[#allocation17 + $0x120] sm:$0xf]
        %v5512 = vld [vmem:[#allocation17 + $0x124] sm:$0xf]
        %v5513 = vld [vmem:[#allocation17 + $0x128] sm:$0xf]
        %v5514 = vld [vmem:[#allocation17 + $0x12c] sm:$0xf]
        %v5515 = vld [vmem:[#allocation17 + $0x130] sm:$0xf]
        %v5516 = vld [vmem:[#allocation17 + $0x134] sm:$0xf]
        %v5517 = vld [vmem:[#allocation17 + $0x138] sm:$0xf]
        %v5518 = vld [vmem:[#allocation17 + $0x13c] sm:$0xf]
        %v5519 = vld [vmem:[#allocation17 + $0x140] sm:$0xf]
        %v5520 = vld [vmem:[#allocation17 + $0x144] sm:$0xf]
        %v5521 = vld [vmem:[#allocation17 + $0x148] sm:$0xf]
        %v5522 = vld [vmem:[#allocation17 + $0x14c] sm:$0xf]
        %v5523 = vld [vmem:[#allocation17 + $0x150] sm:$0xf]
        %v5524 = vld [vmem:[#allocation17 + $0x154] sm:$0xf]
        %v5525 = vld [vmem:[#allocation17 + $0x158] sm:$0xf]
        %v5526 = vld [vmem:[#allocation17 + $0x15c] sm:$0xf]
        %v5527 = vld [vmem:[#allocation17 + $0x160] sm:$0xf]
        %v5528 = vld [vmem:[#allocation17 + $0x164] sm:$0xf]
        %v5529 = vld [vmem:[#allocation17 + $0x168] sm:$0xf]
        %v5530 = vld [vmem:[#allocation17 + $0x16c] sm:$0xf]
        %v5531 = vld [vmem:[#allocation17 + $0x170] sm:$0xf]
        %v5532 = vld [vmem:[#allocation17 + $0x174] sm:$0xf]
        %v5533 = vld [vmem:[#allocation17 + $0x178] sm:$0xf]
        %v5534 = vld [vmem:[#allocation17 + $0x17c] sm:$0xf]
        %v5535 = vld [vmem:[#allocation19] sm:$0x1]
        %v5537 = vlaneseq
        %v5538 = vshrl.u32 %v5537, 7
        %v5539 = vsub.s32 0, %v5538
        %v5540 = vrot.slane %v5535, %v5539
        %v5638 = vunpack.c.l.b16 %v5439
        %v5639 = vunpack.c.l.b16 %v5440
        %v5640 = vunpack.c.l.b16 %v5441
        %v5641 = vunpack.c.l.b16 %v5442
        %v5642 = vunpack.c.l.b16 %v5443
        %v5643 = vunpack.c.l.b16 %v5444
        %v5644 = vunpack.c.l.b16 %v5445
        %v5645 = vunpack.c.l.b16 %v5446
        %v5646 = vunpack.c.l.b16 %v5447
        %v5647 = vunpack.c.l.b16 %v5448
        %v5648 = vunpack.c.l.b16 %v5449
        %v5649 = vunpack.c.l.b16 %v5450
        %v5650 = vunpack.c.l.b16 %v5451
        %v5651 = vunpack.c.l.b16 %v5452
        %v5652 = vunpack.c.l.b16 %v5453
        %v5653 = vunpack.c.l.b16 %v5454
        %v5654 = vunpack.c.l.b16 %v5455
        %v5655 = vunpack.c.l.b16 %v5456
        %v5656 = vunpack.c.l.b16 %v5457
        %v5657 = vunpack.c.l.b16 %v5458
        %v5658 = vunpack.c.l.b16 %v5459
        %v5659 = vunpack.c.l.b16 %v5460
        %v5660 = vunpack.c.l.b16 %v5461
        %v5661 = vunpack.c.l.b16 %v5462
        %v5662 = vunpack.c.l.b16 %v5463
        %v5663 = vunpack.c.l.b16 %v5464
        %v5664 = vunpack.c.l.b16 %v5465
        %v5665 = vunpack.c.l.b16 %v5466
        %v5666 = vunpack.c.l.b16 %v5467
        %v5667 = vunpack.c.l.b16 %v5468
        %v5668 = vunpack.c.l.b16 %v5469
        %v5669 = vunpack.c.l.b16 %v5470
        %v5670 = vunpack.c.l.b16 %v5471
        %v5671 = vunpack.c.l.b16 %v5472
        %v5672 = vunpack.c.l.b16 %v5473
        %v5673 = vunpack.c.l.b16 %v5474
        %v5674 = vunpack.c.l.b16 %v5475
        %v5675 = vunpack.c.l.b16 %v5476
        %v5676 = vunpack.c.l.b16 %v5477
        %v5677 = vunpack.c.l.b16 %v5478
        %v5678 = vunpack.c.l.b16 %v5479
        %v5679 = vunpack.c.l.b16 %v5480
        %v5680 = vunpack.c.l.b16 %v5481
        %v5681 = vunpack.c.l.b16 %v5482
        %v5682 = vunpack.c.l.b16 %v5483
        %v5683 = vunpack.c.l.b16 %v5484
        %v5684 = vunpack.c.l.b16 %v5485
        %v5685 = vunpack.c.l.b16 %v5486
        %v5686 = vunpack.c.l.b16 %v5487
        %v5687 = vunpack.c.l.b16 %v5488
        %v5688 = vunpack.c.l.b16 %v5489
        %v5689 = vunpack.c.l.b16 %v5490
        %v5690 = vunpack.c.l.b16 %v5491
        %v5691 = vunpack.c.l.b16 %v5492
        %v5692 = vunpack.c.l.b16 %v5493
        %v5693 = vunpack.c.l.b16 %v5494
        %v5694 = vunpack.c.l.b16 %v5495
        %v5695 = vunpack.c.l.b16 %v5496
        %v5696 = vunpack.c.l.b16 %v5497
        %v5697 = vunpack.c.l.b16 %v5498
        %v5698 = vunpack.c.l.b16 %v5499
        %v5699 = vunpack.c.l.b16 %v5500
        %v5700 = vunpack.c.l.b16 %v5501
        %v5701 = vunpack.c.l.b16 %v5502
        %v5702 = vunpack.c.l.b16 %v5503
        %v5703 = vunpack.c.l.b16 %v5504
        %v5704 = vunpack.c.l.b16 %v5505
        %v5705 = vunpack.c.l.b16 %v5506
        %v5706 = vunpack.c.l.b16 %v5507
        %v5707 = vunpack.c.l.b16 %v5508
        %v5708 = vunpack.c.l.b16 %v5509
        %v5709 = vunpack.c.l.b16 %v5510
        %v5710 = vunpack.c.l.b16 %v5511
        %v5711 = vunpack.c.l.b16 %v5512
        %v5712 = vunpack.c.l.b16 %v5513
        %v5713 = vunpack.c.l.b16 %v5514
        %v5714 = vunpack.c.l.b16 %v5515
        %v5715 = vunpack.c.l.b16 %v5516
        %v5716 = vunpack.c.l.b16 %v5517
        %v5717 = vunpack.c.l.b16 %v5518
        %v5718 = vunpack.c.l.b16 %v5519
        %v5719 = vunpack.c.l.b16 %v5520
        %v5720 = vunpack.c.l.b16 %v5521
        %v5721 = vunpack.c.l.b16 %v5522
        %v5722 = vunpack.c.l.b16 %v5523
        %v5723 = vunpack.c.l.b16 %v5524
        %v5724 = vunpack.c.l.b16 %v5525
        %v5725 = vunpack.c.l.b16 %v5526
        %v5726 = vunpack.c.l.b16 %v5527
        %v5727 = vunpack.c.l.b16 %v5528
        %v5728 = vunpack.c.l.b16 %v5529
        %v5729 = vunpack.c.l.b16 %v5530
        %v5730 = vunpack.c.l.b16 %v5531
        %v5731 = vunpack.c.l.b16 %v5532
        %v5732 = vunpack.c.l.b16 %v5533
        %v5733 = vunpack.c.l.b16 %v5534
        %v5734 = vpack.c.b16 %v5639, %v5638
        %v5735 = vpack.c.b16 %v5641, %v5640
        %v5736 = vpack.c.b16 %v5643, %v5642
        %v5737 = vpack.c.b16 %v5645, %v5644
        %v5738 = vpack.c.b16 %v5647, %v5646
        %v5739 = vpack.c.b16 %v5649, %v5648
        %v5740 = vpack.c.b16 %v5651, %v5650
        %v5741 = vpack.c.b16 %v5653, %v5652
        %v5742 = vpack.c.b16 %v5655, %v5654
        %v5743 = vpack.c.b16 %v5657, %v5656
        %v5744 = vpack.c.b16 %v5659, %v5658
        %v5745 = vpack.c.b16 %v5661, %v5660
        %v5746 = vpack.c.b16 %v5663, %v5662
        %v5747 = vpack.c.b16 %v5665, %v5664
        %v5748 = vpack.c.b16 %v5667, %v5666
        %v5749 = vpack.c.b16 %v5669, %v5668
        %v5750 = vpack.c.b16 %v5671, %v5670
        %v5751 = vpack.c.b16 %v5673, %v5672
        %v5752 = vpack.c.b16 %v5675, %v5674
        %v5753 = vpack.c.b16 %v5677, %v5676
        %v5754 = vpack.c.b16 %v5679, %v5678
        %v5755 = vpack.c.b16 %v5681, %v5680
        %v5756 = vpack.c.b16 %v5683, %v5682
        %v5757 = vpack.c.b16 %v5685, %v5684
        %v5758 = vpack.c.b16 %v5687, %v5686
        %v5759 = vpack.c.b16 %v5689, %v5688
        %v5760 = vpack.c.b16 %v5691, %v5690
        %v5761 = vpack.c.b16 %v5693, %v5692
        %v5762 = vpack.c.b16 %v5695, %v5694
        %v5763 = vpack.c.b16 %v5697, %v5696
        %v5764 = vpack.c.b16 %v5699, %v5698
        %v5765 = vpack.c.b16 %v5701, %v5700
        %v5766 = vpack.c.b16 %v5703, %v5702
        %v5767 = vpack.c.b16 %v5705, %v5704
        %v5768 = vpack.c.b16 %v5707, %v5706
        %v5769 = vpack.c.b16 %v5709, %v5708
        %v5770 = vpack.c.b16 %v5711, %v5710
        %v5771 = vpack.c.b16 %v5713, %v5712
        %v5772 = vpack.c.b16 %v5715, %v5714
        %v5773 = vpack.c.b16 %v5717, %v5716
        %v5774 = vpack.c.b16 %v5719, %v5718
        %v5775 = vpack.c.b16 %v5721, %v5720
        %v5776 = vpack.c.b16 %v5723, %v5722
        %v5777 = vpack.c.b16 %v5725, %v5724
        %v5778 = vpack.c.b16 %v5727, %v5726
        %v5779 = vpack.c.b16 %v5729, %v5728
        %v5780 = vpack.c.b16 %v5731, %v5730
        %v5781 = vpack.c.b16 %v5733, %v5732
        %5830 = vmatprep.subr.bf16.mxu0 0
        %5831 = vmatpush1.bf16.msra.mxu0 %v5734
        %5832 = vmatprep.subr.bf16.mxu0 0
        %5833 = vmatpush1.bf16.msra.mxu0 %v5735
        %5834 = vmatprep.subr.bf16.mxu0 0
        %5835 = vmatpush1.bf16.msra.mxu0 %v5736
        %5836 = vmatprep.subr.bf16.mxu0 0
        %5837 = vmatpush1.bf16.msra.mxu0 %v5737
        %5838 = vmatprep.subr.bf16.mxu0 0
        %5839 = vmatpush1.bf16.msra.mxu0 %v5738
        %5840 = vmatprep.subr.bf16.mxu0 0
        %5841 = vmatpush1.bf16.msra.mxu0 %v5739
        %5842 = vmatprep.subr.bf16.mxu0 0
        %5843 = vmatpush1.bf16.msra.mxu0 %v5740
        %5844 = vmatprep.subr.bf16.mxu0 0
        %5845 = vmatpush1.bf16.msra.mxu0 %v5741
        %5846 = vmatprep.subr.bf16.mxu0 0
        %5847 = vmatpush1.bf16.msra.mxu0 %v5742
        %5848 = vmatprep.subr.bf16.mxu0 0
        %5849 = vmatpush1.bf16.msra.mxu0 %v5743
        %5850 = vmatprep.subr.bf16.mxu0 0
        %5851 = vmatpush1.bf16.msra.mxu0 %v5744
        %5852 = vmatprep.subr.bf16.mxu0 0
        %5853 = vmatpush1.bf16.msra.mxu0 %v5745
        %5854 = vmatprep.subr.bf16.mxu0 0
        %5855 = vmatpush1.bf16.msra.mxu0 %v5746
        %5856 = vmatprep.subr.bf16.mxu0 0
        %5857 = vmatpush1.bf16.msra.mxu0 %v5747
        %5858 = vmatprep.subr.bf16.mxu0 0
        %5859 = vmatpush1.bf16.msra.mxu0 %v5748
        %5860 = vmatprep.subr.bf16.mxu0 0
        %5861 = vmatpush1.bf16.msra.mxu0 %v5749
        %5862 = vmatprep.mubr.bf16.mxu0 %v4710
        %5863 = vmatmul.mubr.bf16.gmra.mrb[0].mxu0 %v4709
        %v5864 = vpop.f32.mrb[0].mxu0
        %v5865 = vadd.f32 %v5540, %v5864
        %v5866 = vpop.f32.mrb[0].mxu0
        %v5867 = vpop.f32.mrb[0].mxu0
        %v5868 = vadd.f32 %v5540, %v5867
        %v5869 = vpop.f32.mrb[0].mxu0
        %5870 = vmatprep.mubr.bf16.mxu0 %v4716
        %5871 = vmatmul.mubr.bf16.gmra.mrb[0].mxu0 %v4715
        %v5872 = vpop.f32.mrb[0].mxu0
        %v5873 = vadd.f32 %v5540, %v5872
        %v5874 = vpop.f32.mrb[0].mxu0
        %v5875 = vpop.f32.mrb[0].mxu0
        %v5876 = vadd.f32 %v5540, %v5875
        %v5877 = vpop.f32.mrb[0].mxu0
        %5878 = vmatprep.mubr.bf16.mxu0 %v4722
        %5879 = vmatmul.mubr.bf16.gmra.mrb[0].mxu0 %v4721
        %v5880 = vpop.f32.mrb[0].mxu0
        %v5881 = vadd.f32 %v5540, %v5880
        %v5882 = vpop.f32.mrb[0].mxu0
        %v5883 = vpop.f32.mrb[0].mxu0
        %v5884 = vadd.f32 %v5540, %v5883
        %v5885 = vpop.f32.mrb[0].mxu0
        %5886 = vmatprep.mubr.bf16.mxu0 %v4728
        %5887 = vmatmul.mubr.bf16.gmra.mrb[0].mxu0 %v4727
        %v5888 = vpop.f32.mrb[0].mxu0
        %v5889 = vadd.f32 %v5540, %v5888
        %v5890 = vpop.f32.mrb[0].mxu0
        %v5891 = vpop.f32.mrb[0].mxu0
        %v5892 = vadd.f32 %v5540, %v5891
        %v5893 = vpop.f32.mrb[0].mxu0
        %5894 = vmatprep.mubr.bf16.mxu0 %v4734
        %5895 = vmatmul.mubr.bf16.gmra.mrb[0].mxu0 %v4733
        %v5896 = vpop.f32.mrb[0].mxu0
        %v5897 = vadd.f32 %v5540, %v5896
        %v5898 = vpop.f32.mrb[0].mxu0
        %v5899 = vpop.f32.mrb[0].mxu0
        %v5900 = vadd.f32 %v5540, %v5899
        %v5901 = vpop.f32.mrb[0].mxu0
        %5902 = vmatprep.mubr.bf16.mxu0 %v4740
        %5903 = vmatmul.mubr.bf16.gmra.mrb[0].mxu0 %v4739
        %v5904 = vpop.f32.mrb[0].mxu0
        %v5905 = vadd.f32 %v5540, %v5904
        %v5906 = vpop.f32.mrb[0].mxu0
        %v5907 = vpop.f32.mrb[0].mxu0
        %v5908 = vadd.f32 %v5540, %v5907
        %v5909 = vpop.f32.mrb[0].mxu0
        %5910 = vmatprep.mubr.bf16.mxu0 %v4746
        %5911 = vmatmul.mubr.bf16.gmra.mrb[0].mxu0 %v4745
        %v5912 = vpop.f32.mrb[0].mxu0
        %v5913 = vadd.f32 %v5540, %v5912
        %v5914 = vpop.f32.mrb[0].mxu0
        %v5915 = vpop.f32.mrb[0].mxu0
        %v5916 = vadd.f32 %v5540, %v5915
        %v5917 = vpop.f32.mrb[0].mxu0
        %5918 = vmatprep.mubr.bf16.mxu0 %v4752
        %5919 = vmatmul.mubr.bf16.gmra.mrb[0].mxu0 %v4751
        %v5920 = vpop.f32.mrb[0].mxu0
        %v5921 = vadd.f32 %v5540, %v5920
        %v5922 = vpop.f32.mrb[0].mxu0
        %v5923 = vpop.f32.mrb[0].mxu0
        %v5924 = vadd.f32 %v5540, %v5923
        %v5925 = vpop.f32.mrb[0].mxu0
        %5926 = vdwg.mxu0
        %5927 = vmatprep.subr.bf16.mxu0 0
        %5928 = vmatpush1.bf16.msra.mxu0 %v5750
        %5929 = vmatprep.subr.bf16.mxu0 0
        %5930 = vmatpush1.bf16.msra.mxu0 %v5751
        %5931 = vmatprep.subr.bf16.mxu0 0
        %5932 = vmatpush1.bf16.msra.mxu0 %v5752
        %5933 = vmatprep.subr.bf16.mxu0 0
        %5934 = vmatpush1.bf16.msra.mxu0 %v5753
        %5935 = vmatprep.subr.bf16.mxu0 0
        %5936 = vmatpush1.bf16.msra.mxu0 %v5754
        %5937 = vmatprep.subr.bf16.mxu0 0
        %5938 = vmatpush1.bf16.msra.mxu0 %v5755
        %5939 = vmatprep.subr.bf16.mxu0 0
        %5940 = vmatpush1.bf16.msra.mxu0 %v5756
        %5941 = vmatprep.subr.bf16.mxu0 0
        %5942 = vmatpush1.bf16.msra.mxu0 %v5757
        %5943 = vmatprep.subr.bf16.mxu0 0
        %5944 = vmatpush1.bf16.msra.mxu0 %v5758
        %5945 = vmatprep.subr.bf16.mxu0 0
        %5946 = vmatpush1.bf16.msra.mxu0 %v5759
        %5947 = vmatprep.subr.bf16.mxu0 0
        %5948 = vmatpush1.bf16.msra.mxu0 %v5760
        %5949 = vmatprep.subr.bf16.mxu0 0
        %5950 = vmatpush1.bf16.msra.mxu0 %v5761
        %5951 = vmatprep.subr.bf16.mxu0 0
        %5952 = vmatpush1.bf16.msra.mxu0 %v5762
        %5953 = vmatprep.subr.bf16.mxu0 0
        %5954 = vmatpush1.bf16.msra.mxu0 %v5763
        %5955 = vmatprep.subr.bf16.mxu0 0
        %5956 = vmatpush1.bf16.msra.mxu0 %v5764
        %5957 = vmatprep.subr.bf16.mxu0 0
        %5958 = vmatpush1.bf16.msra.mxu0 %v5765
        %5959 = vmatprep.mubr.bf16.mxu0 %v4712
        %5960 = vmatmul.mubr.bf16.gmra.mrb[0].mxu0 %v4711
        %v5961 = vpop.f32.mrb[0].mxu0
        %v5962 = vadd.f32 %v5865, %v5961
        %v5963 = vpop.f32.mrb[0].mxu0
        %v5964 = vpop.f32.mrb[0].mxu0
        %v5965 = vadd.f32 %v5868, %v5964
        %v5966 = vpop.f32.mrb[0].mxu0
        %5967 = vmatprep.mubr.bf16.mxu0 %v4718
        %5968 = vmatmul.mubr.bf16.gmra.mrb[0].mxu0 %v4717
        %v5969 = vpop.f32.mrb[0].mxu0
        %v5970 = vadd.f32 %v5873, %v5969
        %v5971 = vpop.f32.mrb[0].mxu0
        %v5972 = vpop.f32.mrb[0].mxu0
        %v5973 = vadd.f32 %v5876, %v5972
        %v5974 = vpop.f32.mrb[0].mxu0
        %5975 = vmatprep.mubr.bf16.mxu0 %v4724
        %5976 = vmatmul.mubr.bf16.gmra.mrb[0].mxu0 %v4723
        %v5977 = vpop.f32.mrb[0].mxu0
        %v5978 = vadd.f32 %v5881, %v5977
        %v5979 = vpop.f32.mrb[0].mxu0
        %v5980 = vpop.f32.mrb[0].mxu0
        %v5981 = vadd.f32 %v5884, %v5980
        %v5982 = vpop.f32.mrb[0].mxu0
        %5983 = vmatprep.mubr.bf16.mxu0 %v4730
        %5984 = vmatmul.mubr.bf16.gmra.mrb[0].mxu0 %v4729
        %v5985 = vpop.f32.mrb[0].mxu0
        %v5986 = vadd.f32 %v5889, %v5985
        %v5987 = vpop.f32.mrb[0].mxu0
        %v5988 = vpop.f32.mrb[0].mxu0
        %v5989 = vadd.f32 %v5892, %v5988
        %v5990 = vpop.f32.mrb[0].mxu0
        %5991 = vmatprep.mubr.bf16.mxu0 %v4736
        %5992 = vmatmul.mubr.bf16.gmra.mrb[0].mxu0 %v4735
        %v5993 = vpop.f32.mrb[0].mxu0
        %v5994 = vadd.f32 %v5897, %v5993
        %v5995 = vpop.f32.mrb[0].mxu0
        %v5996 = vpop.f32.mrb[0].mxu0
        %v5997 = vadd.f32 %v5900, %v5996
        %v5998 = vpop.f32.mrb[0].mxu0
        %5999 = vmatprep.mubr.bf16.mxu0 %v4742
        %6000 = vmatmul.mubr.bf16.gmra.mrb[0].mxu0 %v4741
        %v6001 = vpop.f32.mrb[0].mxu0
        %v6002 = vadd.f32 %v5905, %v6001
        %v6003 = vpop.f32.mrb[0].mxu0
        %v6004 = vpop.f32.mrb[0].mxu0
        %v6005 = vadd.f32 %v5908, %v6004
        %v6006 = vpop.f32.mrb[0].mxu0
        %6007 = vmatprep.mubr.bf16.mxu0 %v4748
        %6008 = vmatmul.mubr.bf16.gmra.mrb[0].mxu0 %v4747
        %v6009 = vpop.f32.mrb[0].mxu0
        %v6010 = vadd.f32 %v5913, %v6009
        %v6011 = vpop.f32.mrb[0].mxu0
        %v6012 = vpop.f32.mrb[0].mxu0
        %v6013 = vadd.f32 %v5916, %v6012
        %v6014 = vpop.f32.mrb[0].mxu0
        %6015 = vmatprep.mubr.bf16.mxu0 %v4754
        %6016 = vmatmul.mubr.bf16.gmra.mrb[0].mxu0 %v4753
        %v6017 = vpop.f32.mrb[0].mxu0
        %v6018 = vadd.f32 %v5921, %v6017
        %v6019 = vpop.f32.mrb[0].mxu0
        %v6020 = vpop.f32.mrb[0].mxu0
        %v6021 = vadd.f32 %v5924, %v6020
        %v6022 = vpop.f32.mrb[0].mxu0
        %6023 = vdwg.mxu0
        %6024 = vmatprep.subr.bf16.mxu0 0
        %6025 = vmatpush1.bf16.msra.mxu0 %v5766
        %6026 = vmatprep.subr.bf16.mxu0 0
        %6027 = vmatpush1.bf16.msra.mxu0 %v5767
        %6028 = vmatprep.subr.bf16.mxu0 0
        %6029 = vmatpush1.bf16.msra.mxu0 %v5768
        %6030 = vmatprep.subr.bf16.mxu0 0
        %6031 = vmatpush1.bf16.msra.mxu0 %v5769
        %6032 = vmatprep.subr.bf16.mxu0 0
        %6033 = vmatpush1.bf16.msra.mxu0 %v5770
        %6034 = vmatprep.subr.bf16.mxu0 0
        %6035 = vmatpush1.bf16.msra.mxu0 %v5771
        %6036 = vmatprep.subr.bf16.mxu0 0
        %6037 = vmatpush1.bf16.msra.mxu0 %v5772
        %6038 = vmatprep.subr.bf16.mxu0 0
        %6039 = vmatpush1.bf16.msra.mxu0 %v5773
        %6040 = vmatprep.subr.bf16.mxu0 0
        %6041 = vmatpush1.bf16.msra.mxu0 %v5774
        %6042 = vmatprep.subr.bf16.mxu0 0
        %6043 = vmatpush1.bf16.msra.mxu0 %v5775
        %6044 = vmatprep.subr.bf16.mxu0 0
        %6045 = vmatpush1.bf16.msra.mxu0 %v5776
        %6046 = vmatprep.subr.bf16.mxu0 0
        %6047 = vmatpush1.bf16.msra.mxu0 %v5777
        %6048 = vmatprep.subr.bf16.mxu0 0
        %6049 = vmatpush1.bf16.msra.mxu0 %v5778
        %6050 = vmatprep.subr.bf16.mxu0 0
        %6051 = vmatpush1.bf16.msra.mxu0 %v5779
        %6052 = vmatprep.subr.bf16.mxu0 0
        %6053 = vmatpush1.bf16.msra.mxu0 %v5780
        %6054 = vmatprep.subr.bf16.mxu0 0
        %6055 = vmatpush1.bf16.msra.mxu0 %v5781
        %6056 = vmatprep.mubr.bf16.mxu0 %v4714
        %6057 = vmatmul.mubr.bf16.gmra.mrb[0].mxu0 %v4713
        %v6058 = vpop.f32.mrb[0].mxu0
        %v6059 = vadd.f32 %v5962, %v6058
        %v6060 = vpop.f32.mrb[0].mxu0
        %v6061 = vpop.f32.mrb[0].mxu0
        %v6062 = vadd.f32 %v5965, %v6061
        %v6063 = vpop.f32.mrb[0].mxu0
        %6064 = vmatprep.mubr.bf16.mxu0 %v4720
        %6065 = vmatmul.mubr.bf16.gmra.mrb[0].mxu0 %v4719
        %v6066 = vpop.f32.mrb[0].mxu0
        %v6067 = vadd.f32 %v5970, %v6066
        %v6068 = vpop.f32.mrb[0].mxu0
        %v6069 = vpop.f32.mrb[0].mxu0
        %v6070 = vadd.f32 %v5973, %v6069
        %v6071 = vpop.f32.mrb[0].mxu0
        %6072 = vmatprep.mubr.bf16.mxu0 %v4726
        %6073 = vmatmul.mubr.bf16.gmra.mrb[0].mxu0 %v4725
        %v6074 = vpop.f32.mrb[0].mxu0
        %v6075 = vadd.f32 %v5978, %v6074
        %v6076 = vpop.f32.mrb[0].mxu0
        %v6077 = vpop.f32.mrb[0].mxu0
        %v6078 = vadd.f32 %v5981, %v6077
        %v6079 = vpop.f32.mrb[0].mxu0
        %6080 = vmatprep.mubr.bf16.mxu0 %v4732
        %6081 = vmatmul.mubr.bf16.gmra.mrb[0].mxu0 %v4731
        %v6082 = vpop.f32.mrb[0].mxu0
        %v6083 = vadd.f32 %v5986, %v6082
        %v6084 = vpop.f32.mrb[0].mxu0
        %v6085 = vpop.f32.mrb[0].mxu0
        %v6086 = vadd.f32 %v5989, %v6085
        %v6087 = vpop.f32.mrb[0].mxu0
        %6088 = vmatprep.mubr.bf16.mxu0 %v4738
        %6089 = vmatmul.mubr.bf16.gmra.mrb[0].mxu0 %v4737
        %v6090 = vpop.f32.mrb[0].mxu0
        %v6091 = vadd.f32 %v5994, %v6090
        %v6092 = vpop.f32.mrb[0].mxu0
        %v6093 = vpop.f32.mrb[0].mxu0
        %v6094 = vadd.f32 %v5997, %v6093
        %v6095 = vpop.f32.mrb[0].mxu0
        %6096 = vmatprep.mubr.bf16.mxu0 %v4744
        %6097 = vmatmul.mubr.bf16.gmra.mrb[0].mxu0 %v4743
        %v6098 = vpop.f32.mrb[0].mxu0
        %v6099 = vadd.f32 %v6002, %v6098
        %v6100 = vpop.f32.mrb[0].mxu0
        %v6101 = vpop.f32.mrb[0].mxu0
        %v6102 = vadd.f32 %v6005, %v6101
        %v6103 = vpop.f32.mrb[0].mxu0
        %6104 = vmatprep.mubr.bf16.mxu0 %v4750
        %6105 = vmatmul.mubr.bf16.gmra.mrb[0].mxu0 %v4749
        %v6106 = vpop.f32.mrb[0].mxu0
        %v6107 = vadd.f32 %v6010, %v6106
        %v6108 = vpop.f32.mrb[0].mxu0
        %v6109 = vpop.f32.mrb[0].mxu0
        %v6110 = vadd.f32 %v6013, %v6109
        %v6111 = vpop.f32.mrb[0].mxu0
        %6112 = vmatprep.mubr.bf16.mxu0 %v4756
        %6113 = vmatmul.mubr.bf16.gmra.mrb[0].mxu0 %v4755
        %v6114 = vpop.f32.mrb[0].mxu0
        %v6115 = vadd.f32 %v6018, %v6114
        %v6116 = vpop.f32.mrb[0].mxu0
        %v6117 = vpop.f32.mrb[0].mxu0
        %v6118 = vadd.f32 %v6021, %v6117
        %v6119 = vpop.f32.mrb[0].mxu0
        %6120 = vdwg.mxu0
        %v6121 = vmax.f32 %v6059, -4.0
        %v6122 = vmax.f32 %v6062, -4.0
        %v6123 = vmax.f32 %v6067, -4.0
        %v6124 = vmax.f32 %v6070, -4.0
        %v6125 = vmax.f32 %v6075, -4.0
        %v6126 = vmax.f32 %v6078, -4.0
        %v6127 = vmax.f32 %v6083, -4.0
        %v6128 = vmax.f32 %v6086, -4.0
        %v6129 = vmax.f32 %v6091, -4.0
        %v6130 = vmax.f32 %v6094, -4.0
        %v6131 = vmax.f32 %v6099, -4.0
        %v6132 = vmax.f32 %v6102, -4.0
        %v6133 = vmax.f32 %v6107, -4.0
        %v6134 = vmax.f32 %v6110, -4.0
        %v6135 = vmax.f32 %v6115, -4.0
        %v6136 = vmax.f32 %v6118, -4.0
        %v6137 = vmin.f32 %v6121, 15.0
        %v6138 = vmin.f32 %v6122, 15.0
        %v6139 = vmin.f32 %v6123, 15.0
        %v6140 = vmin.f32 %v6124, 15.0
        %v6141 = vmin.f32 %v6125, 15.0
        %v6142 = vmin.f32 %v6126, 15.0
        %v6143 = vmin.f32 %v6127, 15.0
        %v6144 = vmin.f32 %v6128, 15.0
        %v6145 = vmin.f32 %v6129, 15.0
        %v6146 = vmin.f32 %v6130, 15.0
        %v6147 = vmin.f32 %v6131, 15.0
        %v6148 = vmin.f32 %v6132, 15.0
        %v6149 = vmin.f32 %v6133, 15.0
        %v6150 = vmin.f32 %v6134, 15.0
        %v6151 = vmin.f32 %v6135, 15.0
        %v6152 = vmin.f32 %v6136, 15.0
        %v6153 = vmul.f32 %v6137, 1.442695
        %v6154 = vpow.pop %v6153
        %v6155 = vmul.f32 %v6138, 1.442695
        %v6156 = vpow.pop %v6155
        %v6157 = vmul.f32 %v6139, 1.442695
        %v6158 = vpow.pop %v6157
        %v6159 = vmul.f32 %v6140, 1.442695
        %v6160 = vpow.pop %v6159
        %v6161 = vmul.f32 %v6141, 1.442695
        %v6162 = vpow.pop %v6161
        %v6163 = vmul.f32 %v6142, 1.442695
        %v6164 = vpow.pop %v6163
        %v6165 = vmul.f32 %v6143, 1.442695
        %v6166 = vpow.pop %v6165
        %v6167 = vmul.f32 %v6144, 1.442695
        %v6168 = vpow.pop %v6167
        %v6169 = vmul.f32 %v6145, 1.442695
        %v6170 = vpow.pop %v6169
        %v6171 = vmul.f32 %v6146, 1.442695
        %v6172 = vpow.pop %v6171
        %v6173 = vmul.f32 %v6147, 1.442695
        %v6174 = vpow.pop %v6173
        %v6175 = vmul.f32 %v6148, 1.442695
        %v6176 = vpow.pop %v6175
        %v6177 = vmul.f32 %v6149, 1.442695
        %v6178 = vpow.pop %v6177
        %v6179 = vmul.f32 %v6150, 1.442695
        %v6180 = vpow.pop %v6179
        %v6181 = vmul.f32 %v6151, 1.442695
        %v6182 = vpow.pop %v6181
        %v6183 = vmul.f32 %v6152, 1.442695
        %v6184 = vpow.pop %v6183
        %v6185 = vld [vmem:[%s843] sm:$0xff]
        %v6186 = vld [vmem:[%s843 + $0x8] sm:$0xff]
        %v6187 = vld [vmem:[%s843 + $0x10] sm:$0xff]
        %v6188 = vld [vmem:[%s843 + $0x18] sm:$0xff]
        %v6189 = vld [vmem:[%s843 + $0x20] sm:$0xff]
        %v6190 = vld [vmem:[%s843 + $0x28] sm:$0xff]
        %v6191 = vld [vmem:[%s843 + $0x30] sm:$0xff]
        %v6192 = vld [vmem:[%s843 + $0x38] sm:$0xff]
        %v6193 = vld [vmem:[%s843 + $0x40] sm:$0xff]
        %v6194 = vld [vmem:[%s843 + $0x48] sm:$0xff]
        %v6195 = vld [vmem:[%s843 + $0x50] sm:$0xff]
        %v6196 = vld [vmem:[%s843 + $0x58] sm:$0xff]
        %v6197 = vld [vmem:[%s843 + $0x60] sm:$0xff]
        %v6198 = vld [vmem:[%s843 + $0x68] sm:$0xff]
        %v6199 = vld [vmem:[%s843 + $0x70] sm:$0xff]
        %v6200 = vld [vmem:[%s843 + $0x78] sm:$0xff]
        %v6201 = vmul.f32 %v6154, %v6185
        %v6202 = vmul.f32 %v6156, %v6186
        %v6203 = vmul.f32 %v6158, %v6187
        %v6204 = vmul.f32 %v6160, %v6188
        %v6205 = vmul.f32 %v6162, %v6189
        %v6206 = vmul.f32 %v6164, %v6190
        %v6207 = vmul.f32 %v6166, %v6191
        %v6208 = vmul.f32 %v6168, %v6192
        %v6209 = vmul.f32 %v6170, %v6193
        %v6210 = vmul.f32 %v6172, %v6194
        %v6211 = vmul.f32 %v6174, %v6195
        %v6212 = vmul.f32 %v6176, %v6196
        %v6213 = vmul.f32 %v6178, %v6197
        %v6214 = vmul.f32 %v6180, %v6198
        %v6215 = vmul.f32 %v6182, %v6199
        %v6216 = vmul.f32 %v6184, %v6200
        %v6217 = vadd.f32 %v5377, %v6201
        %v6218 = vadd.f32 %v5380, %v6202
        %v6219 = vadd.f32 %v5385, %v6203
        %v6220 = vadd.f32 %v5388, %v6204
        %v6221 = vadd.f32 %v5393, %v6205
        %v6222 = vadd.f32 %v5396, %v6206
        %v6223 = vadd.f32 %v5401, %v6207
        %v6224 = vadd.f32 %v5404, %v6208
        %v6225 = vadd.f32 %v5409, %v6209
        %v6226 = vadd.f32 %v5412, %v6210
        %v6227 = vadd.f32 %v5417, %v6211
        %v6228 = vadd.f32 %v5420, %v6212
        %v6229 = vadd.f32 %v5425, %v6213
        %v6230 = vadd.f32 %v5428, %v6214
        %v6231 = vadd.f32 %v5433, %v6215
        %v6232 = vadd.f32 %v5436, %v6216
        %v6233 = vpack.c.bf16 %v1010, %v1009
        %v6234 = vpack.c.bf16 %v1012, %v1011
        %v6235 = vpack.c.bf16 %v1014, %v1013
        %v6236 = vpack.c.bf16 %v1016, %v1015
        %v6237 = vpack.c.bf16 %v1018, %v1017
        %v6238 = vpack.c.bf16 %v1020, %v1019
        %v6239 = vpack.c.bf16 %v1022, %v1021
        %v6240 = vpack.c.bf16 %v1024, %v1023
        %v6241 = vld [vmem:[#allocation20] sm:$0xff]
        %v6242 = vld [vmem:[#allocation20 + $0x8] sm:$0xff]
        %v6243 = vld [vmem:[#allocation20 + $0x10] sm:$0xff]
        %v6244 = vld [vmem:[#allocation20 + $0x18] sm:$0xff]
        %v6245 = vld [vmem:[#allocation20 + $0x20] sm:$0xff]
        %v6246 = vld [vmem:[#allocation20 + $0x28] sm:$0xff]
        %v6247 = vld [vmem:[#allocation20 + $0x30] sm:$0xff]
        %v6248 = vld [vmem:[#allocation20 + $0x38] sm:$0xff]
        %v6249 = vld [vmem:[#allocation20 + $0x40] sm:$0xff]
        %v6250 = vld [vmem:[#allocation20 + $0x48] sm:$0xff]
        %v6251 = vld [vmem:[#allocation20 + $0x50] sm:$0xff]
        %v6252 = vld [vmem:[#allocation20 + $0x58] sm:$0xff]
        %v6253 = vld [vmem:[#allocation20 + $0x60] sm:$0xff]
        %v6254 = vld [vmem:[#allocation20 + $0x68] sm:$0xff]
        %v6255 = vld [vmem:[#allocation20 + $0x70] sm:$0xff]
        %v6256 = vld [vmem:[#allocation20 + $0x78] sm:$0xff]
        %v6257 = vld [vmem:[#allocation20 + $0x80] sm:$0xff]
        %v6258 = vld [vmem:[#allocation20 + $0x88] sm:$0xff]
        %v6259 = vld [vmem:[#allocation20 + $0x90] sm:$0xff]
        %v6260 = vld [vmem:[#allocation20 + $0x98] sm:$0xff]
        %v6261 = vld [vmem:[#allocation20 + $0xa0] sm:$0xff]
        %v6262 = vld [vmem:[#allocation20 + $0xa8] sm:$0xff]
        %v6263 = vld [vmem:[#allocation20 + $0xb0] sm:$0xff]
        %v6264 = vld [vmem:[#allocation20 + $0xb8] sm:$0xff]
        %v6265 = vld [vmem:[#allocation20 + $0xc0] sm:$0xff]
        %v6266 = vld [vmem:[#allocation20 + $0xc8] sm:$0xff]
        %v6267 = vld [vmem:[#allocation20 + $0xd0] sm:$0xff]
        %v6268 = vld [vmem:[#allocation20 + $0xd8] sm:$0xff]
        %v6269 = vld [vmem:[#allocation20 + $0xe0] sm:$0xff]
        %v6270 = vld [vmem:[#allocation20 + $0xe8] sm:$0xff]
        %v6271 = vld [vmem:[#allocation20 + $0xf0] sm:$0xff]
        %v6272 = vld [vmem:[#allocation20 + $0xf8] sm:$0xff]
        %v6273 = vld [vmem:[#allocation20 + $0x100] sm:$0xff]
        %v6274 = vld [vmem:[#allocation20 + $0x108] sm:$0xff]
        %v6275 = vld [vmem:[#allocation20 + $0x110] sm:$0xff]
        %v6276 = vld [vmem:[#allocation20 + $0x118] sm:$0xff]
        %v6277 = vld [vmem:[#allocation20 + $0x120] sm:$0xff]
        %v6278 = vld [vmem:[#allocation20 + $0x128] sm:$0xff]
        %v6279 = vld [vmem:[#allocation20 + $0x130] sm:$0xff]
        %v6280 = vld [vmem:[#allocation20 + $0x138] sm:$0xff]
        %v6281 = vld [vmem:[#allocation20 + $0x140] sm:$0xff]
        %v6282 = vld [vmem:[#allocation20 + $0x148] sm:$0xff]
        %v6283 = vld [vmem:[#allocation20 + $0x150] sm:$0xff]
        %v6284 = vld [vmem:[#allocation20 + $0x158] sm:$0xff]
        %v6285 = vld [vmem:[#allocation20 + $0x160] sm:$0xff]
        %v6286 = vld [vmem:[#allocation20 + $0x168] sm:$0xff]
        %v6287 = vld [vmem:[#allocation20 + $0x170] sm:$0xff]
        %v6288 = vld [vmem:[#allocation20 + $0x178] sm:$0xff]
        %v6289 = vpack.c.bf16 %v6218, %v6217
        %v6290 = vpack.c.bf16 %v6220, %v6219
        %v6291 = vpack.c.bf16 %v6222, %v6221
        %v6292 = vpack.c.bf16 %v6224, %v6223
        %v6293 = vpack.c.bf16 %v6226, %v6225
        %v6294 = vpack.c.bf16 %v6228, %v6227
        %v6295 = vpack.c.bf16 %v6230, %v6229
        %v6296 = vpack.c.bf16 %v6232, %v6231
        %v6297 = vld [vmem:[#allocation22] sm:$0xff]
        %v6298 = vld [vmem:[#allocation22 + $0x8] sm:$0xff]
        %v6299 = vld [vmem:[#allocation22 + $0x10] sm:$0xff]
        %v6300 = vld [vmem:[#allocation22 + $0x18] sm:$0xff]
        %v6301 = vld [vmem:[#allocation22 + $0x20] sm:$0xff]
        %v6302 = vld [vmem:[#allocation22 + $0x28] sm:$0xff]
        %v6303 = vld [vmem:[#allocation22 + $0x30] sm:$0xff]
        %v6304 = vld [vmem:[#allocation22 + $0x38] sm:$0xff]
        %v6305 = vld [vmem:[#allocation22 + $0x40] sm:$0xff]
        %v6306 = vld [vmem:[#allocation22 + $0x48] sm:$0xff]
        %v6307 = vld [vmem:[#allocation22 + $0x50] sm:$0xff]
        %v6308 = vld [vmem:[#allocation22 + $0x58] sm:$0xff]
        %v6309 = vld [vmem:[#allocation22 + $0x60] sm:$0xff]
        %v6310 = vld [vmem:[#allocation22 + $0x68] sm:$0xff]
        %v6311 = vld [vmem:[#allocation22 + $0x70] sm:$0xff]
        %v6312 = vld [vmem:[#allocation22 + $0x78] sm:$0xff]
        %v6313 = vld [vmem:[#allocation22 + $0x80] sm:$0xff]
        %v6314 = vld [vmem:[#allocation22 + $0x88] sm:$0xff]
        %v6315 = vld [vmem:[#allocation22 + $0x90] sm:$0xff]
        %v6316 = vld [vmem:[#allocation22 + $0x98] sm:$0xff]
        %v6317 = vld [vmem:[#allocation22 + $0xa0] sm:$0xff]
        %v6318 = vld [vmem:[#allocation22 + $0xa8] sm:$0xff]
        %v6319 = vld [vmem:[#allocation22 + $0xb0] sm:$0xff]
        %v6320 = vld [vmem:[#allocation22 + $0xb8] sm:$0xff]
        %v6321 = vld [vmem:[#allocation22 + $0xc0] sm:$0xff]
        %v6322 = vld [vmem:[#allocation22 + $0xc8] sm:$0xff]
        %v6323 = vld [vmem:[#allocation22 + $0xd0] sm:$0xff]
        %v6324 = vld [vmem:[#allocation22 + $0xd8] sm:$0xff]
        %v6325 = vld [vmem:[#allocation22 + $0xe0] sm:$0xff]
        %v6326 = vld [vmem:[#allocation22 + $0xe8] sm:$0xff]
        %v6327 = vld [vmem:[#allocation22 + $0xf0] sm:$0xff]
        %v6328 = vld [vmem:[#allocation22 + $0xf8] sm:$0xff]
        %v6329 = vld [vmem:[#allocation22 + $0x100] sm:$0xff]
        %v6330 = vld [vmem:[#allocation22 + $0x108] sm:$0xff]
        %v6331 = vld [vmem:[#allocation22 + $0x110] sm:$0xff]
        %v6332 = vld [vmem:[#allocation22 + $0x118] sm:$0xff]
        %v6333 = vld [vmem:[#allocation22 + $0x120] sm:$0xff]
        %v6334 = vld [vmem:[#allocation22 + $0x128] sm:$0xff]
        %v6335 = vld [vmem:[#allocation22 + $0x130] sm:$0xff]
        %v6336 = vld [vmem:[#allocation22 + $0x138] sm:$0xff]
        %v6337 = vld [vmem:[#allocation22 + $0x140] sm:$0xff]
        %v6338 = vld [vmem:[#allocation22 + $0x148] sm:$0xff]
        %v6339 = vld [vmem:[#allocation22 + $0x150] sm:$0xff]
        %v6340 = vld [vmem:[#allocation22 + $0x158] sm:$0xff]
        %v6341 = vld [vmem:[#allocation22 + $0x160] sm:$0xff]
        %v6342 = vld [vmem:[#allocation22 + $0x168] sm:$0xff]
        %v6343 = vld [vmem:[#allocation22 + $0x170] sm:$0xff]
        %v6344 = vld [vmem:[#allocation22 + $0x178] sm:$0xff]
        %v6393 = vunpack.c.l.b16 %v6297
        %v6394 = vunpack.c.h.b16 %v6297
        %v6395 = vunpack.c.l.b16 %v6298
        %v6396 = vunpack.c.h.b16 %v6298
        %v6397 = vunpack.c.l.b16 %v6299
        %v6398 = vunpack.c.h.b16 %v6299
        %v6399 = vunpack.c.l.b16 %v6300
        %v6400 = vunpack.c.h.b16 %v6300
        %v6401 = vunpack.c.l.b16 %v6301
        %v6402 = vunpack.c.h.b16 %v6301
        %v6403 = vunpack.c.l.b16 %v6302
        %v6404 = vunpack.c.h.b16 %v6302
        %v6405 = vunpack.c.l.b16 %v6303
        %v6406 = vunpack.c.h.b16 %v6303
        %v6407 = vunpack.c.l.b16 %v6304
        %v6408 = vunpack.c.h.b16 %v6304
        %v6409 = vunpack.c.l.b16 %v6305
        %v6410 = vunpack.c.h.b16 %v6305
        %v6411 = vunpack.c.l.b16 %v6306
        %v6412 = vunpack.c.h.b16 %v6306
        %v6413 = vunpack.c.l.b16 %v6307
        %v6414 = vunpack.c.h.b16 %v6307
        %v6415 = vunpack.c.l.b16 %v6308
        %v6416 = vunpack.c.h.b16 %v6308
        %v6417 = vunpack.c.l.b16 %v6309
        %v6418 = vunpack.c.h.b16 %v6309
        %v6419 = vunpack.c.l.b16 %v6310
        %v6420 = vunpack.c.h.b16 %v6310
        %v6421 = vunpack.c.l.b16 %v6311
        %v6422 = vunpack.c.h.b16 %v6311
        %v6423 = vunpack.c.l.b16 %v6312
        %v6424 = vunpack.c.h.b16 %v6312
        %v6425 = vunpack.c.l.b16 %v6313
        %v6426 = vunpack.c.h.b16 %v6313
        %v6427 = vunpack.c.l.b16 %v6314
        %v6428 = vunpack.c.h.b16 %v6314
        %v6429 = vunpack.c.l.b16 %v6315
        %v6430 = vunpack.c.h.b16 %v6315
        %v6431 = vunpack.c.l.b16 %v6316
        %v6432 = vunpack.c.h.b16 %v6316
        %v6433 = vunpack.c.l.b16 %v6317
        %v6434 = vunpack.c.h.b16 %v6317
        %v6435 = vunpack.c.l.b16 %v6318
        %v6436 = vunpack.c.h.b16 %v6318
        %v6437 = vunpack.c.l.b16 %v6319
        %v6438 = vunpack.c.h.b16 %v6319
        %v6439 = vunpack.c.l.b16 %v6320
        %v6440 = vunpack.c.h.b16 %v6320
        %v6441 = vunpack.c.l.b16 %v6321
        %v6442 = vunpack.c.h.b16 %v6321
        %v6443 = vunpack.c.l.b16 %v6322
        %v6444 = vunpack.c.h.b16 %v6322
        %v6445 = vunpack.c.l.b16 %v6323
        %v6446 = vunpack.c.h.b16 %v6323
        %v6447 = vunpack.c.l.b16 %v6324
        %v6448 = vunpack.c.h.b16 %v6324
        %v6449 = vunpack.c.l.b16 %v6325
        %v6450 = vunpack.c.h.b16 %v6325
        %v6451 = vunpack.c.l.b16 %v6326
        %v6452 = vunpack.c.h.b16 %v6326
        %v6453 = vunpack.c.l.b16 %v6327
        %v6454 = vunpack.c.h.b16 %v6327
        %v6455 = vunpack.c.l.b16 %v6328
        %v6456 = vunpack.c.h.b16 %v6328
        %v6457 = vunpack.c.l.b16 %v6329
        %v6458 = vunpack.c.h.b16 %v6329
        %v6459 = vunpack.c.l.b16 %v6330
        %v6460 = vunpack.c.h.b16 %v6330
        %v6461 = vunpack.c.l.b16 %v6331
        %v6462 = vunpack.c.h.b16 %v6331
        %v6463 = vunpack.c.l.b16 %v6332
        %v6464 = vunpack.c.h.b16 %v6332
        %v6465 = vunpack.c.l.b16 %v6333
        %v6466 = vunpack.c.h.b16 %v6333
        %v6467 = vunpack.c.l.b16 %v6334
        %v6468 = vunpack.c.h.b16 %v6334
        %v6469 = vunpack.c.l.b16 %v6335
        %v6470 = vunpack.c.h.b16 %v6335
        %v6471 = vunpack.c.l.b16 %v6336
        %v6472 = vunpack.c.h.b16 %v6336
        %v6473 = vunpack.c.l.b16 %v6337
        %v6474 = vunpack.c.h.b16 %v6337
        %v6475 = vunpack.c.l.b16 %v6338
        %v6476 = vunpack.c.h.b16 %v6338
        %v6477 = vunpack.c.l.b16 %v6339
        %v6478 = vunpack.c.h.b16 %v6339
        %v6479 = vunpack.c.l.b16 %v6340
        %v6480 = vunpack.c.h.b16 %v6340
        %v6481 = vunpack.c.l.b16 %v6341
        %v6482 = vunpack.c.h.b16 %v6341
        %v6483 = vunpack.c.l.b16 %v6342
        %v6484 = vunpack.c.h.b16 %v6342
        %v6485 = vunpack.c.l.b16 %v6343
        %v6486 = vunpack.c.h.b16 %v6343
        %v6487 = vunpack.c.l.b16 %v6344
        %v6488 = vunpack.c.h.b16 %v6344
        %v6489 = vpack.c.b16 %v6399, %v6393
        %v6490 = vpack.c.b16 %v6400, %v6394
        %v6491 = vpack.c.b16 %v6401, %v6395
        %v6492 = vpack.c.b16 %v6402, %v6396
        %v6493 = vpack.c.b16 %v6403, %v6397
        %v6494 = vpack.c.b16 %v6404, %v6398
        %v6495 = vpack.c.b16 %v6411, %v6405
        %v6496 = vpack.c.b16 %v6412, %v6406
        %v6497 = vpack.c.b16 %v6413, %v6407
        %v6498 = vpack.c.b16 %v6414, %v6408
        %v6499 = vpack.c.b16 %v6415, %v6409
        %v6500 = vpack.c.b16 %v6416, %v6410
        %v6501 = vpack.c.b16 %v6423, %v6417
        %v6502 = vpack.c.b16 %v6424, %v6418
        %v6503 = vpack.c.b16 %v6425, %v6419
        %v6504 = vpack.c.b16 %v6426, %v6420
        %v6505 = vpack.c.b16 %v6427, %v6421
        %v6506 = vpack.c.b16 %v6428, %v6422
        %v6507 = vpack.c.b16 %v6435, %v6429
        %v6508 = vpack.c.b16 %v6436, %v6430
        %v6509 = vpack.c.b16 %v6437, %v6431
        %v6510 = vpack.c.b16 %v6438, %v6432
        %v6511 = vpack.c.b16 %v6439, %v6433
        %v6512 = vpack.c.b16 %v6440, %v6434
        %v6513 = vpack.c.b16 %v6447, %v6441
        %v6514 = vpack.c.b16 %v6448, %v6442
        %v6515 = vpack.c.b16 %v6449, %v6443
        %v6516 = vpack.c.b16 %v6450, %v6444
        %v6517 = vpack.c.b16 %v6451, %v6445
        %v6518 = vpack.c.b16 %v6452, %v6446
        %v6519 = vpack.c.b16 %v6459, %v6453
        %v6520 = vpack.c.b16 %v6460, %v6454
        %v6521 = vpack.c.b16 %v6461, %v6455
        %v6522 = vpack.c.b16 %v6462, %v6456
        %v6523 = vpack.c.b16 %v6463, %v6457
        %v6524 = vpack.c.b16 %v6464, %v6458
        %v6525 = vpack.c.b16 %v6471, %v6465
        %v6526 = vpack.c.b16 %v6472, %v6466
        %v6527 = vpack.c.b16 %v6473, %v6467
        %v6528 = vpack.c.b16 %v6474, %v6468
        %v6529 = vpack.c.b16 %v6475, %v6469
        %v6530 = vpack.c.b16 %v6476, %v6470
        %v6531 = vpack.c.b16 %v6483, %v6477
        %v6532 = vpack.c.b16 %v6484, %v6478
        %v6533 = vpack.c.b16 %v6485, %v6479
        %v6534 = vpack.c.b16 %v6486, %v6480
        %v6535 = vpack.c.b16 %v6487, %v6481
        %v6536 = vpack.c.b16 %v6488, %v6482
        %6585 = vmatprep.subr.bf16.mxu0 %v6490
        %6586 = vmatpush1.bf16.msra.mxu0 %v6489
        %6587 = vmatprep.subr.bf16.mxu0 %v6496
        %6588 = vmatpush1.bf16.msra.mxu0 %v6495
        %6589 = vmatprep.subr.bf16.mxu0 %v6502
        %6590 = vmatpush1.bf16.msra.mxu0 %v6501
        %6591 = vmatprep.subr.bf16.mxu0 %v6508
        %6592 = vmatpush1.bf16.msra.mxu0 %v6507
        %6593 = vmatprep.subr.bf16.mxu0 %v6514
        %6594 = vmatpush1.bf16.msra.mxu0 %v6513
        %6595 = vmatprep.subr.bf16.mxu0 %v6520
        %6596 = vmatpush1.bf16.msra.mxu0 %v6519
        %6597 = vmatprep.subr.bf16.mxu0 %v6526
        %6598 = vmatpush1.bf16.msra.mxu0 %v6525
        %6599 = vmatprep.subr.bf16.mxu0 %v6532
        %6600 = vmatpush1.bf16.msra.mxu0 %v6531
        %6601 = vmatprep.subr.bf16.mxu0 0
        %6602 = vmatpush1.bf16.msra.mxu0 0
        %6603 = vmatprep.subr.bf16.mxu0 0
        %6604 = vmatpush1.bf16.msra.mxu0 0
        %6605 = vmatprep.subr.bf16.mxu0 0
        %6606 = vmatpush1.bf16.msra.mxu0 0
        %6607 = vmatprep.subr.bf16.mxu0 0
        %6608 = vmatpush1.bf16.msra.mxu0 0
        %6609 = vmatprep.subr.bf16.mxu0 0
        %6610 = vmatpush1.bf16.msra.mxu0 0
        %6611 = vmatprep.subr.bf16.mxu0 0
        %6612 = vmatpush1.bf16.msra.mxu0 0
        %6613 = vmatprep.subr.bf16.mxu0 0
        %6614 = vmatpush1.bf16.msra.mxu0 0
        %6615 = vmatprep.subr.bf16.mxu0 0
        %6616 = vmatpush1.bf16.msra.mxu0 0
        %6617 = vmatprep.mubr.bf16.mxu0 0
        %6618 = vmatmul.mubr.bf16.gmra.mrb[0].mxu0 %v6289
        %v6619 = vpop.f32.mrb[0].mxu0
        %v6620 = vadd.f32 0.0, %v6619
        %v6621 = vpop.f32.mrb[0].mxu0
        %v6622 = vadd.f32 0.0, %v6621
        %v6623 = vpop.f32.mrb[0].mxu0
        %v6624 = vadd.f32 0.0, %v6623
        %v6625 = vpop.f32.mrb[0].mxu0
        %v6626 = vadd.f32 0.0, %v6625
        %6627 = vmatprep.mubr.bf16.mxu0 0
        %6628 = vmatmul.mubr.bf16.gmra.mrb[0].mxu0 %v6290
        %v6629 = vpop.f32.mrb[0].mxu0
        %v6630 = vadd.f32 0.0, %v6629
        %v6631 = vpop.f32.mrb[0].mxu0
        %v6632 = vadd.f32 0.0, %v6631
        %v6633 = vpop.f32.mrb[0].mxu0
        %v6634 = vadd.f32 0.0, %v6633
        %v6635 = vpop.f32.mrb[0].mxu0
        %v6636 = vadd.f32 0.0, %v6635
        %6637 = vmatprep.mubr.bf16.mxu0 0
        %6638 = vmatmul.mubr.bf16.gmra.mrb[0].mxu0 %v6291
        %v6639 = vpop.f32.mrb[0].mxu0
        %v6640 = vadd.f32 0.0, %v6639
        %v6641 = vpop.f32.mrb[0].mxu0
        %v6642 = vadd.f32 0.0, %v6641
        %v6643 = vpop.f32.mrb[0].mxu0
        %v6644 = vadd.f32 0.0, %v6643
        %v6645 = vpop.f32.mrb[0].mxu0
        %v6646 = vadd.f32 0.0, %v6645
        %6647 = vmatprep.mubr.bf16.mxu0 0
        %6648 = vmatmul.mubr.bf16.gmra.mrb[0].mxu0 %v6292
        %v6649 = vpop.f32.mrb[0].mxu0
        %v6650 = vadd.f32 0.0, %v6649
        %v6651 = vpop.f32.mrb[0].mxu0
        %v6652 = vadd.f32 0.0, %v6651
        %v6653 = vpop.f32.mrb[0].mxu0
        %v6654 = vadd.f32 0.0, %v6653
        %v6655 = vpop.f32.mrb[0].mxu0
        %v6656 = vadd.f32 0.0, %v6655
        %6657 = vmatprep.mubr.bf16.mxu0 0
        %6658 = vmatmul.mubr.bf16.gmra.mrb[0].mxu0 %v6293
        %v6659 = vpop.f32.mrb[0].mxu0
        %v6660 = vadd.f32 0.0, %v6659
        %v6661 = vpop.f32.mrb[0].mxu0
        %v6662 = vadd.f32 0.0, %v6661
        %v6663 = vpop.f32.mrb[0].mxu0
        %v6664 = vadd.f32 0.0, %v6663
        %v6665 = vpop.f32.mrb[0].mxu0
        %v6666 = vadd.f32 0.0, %v6665
        %6667 = vmatprep.mubr.bf16.mxu0 0
        %6668 = vmatmul.mubr.bf16.gmra.mrb[0].mxu0 %v6294
        %v6669 = vpop.f32.mrb[0].mxu0
        %v6670 = vadd.f32 0.0, %v6669
        %v6671 = vpop.f32.mrb[0].mxu0
        %v6672 = vadd.f32 0.0, %v6671
        %v6673 = vpop.f32.mrb[0].mxu0
        %v6674 = vadd.f32 0.0, %v6673
        %v6675 = vpop.f32.mrb[0].mxu0
        %v6676 = vadd.f32 0.0, %v6675
        %6677 = vmatprep.mubr.bf16.mxu0 0
        %6678 = vmatmul.mubr.bf16.gmra.mrb[0].mxu0 %v6295
        %v6679 = vpop.f32.mrb[0].mxu0
        %v6680 = vadd.f32 0.0, %v6679
        %v6681 = vpop.f32.mrb[0].mxu0
        %v6682 = vadd.f32 0.0, %v6681
        %v6683 = vpop.f32.mrb[0].mxu0
        %v6684 = vadd.f32 0.0, %v6683
        %v6685 = vpop.f32.mrb[0].mxu0
        %v6686 = vadd.f32 0.0, %v6685
        %6687 = vmatprep.mubr.bf16.mxu0 0
        %6688 = vmatmul.mubr.bf16.gmra.mrb[0].mxu0 %v6296
        %v6689 = vpop.f32.mrb[0].mxu0
        %v6690 = vadd.f32 0.0, %v6689
        %v6691 = vpop.f32.mrb[0].mxu0
        %v6692 = vadd.f32 0.0, %v6691
        %v6693 = vpop.f32.mrb[0].mxu0
        %v6694 = vadd.f32 0.0, %v6693
        %v6695 = vpop.f32.mrb[0].mxu0
        %v6696 = vadd.f32 0.0, %v6695
        %6697 = vdwg.mxu0
        %6698 = vmatprep.subr.bf16.mxu0 %v6492
        %6699 = vmatpush1.bf16.msra.mxu0 %v6491
        %6700 = vmatprep.subr.bf16.mxu0 %v6498
        %6701 = vmatpush1.bf16.msra.mxu0 %v6497
        %6702 = vmatprep.subr.bf16.mxu0 %v6504
        %6703 = vmatpush1.bf16.msra.mxu0 %v6503
        %6704 = vmatprep.subr.bf16.mxu0 %v6510
        %6705 = vmatpush1.bf16.msra.mxu0 %v6509
        %6706 = vmatprep.subr.bf16.mxu0 %v6516
        %6707 = vmatpush1.bf16.msra.mxu0 %v6515
        %6708 = vmatprep.subr.bf16.mxu0 %v6522
        %6709 = vmatpush1.bf16.msra.mxu0 %v6521
        %6710 = vmatprep.subr.bf16.mxu0 %v6528
        %6711 = vmatpush1.bf16.msra.mxu0 %v6527
        %6712 = vmatprep.subr.bf16.mxu0 %v6534
        %6713 = vmatpush1.bf16.msra.mxu0 %v6533
        %6714 = vmatprep.subr.bf16.mxu0 0
        %6715 = vmatpush1.bf16.msra.mxu0 0
        %6716 = vmatprep.subr.bf16.mxu0 0
        %6717 = vmatpush1.bf16.msra.mxu0 0
        %6718 = vmatprep.subr.bf16.mxu0 0
        %6719 = vmatpush1.bf16.msra.mxu0 0
        %6720 = vmatprep.subr.bf16.mxu0 0
        %6721 = vmatpush1.bf16.msra.mxu0 0
        %6722 = vmatprep.subr.bf16.mxu0 0
        %6723 = vmatpush1.bf16.msra.mxu0 0
        %6724 = vmatprep.subr.bf16.mxu0 0
        %6725 = vmatpush1.bf16.msra.mxu0 0
        %6726 = vmatprep.subr.bf16.mxu0 0
        %6727 = vmatpush1.bf16.msra.mxu0 0
        %6728 = vmatprep.subr.bf16.mxu0 0
        %6729 = vmatpush1.bf16.msra.mxu0 0
        %6730 = vmatprep.mubr.bf16.mxu0 0
        %6731 = vmatmul.mubr.bf16.gmra.mrb[0].mxu0 %v6289
        %v6732 = vpop.f32.mrb[0].mxu0
        %v6733 = vadd.f32 0.0, %v6732
        %v6734 = vpop.f32.mrb[0].mxu0
        %v6735 = vadd.f32 0.0, %v6734
        %v6736 = vpop.f32.mrb[0].mxu0
        %v6737 = vadd.f32 0.0, %v6736
        %v6738 = vpop.f32.mrb[0].mxu0
        %v6739 = vadd.f32 0.0, %v6738
        %6740 = vmatprep.mubr.bf16.mxu0 0
        %6741 = vmatmul.mubr.bf16.gmra.mrb[0].mxu0 %v6290
        %v6742 = vpop.f32.mrb[0].mxu0
        %v6743 = vadd.f32 0.0, %v6742
        %v6744 = vpop.f32.mrb[0].mxu0
        %v6745 = vadd.f32 0.0, %v6744
        %v6746 = vpop.f32.mrb[0].mxu0
        %v6747 = vadd.f32 0.0, %v6746
        %v6748 = vpop.f32.mrb[0].mxu0
        %v6749 = vadd.f32 0.0, %v6748
        %6750 = vmatprep.mubr.bf16.mxu0 0
        %6751 = vmatmul.mubr.bf16.gmra.mrb[0].mxu0 %v6291
        %v6752 = vpop.f32.mrb[0].mxu0
        %v6753 = vadd.f32 0.0, %v6752
        %v6754 = vpop.f32.mrb[0].mxu0
        %v6755 = vadd.f32 0.0, %v6754
        %v6756 = vpop.f32.mrb[0].mxu0
        %v6757 = vadd.f32 0.0, %v6756
        %v6758 = vpop.f32.mrb[0].mxu0
        %v6759 = vadd.f32 0.0, %v6758
        %6760 = vmatprep.mubr.bf16.mxu0 0
        %6761 = vmatmul.mubr.bf16.gmra.mrb[0].mxu0 %v6292
        %v6762 = vpop.f32.mrb[0].mxu0
        %v6763 = vadd.f32 0.0, %v6762
        %v6764 = vpop.f32.mrb[0].mxu0
        %v6765 = vadd.f32 0.0, %v6764
        %v6766 = vpop.f32.mrb[0].mxu0
        %v6767 = vadd.f32 0.0, %v6766
        %v6768 = vpop.f32.mrb[0].mxu0
        %v6769 = vadd.f32 0.0, %v6768
        %6770 = vmatprep.mubr.bf16.mxu0 0
        %6771 = vmatmul.mubr.bf16.gmra.mrb[0].mxu0 %v6293
        %v6772 = vpop.f32.mrb[0].mxu0
        %v6773 = vadd.f32 0.0, %v6772
        %v6774 = vpop.f32.mrb[0].mxu0
        %v6775 = vadd.f32 0.0, %v6774
        %v6776 = vpop.f32.mrb[0].mxu0
        %v6777 = vadd.f32 0.0, %v6776
        %v6778 = vpop.f32.mrb[0].mxu0
        %v6779 = vadd.f32 0.0, %v6778
        %6780 = vmatprep.mubr.bf16.mxu0 0
        %6781 = vmatmul.mubr.bf16.gmra.mrb[0].mxu0 %v6294
        %v6782 = vpop.f32.mrb[0].mxu0
        %v6783 = vadd.f32 0.0, %v6782
        %v6784 = vpop.f32.mrb[0].mxu0
        %v6785 = vadd.f32 0.0, %v6784
        %v6786 = vpop.f32.mrb[0].mxu0
        %v6787 = vadd.f32 0.0, %v6786
        %v6788 = vpop.f32.mrb[0].mxu0
        %v6789 = vadd.f32 0.0, %v6788
        %6790 = vmatprep.mubr.bf16.mxu0 0
        %6791 = vmatmul.mubr.bf16.gmra.mrb[0].mxu0 %v6295
        %v6792 = vpop.f32.mrb[0].mxu0
        %v6793 = vadd.f32 0.0, %v6792
        %v6794 = vpop.f32.mrb[0].mxu0
        %v6795 = vadd.f32 0.0, %v6794
        %v6796 = vpop.f32.mrb[0].mxu0
        %v6797 = vadd.f32 0.0, %v6796
        %v6798 = vpop.f32.mrb[0].mxu0
        %v6799 = vadd.f32 0.0, %v6798
        %6800 = vmatprep.mubr.bf16.mxu0 0
        %6801 = vmatmul.mubr.bf16.gmra.mrb[0].mxu0 %v6296
        %v6802 = vpop.f32.mrb[0].mxu0
        %v6803 = vadd.f32 0.0, %v6802
        %v6804 = vpop.f32.mrb[0].mxu0
        %v6805 = vadd.f32 0.0, %v6804
        %v6806 = vpop.f32.mrb[0].mxu0
        %v6807 = vadd.f32 0.0, %v6806
        %v6808 = vpop.f32.mrb[0].mxu0
        %v6809 = vadd.f32 0.0, %v6808
        %6810 = vdwg.mxu0
        %6811 = vmatprep.subr.bf16.mxu0 %v6494
        %6812 = vmatpush1.bf16.msra.mxu0 %v6493
        %6813 = vmatprep.subr.bf16.mxu0 %v6500
        %6814 = vmatpush1.bf16.msra.mxu0 %v6499
        %6815 = vmatprep.subr.bf16.mxu0 %v6506
        %6816 = vmatpush1.bf16.msra.mxu0 %v6505
        %6817 = vmatprep.subr.bf16.mxu0 %v6512
        %6818 = vmatpush1.bf16.msra.mxu0 %v6511
        %6819 = vmatprep.subr.bf16.mxu0 %v6518
        %6820 = vmatpush1.bf16.msra.mxu0 %v6517
        %6821 = vmatprep.subr.bf16.mxu0 %v6524
        %6822 = vmatpush1.bf16.msra.mxu0 %v6523
        %6823 = vmatprep.subr.bf16.mxu0 %v6530
        %6824 = vmatpush1.bf16.msra.mxu0 %v6529
        %6825 = vmatprep.subr.bf16.mxu0 %v6536
        %6826 = vmatpush1.bf16.msra.mxu0 %v6535
        %6827 = vmatprep.subr.bf16.mxu0 0
        %6828 = vmatpush1.bf16.msra.mxu0 0
        %6829 = vmatprep.subr.bf16.mxu0 0
        %6830 = vmatpush1.bf16.msra.mxu0 0
        %6831 = vmatprep.subr.bf16.mxu0 0
        %6832 = vmatpush1.bf16.msra.mxu0 0
        %6833 = vmatprep.subr.bf16.mxu0 0
        %6834 = vmatpush1.bf16.msra.mxu0 0
        %6835 = vmatprep.subr.bf16.mxu0 0
        %6836 = vmatpush1.bf16.msra.mxu0 0
        %6837 = vmatprep.subr.bf16.mxu0 0
        %6838 = vmatpush1.bf16.msra.mxu0 0
        %6839 = vmatprep.subr.bf16.mxu0 0
        %6840 = vmatpush1.bf16.msra.mxu0 0
        %6841 = vmatprep.subr.bf16.mxu0 0
        %6842 = vmatpush1.bf16.msra.mxu0 0
        %6843 = vmatprep.mubr.bf16.mxu0 0
        %6844 = vmatmul.mubr.bf16.gmra.mrb[0].mxu0 %v6289
        %v6845 = vpop.f32.mrb[0].mxu0
        %v6846 = vadd.f32 0.0, %v6845
        %v6847 = vpop.f32.mrb[0].mxu0
        %v6848 = vadd.f32 0.0, %v6847
        %v6849 = vpop.f32.mrb[0].mxu0
        %v6850 = vadd.f32 0.0, %v6849
        %v6851 = vpop.f32.mrb[0].mxu0
        %v6852 = vadd.f32 0.0, %v6851
        %6853 = vmatprep.mubr.bf16.mxu0 0
        %6854 = vmatmul.mubr.bf16.gmra.mrb[0].mxu0 %v6290
        %v6855 = vpop.f32.mrb[0].mxu0
        %v6856 = vadd.f32 0.0, %v6855
        %v6857 = vpop.f32.mrb[0].mxu0
        %v6858 = vadd.f32 0.0, %v6857
        %v6859 = vpop.f32.mrb[0].mxu0
        %v6860 = vadd.f32 0.0, %v6859
        %v6861 = vpop.f32.mrb[0].mxu0
        %v6862 = vadd.f32 0.0, %v6861
        %6863 = vmatprep.mubr.bf16.mxu0 0
        %6864 = vmatmul.mubr.bf16.gmra.mrb[0].mxu0 %v6291
        %v6865 = vpop.f32.mrb[0].mxu0
        %v6866 = vadd.f32 0.0, %v6865
        %v6867 = vpop.f32.mrb[0].mxu0
        %v6868 = vadd.f32 0.0, %v6867
        %v6869 = vpop.f32.mrb[0].mxu0
        %v6870 = vadd.f32 0.0, %v6869
        %v6871 = vpop.f32.mrb[0].mxu0
        %v6872 = vadd.f32 0.0, %v6871
        %6873 = vmatprep.mubr.bf16.mxu0 0
        %6874 = vmatmul.mubr.bf16.gmra.mrb[0].mxu0 %v6292
        %v6875 = vpop.f32.mrb[0].mxu0
        %v6876 = vadd.f32 0.0, %v6875
        %v6877 = vpop.f32.mrb[0].mxu0
        %v6878 = vadd.f32 0.0, %v6877
        %v6879 = vpop.f32.mrb[0].mxu0
        %v6880 = vadd.f32 0.0, %v6879
        %v6881 = vpop.f32.mrb[0].mxu0
        %v6882 = vadd.f32 0.0, %v6881
        %6883 = vmatprep.mubr.bf16.mxu0 0
        %6884 = vmatmul.mubr.bf16.gmra.mrb[0].mxu0 %v6293
        %v6885 = vpop.f32.mrb[0].mxu0
        %v6886 = vadd.f32 0.0, %v6885
        %v6887 = vpop.f32.mrb[0].mxu0
        %v6888 = vadd.f32 0.0, %v6887
        %v6889 = vpop.f32.mrb[0].mxu0
        %v6890 = vadd.f32 0.0, %v6889
        %v6891 = vpop.f32.mrb[0].mxu0
        %v6892 = vadd.f32 0.0, %v6891
        %6893 = vmatprep.mubr.bf16.mxu0 0
        %6894 = vmatmul.mubr.bf16.gmra.mrb[0].mxu0 %v6294
        %v6895 = vpop.f32.mrb[0].mxu0
        %v6896 = vadd.f32 0.0, %v6895
        %v6897 = vpop.f32.mrb[0].mxu0
        %v6898 = vadd.f32 0.0, %v6897
        %v6899 = vpop.f32.mrb[0].mxu0
        %v6900 = vadd.f32 0.0, %v6899
        %v6901 = vpop.f32.mrb[0].mxu0
        %v6902 = vadd.f32 0.0, %v6901
        %6903 = vmatprep.mubr.bf16.mxu0 0
        %6904 = vmatmul.mubr.bf16.gmra.mrb[0].mxu0 %v6295
        %v6905 = vpop.f32.mrb[0].mxu0
        %v6906 = vadd.f32 0.0, %v6905
        %v6907 = vpop.f32.mrb[0].mxu0
        %v6908 = vadd.f32 0.0, %v6907
        %v6909 = vpop.f32.mrb[0].mxu0
        %v6910 = vadd.f32 0.0, %v6909
        %v6911 = vpop.f32.mrb[0].mxu0
        %v6912 = vadd.f32 0.0, %v6911
        %6913 = vmatprep.mubr.bf16.mxu0 0
        %6914 = vmatmul.mubr.bf16.gmra.mrb[0].mxu0 %v6296
        %v6915 = vpop.f32.mrb[0].mxu0
        %v6916 = vadd.f32 0.0, %v6915
        %v6917 = vpop.f32.mrb[0].mxu0
        %v6918 = vadd.f32 0.0, %v6917
        %v6919 = vpop.f32.mrb[0].mxu0
        %v6920 = vadd.f32 0.0, %v6919
        %v6921 = vpop.f32.mrb[0].mxu0
        %v6922 = vadd.f32 0.0, %v6921
        %6923 = vdwg.mxu0
        %v6972 = vunpack.c.l.b16 %v6241
        %v6973 = vunpack.c.h.b16 %v6241
        %v6974 = vunpack.c.l.b16 %v6242
        %v6975 = vunpack.c.h.b16 %v6242
        %v6976 = vunpack.c.l.b16 %v6243
        %v6977 = vunpack.c.h.b16 %v6243
        %v6978 = vunpack.c.l.b16 %v6244
        %v6979 = vunpack.c.h.b16 %v6244
        %v6980 = vunpack.c.l.b16 %v6245
        %v6981 = vunpack.c.h.b16 %v6245
        %v6982 = vunpack.c.l.b16 %v6246
        %v6983 = vunpack.c.h.b16 %v6246
        %v6984 = vunpack.c.l.b16 %v6247
        %v6985 = vunpack.c.h.b16 %v6247
        %v6986 = vunpack.c.l.b16 %v6248
        %v6987 = vunpack.c.h.b16 %v6248
        %v6988 = vunpack.c.l.b16 %v6249
        %v6989 = vunpack.c.h.b16 %v6249
        %v6990 = vunpack.c.l.b16 %v6250
        %v6991 = vunpack.c.h.b16 %v6250
        %v6992 = vunpack.c.l.b16 %v6251
        %v6993 = vunpack.c.h.b16 %v6251
        %v6994 = vunpack.c.l.b16 %v6252
        %v6995 = vunpack.c.h.b16 %v6252
        %v6996 = vunpack.c.l.b16 %v6253
        %v6997 = vunpack.c.h.b16 %v6253
        %v6998 = vunpack.c.l.b16 %v6254
        %v6999 = vunpack.c.h.b16 %v6254
        %v7000 = vunpack.c.l.b16 %v6255
        %v7001 = vunpack.c.h.b16 %v6255
        %v7002 = vunpack.c.l.b16 %v6256
        %v7003 = vunpack.c.h.b16 %v6256
        %v7004 = vunpack.c.l.b16 %v6257
        %v7005 = vunpack.c.h.b16 %v6257
        %v7006 = vunpack.c.l.b16 %v6258
        %v7007 = vunpack.c.h.b16 %v6258
        %v7008 = vunpack.c.l.b16 %v6259
        %v7009 = vunpack.c.h.b16 %v6259
        %v7010 = vunpack.c.l.b16 %v6260
        %v7011 = vunpack.c.h.b16 %v6260
        %v7012 = vunpack.c.l.b16 %v6261
        %v7013 = vunpack.c.h.b16 %v6261
        %v7014 = vunpack.c.l.b16 %v6262
        %v7015 = vunpack.c.h.b16 %v6262
        %v7016 = vunpack.c.l.b16 %v6263
        %v7017 = vunpack.c.h.b16 %v6263
        %v7018 = vunpack.c.l.b16 %v6264
        %v7019 = vunpack.c.h.b16 %v6264
        %v7020 = vunpack.c.l.b16 %v6265
        %v7021 = vunpack.c.h.b16 %v6265
        %v7022 = vunpack.c.l.b16 %v6266
        %v7023 = vunpack.c.h.b16 %v6266
        %v7024 = vunpack.c.l.b16 %v6267
        %v7025 = vunpack.c.h.b16 %v6267
        %v7026 = vunpack.c.l.b16 %v6268
        %v7027 = vunpack.c.h.b16 %v6268
        %v7028 = vunpack.c.l.b16 %v6269
        %v7029 = vunpack.c.h.b16 %v6269
        %v7030 = vunpack.c.l.b16 %v6270
        %v7031 = vunpack.c.h.b16 %v6270
        %v7032 = vunpack.c.l.b16 %v6271
        %v7033 = vunpack.c.h.b16 %v6271
        %v7034 = vunpack.c.l.b16 %v6272
        %v7035 = vunpack.c.h.b16 %v6272
        %v7036 = vunpack.c.l.b16 %v6273
        %v7037 = vunpack.c.h.b16 %v6273
        %v7038 = vunpack.c.l.b16 %v6274
        %v7039 = vunpack.c.h.b16 %v6274
        %v7040 = vunpack.c.l.b16 %v6275
        %v7041 = vunpack.c.h.b16 %v6275
        %v7042 = vunpack.c.l.b16 %v6276
        %v7043 = vunpack.c.h.b16 %v6276
        %v7044 = vunpack.c.l.b16 %v6277
        %v7045 = vunpack.c.h.b16 %v6277
        %v7046 = vunpack.c.l.b16 %v6278
        %v7047 = vunpack.c.h.b16 %v6278
        %v7048 = vunpack.c.l.b16 %v6279
        %v7049 = vunpack.c.h.b16 %v6279
        %v7050 = vunpack.c.l.b16 %v6280
        %v7051 = vunpack.c.h.b16 %v6280
        %v7052 = vunpack.c.l.b16 %v6281
        %v7053 = vunpack.c.h.b16 %v6281
        %v7054 = vunpack.c.l.b16 %v6282
        %v7055 = vunpack.c.h.b16 %v6282
        %v7056 = vunpack.c.l.b16 %v6283
        %v7057 = vunpack.c.h.b16 %v6283
        %v7058 = vunpack.c.l.b16 %v6284
        %v7059 = vunpack.c.h.b16 %v6284
        %v7060 = vunpack.c.l.b16 %v6285
        %v7061 = vunpack.c.h.b16 %v6285
        %v7062 = vunpack.c.l.b16 %v6286
        %v7063 = vunpack.c.h.b16 %v6286
        %v7064 = vunpack.c.l.b16 %v6287
        %v7065 = vunpack.c.h.b16 %v6287
        %v7066 = vunpack.c.l.b16 %v6288
        %v7067 = vunpack.c.h.b16 %v6288
        %v7068 = vpack.c.b16 %v6978, %v6972
        %v7069 = vpack.c.b16 %v6979, %v6973
        %v7070 = vpack.c.b16 %v6980, %v6974
        %v7071 = vpack.c.b16 %v6981, %v6975
        %v7072 = vpack.c.b16 %v6982, %v6976
        %v7073 = vpack.c.b16 %v6983, %v6977
        %v7074 = vpack.c.b16 %v6990, %v6984
        %v7075 = vpack.c.b16 %v6991, %v6985
        %v7076 = vpack.c.b16 %v6992, %v6986
        %v7077 = vpack.c.b16 %v6993, %v6987
        %v7078 = vpack.c.b16 %v6994, %v6988
        %v7079 = vpack.c.b16 %v6995, %v6989
        %v7080 = vpack.c.b16 %v7002, %v6996
        %v7081 = vpack.c.b16 %v7003, %v6997
        %v7082 = vpack.c.b16 %v7004, %v6998
        %v7083 = vpack.c.b16 %v7005, %v6999
        %v7084 = vpack.c.b16 %v7006, %v7000
        %v7085 = vpack.c.b16 %v7007, %v7001
        %v7086 = vpack.c.b16 %v7014, %v7008
        %v7087 = vpack.c.b16 %v7015, %v7009
        %v7088 = vpack.c.b16 %v7016, %v7010
        %v7089 = vpack.c.b16 %v7017, %v7011
        %v7090 = vpack.c.b16 %v7018, %v7012
        %v7091 = vpack.c.b16 %v7019, %v7013
        %v7092 = vpack.c.b16 %v7026, %v7020
        %v7093 = vpack.c.b16 %v7027, %v7021
        %v7094 = vpack.c.b16 %v7028, %v7022
        %v7095 = vpack.c.b16 %v7029, %v7023
        %v7096 = vpack.c.b16 %v7030, %v7024
        %v7097 = vpack.c.b16 %v7031, %v7025
        %v7098 = vpack.c.b16 %v7038, %v7032
        %v7099 = vpack.c.b16 %v7039, %v7033
        %v7100 = vpack.c.b16 %v7040, %v7034
        %v7101 = vpack.c.b16 %v7041, %v7035
        %v7102 = vpack.c.b16 %v7042, %v7036
        %v7103 = vpack.c.b16 %v7043, %v7037
        %v7104 = vpack.c.b16 %v7050, %v7044
        %v7105 = vpack.c.b16 %v7051, %v7045
        %v7106 = vpack.c.b16 %v7052, %v7046
        %v7107 = vpack.c.b16 %v7053, %v7047
        %v7108 = vpack.c.b16 %v7054, %v7048
        %v7109 = vpack.c.b16 %v7055, %v7049
        %v7110 = vpack.c.b16 %v7062, %v7056
        %v7111 = vpack.c.b16 %v7063, %v7057
        %v7112 = vpack.c.b16 %v7064, %v7058
        %v7113 = vpack.c.b16 %v7065, %v7059
        %v7114 = vpack.c.b16 %v7066, %v7060
        %v7115 = vpack.c.b16 %v7067, %v7061
        %7164 = vmatprep.subr.bf16.mxu0 %v7069
        %7165 = vmatpush1.bf16.msra.mxu0 %v7068
        %7166 = vmatprep.subr.bf16.mxu0 %v7075
        %7167 = vmatpush1.bf16.msra.mxu0 %v7074
        %7168 = vmatprep.subr.bf16.mxu0 %v7081
        %7169 = vmatpush1.bf16.msra.mxu0 %v7080
        %7170 = vmatprep.subr.bf16.mxu0 %v7087
        %7171 = vmatpush1.bf16.msra.mxu0 %v7086
        %7172 = vmatprep.subr.bf16.mxu0 %v7093
        %7173 = vmatpush1.bf16.msra.mxu0 %v7092
        %7174 = vmatprep.subr.bf16.mxu0 %v7099
        %7175 = vmatpush1.bf16.msra.mxu0 %v7098
        %7176 = vmatprep.subr.bf16.mxu0 %v7105
        %7177 = vmatpush1.bf16.msra.mxu0 %v7104
        %7178 = vmatprep.subr.bf16.mxu0 %v7111
        %7179 = vmatpush1.bf16.msra.mxu0 %v7110
        %7180 = vmatprep.subr.bf16.mxu0 0
        %7181 = vmatpush1.bf16.msra.mxu0 0
        %7182 = vmatprep.subr.bf16.mxu0 0
        %7183 = vmatpush1.bf16.msra.mxu0 0
        %7184 = vmatprep.subr.bf16.mxu0 0
        %7185 = vmatpush1.bf16.msra.mxu0 0
        %7186 = vmatprep.subr.bf16.mxu0 0
        %7187 = vmatpush1.bf16.msra.mxu0 0
        %7188 = vmatprep.subr.bf16.mxu0 0
        %7189 = vmatpush1.bf16.msra.mxu0 0
        %7190 = vmatprep.subr.bf16.mxu0 0
        %7191 = vmatpush1.bf16.msra.mxu0 0
        %7192 = vmatprep.subr.bf16.mxu0 0
        %7193 = vmatpush1.bf16.msra.mxu0 0
        %7194 = vmatprep.subr.bf16.mxu0 0
        %7195 = vmatpush1.bf16.msra.mxu0 0
        %7196 = vmatprep.mubr.bf16.mxu0 0
        %7197 = vmatmul.mubr.bf16.gmra.mrb[0].mxu0 %v6233
        %v7198 = vpop.f32.mrb[0].mxu0
        %v7199 = vadd.f32 %v6620, %v7198
        %v7200 = vpop.f32.mrb[0].mxu0
        %v7201 = vadd.f32 %v6622, %v7200
        %v7202 = vpop.f32.mrb[0].mxu0
        %v7203 = vadd.f32 %v6624, %v7202
        %v7204 = vpop.f32.mrb[0].mxu0
        %v7205 = vadd.f32 %v6626, %v7204
        %7206 = vmatprep.mubr.bf16.mxu0 0
        %7207 = vmatmul.mubr.bf16.gmra.mrb[0].mxu0 %v6234
        %v7208 = vpop.f32.mrb[0].mxu0
        %v7209 = vadd.f32 %v6630, %v7208
        %v7210 = vpop.f32.mrb[0].mxu0
        %v7211 = vadd.f32 %v6632, %v7210
        %v7212 = vpop.f32.mrb[0].mxu0
        %v7213 = vadd.f32 %v6634, %v7212
        %v7214 = vpop.f32.mrb[0].mxu0
        %v7215 = vadd.f32 %v6636, %v7214
        %7216 = vmatprep.mubr.bf16.mxu0 0
        %7217 = vmatmul.mubr.bf16.gmra.mrb[0].mxu0 %v6235
        %v7218 = vpop.f32.mrb[0].mxu0
        %v7219 = vadd.f32 %v6640, %v7218
        %v7220 = vpop.f32.mrb[0].mxu0
        %v7221 = vadd.f32 %v6642, %v7220
        %v7222 = vpop.f32.mrb[0].mxu0
        %v7223 = vadd.f32 %v6644, %v7222
        %v7224 = vpop.f32.mrb[0].mxu0
        %v7225 = vadd.f32 %v6646, %v7224
        %7226 = vmatprep.mubr.bf16.mxu0 0
        %7227 = vmatmul.mubr.bf16.gmra.mrb[0].mxu0 %v6236
        %v7228 = vpop.f32.mrb[0].mxu0
        %v7229 = vadd.f32 %v6650, %v7228
        %v7230 = vpop.f32.mrb[0].mxu0
        %v7231 = vadd.f32 %v6652, %v7230
        %v7232 = vpop.f32.mrb[0].mxu0
        %v7233 = vadd.f32 %v6654, %v7232
        %v7234 = vpop.f32.mrb[0].mxu0
        %v7235 = vadd.f32 %v6656, %v7234
        %7236 = vmatprep.mubr.bf16.mxu0 0
        %7237 = vmatmul.mubr.bf16.gmra.mrb[0].mxu0 %v6237
        %v7238 = vpop.f32.mrb[0].mxu0
        %v7239 = vadd.f32 %v6660, %v7238
        %v7240 = vpop.f32.mrb[0].mxu0
        %v7241 = vadd.f32 %v6662, %v7240
        %v7242 = vpop.f32.mrb[0].mxu0
        %v7243 = vadd.f32 %v6664, %v7242
        %v7244 = vpop.f32.mrb[0].mxu0
        %v7245 = vadd.f32 %v6666, %v7244
        %7246 = vmatprep.mubr.bf16.mxu0 0
        %7247 = vmatmul.mubr.bf16.gmra.mrb[0].mxu0 %v6238
        %v7248 = vpop.f32.mrb[0].mxu0
        %v7249 = vadd.f32 %v6670, %v7248
        %v7250 = vpop.f32.mrb[0].mxu0
        %v7251 = vadd.f32 %v6672, %v7250
        %v7252 = vpop.f32.mrb[0].mxu0
        %v7253 = vadd.f32 %v6674, %v7252
        %v7254 = vpop.f32.mrb[0].mxu0
        %v7255 = vadd.f32 %v6676, %v7254
        %7256 = vmatprep.mubr.bf16.mxu0 0
        %7257 = vmatmul.mubr.bf16.gmra.mrb[0].mxu0 %v6239
        %v7258 = vpop.f32.mrb[0].mxu0
        %v7259 = vadd.f32 %v6680, %v7258
        %v7260 = vpop.f32.mrb[0].mxu0
        %v7261 = vadd.f32 %v6682, %v7260
        %v7262 = vpop.f32.mrb[0].mxu0
        %v7263 = vadd.f32 %v6684, %v7262
        %v7264 = vpop.f32.mrb[0].mxu0
        %v7265 = vadd.f32 %v6686, %v7264
        %7266 = vmatprep.mubr.bf16.mxu0 0
        %7267 = vmatmul.mubr.bf16.gmra.mrb[0].mxu0 %v6240
        %v7268 = vpop.f32.mrb[0].mxu0
        %v7269 = vadd.f32 %v6690, %v7268
        %v7270 = vpop.f32.mrb[0].mxu0
        %v7271 = vadd.f32 %v6692, %v7270
        %v7272 = vpop.f32.mrb[0].mxu0
        %v7273 = vadd.f32 %v6694, %v7272
        %v7274 = vpop.f32.mrb[0].mxu0
        %v7275 = vadd.f32 %v6696, %v7274
        %7276 = vdwg.mxu0
        %7277 = vmatprep.subr.bf16.mxu0 %v7071
        %7278 = vmatpush1.bf16.msra.mxu0 %v7070
        %7279 = vmatprep.subr.bf16.mxu0 %v7077
        %7280 = vmatpush1.bf16.msra.mxu0 %v7076
        %7281 = vmatprep.subr.bf16.mxu0 %v7083
        %7282 = vmatpush1.bf16.msra.mxu0 %v7082
        %7283 = vmatprep.subr.bf16.mxu0 %v7089
        %7284 = vmatpush1.bf16.msra.mxu0 %v7088
        %7285 = vmatprep.subr.bf16.mxu0 %v7095
        %7286 = vmatpush1.bf16.msra.mxu0 %v7094
        %7287 = vmatprep.subr.bf16.mxu0 %v7101
        %7288 = vmatpush1.bf16.msra.mxu0 %v7100
        %7289 = vmatprep.subr.bf16.mxu0 %v7107
        %7290 = vmatpush1.bf16.msra.mxu0 %v7106
        %7291 = vmatprep.subr.bf16.mxu0 %v7113
        %7292 = vmatpush1.bf16.msra.mxu0 %v7112
        %7293 = vmatprep.subr.bf16.mxu0 0
        %7294 = vmatpush1.bf16.msra.mxu0 0
        %7295 = vmatprep.subr.bf16.mxu0 0
        %7296 = vmatpush1.bf16.msra.mxu0 0
        %7297 = vmatprep.subr.bf16.mxu0 0
        %7298 = vmatpush1.bf16.msra.mxu0 0
        %7299 = vmatprep.subr.bf16.mxu0 0
        %7300 = vmatpush1.bf16.msra.mxu0 0
        %7301 = vmatprep.subr.bf16.mxu0 0
        %7302 = vmatpush1.bf16.msra.mxu0 0
        %7303 = vmatprep.subr.bf16.mxu0 0
        %7304 = vmatpush1.bf16.msra.mxu0 0
        %7305 = vmatprep.subr.bf16.mxu0 0
        %7306 = vmatpush1.bf16.msra.mxu0 0
        %7307 = vmatprep.subr.bf16.mxu0 0
        %7308 = vmatpush1.bf16.msra.mxu0 0
        %7309 = vmatprep.mubr.bf16.mxu0 0
        %7310 = vmatmul.mubr.bf16.gmra.mrb[0].mxu0 %v6233
        %v7311 = vpop.f32.mrb[0].mxu0
        %v7312 = vadd.f32 %v6733, %v7311
        %v7313 = vpop.f32.mrb[0].mxu0
        %v7314 = vadd.f32 %v6735, %v7313
        %v7315 = vpop.f32.mrb[0].mxu0
        %v7316 = vadd.f32 %v6737, %v7315
        %v7317 = vpop.f32.mrb[0].mxu0
        %v7318 = vadd.f32 %v6739, %v7317
        %7319 = vmatprep.mubr.bf16.mxu0 0
        %7320 = vmatmul.mubr.bf16.gmra.mrb[0].mxu0 %v6234
        %v7321 = vpop.f32.mrb[0].mxu0
        %v7322 = vadd.f32 %v6743, %v7321
        %v7323 = vpop.f32.mrb[0].mxu0
        %v7324 = vadd.f32 %v6745, %v7323
        %v7325 = vpop.f32.mrb[0].mxu0
        %v7326 = vadd.f32 %v6747, %v7325
        %v7327 = vpop.f32.mrb[0].mxu0
        %v7328 = vadd.f32 %v6749, %v7327
        %7329 = vmatprep.mubr.bf16.mxu0 0
        %7330 = vmatmul.mubr.bf16.gmra.mrb[0].mxu0 %v6235
        %v7331 = vpop.f32.mrb[0].mxu0
        %v7332 = vadd.f32 %v6753, %v7331
        %v7333 = vpop.f32.mrb[0].mxu0
        %v7334 = vadd.f32 %v6755, %v7333
        %v7335 = vpop.f32.mrb[0].mxu0
        %v7336 = vadd.f32 %v6757, %v7335
        %v7337 = vpop.f32.mrb[0].mxu0
        %v7338 = vadd.f32 %v6759, %v7337
        %7339 = vmatprep.mubr.bf16.mxu0 0
        %7340 = vmatmul.mubr.bf16.gmra.mrb[0].mxu0 %v6236
        %v7341 = vpop.f32.mrb[0].mxu0
        %v7342 = vadd.f32 %v6763, %v7341
        %v7343 = vpop.f32.mrb[0].mxu0
        %v7344 = vadd.f32 %v6765, %v7343
        %v7345 = vpop.f32.mrb[0].mxu0
        %v7346 = vadd.f32 %v6767, %v7345
        %v7347 = vpop.f32.mrb[0].mxu0
        %v7348 = vadd.f32 %v6769, %v7347
        %7349 = vmatprep.mubr.bf16.mxu0 0
        %7350 = vmatmul.mubr.bf16.gmra.mrb[0].mxu0 %v6237
        %v7351 = vpop.f32.mrb[0].mxu0
        %v7352 = vadd.f32 %v6773, %v7351
        %v7353 = vpop.f32.mrb[0].mxu0
        %v7354 = vadd.f32 %v6775, %v7353
        %v7355 = vpop.f32.mrb[0].mxu0
        %v7356 = vadd.f32 %v6777, %v7355
        %v7357 = vpop.f32.mrb[0].mxu0
        %v7358 = vadd.f32 %v6779, %v7357
        %7359 = vmatprep.mubr.bf16.mxu0 0
        %7360 = vmatmul.mubr.bf16.gmra.mrb[0].mxu0 %v6238
        %v7361 = vpop.f32.mrb[0].mxu0
        %v7362 = vadd.f32 %v6783, %v7361
        %v7363 = vpop.f32.mrb[0].mxu0
        %v7364 = vadd.f32 %v6785, %v7363
        %v7365 = vpop.f32.mrb[0].mxu0
        %v7366 = vadd.f32 %v6787, %v7365
        %v7367 = vpop.f32.mrb[0].mxu0
        %v7368 = vadd.f32 %v6789, %v7367
        %7369 = vmatprep.mubr.bf16.mxu0 0
        %7370 = vmatmul.mubr.bf16.gmra.mrb[0].mxu0 %v6239
        %v7371 = vpop.f32.mrb[0].mxu0
        %v7372 = vadd.f32 %v6793, %v7371
        %v7373 = vpop.f32.mrb[0].mxu0
        %v7374 = vadd.f32 %v6795, %v7373
        %v7375 = vpop.f32.mrb[0].mxu0
        %v7376 = vadd.f32 %v6797, %v7375
        %v7377 = vpop.f32.mrb[0].mxu0
        %v7378 = vadd.f32 %v6799, %v7377
        %7379 = vmatprep.mubr.bf16.mxu0 0
        %7380 = vmatmul.mubr.bf16.gmra.mrb[0].mxu0 %v6240
        %v7381 = vpop.f32.mrb[0].mxu0
        %v7382 = vadd.f32 %v6803, %v7381
        %v7383 = vpop.f32.mrb[0].mxu0
        %v7384 = vadd.f32 %v6805, %v7383
        %v7385 = vpop.f32.mrb[0].mxu0
        %v7386 = vadd.f32 %v6807, %v7385
        %v7387 = vpop.f32.mrb[0].mxu0
        %v7388 = vadd.f32 %v6809, %v7387
        %7389 = vdwg.mxu0
        %7390 = vmatprep.subr.bf16.mxu0 %v7073
        %7391 = vmatpush1.bf16.msra.mxu0 %v7072
        %7392 = vmatprep.subr.bf16.mxu0 %v7079
        %7393 = vmatpush1.bf16.msra.mxu0 %v7078
        %7394 = vmatprep.subr.bf16.mxu0 %v7085
        %7395 = vmatpush1.bf16.msra.mxu0 %v7084
        %7396 = vmatprep.subr.bf16.mxu0 %v7091
        %7397 = vmatpush1.bf16.msra.mxu0 %v7090
        %7398 = vmatprep.subr.bf16.mxu0 %v7097
        %7399 = vmatpush1.bf16.msra.mxu0 %v7096
        %7400 = vmatprep.subr.bf16.mxu0 %v7103
        %7401 = vmatpush1.bf16.msra.mxu0 %v7102
        %7402 = vmatprep.subr.bf16.mxu0 %v7109
        %7403 = vmatpush1.bf16.msra.mxu0 %v7108
        %7404 = vmatprep.subr.bf16.mxu0 %v7115
        %7405 = vmatpush1.bf16.msra.mxu0 %v7114
        %7406 = vmatprep.subr.bf16.mxu0 0
        %7407 = vmatpush1.bf16.msra.mxu0 0
        %7408 = vmatprep.subr.bf16.mxu0 0
        %7409 = vmatpush1.bf16.msra.mxu0 0
        %7410 = vmatprep.subr.bf16.mxu0 0
        %7411 = vmatpush1.bf16.msra.mxu0 0
        %7412 = vmatprep.subr.bf16.mxu0 0
        %7413 = vmatpush1.bf16.msra.mxu0 0
        %7414 = vmatprep.subr.bf16.mxu0 0
        %7415 = vmatpush1.bf16.msra.mxu0 0
        %7416 = vmatprep.subr.bf16.mxu0 0
        %7417 = vmatpush1.bf16.msra.mxu0 0
        %7418 = vmatprep.subr.bf16.mxu0 0
        %7419 = vmatpush1.bf16.msra.mxu0 0
        %7420 = vmatprep.subr.bf16.mxu0 0
        %7421 = vmatpush1.bf16.msra.mxu0 0
        %7422 = vmatprep.mubr.bf16.mxu0 0
        %7423 = vmatmul.mubr.bf16.gmra.mrb[0].mxu0 %v6233
        %v7424 = vpop.f32.mrb[0].mxu0
        %v7425 = vadd.f32 %v6846, %v7424
        %v7426 = vpop.f32.mrb[0].mxu0
        %v7427 = vadd.f32 %v6848, %v7426
        %v7428 = vpop.f32.mrb[0].mxu0
        %v7429 = vadd.f32 %v6850, %v7428
        %v7430 = vpop.f32.mrb[0].mxu0
        %v7431 = vadd.f32 %v6852, %v7430
        %7432 = vmatprep.mubr.bf16.mxu0 0
        %7433 = vmatmul.mubr.bf16.gmra.mrb[0].mxu0 %v6234
        %v7434 = vpop.f32.mrb[0].mxu0
        %v7435 = vadd.f32 %v6856, %v7434
        %v7436 = vpop.f32.mrb[0].mxu0
        %v7437 = vadd.f32 %v6858, %v7436
        %v7438 = vpop.f32.mrb[0].mxu0
        %v7439 = vadd.f32 %v6860, %v7438
        %v7440 = vpop.f32.mrb[0].mxu0
        %v7441 = vadd.f32 %v6862, %v7440
        %7442 = vmatprep.mubr.bf16.mxu0 0
        %7443 = vmatmul.mubr.bf16.gmra.mrb[0].mxu0 %v6235
        %v7444 = vpop.f32.mrb[0].mxu0
        %v7445 = vadd.f32 %v6866, %v7444
        %v7446 = vpop.f32.mrb[0].mxu0
        %v7447 = vadd.f32 %v6868, %v7446
        %v7448 = vpop.f32.mrb[0].mxu0
        %v7449 = vadd.f32 %v6870, %v7448
        %v7450 = vpop.f32.mrb[0].mxu0
        %v7451 = vadd.f32 %v6872, %v7450
        %7452 = vmatprep.mubr.bf16.mxu0 0
        %7453 = vmatmul.mubr.bf16.gmra.mrb[0].mxu0 %v6236
        %v7454 = vpop.f32.mrb[0].mxu0
        %v7455 = vadd.f32 %v6876, %v7454
        %v7456 = vpop.f32.mrb[0].mxu0
        %v7457 = vadd.f32 %v6878, %v7456
        %v7458 = vpop.f32.mrb[0].mxu0
        %v7459 = vadd.f32 %v6880, %v7458
        %v7460 = vpop.f32.mrb[0].mxu0
        %v7461 = vadd.f32 %v6882, %v7460
        %7462 = vmatprep.mubr.bf16.mxu0 0
        %7463 = vmatmul.mubr.bf16.gmra.mrb[0].mxu0 %v6237
        %v7464 = vpop.f32.mrb[0].mxu0
        %v7465 = vadd.f32 %v6886, %v7464
        %v7466 = vpop.f32.mrb[0].mxu0
        %v7467 = vadd.f32 %v6888, %v7466
        %v7468 = vpop.f32.mrb[0].mxu0
        %v7469 = vadd.f32 %v6890, %v7468
        %v7470 = vpop.f32.mrb[0].mxu0
        %v7471 = vadd.f32 %v6892, %v7470
        %7472 = vmatprep.mubr.bf16.mxu0 0
        %7473 = vmatmul.mubr.bf16.gmra.mrb[0].mxu0 %v6238
        %v7474 = vpop.f32.mrb[0].mxu0
        %v7475 = vadd.f32 %v6896, %v7474
        %v7476 = vpop.f32.mrb[0].mxu0
        %v7477 = vadd.f32 %v6898, %v7476
        %v7478 = vpop.f32.mrb[0].mxu0
        %v7479 = vadd.f32 %v6900, %v7478
        %v7480 = vpop.f32.mrb[0].mxu0
        %v7481 = vadd.f32 %v6902, %v7480
        %7482 = vmatprep.mubr.bf16.mxu0 0
        %7483 = vmatmul.mubr.bf16.gmra.mrb[0].mxu0 %v6239
        %v7484 = vpop.f32.mrb[0].mxu0
        %v7485 = vadd.f32 %v6906, %v7484
        %v7486 = vpop.f32.mrb[0].mxu0
        %v7487 = vadd.f32 %v6908, %v7486
        %v7488 = vpop.f32.mrb[0].mxu0
        %v7489 = vadd.f32 %v6910, %v7488
        %v7490 = vpop.f32.mrb[0].mxu0
        %v7491 = vadd.f32 %v6912, %v7490
        %7492 = vmatprep.mubr.bf16.mxu0 0
        %7493 = vmatmul.mubr.bf16.gmra.mrb[0].mxu0 %v6240
        %v7494 = vpop.f32.mrb[0].mxu0
        %v7495 = vadd.f32 %v6916, %v7494
        %v7496 = vpop.f32.mrb[0].mxu0
        %v7497 = vadd.f32 %v6918, %v7496
        %v7498 = vpop.f32.mrb[0].mxu0
        %v7499 = vadd.f32 %v6920, %v7498
        %v7500 = vpop.f32.mrb[0].mxu0
        %v7501 = vadd.f32 %v6922, %v7500
        %7502 = vdwg.mxu0
        %v7503 = vld [vmem:[#allocation23] sm:$0x3f]
        %v7505 = vlaneseq
        %v7506 = vshrl.u32 %v7505, 7
        %v7507 = vsub.s32 0, %v7506
        %v7508 = vrot.slane %v7503, %v7507
        %v7509 = vlaneseq
        %v7510 = vshrl.u32 %v7509, 7
        %v7511 = vsub.s32 1, %v7510
        %v7512 = vrot.slane %v7503, %v7511
        %v7513 = vlaneseq
        %v7514 = vshrl.u32 %v7513, 7
        %v7515 = vsub.s32 2, %v7514
        %v7516 = vrot.slane %v7503, %v7515
        %v7517 = vlaneseq
        %v7518 = vshrl.u32 %v7517, 7
        %v7519 = vsub.s32 3, %v7518
        %v7520 = vrot.slane %v7503, %v7519
        %v7521 = vlaneseq
        %v7522 = vshrl.u32 %v7521, 7
        %v7523 = vsub.s32 4, %v7522
        %v7524 = vrot.slane %v7503, %v7523
        %v7525 = vlaneseq
        %v7526 = vshrl.u32 %v7525, 7
        %v7527 = vsub.s32 5, %v7526
        %v7528 = vrot.slane %v7503, %v7527
        %v7535 = vadd.f32 %v7199, %v7508
        %v7536 = vadd.f32 %v7201, %v7512
        %v7537 = vadd.f32 %v7312, %v7516
        %v7538 = vadd.f32 %v7314, %v7520
        %v7539 = vadd.f32 %v7425, %v7524
        %v7540 = vadd.f32 %v7427, %v7528
        %v7541 = vadd.f32 %v7203, %v7508
        %v7542 = vadd.f32 %v7205, %v7512
        %v7543 = vadd.f32 %v7316, %v7516
        %v7544 = vadd.f32 %v7318, %v7520
        %v7545 = vadd.f32 %v7429, %v7524
        %v7546 = vadd.f32 %v7431, %v7528
        %v7547 = vadd.f32 %v7209, %v7508
        %v7548 = vadd.f32 %v7211, %v7512
        %v7549 = vadd.f32 %v7322, %v7516
        %v7550 = vadd.f32 %v7324, %v7520
        %v7551 = vadd.f32 %v7435, %v7524
        %v7552 = vadd.f32 %v7437, %v7528
        %v7553 = vadd.f32 %v7213, %v7508
        %v7554 = vadd.f32 %v7215, %v7512
        %v7555 = vadd.f32 %v7326, %v7516
        %v7556 = vadd.f32 %v7328, %v7520
        %v7557 = vadd.f32 %v7439, %v7524
        %v7558 = vadd.f32 %v7441, %v7528
        %v7559 = vadd.f32 %v7219, %v7508
        %v7560 = vadd.f32 %v7221, %v7512
        %v7561 = vadd.f32 %v7332, %v7516
        %v7562 = vadd.f32 %v7334, %v7520
        %v7563 = vadd.f32 %v7445, %v7524
        %v7564 = vadd.f32 %v7447, %v7528
        %v7565 = vadd.f32 %v7223, %v7508
        %v7566 = vadd.f32 %v7225, %v7512
        %v7567 = vadd.f32 %v7336, %v7516
        %v7568 = vadd.f32 %v7338, %v7520
        %v7569 = vadd.f32 %v7449, %v7524
        %v7570 = vadd.f32 %v7451, %v7528
        %v7571 = vadd.f32 %v7229, %v7508
        %v7572 = vadd.f32 %v7231, %v7512
        %v7573 = vadd.f32 %v7342, %v7516
        %v7574 = vadd.f32 %v7344, %v7520
        %v7575 = vadd.f32 %v7455, %v7524
        %v7576 = vadd.f32 %v7457, %v7528
        %v7577 = vadd.f32 %v7233, %v7508
        %v7578 = vadd.f32 %v7235, %v7512
        %v7579 = vadd.f32 %v7346, %v7516
        %v7580 = vadd.f32 %v7348, %v7520
        %v7581 = vadd.f32 %v7459, %v7524
        %v7582 = vadd.f32 %v7461, %v7528
        %v7583 = vadd.f32 %v7239, %v7508
        %v7584 = vadd.f32 %v7241, %v7512
        %v7585 = vadd.f32 %v7352, %v7516
        %v7586 = vadd.f32 %v7354, %v7520
        %v7587 = vadd.f32 %v7465, %v7524
        %v7588 = vadd.f32 %v7467, %v7528
        %v7589 = vadd.f32 %v7243, %v7508
        %v7590 = vadd.f32 %v7245, %v7512
        %v7591 = vadd.f32 %v7356, %v7516
        %v7592 = vadd.f32 %v7358, %v7520
        %v7593 = vadd.f32 %v7469, %v7524
        %v7594 = vadd.f32 %v7471, %v7528
        %v7595 = vadd.f32 %v7249, %v7508
        %v7596 = vadd.f32 %v7251, %v7512
        %v7597 = vadd.f32 %v7362, %v7516
        %v7598 = vadd.f32 %v7364, %v7520
        %v7599 = vadd.f32 %v7475, %v7524
        %v7600 = vadd.f32 %v7477, %v7528
        %v7601 = vadd.f32 %v7253, %v7508
        %v7602 = vadd.f32 %v7255, %v7512
        %v7603 = vadd.f32 %v7366, %v7516
        %v7604 = vadd.f32 %v7368, %v7520
        %v7605 = vadd.f32 %v7479, %v7524
        %v7606 = vadd.f32 %v7481, %v7528
        %v7607 = vadd.f32 %v7259, %v7508
        %v7608 = vadd.f32 %v7261, %v7512
        %v7609 = vadd.f32 %v7372, %v7516
        %v7610 = vadd.f32 %v7374, %v7520
        %v7611 = vadd.f32 %v7485, %v7524
        %v7612 = vadd.f32 %v7487, %v7528
        %v7613 = vadd.f32 %v7263, %v7508
        %v7614 = vadd.f32 %v7265, %v7512
        %v7615 = vadd.f32 %v7376, %v7516
        %v7616 = vadd.f32 %v7378, %v7520
        %v7617 = vadd.f32 %v7489, %v7524
        %v7618 = vadd.f32 %v7491, %v7528
        %v7619 = vadd.f32 %v7269, %v7508
        %v7620 = vadd.f32 %v7271, %v7512
        %v7621 = vadd.f32 %v7382, %v7516
        %v7622 = vadd.f32 %v7384, %v7520
        %v7623 = vadd.f32 %v7495, %v7524
        %v7624 = vadd.f32 %v7497, %v7528
        %v7625 = vadd.f32 %v7273, %v7508
        %v7626 = vadd.f32 %v7275, %v7512
        %v7627 = vadd.f32 %v7386, %v7516
        %v7628 = vadd.f32 %v7388, %v7520
        %v7629 = vadd.f32 %v7499, %v7524
        %v7630 = vadd.f32 %v7501, %v7528
        %v7631 = vmax.f32 %v7535, 0.0
        %v7632 = vmax.f32 %v7536, 0.0
        %v7633 = vmax.f32 %v7537, 0.0
        %v7634 = vmax.f32 %v7538, 0.0
        %v7635 = vmax.f32 %v7539, 0.0
        %v7636 = vmax.f32 %v7540, 0.0
        %v7637 = vmax.f32 %v7541, 0.0
        %v7638 = vmax.f32 %v7542, 0.0
        %v7639 = vmax.f32 %v7543, 0.0
        %v7640 = vmax.f32 %v7544, 0.0
        %v7641 = vmax.f32 %v7545, 0.0
        %v7642 = vmax.f32 %v7546, 0.0
        %v7643 = vmax.f32 %v7547, 0.0
        %v7644 = vmax.f32 %v7548, 0.0
        %v7645 = vmax.f32 %v7549, 0.0
        %v7646 = vmax.f32 %v7550, 0.0
        %v7647 = vmax.f32 %v7551, 0.0
        %v7648 = vmax.f32 %v7552, 0.0
        %v7649 = vmax.f32 %v7553, 0.0
        %v7650 = vmax.f32 %v7554, 0.0
        %v7651 = vmax.f32 %v7555, 0.0
        %v7652 = vmax.f32 %v7556, 0.0
        %v7653 = vmax.f32 %v7557, 0.0
        %v7654 = vmax.f32 %v7558, 0.0
        %v7655 = vmax.f32 %v7559, 0.0
        %v7656 = vmax.f32 %v7560, 0.0
        %v7657 = vmax.f32 %v7561, 0.0
        %v7658 = vmax.f32 %v7562, 0.0
        %v7659 = vmax.f32 %v7563, 0.0
        %v7660 = vmax.f32 %v7564, 0.0
        %v7661 = vmax.f32 %v7565, 0.0
        %v7662 = vmax.f32 %v7566, 0.0
        %v7663 = vmax.f32 %v7567, 0.0
        %v7664 = vmax.f32 %v7568, 0.0
        %v7665 = vmax.f32 %v7569, 0.0
        %v7666 = vmax.f32 %v7570, 0.0
        %v7667 = vmax.f32 %v7571, 0.0
        %v7668 = vmax.f32 %v7572, 0.0
        %v7669 = vmax.f32 %v7573, 0.0
        %v7670 = vmax.f32 %v7574, 0.0
        %v7671 = vmax.f32 %v7575, 0.0
        %v7672 = vmax.f32 %v7576, 0.0
        %v7673 = vmax.f32 %v7577, 0.0
        %v7674 = vmax.f32 %v7578, 0.0
        %v7675 = vmax.f32 %v7579, 0.0
        %v7676 = vmax.f32 %v7580, 0.0
        %v7677 = vmax.f32 %v7581, 0.0
        %v7678 = vmax.f32 %v7582, 0.0
        %v7679 = vmax.f32 %v7583, 0.0
        %v7680 = vmax.f32 %v7584, 0.0
        %v7681 = vmax.f32 %v7585, 0.0
        %v7682 = vmax.f32 %v7586, 0.0
        %v7683 = vmax.f32 %v7587, 0.0
        %v7684 = vmax.f32 %v7588, 0.0
        %v7685 = vmax.f32 %v7589, 0.0
        %v7686 = vmax.f32 %v7590, 0.0
        %v7687 = vmax.f32 %v7591, 0.0
        %v7688 = vmax.f32 %v7592, 0.0
        %v7689 = vmax.f32 %v7593, 0.0
        %v7690 = vmax.f32 %v7594, 0.0
        %v7691 = vmax.f32 %v7595, 0.0
        %v7692 = vmax.f32 %v7596, 0.0
        %v7693 = vmax.f32 %v7597, 0.0
        %v7694 = vmax.f32 %v7598, 0.0
        %v7695 = vmax.f32 %v7599, 0.0
        %v7696 = vmax.f32 %v7600, 0.0
        %v7697 = vmax.f32 %v7601, 0.0
        %v7698 = vmax.f32 %v7602, 0.0
        %v7699 = vmax.f32 %v7603, 0.0
        %v7700 = vmax.f32 %v7604, 0.0
        %v7701 = vmax.f32 %v7605, 0.0
        %v7702 = vmax.f32 %v7606, 0.0
        %v7703 = vmax.f32 %v7607, 0.0
        %v7704 = vmax.f32 %v7608, 0.0
        %v7705 = vmax.f32 %v7609, 0.0
        %v7706 = vmax.f32 %v7610, 0.0
        %v7707 = vmax.f32 %v7611, 0.0
        %v7708 = vmax.f32 %v7612, 0.0
        %v7709 = vmax.f32 %v7613, 0.0
        %v7710 = vmax.f32 %v7614, 0.0
        %v7711 = vmax.f32 %v7615, 0.0
        %v7712 = vmax.f32 %v7616, 0.0
        %v7713 = vmax.f32 %v7617, 0.0
        %v7714 = vmax.f32 %v7618, 0.0
        %v7715 = vmax.f32 %v7619, 0.0
        %v7716 = vmax.f32 %v7620, 0.0
        %v7717 = vmax.f32 %v7621, 0.0
        %v7718 = vmax.f32 %v7622, 0.0
        %v7719 = vmax.f32 %v7623, 0.0
        %v7720 = vmax.f32 %v7624, 0.0
        %v7721 = vmax.f32 %v7625, 0.0
        %v7722 = vmax.f32 %v7626, 0.0
        %v7723 = vmax.f32 %v7627, 0.0
        %v7724 = vmax.f32 %v7628, 0.0
        %v7725 = vmax.f32 %v7629, 0.0
        %v7726 = vmax.f32 %v7630, 0.0
        %v7727 = vpack.c.bf16 %v7637, %v7631
        %v7728 = vpack.c.bf16 %v7638, %v7632
        %v7729 = vpack.c.bf16 %v7639, %v7633
        %v7730 = vpack.c.bf16 %v7640, %v7634
        %v7731 = vpack.c.bf16 %v7641, %v7635
        %v7732 = vpack.c.bf16 %v7642, %v7636
        %v7733 = vpack.c.bf16 %v7649, %v7643
        %v7734 = vpack.c.bf16 %v7650, %v7644
        %v7735 = vpack.c.bf16 %v7651, %v7645
        %v7736 = vpack.c.bf16 %v7652, %v7646
        %v7737 = vpack.c.bf16 %v7653, %v7647
        %v7738 = vpack.c.bf16 %v7654, %v7648
        %v7739 = vpack.c.bf16 %v7661, %v7655
        %v7740 = vpack.c.bf16 %v7662, %v7656
        %v7741 = vpack.c.bf16 %v7663, %v7657
        %v7742 = vpack.c.bf16 %v7664, %v7658
        %v7743 = vpack.c.bf16 %v7665, %v7659
        %v7744 = vpack.c.bf16 %v7666, %v7660
        %v7745 = vpack.c.bf16 %v7673, %v7667
        %v7746 = vpack.c.bf16 %v7674, %v7668
        %v7747 = vpack.c.bf16 %v7675, %v7669
        %v7748 = vpack.c.bf16 %v7676, %v7670
        %v7749 = vpack.c.bf16 %v7677, %v7671
        %v7750 = vpack.c.bf16 %v7678, %v7672
        %v7751 = vpack.c.bf16 %v7685, %v7679
        %v7752 = vpack.c.bf16 %v7686, %v7680
        %v7753 = vpack.c.bf16 %v7687, %v7681
        %v7754 = vpack.c.bf16 %v7688, %v7682
        %v7755 = vpack.c.bf16 %v7689, %v7683
        %v7756 = vpack.c.bf16 %v7690, %v7684
        %v7757 = vpack.c.bf16 %v7697, %v7691
        %v7758 = vpack.c.bf16 %v7698, %v7692
        %v7759 = vpack.c.bf16 %v7699, %v7693
        %v7760 = vpack.c.bf16 %v7700, %v7694
        %v7761 = vpack.c.bf16 %v7701, %v7695
        %v7762 = vpack.c.bf16 %v7702, %v7696
        %v7763 = vpack.c.bf16 %v7709, %v7703
        %v7764 = vpack.c.bf16 %v7710, %v7704
        %v7765 = vpack.c.bf16 %v7711, %v7705
        %v7766 = vpack.c.bf16 %v7712, %v7706
        %v7767 = vpack.c.bf16 %v7713, %v7707
        %v7768 = vpack.c.bf16 %v7714, %v7708
        %v7769 = vpack.c.bf16 %v7721, %v7715
        %v7770 = vpack.c.bf16 %v7722, %v7716
        %v7771 = vpack.c.bf16 %v7723, %v7717
        %v7772 = vpack.c.bf16 %v7724, %v7718
        %v7773 = vpack.c.bf16 %v7725, %v7719
        %v7774 = vpack.c.bf16 %v7726, %v7720
        %v7775 = vld [vmem:[#allocation25] sm:$0xff]
        %v7776 = vld [vmem:[#allocation25 + $0x8] sm:$0xff]
        %v7777 = vld [vmem:[#allocation25 + $0x10] sm:$0xff]
        %v7778 = vld [vmem:[#allocation25 + $0x18] sm:$0xff]
        %v7779 = vld [vmem:[#allocation25 + $0x20] sm:$0xff]
        %v7780 = vld [vmem:[#allocation25 + $0x28] sm:$0xff]
        %v7781 = vld [vmem:[#allocation25 + $0x30] sm:$0xff]
        %v7782 = vld [vmem:[#allocation25 + $0x38] sm:$0xff]
        %v7783 = vld [vmem:[#allocation25 + $0x40] sm:$0xff]
        %v7784 = vld [vmem:[#allocation25 + $0x48] sm:$0xff]
        %v7785 = vld [vmem:[#allocation25 + $0x50] sm:$0xff]
        %v7786 = vld [vmem:[#allocation25 + $0x58] sm:$0xff]
        %v7787 = vld [vmem:[#allocation25 + $0x60] sm:$0xff]
        %v7788 = vld [vmem:[#allocation25 + $0x68] sm:$0xff]
        %v7789 = vld [vmem:[#allocation25 + $0x70] sm:$0xff]
        %v7790 = vld [vmem:[#allocation25 + $0x78] sm:$0xff]
        %v7791 = vld [vmem:[#allocation25 + $0x80] sm:$0xff]
        %v7792 = vld [vmem:[#allocation25 + $0x88] sm:$0xff]
        %v7793 = vld [vmem:[#allocation25 + $0x90] sm:$0xff]
        %v7794 = vld [vmem:[#allocation25 + $0x98] sm:$0xff]
        %v7795 = vld [vmem:[#allocation25 + $0xa0] sm:$0xff]
        %v7796 = vld [vmem:[#allocation25 + $0xa8] sm:$0xff]
        %v7797 = vld [vmem:[#allocation25 + $0xb0] sm:$0xff]
        %v7798 = vld [vmem:[#allocation25 + $0xb8] sm:$0xff]
        %v7799 = vld [vmem:[#allocation25 + $0xc0] sm:$0xff]
        %v7800 = vld [vmem:[#allocation25 + $0xc8] sm:$0xff]
        %v7801 = vld [vmem:[#allocation25 + $0xd0] sm:$0xff]
        %v7802 = vld [vmem:[#allocation25 + $0xd8] sm:$0xff]
        %v7803 = vld [vmem:[#allocation25 + $0xe0] sm:$0xff]
        %v7804 = vld [vmem:[#allocation25 + $0xe8] sm:$0xff]
        %v7805 = vld [vmem:[#allocation25 + $0xf0] sm:$0xff]
        %v7806 = vld [vmem:[#allocation25 + $0xf8] sm:$0xff]
        %v7807 = vld [vmem:[#allocation25 + $0x100] sm:$0xff]
        %v7808 = vld [vmem:[#allocation25 + $0x108] sm:$0xff]
        %v7809 = vld [vmem:[#allocation25 + $0x110] sm:$0xff]
        %v7810 = vld [vmem:[#allocation25 + $0x118] sm:$0xff]
        %v7811 = vld [vmem:[#allocation25 + $0x120] sm:$0xff]
        %v7812 = vld [vmem:[#allocation25 + $0x128] sm:$0xff]
        %v7813 = vld [vmem:[#allocation25 + $0x130] sm:$0xff]
        %v7814 = vld [vmem:[#allocation25 + $0x138] sm:$0xff]
        %v7815 = vld [vmem:[#allocation25 + $0x140] sm:$0xff]
        %v7816 = vld [vmem:[#allocation25 + $0x148] sm:$0xff]
        %v7817 = vld [vmem:[#allocation25 + $0x150] sm:$0xff]
        %v7818 = vld [vmem:[#allocation25 + $0x158] sm:$0xff]
        %v7819 = vld [vmem:[#allocation25 + $0x160] sm:$0xff]
        %v7820 = vld [vmem:[#allocation25 + $0x168] sm:$0xff]
        %v7821 = vld [vmem:[#allocation25 + $0x170] sm:$0xff]
        %v7822 = vld [vmem:[#allocation25 + $0x178] sm:$0xff]
        %v7823 = vld [vmem:[#allocation25 + $0x180] sm:$0xff]
        %v7824 = vld [vmem:[#allocation25 + $0x188] sm:$0xff]
        %v7825 = vld [vmem:[#allocation25 + $0x190] sm:$0xff]
        %v7826 = vld [vmem:[#allocation25 + $0x198] sm:$0xff]
        %v7827 = vld [vmem:[#allocation25 + $0x1a0] sm:$0xff]
        %v7828 = vld [vmem:[#allocation25 + $0x1a8] sm:$0xff]
        %v7829 = vld [vmem:[#allocation25 + $0x1b0] sm:$0xff]
        %v7830 = vld [vmem:[#allocation25 + $0x1b8] sm:$0xff]
        %v7831 = vld [vmem:[#allocation25 + $0x1c0] sm:$0xff]
        %v7832 = vld [vmem:[#allocation25 + $0x1c8] sm:$0xff]
        %v7833 = vld [vmem:[#allocation25 + $0x1d0] sm:$0xff]
        %v7834 = vld [vmem:[#allocation25 + $0x1d8] sm:$0xff]
        %v7835 = vld [vmem:[#allocation25 + $0x1e0] sm:$0xff]
        %v7836 = vld [vmem:[#allocation25 + $0x1e8] sm:$0xff]
        %v7837 = vld [vmem:[#allocation25 + $0x1f0] sm:$0xff]
        %v7838 = vld [vmem:[#allocation25 + $0x1f8] sm:$0xff]
        %v7839 = vld [vmem:[#allocation25 + $0x200] sm:$0xff]
        %v7840 = vld [vmem:[#allocation25 + $0x208] sm:$0xff]
        %v7841 = vld [vmem:[#allocation25 + $0x210] sm:$0xff]
        %v7842 = vld [vmem:[#allocation25 + $0x218] sm:$0xff]
        %v7843 = vld [vmem:[#allocation25 + $0x220] sm:$0xff]
        %v7844 = vld [vmem:[#allocation25 + $0x228] sm:$0xff]
        %v7845 = vld [vmem:[#allocation25 + $0x230] sm:$0xff]
        %v7846 = vld [vmem:[#allocation25 + $0x238] sm:$0xff]
        %v7847 = vld [vmem:[#allocation25 + $0x240] sm:$0xff]
        %v7848 = vld [vmem:[#allocation25 + $0x248] sm:$0xff]
        %v7849 = vld [vmem:[#allocation25 + $0x250] sm:$0xff]
        %v7850 = vld [vmem:[#allocation25 + $0x258] sm:$0xff]
        %v7851 = vld [vmem:[#allocation25 + $0x260] sm:$0xff]
        %v7852 = vld [vmem:[#allocation25 + $0x268] sm:$0xff]
        %v7853 = vld [vmem:[#allocation25 + $0x270] sm:$0xff]
        %v7854 = vld [vmem:[#allocation25 + $0x278] sm:$0xff]
        %v7855 = vld [vmem:[#allocation25 + $0x280] sm:$0xff]
        %v7856 = vld [vmem:[#allocation25 + $0x288] sm:$0xff]
        %v7857 = vld [vmem:[#allocation25 + $0x290] sm:$0xff]
        %v7858 = vld [vmem:[#allocation25 + $0x298] sm:$0xff]
        %v7859 = vld [vmem:[#allocation25 + $0x2a0] sm:$0xff]
        %v7860 = vld [vmem:[#allocation25 + $0x2a8] sm:$0xff]
        %v7861 = vld [vmem:[#allocation25 + $0x2b0] sm:$0xff]
        %v7862 = vld [vmem:[#allocation25 + $0x2b8] sm:$0xff]
        %v7863 = vld [vmem:[#allocation25 + $0x2c0] sm:$0xff]
        %v7864 = vld [vmem:[#allocation25 + $0x2c8] sm:$0xff]
        %v7865 = vld [vmem:[#allocation25 + $0x2d0] sm:$0xff]
        %v7866 = vld [vmem:[#allocation25 + $0x2d8] sm:$0xff]
        %v7867 = vld [vmem:[#allocation25 + $0x2e0] sm:$0xff]
        %v7868 = vld [vmem:[#allocation25 + $0x2e8] sm:$0xff]
        %v7869 = vld [vmem:[#allocation25 + $0x2f0] sm:$0xff]
        %v7870 = vld [vmem:[#allocation25 + $0x2f8] sm:$0xff]
        %v7871 = vld [vmem:[#allocation25 + $0x300] sm:$0xff]
        %v7872 = vld [vmem:[#allocation25 + $0x308] sm:$0xff]
        %v7873 = vld [vmem:[#allocation25 + $0x310] sm:$0xff]
        %v7874 = vld [vmem:[#allocation25 + $0x318] sm:$0xff]
        %v7875 = vld [vmem:[#allocation25 + $0x320] sm:$0xff]
        %v7876 = vld [vmem:[#allocation25 + $0x328] sm:$0xff]
        %v7877 = vld [vmem:[#allocation25 + $0x330] sm:$0xff]
        %v7878 = vld [vmem:[#allocation25 + $0x338] sm:$0xff]
        %v7879 = vld [vmem:[#allocation25 + $0x340] sm:$0xff]
        %v7880 = vld [vmem:[#allocation25 + $0x348] sm:$0xff]
        %v7881 = vld [vmem:[#allocation25 + $0x350] sm:$0xff]
        %v7882 = vld [vmem:[#allocation25 + $0x358] sm:$0xff]
        %v7883 = vld [vmem:[#allocation25 + $0x360] sm:$0xff]
        %v7884 = vld [vmem:[#allocation25 + $0x368] sm:$0xff]
        %v7885 = vld [vmem:[#allocation25 + $0x370] sm:$0xff]
        %v7886 = vld [vmem:[#allocation25 + $0x378] sm:$0xff]
        %v7887 = vld [vmem:[#allocation25 + $0x380] sm:$0xff]
        %v7888 = vld [vmem:[#allocation25 + $0x388] sm:$0xff]
        %v7889 = vld [vmem:[#allocation25 + $0x390] sm:$0xff]
        %v7890 = vld [vmem:[#allocation25 + $0x398] sm:$0xff]
        %v7891 = vld [vmem:[#allocation25 + $0x3a0] sm:$0xff]
        %v7892 = vld [vmem:[#allocation25 + $0x3a8] sm:$0xff]
        %v7893 = vld [vmem:[#allocation25 + $0x3b0] sm:$0xff]
        %v7894 = vld [vmem:[#allocation25 + $0x3b8] sm:$0xff]
        %v7895 = vld [vmem:[#allocation25 + $0x3c0] sm:$0xff]
        %v7896 = vld [vmem:[#allocation25 + $0x3c8] sm:$0xff]
        %v7897 = vld [vmem:[#allocation25 + $0x3d0] sm:$0xff]
        %v7898 = vld [vmem:[#allocation25 + $0x3d8] sm:$0xff]
        %v7899 = vld [vmem:[#allocation25 + $0x3e0] sm:$0xff]
        %v7900 = vld [vmem:[#allocation25 + $0x3e8] sm:$0xff]
        %v7901 = vld [vmem:[#allocation25 + $0x3f0] sm:$0xff]
        %v7902 = vld [vmem:[#allocation25 + $0x3f8] sm:$0xff]
        %v7903 = vld [vmem:[#allocation25 + $0x400] sm:$0xff]
        %v7904 = vld [vmem:[#allocation25 + $0x408] sm:$0xff]
        %v7905 = vld [vmem:[#allocation25 + $0x410] sm:$0xff]
        %v7906 = vld [vmem:[#allocation25 + $0x418] sm:$0xff]
        %v7907 = vld [vmem:[#allocation25 + $0x420] sm:$0xff]
        %v7908 = vld [vmem:[#allocation25 + $0x428] sm:$0xff]
        %v7909 = vld [vmem:[#allocation25 + $0x430] sm:$0xff]
        %v7910 = vld [vmem:[#allocation25 + $0x438] sm:$0xff]
        %v7911 = vld [vmem:[#allocation25 + $0x440] sm:$0xff]
        %v7912 = vld [vmem:[#allocation25 + $0x448] sm:$0xff]
        %v7913 = vld [vmem:[#allocation25 + $0x450] sm:$0xff]
        %v7914 = vld [vmem:[#allocation25 + $0x458] sm:$0xff]
        %v7915 = vld [vmem:[#allocation25 + $0x460] sm:$0xff]
        %v7916 = vld [vmem:[#allocation25 + $0x468] sm:$0xff]
        %v7917 = vld [vmem:[#allocation25 + $0x470] sm:$0xff]
        %v7918 = vld [vmem:[#allocation25 + $0x478] sm:$0xff]
        %v7919 = vld [vmem:[#allocation25 + $0x480] sm:$0xff]
        %v7920 = vld [vmem:[#allocation25 + $0x488] sm:$0xff]
        %v7921 = vld [vmem:[#allocation25 + $0x490] sm:$0xff]
        %v7922 = vld [vmem:[#allocation25 + $0x498] sm:$0xff]
        %v7923 = vld [vmem:[#allocation25 + $0x4a0] sm:$0xff]
        %v7924 = vld [vmem:[#allocation25 + $0x4a8] sm:$0xff]
        %v7925 = vld [vmem:[#allocation25 + $0x4b0] sm:$0xff]
        %v7926 = vld [vmem:[#allocation25 + $0x4b8] sm:$0xff]
        %v7927 = vld [vmem:[#allocation25 + $0x4c0] sm:$0xff]
        %v7928 = vld [vmem:[#allocation25 + $0x4c8] sm:$0xff]
        %v7929 = vld [vmem:[#allocation25 + $0x4d0] sm:$0xff]
        %v7930 = vld [vmem:[#allocation25 + $0x4d8] sm:$0xff]
        %v7931 = vld [vmem:[#allocation25 + $0x4e0] sm:$0xff]
        %v7932 = vld [vmem:[#allocation25 + $0x4e8] sm:$0xff]
        %v7933 = vld [vmem:[#allocation25 + $0x4f0] sm:$0xff]
        %v7934 = vld [vmem:[#allocation25 + $0x4f8] sm:$0xff]
        %v7935 = vld [vmem:[#allocation25 + $0x500] sm:$0xff]
        %v7936 = vld [vmem:[#allocation25 + $0x508] sm:$0xff]
        %v7937 = vld [vmem:[#allocation25 + $0x510] sm:$0xff]
        %v7938 = vld [vmem:[#allocation25 + $0x518] sm:$0xff]
        %v7939 = vld [vmem:[#allocation25 + $0x520] sm:$0xff]
        %v7940 = vld [vmem:[#allocation25 + $0x528] sm:$0xff]
        %v7941 = vld [vmem:[#allocation25 + $0x530] sm:$0xff]
        %v7942 = vld [vmem:[#allocation25 + $0x538] sm:$0xff]
        %v7943 = vld [vmem:[#allocation25 + $0x540] sm:$0xff]
        %v7944 = vld [vmem:[#allocation25 + $0x548] sm:$0xff]
        %v7945 = vld [vmem:[#allocation25 + $0x550] sm:$0xff]
        %v7946 = vld [vmem:[#allocation25 + $0x558] sm:$0xff]
        %v7947 = vld [vmem:[#allocation25 + $0x560] sm:$0xff]
        %v7948 = vld [vmem:[#allocation25 + $0x568] sm:$0xff]
        %v7949 = vld [vmem:[#allocation25 + $0x570] sm:$0xff]
        %v7950 = vld [vmem:[#allocation25 + $0x578] sm:$0xff]
        %v7951 = vld [vmem:[#allocation25 + $0x580] sm:$0xff]
        %v7952 = vld [vmem:[#allocation25 + $0x588] sm:$0xff]
        %v7953 = vld [vmem:[#allocation25 + $0x590] sm:$0xff]
        %v7954 = vld [vmem:[#allocation25 + $0x598] sm:$0xff]
        %v7955 = vld [vmem:[#allocation25 + $0x5a0] sm:$0xff]
        %v7956 = vld [vmem:[#allocation25 + $0x5a8] sm:$0xff]
        %v7957 = vld [vmem:[#allocation25 + $0x5b0] sm:$0xff]
        %v7958 = vld [vmem:[#allocation25 + $0x5b8] sm:$0xff]
        %v7959 = vld [vmem:[#allocation25 + $0x5c0] sm:$0xff]
        %v7960 = vld [vmem:[#allocation25 + $0x5c8] sm:$0xff]
        %v7961 = vld [vmem:[#allocation25 + $0x5d0] sm:$0xff]
        %v7962 = vld [vmem:[#allocation25 + $0x5d8] sm:$0xff]
        %v7963 = vld [vmem:[#allocation25 + $0x5e0] sm:$0xff]
        %v7964 = vld [vmem:[#allocation25 + $0x5e8] sm:$0xff]
        %v7965 = vld [vmem:[#allocation25 + $0x5f0] sm:$0xff]
        %v7966 = vld [vmem:[#allocation25 + $0x5f8] sm:$0xff]
        %v7967 = vld [vmem:[#allocation25 + $0x600] sm:$0xff]
        %v7968 = vld [vmem:[#allocation25 + $0x608] sm:$0xff]
        %v7969 = vld [vmem:[#allocation25 + $0x610] sm:$0xff]
        %v7970 = vld [vmem:[#allocation25 + $0x618] sm:$0xff]
        %v7971 = vld [vmem:[#allocation25 + $0x620] sm:$0xff]
        %v7972 = vld [vmem:[#allocation25 + $0x628] sm:$0xff]
        %v7973 = vld [vmem:[#allocation25 + $0x630] sm:$0xff]
        %v7974 = vld [vmem:[#allocation25 + $0x638] sm:$0xff]
        %v7975 = vld [vmem:[#allocation25 + $0x640] sm:$0xff]
        %v7976 = vld [vmem:[#allocation25 + $0x648] sm:$0xff]
        %v7977 = vld [vmem:[#allocation25 + $0x650] sm:$0xff]
        %v7978 = vld [vmem:[#allocation25 + $0x658] sm:$0xff]
        %v7979 = vld [vmem:[#allocation25 + $0x660] sm:$0xff]
        %v7980 = vld [vmem:[#allocation25 + $0x668] sm:$0xff]
        %v7981 = vld [vmem:[#allocation25 + $0x670] sm:$0xff]
        %v7982 = vld [vmem:[#allocation25 + $0x678] sm:$0xff]
        %v7983 = vld [vmem:[#allocation25 + $0x680] sm:$0xff]
        %v7984 = vld [vmem:[#allocation25 + $0x688] sm:$0xff]
        %v7985 = vld [vmem:[#allocation25 + $0x690] sm:$0xff]
        %v7986 = vld [vmem:[#allocation25 + $0x698] sm:$0xff]
        %v7987 = vld [vmem:[#allocation25 + $0x6a0] sm:$0xff]
        %v7988 = vld [vmem:[#allocation25 + $0x6a8] sm:$0xff]
        %v7989 = vld [vmem:[#allocation25 + $0x6b0] sm:$0xff]
        %v7990 = vld [vmem:[#allocation25 + $0x6b8] sm:$0xff]
        %v7991 = vld [vmem:[#allocation25 + $0x6c0] sm:$0xff]
        %v7992 = vld [vmem:[#allocation25 + $0x6c8] sm:$0xff]
        %v7993 = vld [vmem:[#allocation25 + $0x6d0] sm:$0xff]
        %v7994 = vld [vmem:[#allocation25 + $0x6d8] sm:$0xff]
        %v7995 = vld [vmem:[#allocation25 + $0x6e0] sm:$0xff]
        %v7996 = vld [vmem:[#allocation25 + $0x6e8] sm:$0xff]
        %v7997 = vld [vmem:[#allocation25 + $0x6f0] sm:$0xff]
        %v7998 = vld [vmem:[#allocation25 + $0x6f8] sm:$0xff]
        %v7999 = vld [vmem:[#allocation25 + $0x700] sm:$0xff]
        %v8000 = vld [vmem:[#allocation25 + $0x708] sm:$0xff]
        %v8001 = vld [vmem:[#allocation25 + $0x710] sm:$0xff]
        %v8002 = vld [vmem:[#allocation25 + $0x718] sm:$0xff]
        %v8003 = vld [vmem:[#allocation25 + $0x720] sm:$0xff]
        %v8004 = vld [vmem:[#allocation25 + $0x728] sm:$0xff]
        %v8005 = vld [vmem:[#allocation25 + $0x730] sm:$0xff]
        %v8006 = vld [vmem:[#allocation25 + $0x738] sm:$0xff]
        %v8007 = vld [vmem:[#allocation25 + $0x740] sm:$0xff]
        %v8008 = vld [vmem:[#allocation25 + $0x748] sm:$0xff]
        %v8009 = vld [vmem:[#allocation25 + $0x750] sm:$0xff]
        %v8010 = vld [vmem:[#allocation25 + $0x758] sm:$0xff]
        %v8011 = vld [vmem:[#allocation25 + $0x760] sm:$0xff]
        %v8012 = vld [vmem:[#allocation25 + $0x768] sm:$0xff]
        %v8013 = vld [vmem:[#allocation25 + $0x770] sm:$0xff]
        %v8014 = vld [vmem:[#allocation25 + $0x778] sm:$0xff]
        %v8015 = vld [vmem:[#allocation25 + $0x780] sm:$0xff]
        %v8016 = vld [vmem:[#allocation25 + $0x788] sm:$0xff]
        %v8017 = vld [vmem:[#allocation25 + $0x790] sm:$0xff]
        %v8018 = vld [vmem:[#allocation25 + $0x798] sm:$0xff]
        %v8019 = vld [vmem:[#allocation25 + $0x7a0] sm:$0xff]
        %v8020 = vld [vmem:[#allocation25 + $0x7a8] sm:$0xff]
        %v8021 = vld [vmem:[#allocation25 + $0x7b0] sm:$0xff]
        %v8022 = vld [vmem:[#allocation25 + $0x7b8] sm:$0xff]
        %v8023 = vld [vmem:[#allocation25 + $0x7c0] sm:$0xff]
        %v8024 = vld [vmem:[#allocation25 + $0x7c8] sm:$0xff]
        %v8025 = vld [vmem:[#allocation25 + $0x7d0] sm:$0xff]
        %v8026 = vld [vmem:[#allocation25 + $0x7d8] sm:$0xff]
        %v8027 = vld [vmem:[#allocation25 + $0x7e0] sm:$0xff]
        %v8028 = vld [vmem:[#allocation25 + $0x7e8] sm:$0xff]
        %v8029 = vld [vmem:[#allocation25 + $0x7f0] sm:$0xff]
        %v8030 = vld [vmem:[#allocation25 + $0x7f8] sm:$0xff]
        %v8031 = vld [vmem:[#allocation25 + $0x800] sm:$0xff]
        %v8032 = vld [vmem:[#allocation25 + $0x808] sm:$0xff]
        %v8033 = vld [vmem:[#allocation25 + $0x810] sm:$0xff]
        %v8034 = vld [vmem:[#allocation25 + $0x818] sm:$0xff]
        %v8035 = vld [vmem:[#allocation25 + $0x820] sm:$0xff]
        %v8036 = vld [vmem:[#allocation25 + $0x828] sm:$0xff]
        %v8037 = vld [vmem:[#allocation25 + $0x830] sm:$0xff]
        %v8038 = vld [vmem:[#allocation25 + $0x838] sm:$0xff]
        %v8039 = vld [vmem:[#allocation25 + $0x840] sm:$0xff]
        %v8040 = vld [vmem:[#allocation25 + $0x848] sm:$0xff]
        %v8041 = vld [vmem:[#allocation25 + $0x850] sm:$0xff]
        %v8042 = vld [vmem:[#allocation25 + $0x858] sm:$0xff]
        %v8043 = vld [vmem:[#allocation25 + $0x860] sm:$0xff]
        %v8044 = vld [vmem:[#allocation25 + $0x868] sm:$0xff]
        %v8045 = vld [vmem:[#allocation25 + $0x870] sm:$0xff]
        %v8046 = vld [vmem:[#allocation25 + $0x878] sm:$0xff]
        %v8047 = vld [vmem:[#allocation25 + $0x880] sm:$0xff]
        %v8048 = vld [vmem:[#allocation25 + $0x888] sm:$0xff]
        %v8049 = vld [vmem:[#allocation25 + $0x890] sm:$0xff]
        %v8050 = vld [vmem:[#allocation25 + $0x898] sm:$0xff]
        %v8051 = vld [vmem:[#allocation25 + $0x8a0] sm:$0xff]
        %v8052 = vld [vmem:[#allocation25 + $0x8a8] sm:$0xff]
        %v8053 = vld [vmem:[#allocation25 + $0x8b0] sm:$0xff]
        %v8054 = vld [vmem:[#allocation25 + $0x8b8] sm:$0xff]
        %v8055 = vld [vmem:[#allocation25 + $0x8c0] sm:$0xff]
        %v8056 = vld [vmem:[#allocation25 + $0x8c8] sm:$0xff]
        %v8057 = vld [vmem:[#allocation25 + $0x8d0] sm:$0xff]
        %v8058 = vld [vmem:[#allocation25 + $0x8d8] sm:$0xff]
        %v8059 = vld [vmem:[#allocation25 + $0x8e0] sm:$0xff]
        %v8060 = vld [vmem:[#allocation25 + $0x8e8] sm:$0xff]
        %v8061 = vld [vmem:[#allocation25 + $0x8f0] sm:$0xff]
        %v8062 = vld [vmem:[#allocation25 + $0x8f8] sm:$0xff]
        %v8063 = vld [vmem:[#allocation26] sm:$0x3f]
        %v8065 = vlaneseq
        %v8066 = vshrl.u32 %v8065, 7
        %v8067 = vsub.s32 0, %v8066
        %v8068 = vrot.slane %v8063, %v8067
        %v8069 = vlaneseq
        %v8070 = vshrl.u32 %v8069, 7
        %v8071 = vsub.s32 1, %v8070
        %v8072 = vrot.slane %v8063, %v8071
        %v8073 = vlaneseq
        %v8074 = vshrl.u32 %v8073, 7
        %v8075 = vsub.s32 2, %v8074
        %v8076 = vrot.slane %v8063, %v8075
        %v8077 = vlaneseq
        %v8078 = vshrl.u32 %v8077, 7
        %v8079 = vsub.s32 3, %v8078
        %v8080 = vrot.slane %v8063, %v8079
        %v8081 = vlaneseq
        %v8082 = vshrl.u32 %v8081, 7
        %v8083 = vsub.s32 4, %v8082
        %v8084 = vrot.slane %v8063, %v8083
        %v8085 = vlaneseq
        %v8086 = vshrl.u32 %v8085, 7
        %v8087 = vsub.s32 5, %v8086
        %v8088 = vrot.slane %v8063, %v8087
        %v8383 = vunpack.c.l.b16 %v7775
        %v8384 = vunpack.c.h.b16 %v7775
        %v8385 = vunpack.c.l.b16 %v7776
        %v8386 = vunpack.c.h.b16 %v7776
        %v8387 = vunpack.c.l.b16 %v7777
        %v8388 = vunpack.c.h.b16 %v7777
        %v8389 = vunpack.c.l.b16 %v7778
        %v8390 = vunpack.c.h.b16 %v7778
        %v8391 = vunpack.c.l.b16 %v7779
        %v8392 = vunpack.c.h.b16 %v7779
        %v8393 = vunpack.c.l.b16 %v7780
        %v8394 = vunpack.c.h.b16 %v7780
        %v8395 = vunpack.c.l.b16 %v7781
        %v8396 = vunpack.c.h.b16 %v7781
        %v8397 = vunpack.c.l.b16 %v7782
        %v8398 = vunpack.c.h.b16 %v7782
        %v8399 = vunpack.c.l.b16 %v7783
        %v8400 = vunpack.c.h.b16 %v7783
        %v8401 = vunpack.c.l.b16 %v7784
        %v8402 = vunpack.c.h.b16 %v7784
        %v8403 = vunpack.c.l.b16 %v7785
        %v8404 = vunpack.c.h.b16 %v7785
        %v8405 = vunpack.c.l.b16 %v7786
        %v8406 = vunpack.c.h.b16 %v7786
        %v8407 = vunpack.c.l.b16 %v7787
        %v8408 = vunpack.c.h.b16 %v7787
        %v8409 = vunpack.c.l.b16 %v7788
        %v8410 = vunpack.c.h.b16 %v7788
        %v8411 = vunpack.c.l.b16 %v7789
        %v8412 = vunpack.c.h.b16 %v7789
        %v8413 = vunpack.c.l.b16 %v7790
        %v8414 = vunpack.c.h.b16 %v7790
        %v8415 = vunpack.c.l.b16 %v7791
        %v8416 = vunpack.c.h.b16 %v7791
        %v8417 = vunpack.c.l.b16 %v7792
        %v8418 = vunpack.c.h.b16 %v7792
        %v8419 = vunpack.c.l.b16 %v7793
        %v8420 = vunpack.c.h.b16 %v7793
        %v8421 = vunpack.c.l.b16 %v7794
        %v8422 = vunpack.c.h.b16 %v7794
        %v8423 = vunpack.c.l.b16 %v7795
        %v8424 = vunpack.c.h.b16 %v7795
        %v8425 = vunpack.c.l.b16 %v7796
        %v8426 = vunpack.c.h.b16 %v7796
        %v8427 = vunpack.c.l.b16 %v7797
        %v8428 = vunpack.c.h.b16 %v7797
        %v8429 = vunpack.c.l.b16 %v7798
        %v8430 = vunpack.c.h.b16 %v7798
        %v8431 = vunpack.c.l.b16 %v7799
        %v8432 = vunpack.c.h.b16 %v7799
        %v8433 = vunpack.c.l.b16 %v7800
        %v8434 = vunpack.c.h.b16 %v7800
        %v8435 = vunpack.c.l.b16 %v7801
        %v8436 = vunpack.c.h.b16 %v7801
        %v8437 = vunpack.c.l.b16 %v7802
        %v8438 = vunpack.c.h.b16 %v7802
        %v8439 = vunpack.c.l.b16 %v7803
        %v8440 = vunpack.c.h.b16 %v7803
        %v8441 = vunpack.c.l.b16 %v7804
        %v8442 = vunpack.c.h.b16 %v7804
        %v8443 = vunpack.c.l.b16 %v7805
        %v8444 = vunpack.c.h.b16 %v7805
        %v8445 = vunpack.c.l.b16 %v7806
        %v8446 = vunpack.c.h.b16 %v7806
        %v8447 = vunpack.c.l.b16 %v7807
        %v8448 = vunpack.c.h.b16 %v7807
        %v8449 = vunpack.c.l.b16 %v7808
        %v8450 = vunpack.c.h.b16 %v7808
        %v8451 = vunpack.c.l.b16 %v7809
        %v8452 = vunpack.c.h.b16 %v7809
        %v8453 = vunpack.c.l.b16 %v7810
        %v8454 = vunpack.c.h.b16 %v7810
        %v8455 = vunpack.c.l.b16 %v7811
        %v8456 = vunpack.c.h.b16 %v7811
        %v8457 = vunpack.c.l.b16 %v7812
        %v8458 = vunpack.c.h.b16 %v7812
        %v8459 = vunpack.c.l.b16 %v7813
        %v8460 = vunpack.c.h.b16 %v7813
        %v8461 = vunpack.c.l.b16 %v7814
        %v8462 = vunpack.c.h.b16 %v7814
        %v8463 = vunpack.c.l.b16 %v7815
        %v8464 = vunpack.c.h.b16 %v7815
        %v8465 = vunpack.c.l.b16 %v7816
        %v8466 = vunpack.c.h.b16 %v7816
        %v8467 = vunpack.c.l.b16 %v7817
        %v8468 = vunpack.c.h.b16 %v7817
        %v8469 = vunpack.c.l.b16 %v7818
        %v8470 = vunpack.c.h.b16 %v7818
        %v8471 = vunpack.c.l.b16 %v7819
        %v8472 = vunpack.c.h.b16 %v7819
        %v8473 = vunpack.c.l.b16 %v7820
        %v8474 = vunpack.c.h.b16 %v7820
        %v8475 = vunpack.c.l.b16 %v7821
        %v8476 = vunpack.c.h.b16 %v7821
        %v8477 = vunpack.c.l.b16 %v7822
        %v8478 = vunpack.c.h.b16 %v7822
        %v8479 = vunpack.c.l.b16 %v7823
        %v8480 = vunpack.c.h.b16 %v7823
        %v8481 = vunpack.c.l.b16 %v7824
        %v8482 = vunpack.c.h.b16 %v7824
        %v8483 = vunpack.c.l.b16 %v7825
        %v8484 = vunpack.c.h.b16 %v7825
        %v8485 = vunpack.c.l.b16 %v7826
        %v8486 = vunpack.c.h.b16 %v7826
        %v8487 = vunpack.c.l.b16 %v7827
        %v8488 = vunpack.c.h.b16 %v7827
        %v8489 = vunpack.c.l.b16 %v7828
        %v8490 = vunpack.c.h.b16 %v7828
        %v8491 = vunpack.c.l.b16 %v7829
        %v8492 = vunpack.c.h.b16 %v7829
        %v8493 = vunpack.c.l.b16 %v7830
        %v8494 = vunpack.c.h.b16 %v7830
        %v8495 = vunpack.c.l.b16 %v7831
        %v8496 = vunpack.c.h.b16 %v7831
        %v8497 = vunpack.c.l.b16 %v7832
        %v8498 = vunpack.c.h.b16 %v7832
        %v8499 = vunpack.c.l.b16 %v7833
        %v8500 = vunpack.c.h.b16 %v7833
        %v8501 = vunpack.c.l.b16 %v7834
        %v8502 = vunpack.c.h.b16 %v7834
        %v8503 = vunpack.c.l.b16 %v7835
        %v8504 = vunpack.c.h.b16 %v7835
        %v8505 = vunpack.c.l.b16 %v7836
        %v8506 = vunpack.c.h.b16 %v7836
        %v8507 = vunpack.c.l.b16 %v7837
        %v8508 = vunpack.c.h.b16 %v7837
        %v8509 = vunpack.c.l.b16 %v7838
        %v8510 = vunpack.c.h.b16 %v7838
        %v8511 = vunpack.c.l.b16 %v7839
        %v8512 = vunpack.c.h.b16 %v7839
        %v8513 = vunpack.c.l.b16 %v7840
        %v8514 = vunpack.c.h.b16 %v7840
        %v8515 = vunpack.c.l.b16 %v7841
        %v8516 = vunpack.c.h.b16 %v7841
        %v8517 = vunpack.c.l.b16 %v7842
        %v8518 = vunpack.c.h.b16 %v7842
        %v8519 = vunpack.c.l.b16 %v7843
        %v8520 = vunpack.c.h.b16 %v7843
        %v8521 = vunpack.c.l.b16 %v7844
        %v8522 = vunpack.c.h.b16 %v7844
        %v8523 = vunpack.c.l.b16 %v7845
        %v8524 = vunpack.c.h.b16 %v7845
        %v8525 = vunpack.c.l.b16 %v7846
        %v8526 = vunpack.c.h.b16 %v7846
        %v8527 = vunpack.c.l.b16 %v7847
        %v8528 = vunpack.c.h.b16 %v7847
        %v8529 = vunpack.c.l.b16 %v7848
        %v8530 = vunpack.c.h.b16 %v7848
        %v8531 = vunpack.c.l.b16 %v7849
        %v8532 = vunpack.c.h.b16 %v7849
        %v8533 = vunpack.c.l.b16 %v7850
        %v8534 = vunpack.c.h.b16 %v7850
        %v8535 = vunpack.c.l.b16 %v7851
        %v8536 = vunpack.c.h.b16 %v7851
        %v8537 = vunpack.c.l.b16 %v7852
        %v8538 = vunpack.c.h.b16 %v7852
        %v8539 = vunpack.c.l.b16 %v7853
        %v8540 = vunpack.c.h.b16 %v7853
        %v8541 = vunpack.c.l.b16 %v7854
        %v8542 = vunpack.c.h.b16 %v7854
        %v8543 = vunpack.c.l.b16 %v7855
        %v8544 = vunpack.c.h.b16 %v7855
        %v8545 = vunpack.c.l.b16 %v7856
        %v8546 = vunpack.c.h.b16 %v7856
        %v8547 = vunpack.c.l.b16 %v7857
        %v8548 = vunpack.c.h.b16 %v7857
        %v8549 = vunpack.c.l.b16 %v7858
        %v8550 = vunpack.c.h.b16 %v7858
        %v8551 = vunpack.c.l.b16 %v7859
        %v8552 = vunpack.c.h.b16 %v7859
        %v8553 = vunpack.c.l.b16 %v7860
        %v8554 = vunpack.c.h.b16 %v7860
        %v8555 = vunpack.c.l.b16 %v7861
        %v8556 = vunpack.c.h.b16 %v7861
        %v8557 = vunpack.c.l.b16 %v7862
        %v8558 = vunpack.c.h.b16 %v7862
        %v8559 = vunpack.c.l.b16 %v7863
        %v8560 = vunpack.c.h.b16 %v7863
        %v8561 = vunpack.c.l.b16 %v7864
        %v8562 = vunpack.c.h.b16 %v7864
        %v8563 = vunpack.c.l.b16 %v7865
        %v8564 = vunpack.c.h.b16 %v7865
        %v8565 = vunpack.c.l.b16 %v7866
        %v8566 = vunpack.c.h.b16 %v7866
        %v8567 = vunpack.c.l.b16 %v7867
        %v8568 = vunpack.c.h.b16 %v7867
        %v8569 = vunpack.c.l.b16 %v7868
        %v8570 = vunpack.c.h.b16 %v7868
        %v8571 = vunpack.c.l.b16 %v7869
        %v8572 = vunpack.c.h.b16 %v7869
        %v8573 = vunpack.c.l.b16 %v7870
        %v8574 = vunpack.c.h.b16 %v7870
        %v8575 = vunpack.c.l.b16 %v7871
        %v8576 = vunpack.c.h.b16 %v7871
        %v8577 = vunpack.c.l.b16 %v7872
        %v8578 = vunpack.c.h.b16 %v7872
        %v8579 = vunpack.c.l.b16 %v7873
        %v8580 = vunpack.c.h.b16 %v7873
        %v8581 = vunpack.c.l.b16 %v7874
        %v8582 = vunpack.c.h.b16 %v7874
        %v8583 = vunpack.c.l.b16 %v7875
        %v8584 = vunpack.c.h.b16 %v7875
        %v8585 = vunpack.c.l.b16 %v7876
        %v8586 = vunpack.c.h.b16 %v7876
        %v8587 = vunpack.c.l.b16 %v7877
        %v8588 = vunpack.c.h.b16 %v7877
        %v8589 = vunpack.c.l.b16 %v7878
        %v8590 = vunpack.c.h.b16 %v7878
        %v8591 = vunpack.c.l.b16 %v7879
        %v8592 = vunpack.c.h.b16 %v7879
        %v8593 = vunpack.c.l.b16 %v7880
        %v8594 = vunpack.c.h.b16 %v7880
        %v8595 = vunpack.c.l.b16 %v7881
        %v8596 = vunpack.c.h.b16 %v7881
        %v8597 = vunpack.c.l.b16 %v7882
        %v8598 = vunpack.c.h.b16 %v7882
        %v8599 = vunpack.c.l.b16 %v7883
        %v8600 = vunpack.c.h.b16 %v7883
        %v8601 = vunpack.c.l.b16 %v7884
        %v8602 = vunpack.c.h.b16 %v7884
        %v8603 = vunpack.c.l.b16 %v7885
        %v8604 = vunpack.c.h.b16 %v7885
        %v8605 = vunpack.c.l.b16 %v7886
        %v8606 = vunpack.c.h.b16 %v7886
        %v8607 = vunpack.c.l.b16 %v7887
        %v8608 = vunpack.c.h.b16 %v7887
        %v8609 = vunpack.c.l.b16 %v7888
        %v8610 = vunpack.c.h.b16 %v7888
        %v8611 = vunpack.c.l.b16 %v7889
        %v8612 = vunpack.c.h.b16 %v7889
        %v8613 = vunpack.c.l.b16 %v7890
        %v8614 = vunpack.c.h.b16 %v7890
        %v8615 = vunpack.c.l.b16 %v7891
        %v8616 = vunpack.c.h.b16 %v7891
        %v8617 = vunpack.c.l.b16 %v7892
        %v8618 = vunpack.c.h.b16 %v7892
        %v8619 = vunpack.c.l.b16 %v7893
        %v8620 = vunpack.c.h.b16 %v7893
        %v8621 = vunpack.c.l.b16 %v7894
        %v8622 = vunpack.c.h.b16 %v7894
        %v8623 = vunpack.c.l.b16 %v7895
        %v8624 = vunpack.c.h.b16 %v7895
        %v8625 = vunpack.c.l.b16 %v7896
        %v8626 = vunpack.c.h.b16 %v7896
        %v8627 = vunpack.c.l.b16 %v7897
        %v8628 = vunpack.c.h.b16 %v7897
        %v8629 = vunpack.c.l.b16 %v7898
        %v8630 = vunpack.c.h.b16 %v7898
        %v8631 = vunpack.c.l.b16 %v7899
        %v8632 = vunpack.c.h.b16 %v7899
        %v8633 = vunpack.c.l.b16 %v7900
        %v8634 = vunpack.c.h.b16 %v7900
        %v8635 = vunpack.c.l.b16 %v7901
        %v8636 = vunpack.c.h.b16 %v7901
        %v8637 = vunpack.c.l.b16 %v7902
        %v8638 = vunpack.c.h.b16 %v7902
        %v8639 = vunpack.c.l.b16 %v7903
        %v8640 = vunpack.c.h.b16 %v7903
        %v8641 = vunpack.c.l.b16 %v7904
        %v8642 = vunpack.c.h.b16 %v7904
        %v8643 = vunpack.c.l.b16 %v7905
        %v8644 = vunpack.c.h.b16 %v7905
        %v8645 = vunpack.c.l.b16 %v7906
        %v8646 = vunpack.c.h.b16 %v7906
        %v8647 = vunpack.c.l.b16 %v7907
        %v8648 = vunpack.c.h.b16 %v7907
        %v8649 = vunpack.c.l.b16 %v7908
        %v8650 = vunpack.c.h.b16 %v7908
        %v8651 = vunpack.c.l.b16 %v7909
        %v8652 = vunpack.c.h.b16 %v7909
        %v8653 = vunpack.c.l.b16 %v7910
        %v8654 = vunpack.c.h.b16 %v7910
        %v8655 = vunpack.c.l.b16 %v7911
        %v8656 = vunpack.c.h.b16 %v7911
        %v8657 = vunpack.c.l.b16 %v7912
        %v8658 = vunpack.c.h.b16 %v7912
        %v8659 = vunpack.c.l.b16 %v7913
        %v8660 = vunpack.c.h.b16 %v7913
        %v8661 = vunpack.c.l.b16 %v7914
        %v8662 = vunpack.c.h.b16 %v7914
        %v8663 = vunpack.c.l.b16 %v7915
        %v8664 = vunpack.c.h.b16 %v7915
        %v8665 = vunpack.c.l.b16 %v7916
        %v8666 = vunpack.c.h.b16 %v7916
        %v8667 = vunpack.c.l.b16 %v7917
        %v8668 = vunpack.c.h.b16 %v7917
        %v8669 = vunpack.c.l.b16 %v7918
        %v8670 = vunpack.c.h.b16 %v7918
        %v8671 = vunpack.c.l.b16 %v7919
        %v8672 = vunpack.c.h.b16 %v7919
        %v8673 = vunpack.c.l.b16 %v7920
        %v8674 = vunpack.c.h.b16 %v7920
        %v8675 = vunpack.c.l.b16 %v7921
        %v8676 = vunpack.c.h.b16 %v7921
        %v8677 = vunpack.c.l.b16 %v7922
        %v8678 = vunpack.c.h.b16 %v7922
        %v8679 = vunpack.c.l.b16 %v7923
        %v8680 = vunpack.c.h.b16 %v7923
        %v8681 = vunpack.c.l.b16 %v7924
        %v8682 = vunpack.c.h.b16 %v7924
        %v8683 = vunpack.c.l.b16 %v7925
        %v8684 = vunpack.c.h.b16 %v7925
        %v8685 = vunpack.c.l.b16 %v7926
        %v8686 = vunpack.c.h.b16 %v7926
        %v8687 = vunpack.c.l.b16 %v7927
        %v8688 = vunpack.c.h.b16 %v7927
        %v8689 = vunpack.c.l.b16 %v7928
        %v8690 = vunpack.c.h.b16 %v7928
        %v8691 = vunpack.c.l.b16 %v7929
        %v8692 = vunpack.c.h.b16 %v7929
        %v8693 = vunpack.c.l.b16 %v7930
        %v8694 = vunpack.c.h.b16 %v7930
        %v8695 = vunpack.c.l.b16 %v7931
        %v8696 = vunpack.c.h.b16 %v7931
        %v8697 = vunpack.c.l.b16 %v7932
        %v8698 = vunpack.c.h.b16 %v7932
        %v8699 = vunpack.c.l.b16 %v7933
        %v8700 = vunpack.c.h.b16 %v7933
        %v8701 = vunpack.c.l.b16 %v7934
        %v8702 = vunpack.c.h.b16 %v7934
        %v8703 = vunpack.c.l.b16 %v7935
        %v8704 = vunpack.c.h.b16 %v7935
        %v8705 = vunpack.c.l.b16 %v7936
        %v8706 = vunpack.c.h.b16 %v7936
        %v8707 = vunpack.c.l.b16 %v7937
        %v8708 = vunpack.c.h.b16 %v7937
        %v8709 = vunpack.c.l.b16 %v7938
        %v8710 = vunpack.c.h.b16 %v7938
        %v8711 = vunpack.c.l.b16 %v7939
        %v8712 = vunpack.c.h.b16 %v7939
        %v8713 = vunpack.c.l.b16 %v7940
        %v8714 = vunpack.c.h.b16 %v7940
        %v8715 = vunpack.c.l.b16 %v7941
        %v8716 = vunpack.c.h.b16 %v7941
        %v8717 = vunpack.c.l.b16 %v7942
        %v8718 = vunpack.c.h.b16 %v7942
        %v8719 = vunpack.c.l.b16 %v7943
        %v8720 = vunpack.c.h.b16 %v7943
        %v8721 = vunpack.c.l.b16 %v7944
        %v8722 = vunpack.c.h.b16 %v7944
        %v8723 = vunpack.c.l.b16 %v7945
        %v8724 = vunpack.c.h.b16 %v7945
        %v8725 = vunpack.c.l.b16 %v7946
        %v8726 = vunpack.c.h.b16 %v7946
        %v8727 = vunpack.c.l.b16 %v7947
        %v8728 = vunpack.c.h.b16 %v7947
        %v8729 = vunpack.c.l.b16 %v7948
        %v8730 = vunpack.c.h.b16 %v7948
        %v8731 = vunpack.c.l.b16 %v7949
        %v8732 = vunpack.c.h.b16 %v7949
        %v8733 = vunpack.c.l.b16 %v7950
        %v8734 = vunpack.c.h.b16 %v7950
        %v8735 = vunpack.c.l.b16 %v7951
        %v8736 = vunpack.c.h.b16 %v7951
        %v8737 = vunpack.c.l.b16 %v7952
        %v8738 = vunpack.c.h.b16 %v7952
        %v8739 = vunpack.c.l.b16 %v7953
        %v8740 = vunpack.c.h.b16 %v7953
        %v8741 = vunpack.c.l.b16 %v7954
        %v8742 = vunpack.c.h.b16 %v7954
        %v8743 = vunpack.c.l.b16 %v7955
        %v8744 = vunpack.c.h.b16 %v7955
        %v8745 = vunpack.c.l.b16 %v7956
        %v8746 = vunpack.c.h.b16 %v7956
        %v8747 = vunpack.c.l.b16 %v7957
        %v8748 = vunpack.c.h.b16 %v7957
        %v8749 = vunpack.c.l.b16 %v7958
        %v8750 = vunpack.c.h.b16 %v7958
        %v8751 = vunpack.c.l.b16 %v7959
        %v8752 = vunpack.c.h.b16 %v7959
        %v8753 = vunpack.c.l.b16 %v7960
        %v8754 = vunpack.c.h.b16 %v7960
        %v8755 = vunpack.c.l.b16 %v7961
        %v8756 = vunpack.c.h.b16 %v7961
        %v8757 = vunpack.c.l.b16 %v7962
        %v8758 = vunpack.c.h.b16 %v7962
        %v8759 = vunpack.c.l.b16 %v7963
        %v8760 = vunpack.c.h.b16 %v7963
        %v8761 = vunpack.c.l.b16 %v7964
        %v8762 = vunpack.c.h.b16 %v7964
        %v8763 = vunpack.c.l.b16 %v7965
        %v8764 = vunpack.c.h.b16 %v7965
        %v8765 = vunpack.c.l.b16 %v7966
        %v8766 = vunpack.c.h.b16 %v7966
        %v8767 = vunpack.c.l.b16 %v7967
        %v8768 = vunpack.c.h.b16 %v7967
        %v8769 = vunpack.c.l.b16 %v7968
        %v8770 = vunpack.c.h.b16 %v7968
        %v8771 = vunpack.c.l.b16 %v7969
        %v8772 = vunpack.c.h.b16 %v7969
        %v8773 = vunpack.c.l.b16 %v7970
        %v8774 = vunpack.c.h.b16 %v7970
        %v8775 = vunpack.c.l.b16 %v7971
        %v8776 = vunpack.c.h.b16 %v7971
        %v8777 = vunpack.c.l.b16 %v7972
        %v8778 = vunpack.c.h.b16 %v7972
        %v8779 = vunpack.c.l.b16 %v7973
        %v8780 = vunpack.c.h.b16 %v7973
        %v8781 = vunpack.c.l.b16 %v7974
        %v8782 = vunpack.c.h.b16 %v7974
        %v8783 = vunpack.c.l.b16 %v7975
        %v8784 = vunpack.c.h.b16 %v7975
        %v8785 = vunpack.c.l.b16 %v7976
        %v8786 = vunpack.c.h.b16 %v7976
        %v8787 = vunpack.c.l.b16 %v7977
        %v8788 = vunpack.c.h.b16 %v7977
        %v8789 = vunpack.c.l.b16 %v7978
        %v8790 = vunpack.c.h.b16 %v7978
        %v8791 = vunpack.c.l.b16 %v7979
        %v8792 = vunpack.c.h.b16 %v7979
        %v8793 = vunpack.c.l.b16 %v7980
        %v8794 = vunpack.c.h.b16 %v7980
        %v8795 = vunpack.c.l.b16 %v7981
        %v8796 = vunpack.c.h.b16 %v7981
        %v8797 = vunpack.c.l.b16 %v7982
        %v8798 = vunpack.c.h.b16 %v7982
        %v8799 = vunpack.c.l.b16 %v7983
        %v8800 = vunpack.c.h.b16 %v7983
        %v8801 = vunpack.c.l.b16 %v7984
        %v8802 = vunpack.c.h.b16 %v7984
        %v8803 = vunpack.c.l.b16 %v7985
        %v8804 = vunpack.c.h.b16 %v7985
        %v8805 = vunpack.c.l.b16 %v7986
        %v8806 = vunpack.c.h.b16 %v7986
        %v8807 = vunpack.c.l.b16 %v7987
        %v8808 = vunpack.c.h.b16 %v7987
        %v8809 = vunpack.c.l.b16 %v7988
        %v8810 = vunpack.c.h.b16 %v7988
        %v8811 = vunpack.c.l.b16 %v7989
        %v8812 = vunpack.c.h.b16 %v7989
        %v8813 = vunpack.c.l.b16 %v7990
        %v8814 = vunpack.c.h.b16 %v7990
        %v8815 = vunpack.c.l.b16 %v7991
        %v8816 = vunpack.c.h.b16 %v7991
        %v8817 = vunpack.c.l.b16 %v7992
        %v8818 = vunpack.c.h.b16 %v7992
        %v8819 = vunpack.c.l.b16 %v7993
        %v8820 = vunpack.c.h.b16 %v7993
        %v8821 = vunpack.c.l.b16 %v7994
        %v8822 = vunpack.c.h.b16 %v7994
        %v8823 = vunpack.c.l.b16 %v7995
        %v8824 = vunpack.c.h.b16 %v7995
        %v8825 = vunpack.c.l.b16 %v7996
        %v8826 = vunpack.c.h.b16 %v7996
        %v8827 = vunpack.c.l.b16 %v7997
        %v8828 = vunpack.c.h.b16 %v7997
        %v8829 = vunpack.c.l.b16 %v7998
        %v8830 = vunpack.c.h.b16 %v7998
        %v8831 = vunpack.c.l.b16 %v7999
        %v8832 = vunpack.c.h.b16 %v7999
        %v8833 = vunpack.c.l.b16 %v8000
        %v8834 = vunpack.c.h.b16 %v8000
        %v8835 = vunpack.c.l.b16 %v8001
        %v8836 = vunpack.c.h.b16 %v8001
        %v8837 = vunpack.c.l.b16 %v8002
        %v8838 = vunpack.c.h.b16 %v8002
        %v8839 = vunpack.c.l.b16 %v8003
        %v8840 = vunpack.c.h.b16 %v8003
        %v8841 = vunpack.c.l.b16 %v8004
        %v8842 = vunpack.c.h.b16 %v8004
        %v8843 = vunpack.c.l.b16 %v8005
        %v8844 = vunpack.c.h.b16 %v8005
        %v8845 = vunpack.c.l.b16 %v8006
        %v8846 = vunpack.c.h.b16 %v8006
        %v8847 = vunpack.c.l.b16 %v8007
        %v8848 = vunpack.c.h.b16 %v8007
        %v8849 = vunpack.c.l.b16 %v8008
        %v8850 = vunpack.c.h.b16 %v8008
        %v8851 = vunpack.c.l.b16 %v8009
        %v8852 = vunpack.c.h.b16 %v8009
        %v8853 = vunpack.c.l.b16 %v8010
        %v8854 = vunpack.c.h.b16 %v8010
        %v8855 = vunpack.c.l.b16 %v8011
        %v8856 = vunpack.c.h.b16 %v8011
        %v8857 = vunpack.c.l.b16 %v8012
        %v8858 = vunpack.c.h.b16 %v8012
        %v8859 = vunpack.c.l.b16 %v8013
        %v8860 = vunpack.c.h.b16 %v8013
        %v8861 = vunpack.c.l.b16 %v8014
        %v8862 = vunpack.c.h.b16 %v8014
        %v8863 = vunpack.c.l.b16 %v8015
        %v8864 = vunpack.c.h.b16 %v8015
        %v8865 = vunpack.c.l.b16 %v8016
        %v8866 = vunpack.c.h.b16 %v8016
        %v8867 = vunpack.c.l.b16 %v8017
        %v8868 = vunpack.c.h.b16 %v8017
        %v8869 = vunpack.c.l.b16 %v8018
        %v8870 = vunpack.c.h.b16 %v8018
        %v8871 = vunpack.c.l.b16 %v8019
        %v8872 = vunpack.c.h.b16 %v8019
        %v8873 = vunpack.c.l.b16 %v8020
        %v8874 = vunpack.c.h.b16 %v8020
        %v8875 = vunpack.c.l.b16 %v8021
        %v8876 = vunpack.c.h.b16 %v8021
        %v8877 = vunpack.c.l.b16 %v8022
        %v8878 = vunpack.c.h.b16 %v8022
        %v8879 = vunpack.c.l.b16 %v8023
        %v8880 = vunpack.c.h.b16 %v8023
        %v8881 = vunpack.c.l.b16 %v8024
        %v8882 = vunpack.c.h.b16 %v8024
        %v8883 = vunpack.c.l.b16 %v8025
        %v8884 = vunpack.c.h.b16 %v8025
        %v8885 = vunpack.c.l.b16 %v8026
        %v8886 = vunpack.c.h.b16 %v8026
        %v8887 = vunpack.c.l.b16 %v8027
        %v8888 = vunpack.c.h.b16 %v8027
        %v8889 = vunpack.c.l.b16 %v8028
        %v8890 = vunpack.c.h.b16 %v8028
        %v8891 = vunpack.c.l.b16 %v8029
        %v8892 = vunpack.c.h.b16 %v8029
        %v8893 = vunpack.c.l.b16 %v8030
        %v8894 = vunpack.c.h.b16 %v8030
        %v8895 = vunpack.c.l.b16 %v8031
        %v8896 = vunpack.c.h.b16 %v8031
        %v8897 = vunpack.c.l.b16 %v8032
        %v8898 = vunpack.c.h.b16 %v8032
        %v8899 = vunpack.c.l.b16 %v8033
        %v8900 = vunpack.c.h.b16 %v8033
        %v8901 = vunpack.c.l.b16 %v8034
        %v8902 = vunpack.c.h.b16 %v8034
        %v8903 = vunpack.c.l.b16 %v8035
        %v8904 = vunpack.c.h.b16 %v8035
        %v8905 = vunpack.c.l.b16 %v8036
        %v8906 = vunpack.c.h.b16 %v8036
        %v8907 = vunpack.c.l.b16 %v8037
        %v8908 = vunpack.c.h.b16 %v8037
        %v8909 = vunpack.c.l.b16 %v8038
        %v8910 = vunpack.c.h.b16 %v8038
        %v8911 = vunpack.c.l.b16 %v8039
        %v8912 = vunpack.c.h.b16 %v8039
        %v8913 = vunpack.c.l.b16 %v8040
        %v8914 = vunpack.c.h.b16 %v8040
        %v8915 = vunpack.c.l.b16 %v8041
        %v8916 = vunpack.c.h.b16 %v8041
        %v8917 = vunpack.c.l.b16 %v8042
        %v8918 = vunpack.c.h.b16 %v8042
        %v8919 = vunpack.c.l.b16 %v8043
        %v8920 = vunpack.c.h.b16 %v8043
        %v8921 = vunpack.c.l.b16 %v8044
        %v8922 = vunpack.c.h.b16 %v8044
        %v8923 = vunpack.c.l.b16 %v8045
        %v8924 = vunpack.c.h.b16 %v8045
        %v8925 = vunpack.c.l.b16 %v8046
        %v8926 = vunpack.c.h.b16 %v8046
        %v8927 = vunpack.c.l.b16 %v8047
        %v8928 = vunpack.c.h.b16 %v8047
        %v8929 = vunpack.c.l.b16 %v8048
        %v8930 = vunpack.c.h.b16 %v8048
        %v8931 = vunpack.c.l.b16 %v8049
        %v8932 = vunpack.c.h.b16 %v8049
        %v8933 = vunpack.c.l.b16 %v8050
        %v8934 = vunpack.c.h.b16 %v8050
        %v8935 = vunpack.c.l.b16 %v8051
        %v8936 = vunpack.c.h.b16 %v8051
        %v8937 = vunpack.c.l.b16 %v8052
        %v8938 = vunpack.c.h.b16 %v8052
        %v8939 = vunpack.c.l.b16 %v8053
        %v8940 = vunpack.c.h.b16 %v8053
        %v8941 = vunpack.c.l.b16 %v8054
        %v8942 = vunpack.c.h.b16 %v8054
        %v8943 = vunpack.c.l.b16 %v8055
        %v8944 = vunpack.c.h.b16 %v8055
        %v8945 = vunpack.c.l.b16 %v8056
        %v8946 = vunpack.c.h.b16 %v8056
        %v8947 = vunpack.c.l.b16 %v8057
        %v8948 = vunpack.c.h.b16 %v8057
        %v8949 = vunpack.c.l.b16 %v8058
        %v8950 = vunpack.c.h.b16 %v8058
        %v8951 = vunpack.c.l.b16 %v8059
        %v8952 = vunpack.c.h.b16 %v8059
        %v8953 = vunpack.c.l.b16 %v8060
        %v8954 = vunpack.c.h.b16 %v8060
        %v8955 = vunpack.c.l.b16 %v8061
        %v8956 = vunpack.c.h.b16 %v8061
        %v8957 = vunpack.c.l.b16 %v8062
        %v8958 = vunpack.c.h.b16 %v8062
        %v8959 = vpack.c.b16 %v8389, %v8383
        %v8960 = vpack.c.b16 %v8390, %v8384
        %v8961 = vpack.c.b16 %v8391, %v8385
        %v8962 = vpack.c.b16 %v8392, %v8386
        %v8963 = vpack.c.b16 %v8393, %v8387
        %v8964 = vpack.c.b16 %v8394, %v8388
        %v8965 = vpack.c.b16 %v8401, %v8395
        %v8966 = vpack.c.b16 %v8402, %v8396
        %v8967 = vpack.c.b16 %v8403, %v8397
        %v8968 = vpack.c.b16 %v8404, %v8398
        %v8969 = vpack.c.b16 %v8405, %v8399
        %v8970 = vpack.c.b16 %v8406, %v8400
        %v8971 = vpack.c.b16 %v8413, %v8407
        %v8972 = vpack.c.b16 %v8414, %v8408
        %v8973 = vpack.c.b16 %v8415, %v8409
        %v8974 = vpack.c.b16 %v8416, %v8410
        %v8975 = vpack.c.b16 %v8417, %v8411
        %v8976 = vpack.c.b16 %v8418, %v8412
        %v8977 = vpack.c.b16 %v8425, %v8419
        %v8978 = vpack.c.b16 %v8426, %v8420
        %v8979 = vpack.c.b16 %v8427, %v8421
        %v8980 = vpack.c.b16 %v8428, %v8422
        %v8981 = vpack.c.b16 %v8429, %v8423
        %v8982 = vpack.c.b16 %v8430, %v8424
        %v8983 = vpack.c.b16 %v8437, %v8431
        %v8984 = vpack.c.b16 %v8438, %v8432
        %v8985 = vpack.c.b16 %v8439, %v8433
        %v8986 = vpack.c.b16 %v8440, %v8434
        %v8987 = vpack.c.b16 %v8441, %v8435
        %v8988 = vpack.c.b16 %v8442, %v8436
        %v8989 = vpack.c.b16 %v8449, %v8443
        %v8990 = vpack.c.b16 %v8450, %v8444
        %v8991 = vpack.c.b16 %v8451, %v8445
        %v8992 = vpack.c.b16 %v8452, %v8446
        %v8993 = vpack.c.b16 %v8453, %v8447
        %v8994 = vpack.c.b16 %v8454, %v8448
        %v8995 = vpack.c.b16 %v8461, %v8455
        %v8996 = vpack.c.b16 %v8462, %v8456
        %v8997 = vpack.c.b16 %v8463, %v8457
        %v8998 = vpack.c.b16 %v8464, %v8458
        %v8999 = vpack.c.b16 %v8465, %v8459
        %v9000 = vpack.c.b16 %v8466, %v8460
        %v9001 = vpack.c.b16 %v8473, %v8467
        %v9002 = vpack.c.b16 %v8474, %v8468
        %v9003 = vpack.c.b16 %v8475, %v8469
        %v9004 = vpack.c.b16 %v8476, %v8470
        %v9005 = vpack.c.b16 %v8477, %v8471
        %v9006 = vpack.c.b16 %v8478, %v8472
        %v9007 = vpack.c.b16 %v8485, %v8479
        %v9008 = vpack.c.b16 %v8486, %v8480
        %v9009 = vpack.c.b16 %v8487, %v8481
        %v9010 = vpack.c.b16 %v8488, %v8482
        %v9011 = vpack.c.b16 %v8489, %v8483
        %v9012 = vpack.c.b16 %v8490, %v8484
        %v9013 = vpack.c.b16 %v8497, %v8491
        %v9014 = vpack.c.b16 %v8498, %v8492
        %v9015 = vpack.c.b16 %v8499, %v8493
        %v9016 = vpack.c.b16 %v8500, %v8494
        %v9017 = vpack.c.b16 %v8501, %v8495
        %v9018 = vpack.c.b16 %v8502, %v8496
        %v9019 = vpack.c.b16 %v8509, %v8503
        %v9020 = vpack.c.b16 %v8510, %v8504
        %v9021 = vpack.c.b16 %v8511, %v8505
        %v9022 = vpack.c.b16 %v8512, %v8506
        %v9023 = vpack.c.b16 %v8513, %v8507
        %v9024 = vpack.c.b16 %v8514, %v8508
        %v9025 = vpack.c.b16 %v8521, %v8515
        %v9026 = vpack.c.b16 %v8522, %v8516
        %v9027 = vpack.c.b16 %v8523, %v8517
        %v9028 = vpack.c.b16 %v8524, %v8518
        %v9029 = vpack.c.b16 %v8525, %v8519
        %v9030 = vpack.c.b16 %v8526, %v8520
        %v9031 = vpack.c.b16 %v8533, %v8527
        %v9032 = vpack.c.b16 %v8534, %v8528
        %v9033 = vpack.c.b16 %v8535, %v8529
        %v9034 = vpack.c.b16 %v8536, %v8530
        %v9035 = vpack.c.b16 %v8537, %v8531
        %v9036 = vpack.c.b16 %v8538, %v8532
        %v9037 = vpack.c.b16 %v8545, %v8539
        %v9038 = vpack.c.b16 %v8546, %v8540
        %v9039 = vpack.c.b16 %v8547, %v8541
        %v9040 = vpack.c.b16 %v8548, %v8542
        %v9041 = vpack.c.b16 %v8549, %v8543
        %v9042 = vpack.c.b16 %v8550, %v8544
        %v9043 = vpack.c.b16 %v8557, %v8551
        %v9044 = vpack.c.b16 %v8558, %v8552
        %v9045 = vpack.c.b16 %v8559, %v8553
        %v9046 = vpack.c.b16 %v8560, %v8554
        %v9047 = vpack.c.b16 %v8561, %v8555
        %v9048 = vpack.c.b16 %v8562, %v8556
        %v9049 = vpack.c.b16 %v8569, %v8563
        %v9050 = vpack.c.b16 %v8570, %v8564
        %v9051 = vpack.c.b16 %v8571, %v8565
        %v9052 = vpack.c.b16 %v8572, %v8566
        %v9053 = vpack.c.b16 %v8573, %v8567
        %v9054 = vpack.c.b16 %v8574, %v8568
        %v9055 = vpack.c.b16 %v8581, %v8575
        %v9056 = vpack.c.b16 %v8582, %v8576
        %v9057 = vpack.c.b16 %v8583, %v8577
        %v9058 = vpack.c.b16 %v8584, %v8578
        %v9059 = vpack.c.b16 %v8585, %v8579
        %v9060 = vpack.c.b16 %v8586, %v8580
        %v9061 = vpack.c.b16 %v8593, %v8587
        %v9062 = vpack.c.b16 %v8594, %v8588
        %v9063 = vpack.c.b16 %v8595, %v8589
        %v9064 = vpack.c.b16 %v8596, %v8590
        %v9065 = vpack.c.b16 %v8597, %v8591
        %v9066 = vpack.c.b16 %v8598, %v8592
        %v9067 = vpack.c.b16 %v8605, %v8599
        %v9068 = vpack.c.b16 %v8606, %v8600
        %v9069 = vpack.c.b16 %v8607, %v8601
        %v9070 = vpack.c.b16 %v8608, %v8602
        %v9071 = vpack.c.b16 %v8609, %v8603
        %v9072 = vpack.c.b16 %v8610, %v8604
        %v9073 = vpack.c.b16 %v8617, %v8611
        %v9074 = vpack.c.b16 %v8618, %v8612
        %v9075 = vpack.c.b16 %v8619, %v8613
        %v9076 = vpack.c.b16 %v8620, %v8614
        %v9077 = vpack.c.b16 %v8621, %v8615
        %v9078 = vpack.c.b16 %v8622, %v8616
        %v9079 = vpack.c.b16 %v8629, %v8623
        %v9080 = vpack.c.b16 %v8630, %v8624
        %v9081 = vpack.c.b16 %v8631, %v8625
        %v9082 = vpack.c.b16 %v8632, %v8626
        %v9083 = vpack.c.b16 %v8633, %v8627
        %v9084 = vpack.c.b16 %v8634, %v8628
        %v9085 = vpack.c.b16 %v8641, %v8635
        %v9086 = vpack.c.b16 %v8642, %v8636
        %v9087 = vpack.c.b16 %v8643, %v8637
        %v9088 = vpack.c.b16 %v8644, %v8638
        %v9089 = vpack.c.b16 %v8645, %v8639
        %v9090 = vpack.c.b16 %v8646, %v8640
        %v9091 = vpack.c.b16 %v8653, %v8647
        %v9092 = vpack.c.b16 %v8654, %v8648
        %v9093 = vpack.c.b16 %v8655, %v8649
        %v9094 = vpack.c.b16 %v8656, %v8650
        %v9095 = vpack.c.b16 %v8657, %v8651
        %v9096 = vpack.c.b16 %v8658, %v8652
        %v9097 = vpack.c.b16 %v8665, %v8659
        %v9098 = vpack.c.b16 %v8666, %v8660
        %v9099 = vpack.c.b16 %v8667, %v8661
        %v9100 = vpack.c.b16 %v8668, %v8662
        %v9101 = vpack.c.b16 %v8669, %v8663
        %v9102 = vpack.c.b16 %v8670, %v8664
        %v9103 = vpack.c.b16 %v8677, %v8671
        %v9104 = vpack.c.b16 %v8678, %v8672
        %v9105 = vpack.c.b16 %v8679, %v8673
        %v9106 = vpack.c.b16 %v8680, %v8674
        %v9107 = vpack.c.b16 %v8681, %v8675
        %v9108 = vpack.c.b16 %v8682, %v8676
        %v9109 = vpack.c.b16 %v8689, %v8683
        %v9110 = vpack.c.b16 %v8690, %v8684
        %v9111 = vpack.c.b16 %v8691, %v8685
        %v9112 = vpack.c.b16 %v8692, %v8686
        %v9113 = vpack.c.b16 %v8693, %v8687
        %v9114 = vpack.c.b16 %v8694, %v8688
        %v9115 = vpack.c.b16 %v8701, %v8695
        %v9116 = vpack.c.b16 %v8702, %v8696
        %v9117 = vpack.c.b16 %v8703, %v8697
        %v9118 = vpack.c.b16 %v8704, %v8698
        %v9119 = vpack.c.b16 %v8705, %v8699
        %v9120 = vpack.c.b16 %v8706, %v8700
        %v9121 = vpack.c.b16 %v8713, %v8707
        %v9122 = vpack.c.b16 %v8714, %v8708
        %v9123 = vpack.c.b16 %v8715, %v8709
        %v9124 = vpack.c.b16 %v8716, %v8710
        %v9125 = vpack.c.b16 %v8717, %v8711
        %v9126 = vpack.c.b16 %v8718, %v8712
        %v9127 = vpack.c.b16 %v8725, %v8719
        %v9128 = vpack.c.b16 %v8726, %v8720
        %v9129 = vpack.c.b16 %v8727, %v8721
        %v9130 = vpack.c.b16 %v8728, %v8722
        %v9131 = vpack.c.b16 %v8729, %v8723
        %v9132 = vpack.c.b16 %v8730, %v8724
        %v9133 = vpack.c.b16 %v8737, %v8731
        %v9134 = vpack.c.b16 %v8738, %v8732
        %v9135 = vpack.c.b16 %v8739, %v8733
        %v9136 = vpack.c.b16 %v8740, %v8734
        %v9137 = vpack.c.b16 %v8741, %v8735
        %v9138 = vpack.c.b16 %v8742, %v8736
        %v9139 = vpack.c.b16 %v8749, %v8743
        %v9140 = vpack.c.b16 %v8750, %v8744
        %v9141 = vpack.c.b16 %v8751, %v8745
        %v9142 = vpack.c.b16 %v8752, %v8746
        %v9143 = vpack.c.b16 %v8753, %v8747
        %v9144 = vpack.c.b16 %v8754, %v8748
        %v9145 = vpack.c.b16 %v8761, %v8755
        %v9146 = vpack.c.b16 %v8762, %v8756
        %v9147 = vpack.c.b16 %v8763, %v8757
        %v9148 = vpack.c.b16 %v8764, %v8758
        %v9149 = vpack.c.b16 %v8765, %v8759
        %v9150 = vpack.c.b16 %v8766, %v8760
        %v9151 = vpack.c.b16 %v8773, %v8767
        %v9152 = vpack.c.b16 %v8774, %v8768
        %v9153 = vpack.c.b16 %v8775, %v8769
        %v9154 = vpack.c.b16 %v8776, %v8770
        %v9155 = vpack.c.b16 %v8777, %v8771
        %v9156 = vpack.c.b16 %v8778, %v8772
        %v9157 = vpack.c.b16 %v8785, %v8779
        %v9158 = vpack.c.b16 %v8786, %v8780
        %v9159 = vpack.c.b16 %v8787, %v8781
        %v9160 = vpack.c.b16 %v8788, %v8782
        %v9161 = vpack.c.b16 %v8789, %v8783
        %v9162 = vpack.c.b16 %v8790, %v8784
        %v9163 = vpack.c.b16 %v8797, %v8791
        %v9164 = vpack.c.b16 %v8798, %v8792
        %v9165 = vpack.c.b16 %v8799, %v8793
        %v9166 = vpack.c.b16 %v8800, %v8794
        %v9167 = vpack.c.b16 %v8801, %v8795
        %v9168 = vpack.c.b16 %v8802, %v8796
        %v9169 = vpack.c.b16 %v8809, %v8803
        %v9170 = vpack.c.b16 %v8810, %v8804
        %v9171 = vpack.c.b16 %v8811, %v8805
        %v9172 = vpack.c.b16 %v8812, %v8806
        %v9173 = vpack.c.b16 %v8813, %v8807
        %v9174 = vpack.c.b16 %v8814, %v8808
        %v9175 = vpack.c.b16 %v8821, %v8815
        %v9176 = vpack.c.b16 %v8822, %v8816
        %v9177 = vpack.c.b16 %v8823, %v8817
        %v9178 = vpack.c.b16 %v8824, %v8818
        %v9179 = vpack.c.b16 %v8825, %v8819
        %v9180 = vpack.c.b16 %v8826, %v8820
        %v9181 = vpack.c.b16 %v8833, %v8827
        %v9182 = vpack.c.b16 %v8834, %v8828
        %v9183 = vpack.c.b16 %v8835, %v8829
        %v9184 = vpack.c.b16 %v8836, %v8830
        %v9185 = vpack.c.b16 %v8837, %v8831
        %v9186 = vpack.c.b16 %v8838, %v8832
        %v9187 = vpack.c.b16 %v8845, %v8839
        %v9188 = vpack.c.b16 %v8846, %v8840
        %v9189 = vpack.c.b16 %v8847, %v8841
        %v9190 = vpack.c.b16 %v8848, %v8842
        %v9191 = vpack.c.b16 %v8849, %v8843
        %v9192 = vpack.c.b16 %v8850, %v8844
        %v9193 = vpack.c.b16 %v8857, %v8851
        %v9194 = vpack.c.b16 %v8858, %v8852
        %v9195 = vpack.c.b16 %v8859, %v8853
        %v9196 = vpack.c.b16 %v8860, %v8854
        %v9197 = vpack.c.b16 %v8861, %v8855
        %v9198 = vpack.c.b16 %v8862, %v8856
        %v9199 = vpack.c.b16 %v8869, %v8863
        %v9200 = vpack.c.b16 %v8870, %v8864
        %v9201 = vpack.c.b16 %v8871, %v8865
        %v9202 = vpack.c.b16 %v8872, %v8866
        %v9203 = vpack.c.b16 %v8873, %v8867
        %v9204 = vpack.c.b16 %v8874, %v8868
        %v9205 = vpack.c.b16 %v8881, %v8875
        %v9206 = vpack.c.b16 %v8882, %v8876
        %v9207 = vpack.c.b16 %v8883, %v8877
        %v9208 = vpack.c.b16 %v8884, %v8878
        %v9209 = vpack.c.b16 %v8885, %v8879
        %v9210 = vpack.c.b16 %v8886, %v8880
        %v9211 = vpack.c.b16 %v8893, %v8887
        %v9212 = vpack.c.b16 %v8894, %v8888
        %v9213 = vpack.c.b16 %v8895, %v8889
        %v9214 = vpack.c.b16 %v8896, %v8890
        %v9215 = vpack.c.b16 %v8897, %v8891
        %v9216 = vpack.c.b16 %v8898, %v8892
        %v9217 = vpack.c.b16 %v8905, %v8899
        %v9218 = vpack.c.b16 %v8906, %v8900
        %v9219 = vpack.c.b16 %v8907, %v8901
        %v9220 = vpack.c.b16 %v8908, %v8902
        %v9221 = vpack.c.b16 %v8909, %v8903
        %v9222 = vpack.c.b16 %v8910, %v8904
        %v9223 = vpack.c.b16 %v8917, %v8911
        %v9224 = vpack.c.b16 %v8918, %v8912
        %v9225 = vpack.c.b16 %v8919, %v8913
        %v9226 = vpack.c.b16 %v8920, %v8914
        %v9227 = vpack.c.b16 %v8921, %v8915
        %v9228 = vpack.c.b16 %v8922, %v8916
        %v9229 = vpack.c.b16 %v8929, %v8923
        %v9230 = vpack.c.b16 %v8930, %v8924
        %v9231 = vpack.c.b16 %v8931, %v8925
        %v9232 = vpack.c.b16 %v8932, %v8926
        %v9233 = vpack.c.b16 %v8933, %v8927
        %v9234 = vpack.c.b16 %v8934, %v8928
        %v9235 = vpack.c.b16 %v8941, %v8935
        %v9236 = vpack.c.b16 %v8942, %v8936
        %v9237 = vpack.c.b16 %v8943, %v8937
        %v9238 = vpack.c.b16 %v8944, %v8938
        %v9239 = vpack.c.b16 %v8945, %v8939
        %v9240 = vpack.c.b16 %v8946, %v8940
        %v9241 = vpack.c.b16 %v8953, %v8947
        %v9242 = vpack.c.b16 %v8954, %v8948
        %v9243 = vpack.c.b16 %v8955, %v8949
        %v9244 = vpack.c.b16 %v8956, %v8950
        %v9245 = vpack.c.b16 %v8957, %v8951
        %v9246 = vpack.c.b16 %v8958, %v8952
        %9535 = vmatprep.subr.bf16.mxu0 %v8960
        %9536 = vmatpush1.bf16.msra.mxu0 %v8959
        %9537 = vmatprep.subr.bf16.mxu0 %v8966
        %9538 = vmatpush1.bf16.msra.mxu0 %v8965
        %9539 = vmatprep.subr.bf16.mxu0 %v8972
        %9540 = vmatpush1.bf16.msra.mxu0 %v8971
        %9541 = vmatprep.subr.bf16.mxu0 %v8978
        %9542 = vmatpush1.bf16.msra.mxu0 %v8977
        %9543 = vmatprep.subr.bf16.mxu0 %v8984
        %9544 = vmatpush1.bf16.msra.mxu0 %v8983
        %9545 = vmatprep.subr.bf16.mxu0 %v8990
        %9546 = vmatpush1.bf16.msra.mxu0 %v8989
        %9547 = vmatprep.subr.bf16.mxu0 %v8996
        %9548 = vmatpush1.bf16.msra.mxu0 %v8995
        %9549 = vmatprep.subr.bf16.mxu0 %v9002
        %9550 = vmatpush1.bf16.msra.mxu0 %v9001
        %9551 = vmatprep.subr.bf16.mxu0 %v9008
        %9552 = vmatpush1.bf16.msra.mxu0 %v9007
        %9553 = vmatprep.subr.bf16.mxu0 %v9014
        %9554 = vmatpush1.bf16.msra.mxu0 %v9013
        %9555 = vmatprep.subr.bf16.mxu0 %v9020
        %9556 = vmatpush1.bf16.msra.mxu0 %v9019
        %9557 = vmatprep.subr.bf16.mxu0 %v9026
        %9558 = vmatpush1.bf16.msra.mxu0 %v9025
        %9559 = vmatprep.subr.bf16.mxu0 %v9032
        %9560 = vmatpush1.bf16.msra.mxu0 %v9031
        %9561 = vmatprep.subr.bf16.mxu0 %v9038
        %9562 = vmatpush1.bf16.msra.mxu0 %v9037
        %9563 = vmatprep.subr.bf16.mxu0 %v9044
        %9564 = vmatpush1.bf16.msra.mxu0 %v9043
        %9565 = vmatprep.subr.bf16.mxu0 %v9050
        %9566 = vmatpush1.bf16.msra.mxu0 %v9049
        %9567 = vmatprep.mubr.bf16.mxu0 %v7728
        %9568 = vmatmul.mubr.bf16.gmra.mrb[0].mxu0 %v7727
        %v9569 = vpop.f32.mrb[0].mxu0
        %v9570 = vadd.f32 %v8068, %v9569
        %v9571 = vpop.f32.mrb[0].mxu0
        %v9572 = vadd.f32 %v8072, %v9571
        %v9573 = vpop.f32.mrb[0].mxu0
        %v9574 = vadd.f32 %v8068, %v9573
        %v9575 = vpop.f32.mrb[0].mxu0
        %v9576 = vadd.f32 %v8072, %v9575
        %9577 = vmatprep.mubr.bf16.mxu0 %v7734
        %9578 = vmatmul.mubr.bf16.gmra.mrb[0].mxu0 %v7733
        %v9579 = vpop.f32.mrb[0].mxu0
        %v9580 = vadd.f32 %v8068, %v9579
        %v9581 = vpop.f32.mrb[0].mxu0
        %v9582 = vadd.f32 %v8072, %v9581
        %v9583 = vpop.f32.mrb[0].mxu0
        %v9584 = vadd.f32 %v8068, %v9583
        %v9585 = vpop.f32.mrb[0].mxu0
        %v9586 = vadd.f32 %v8072, %v9585
        %9587 = vmatprep.mubr.bf16.mxu0 %v7740
        %9588 = vmatmul.mubr.bf16.gmra.mrb[0].mxu0 %v7739
        %v9589 = vpop.f32.mrb[0].mxu0
        %v9590 = vadd.f32 %v8068, %v9589
        %v9591 = vpop.f32.mrb[0].mxu0
        %v9592 = vadd.f32 %v8072, %v9591
        %v9593 = vpop.f32.mrb[0].mxu0
        %v9594 = vadd.f32 %v8068, %v9593
        %v9595 = vpop.f32.mrb[0].mxu0
        %v9596 = vadd.f32 %v8072, %v9595
        %9597 = vmatprep.mubr.bf16.mxu0 %v7746
        %9598 = vmatmul.mubr.bf16.gmra.mrb[0].mxu0 %v7745
        %v9599 = vpop.f32.mrb[0].mxu0
        %v9600 = vadd.f32 %v8068, %v9599
        %v9601 = vpop.f32.mrb[0].mxu0
        %v9602 = vadd.f32 %v8072, %v9601
        %v9603 = vpop.f32.mrb[0].mxu0
        %v9604 = vadd.f32 %v8068, %v9603
        %v9605 = vpop.f32.mrb[0].mxu0
        %v9606 = vadd.f32 %v8072, %v9605
        %9607 = vmatprep.mubr.bf16.mxu0 %v7752
        %9608 = vmatmul.mubr.bf16.gmra.mrb[0].mxu0 %v7751
        %v9609 = vpop.f32.mrb[0].mxu0
        %v9610 = vadd.f32 %v8068, %v9609
        %v9611 = vpop.f32.mrb[0].mxu0
        %v9612 = vadd.f32 %v8072, %v9611
        %v9613 = vpop.f32.mrb[0].mxu0
        %v9614 = vadd.f32 %v8068, %v9613
        %v9615 = vpop.f32.mrb[0].mxu0
        %v9616 = vadd.f32 %v8072, %v9615
        %9617 = vmatprep.mubr.bf16.mxu0 %v7758
        %9618 = vmatmul.mubr.bf16.gmra.mrb[0].mxu0 %v7757
        %v9619 = vpop.f32.mrb[0].mxu0
        %v9620 = vadd.f32 %v8068, %v9619
        %v9621 = vpop.f32.mrb[0].mxu0
        %v9622 = vadd.f32 %v8072, %v9621
        %v9623 = vpop.f32.mrb[0].mxu0
        %v9624 = vadd.f32 %v8068, %v9623
        %v9625 = vpop.f32.mrb[0].mxu0
        %v9626 = vadd.f32 %v8072, %v9625
        %9627 = vmatprep.mubr.bf16.mxu0 %v7764
        %9628 = vmatmul.mubr.bf16.gmra.mrb[0].mxu0 %v7763
        %v9629 = vpop.f32.mrb[0].mxu0
        %v9630 = vadd.f32 %v8068, %v9629
        %v9631 = vpop.f32.mrb[0].mxu0
        %v9632 = vadd.f32 %v8072, %v9631
        %v9633 = vpop.f32.mrb[0].mxu0
        %v9634 = vadd.f32 %v8068, %v9633
        %v9635 = vpop.f32.mrb[0].mxu0
        %v9636 = vadd.f32 %v8072, %v9635
        %9637 = vmatprep.mubr.bf16.mxu0 %v7770
        %9638 = vmatmul.mubr.bf16.gmra.mrb[0].mxu0 %v7769
        %v9639 = vpop.f32.mrb[0].mxu0
        %v9640 = vadd.f32 %v8068, %v9639
        %v9641 = vpop.f32.mrb[0].mxu0
        %v9642 = vadd.f32 %v8072, %v9641
        %v9643 = vpop.f32.mrb[0].mxu0
        %v9644 = vadd.f32 %v8068, %v9643
        %v9645 = vpop.f32.mrb[0].mxu0
        %v9646 = vadd.f32 %v8072, %v9645
        %9647 = vdwg.mxu0
        %9648 = vmatprep.subr.bf16.mxu0 %v9056
        %9649 = vmatpush1.bf16.msra.mxu0 %v9055
        %9650 = vmatprep.subr.bf16.mxu0 %v9062
        %9651 = vmatpush1.bf16.msra.mxu0 %v9061
        %9652 = vmatprep.subr.bf16.mxu0 %v9068
        %9653 = vmatpush1.bf16.msra.mxu0 %v9067
        %9654 = vmatprep.subr.bf16.mxu0 %v9074
        %9655 = vmatpush1.bf16.msra.mxu0 %v9073
        %9656 = vmatprep.subr.bf16.mxu0 %v9080
        %9657 = vmatpush1.bf16.msra.mxu0 %v9079
        %9658 = vmatprep.subr.bf16.mxu0 %v9086
        %9659 = vmatpush1.bf16.msra.mxu0 %v9085
        %9660 = vmatprep.subr.bf16.mxu0 %v9092
        %9661 = vmatpush1.bf16.msra.mxu0 %v9091
        %9662 = vmatprep.subr.bf16.mxu0 %v9098
        %9663 = vmatpush1.bf16.msra.mxu0 %v9097
        %9664 = vmatprep.subr.bf16.mxu0 %v9104
        %9665 = vmatpush1.bf16.msra.mxu0 %v9103
        %9666 = vmatprep.subr.bf16.mxu0 %v9110
        %9667 = vmatpush1.bf16.msra.mxu0 %v9109
        %9668 = vmatprep.subr.bf16.mxu0 %v9116
        %9669 = vmatpush1.bf16.msra.mxu0 %v9115
        %9670 = vmatprep.subr.bf16.mxu0 %v9122
        %9671 = vmatpush1.bf16.msra.mxu0 %v9121
        %9672 = vmatprep.subr.bf16.mxu0 %v9128
        %9673 = vmatpush1.bf16.msra.mxu0 %v9127
        %9674 = vmatprep.subr.bf16.mxu0 %v9134
        %9675 = vmatpush1.bf16.msra.mxu0 %v9133
        %9676 = vmatprep.subr.bf16.mxu0 %v9140
        %9677 = vmatpush1.bf16.msra.mxu0 %v9139
        %9678 = vmatprep.subr.bf16.mxu0 %v9146
        %9679 = vmatpush1.bf16.msra.mxu0 %v9145
        %9680 = vmatprep.mubr.bf16.mxu0 %v7730
        %9681 = vmatmul.mubr.bf16.gmra.mrb[0].mxu0 %v7729
        %v9682 = vpop.f32.mrb[0].mxu0
        %v9683 = vadd.f32 %v9570, %v9682
        %v9684 = vpop.f32.mrb[0].mxu0
        %v9685 = vadd.f32 %v9572, %v9684
        %v9686 = vpop.f32.mrb[0].mxu0
        %v9687 = vadd.f32 %v9574, %v9686
        %v9688 = vpop.f32.mrb[0].mxu0
        %v9689 = vadd.f32 %v9576, %v9688
        %9690 = vmatprep.mubr.bf16.mxu0 %v7736
        %9691 = vmatmul.mubr.bf16.gmra.mrb[0].mxu0 %v7735
        %v9692 = vpop.f32.mrb[0].mxu0
        %v9693 = vadd.f32 %v9580, %v9692
        %v9694 = vpop.f32.mrb[0].mxu0
        %v9695 = vadd.f32 %v9582, %v9694
        %v9696 = vpop.f32.mrb[0].mxu0
        %v9697 = vadd.f32 %v9584, %v9696
        %v9698 = vpop.f32.mrb[0].mxu0
        %v9699 = vadd.f32 %v9586, %v9698
        %9700 = vmatprep.mubr.bf16.mxu0 %v7742
        %9701 = vmatmul.mubr.bf16.gmra.mrb[0].mxu0 %v7741
        %v9702 = vpop.f32.mrb[0].mxu0
        %v9703 = vadd.f32 %v9590, %v9702
        %v9704 = vpop.f32.mrb[0].mxu0
        %v9705 = vadd.f32 %v9592, %v9704
        %v9706 = vpop.f32.mrb[0].mxu0
        %v9707 = vadd.f32 %v9594, %v9706
        %v9708 = vpop.f32.mrb[0].mxu0
        %v9709 = vadd.f32 %v9596, %v9708
        %9710 = vmatprep.mubr.bf16.mxu0 %v7748
        %9711 = vmatmul.mubr.bf16.gmra.mrb[0].mxu0 %v7747
        %v9712 = vpop.f32.mrb[0].mxu0
        %v9713 = vadd.f32 %v9600, %v9712
        %v9714 = vpop.f32.mrb[0].mxu0
        %v9715 = vadd.f32 %v9602, %v9714
        %v9716 = vpop.f32.mrb[0].mxu0
        %v9717 = vadd.f32 %v9604, %v9716
        %v9718 = vpop.f32.mrb[0].mxu0
        %v9719 = vadd.f32 %v9606, %v9718
        %9720 = vmatprep.mubr.bf16.mxu0 %v7754
        %9721 = vmatmul.mubr.bf16.gmra.mrb[0].mxu0 %v7753
        %v9722 = vpop.f32.mrb[0].mxu0
        %v9723 = vadd.f32 %v9610, %v9722
        %v9724 = vpop.f32.mrb[0].mxu0
        %v9725 = vadd.f32 %v9612, %v9724
        %v9726 = vpop.f32.mrb[0].mxu0
        %v9727 = vadd.f32 %v9614, %v9726
        %v9728 = vpop.f32.mrb[0].mxu0
        %v9729 = vadd.f32 %v9616, %v9728
        %9730 = vmatprep.mubr.bf16.mxu0 %v7760
        %9731 = vmatmul.mubr.bf16.gmra.mrb[0].mxu0 %v7759
        %v9732 = vpop.f32.mrb[0].mxu0
        %v9733 = vadd.f32 %v9620, %v9732
        %v9734 = vpop.f32.mrb[0].mxu0
        %v9735 = vadd.f32 %v9622, %v9734
        %v9736 = vpop.f32.mrb[0].mxu0
        %v9737 = vadd.f32 %v9624, %v9736
        %v9738 = vpop.f32.mrb[0].mxu0
        %v9739 = vadd.f32 %v9626, %v9738
        %9740 = vmatprep.mubr.bf16.mxu0 %v7766
        %9741 = vmatmul.mubr.bf16.gmra.mrb[0].mxu0 %v7765
        %v9742 = vpop.f32.mrb[0].mxu0
        %v9743 = vadd.f32 %v9630, %v9742
        %v9744 = vpop.f32.mrb[0].mxu0
        %v9745 = vadd.f32 %v9632, %v9744
        %v9746 = vpop.f32.mrb[0].mxu0
        %v9747 = vadd.f32 %v9634, %v9746
        %v9748 = vpop.f32.mrb[0].mxu0
        %v9749 = vadd.f32 %v9636, %v9748
        %9750 = vmatprep.mubr.bf16.mxu0 %v7772
        %9751 = vmatmul.mubr.bf16.gmra.mrb[0].mxu0 %v7771
        %v9752 = vpop.f32.mrb[0].mxu0
        %v9753 = vadd.f32 %v9640, %v9752
        %v9754 = vpop.f32.mrb[0].mxu0
        %v9755 = vadd.f32 %v9642, %v9754
        %v9756 = vpop.f32.mrb[0].mxu0
        %v9757 = vadd.f32 %v9644, %v9756
        %v9758 = vpop.f32.mrb[0].mxu0
        %v9759 = vadd.f32 %v9646, %v9758
        %9760 = vdwg.mxu0
        %9761 = vmatprep.subr.bf16.mxu0 %v9152
        %9762 = vmatpush1.bf16.msra.mxu0 %v9151
        %9763 = vmatprep.subr.bf16.mxu0 %v9158
        %9764 = vmatpush1.bf16.msra.mxu0 %v9157
        %9765 = vmatprep.subr.bf16.mxu0 %v9164
        %9766 = vmatpush1.bf16.msra.mxu0 %v9163
        %9767 = vmatprep.subr.bf16.mxu0 %v9170
        %9768 = vmatpush1.bf16.msra.mxu0 %v9169
        %9769 = vmatprep.subr.bf16.mxu0 %v9176
        %9770 = vmatpush1.bf16.msra.mxu0 %v9175
        %9771 = vmatprep.subr.bf16.mxu0 %v9182
        %9772 = vmatpush1.bf16.msra.mxu0 %v9181
        %9773 = vmatprep.subr.bf16.mxu0 %v9188
        %9774 = vmatpush1.bf16.msra.mxu0 %v9187
        %9775 = vmatprep.subr.bf16.mxu0 %v9194
        %9776 = vmatpush1.bf16.msra.mxu0 %v9193
        %9777 = vmatprep.subr.bf16.mxu0 %v9200
        %9778 = vmatpush1.bf16.msra.mxu0 %v9199
        %9779 = vmatprep.subr.bf16.mxu0 %v9206
        %9780 = vmatpush1.bf16.msra.mxu0 %v9205
        %9781 = vmatprep.subr.bf16.mxu0 %v9212
        %9782 = vmatpush1.bf16.msra.mxu0 %v9211
        %9783 = vmatprep.subr.bf16.mxu0 %v9218
        %9784 = vmatpush1.bf16.msra.mxu0 %v9217
        %9785 = vmatprep.subr.bf16.mxu0 %v9224
        %9786 = vmatpush1.bf16.msra.mxu0 %v9223
        %9787 = vmatprep.subr.bf16.mxu0 %v9230
        %9788 = vmatpush1.bf16.msra.mxu0 %v9229
        %9789 = vmatprep.subr.bf16.mxu0 %v9236
        %9790 = vmatpush1.bf16.msra.mxu0 %v9235
        %9791 = vmatprep.subr.bf16.mxu0 %v9242
        %9792 = vmatpush1.bf16.msra.mxu0 %v9241
        %9793 = vmatprep.mubr.bf16.mxu0 %v7732
        %9794 = vmatmul.mubr.bf16.gmra.mrb[0].mxu0 %v7731
        %v9795 = vpop.f32.mrb[0].mxu0
        %v9796 = vadd.f32 %v9683, %v9795
        %v9797 = vpop.f32.mrb[0].mxu0
        %v9798 = vadd.f32 %v9685, %v9797
        %v9799 = vpop.f32.mrb[0].mxu0
        %v9800 = vadd.f32 %v9687, %v9799
        %v9801 = vpop.f32.mrb[0].mxu0
        %v9802 = vadd.f32 %v9689, %v9801
        %9803 = vmatprep.mubr.bf16.mxu0 %v7738
        %9804 = vmatmul.mubr.bf16.gmra.mrb[0].mxu0 %v7737
        %v9805 = vpop.f32.mrb[0].mxu0
        %v9806 = vadd.f32 %v9693, %v9805
        %v9807 = vpop.f32.mrb[0].mxu0
        %v9808 = vadd.f32 %v9695, %v9807
        %v9809 = vpop.f32.mrb[0].mxu0
        %v9810 = vadd.f32 %v9697, %v9809
        %v9811 = vpop.f32.mrb[0].mxu0
        %v9812 = vadd.f32 %v9699, %v9811
        %9813 = vmatprep.mubr.bf16.mxu0 %v7744
        %9814 = vmatmul.mubr.bf16.gmra.mrb[0].mxu0 %v7743
        %v9815 = vpop.f32.mrb[0].mxu0
        %v9816 = vadd.f32 %v9703, %v9815
        %v9817 = vpop.f32.mrb[0].mxu0
        %v9818 = vadd.f32 %v9705, %v9817
        %v9819 = vpop.f32.mrb[0].mxu0
        %v9820 = vadd.f32 %v9707, %v9819
        %v9821 = vpop.f32.mrb[0].mxu0
        %v9822 = vadd.f32 %v9709, %v9821
        %9823 = vmatprep.mubr.bf16.mxu0 %v7750
        %9824 = vmatmul.mubr.bf16.gmra.mrb[0].mxu0 %v7749
        %v9825 = vpop.f32.mrb[0].mxu0
        %v9826 = vadd.f32 %v9713, %v9825
        %v9827 = vpop.f32.mrb[0].mxu0
        %v9828 = vadd.f32 %v9715, %v9827
        %v9829 = vpop.f32.mrb[0].mxu0
        %v9830 = vadd.f32 %v9717, %v9829
        %v9831 = vpop.f32.mrb[0].mxu0
        %v9832 = vadd.f32 %v9719, %v9831
        %9833 = vmatprep.mubr.bf16.mxu0 %v7756
        %9834 = vmatmul.mubr.bf16.gmra.mrb[0].mxu0 %v7755
        %v9835 = vpop.f32.mrb[0].mxu0
        %v9836 = vadd.f32 %v9723, %v9835
        %v9837 = vpop.f32.mrb[0].mxu0
        %v9838 = vadd.f32 %v9725, %v9837
        %v9839 = vpop.f32.mrb[0].mxu0
        %v9840 = vadd.f32 %v9727, %v9839
        %v9841 = vpop.f32.mrb[0].mxu0
        %v9842 = vadd.f32 %v9729, %v9841
        %9843 = vmatprep.mubr.bf16.mxu0 %v7762
        %9844 = vmatmul.mubr.bf16.gmra.mrb[0].mxu0 %v7761
        %v9845 = vpop.f32.mrb[0].mxu0
        %v9846 = vadd.f32 %v9733, %v9845
        %v9847 = vpop.f32.mrb[0].mxu0
        %v9848 = vadd.f32 %v9735, %v9847
        %v9849 = vpop.f32.mrb[0].mxu0
        %v9850 = vadd.f32 %v9737, %v9849
        %v9851 = vpop.f32.mrb[0].mxu0
        %v9852 = vadd.f32 %v9739, %v9851
        %9853 = vmatprep.mubr.bf16.mxu0 %v7768
        %9854 = vmatmul.mubr.bf16.gmra.mrb[0].mxu0 %v7767
        %v9855 = vpop.f32.mrb[0].mxu0
        %v9856 = vadd.f32 %v9743, %v9855
        %v9857 = vpop.f32.mrb[0].mxu0
        %v9858 = vadd.f32 %v9745, %v9857
        %v9859 = vpop.f32.mrb[0].mxu0
        %v9860 = vadd.f32 %v9747, %v9859
        %v9861 = vpop.f32.mrb[0].mxu0
        %v9862 = vadd.f32 %v9749, %v9861
        %9863 = vmatprep.mubr.bf16.mxu0 %v7774
        %9864 = vmatmul.mubr.bf16.gmra.mrb[0].mxu0 %v7773
        %v9865 = vpop.f32.mrb[0].mxu0
        %v9866 = vadd.f32 %v9753, %v9865
        %v9867 = vpop.f32.mrb[0].mxu0
        %v9868 = vadd.f32 %v9755, %v9867
        %v9869 = vpop.f32.mrb[0].mxu0
        %v9870 = vadd.f32 %v9757, %v9869
        %v9871 = vpop.f32.mrb[0].mxu0
        %v9872 = vadd.f32 %v9759, %v9871
        %9873 = vdwg.mxu0
        %9874 = vmatprep.subr.bf16.mxu0 %v8962
        %9875 = vmatpush1.bf16.msra.mxu0 %v8961
        %9876 = vmatprep.subr.bf16.mxu0 %v8968
        %9877 = vmatpush1.bf16.msra.mxu0 %v8967
        %9878 = vmatprep.subr.bf16.mxu0 %v8974
        %9879 = vmatpush1.bf16.msra.mxu0 %v8973
        %9880 = vmatprep.subr.bf16.mxu0 %v8980
        %9881 = vmatpush1.bf16.msra.mxu0 %v8979
        %9882 = vmatprep.subr.bf16.mxu0 %v8986
        %9883 = vmatpush1.bf16.msra.mxu0 %v8985
        %9884 = vmatprep.subr.bf16.mxu0 %v8992
        %9885 = vmatpush1.bf16.msra.mxu0 %v8991
        %9886 = vmatprep.subr.bf16.mxu0 %v8998
        %9887 = vmatpush1.bf16.msra.mxu0 %v8997
        %9888 = vmatprep.subr.bf16.mxu0 %v9004
        %9889 = vmatpush1.bf16.msra.mxu0 %v9003
        %9890 = vmatprep.subr.bf16.mxu0 %v9010
        %9891 = vmatpush1.bf16.msra.mxu0 %v9009
        %9892 = vmatprep.subr.bf16.mxu0 %v9016
        %9893 = vmatpush1.bf16.msra.mxu0 %v9015
        %9894 = vmatprep.subr.bf16.mxu0 %v9022
        %9895 = vmatpush1.bf16.msra.mxu0 %v9021
        %9896 = vmatprep.subr.bf16.mxu0 %v9028
        %9897 = vmatpush1.bf16.msra.mxu0 %v9027
        %9898 = vmatprep.subr.bf16.mxu0 %v9034
        %9899 = vmatpush1.bf16.msra.mxu0 %v9033
        %9900 = vmatprep.subr.bf16.mxu0 %v9040
        %9901 = vmatpush1.bf16.msra.mxu0 %v9039
        %9902 = vmatprep.subr.bf16.mxu0 %v9046
        %9903 = vmatpush1.bf16.msra.mxu0 %v9045
        %9904 = vmatprep.subr.bf16.mxu0 %v9052
        %9905 = vmatpush1.bf16.msra.mxu0 %v9051
        %9906 = vmatprep.mubr.bf16.mxu0 %v7728
        %9907 = vmatmul.mubr.bf16.gmra.mrb[0].mxu0 %v7727
        %v9908 = vpop.f32.mrb[0].mxu0
        %v9909 = vadd.f32 %v8076, %v9908
        %v9910 = vpop.f32.mrb[0].mxu0
        %v9911 = vadd.f32 %v8080, %v9910
        %v9912 = vpop.f32.mrb[0].mxu0
        %v9913 = vadd.f32 %v8076, %v9912
        %v9914 = vpop.f32.mrb[0].mxu0
        %v9915 = vadd.f32 %v8080, %v9914
        %9916 = vmatprep.mubr.bf16.mxu0 %v7734
        %9917 = vmatmul.mubr.bf16.gmra.mrb[0].mxu0 %v7733
        %v9918 = vpop.f32.mrb[0].mxu0
        %v9919 = vadd.f32 %v8076, %v9918
        %v9920 = vpop.f32.mrb[0].mxu0
        %v9921 = vadd.f32 %v8080, %v9920
        %v9922 = vpop.f32.mrb[0].mxu0
        %v9923 = vadd.f32 %v8076, %v9922
        %v9924 = vpop.f32.mrb[0].mxu0
        %v9925 = vadd.f32 %v8080, %v9924
        %9926 = vmatprep.mubr.bf16.mxu0 %v7740
        %9927 = vmatmul.mubr.bf16.gmra.mrb[0].mxu0 %v7739
        %v9928 = vpop.f32.mrb[0].mxu0
        %v9929 = vadd.f32 %v8076, %v9928
        %v9930 = vpop.f32.mrb[0].mxu0
        %v9931 = vadd.f32 %v8080, %v9930
        %v9932 = vpop.f32.mrb[0].mxu0
        %v9933 = vadd.f32 %v8076, %v9932
        %v9934 = vpop.f32.mrb[0].mxu0
        %v9935 = vadd.f32 %v8080, %v9934
        %9936 = vmatprep.mubr.bf16.mxu0 %v7746
        %9937 = vmatmul.mubr.bf16.gmra.mrb[0].mxu0 %v7745
        %v9938 = vpop.f32.mrb[0].mxu0
        %v9939 = vadd.f32 %v8076, %v9938
        %v9940 = vpop.f32.mrb[0].mxu0
        %v9941 = vadd.f32 %v8080, %v9940
        %v9942 = vpop.f32.mrb[0].mxu0
        %v9943 = vadd.f32 %v8076, %v9942
        %v9944 = vpop.f32.mrb[0].mxu0
        %v9945 = vadd.f32 %v8080, %v9944
        %9946 = vmatprep.mubr.bf16.mxu0 %v7752
        %9947 = vmatmul.mubr.bf16.gmra.mrb[0].mxu0 %v7751
        %v9948 = vpop.f32.mrb[0].mxu0
        %v9949 = vadd.f32 %v8076, %v9948
        %v9950 = vpop.f32.mrb[0].mxu0
        %v9951 = vadd.f32 %v8080, %v9950
        %v9952 = vpop.f32.mrb[0].mxu0
        %v9953 = vadd.f32 %v8076, %v9952
        %v9954 = vpop.f32.mrb[0].mxu0
        %v9955 = vadd.f32 %v8080, %v9954
        %9956 = vmatprep.mubr.bf16.mxu0 %v7758
        %9957 = vmatmul.mubr.bf16.gmra.mrb[0].mxu0 %v7757
        %v9958 = vpop.f32.mrb[0].mxu0
        %v9959 = vadd.f32 %v8076, %v9958
        %v9960 = vpop.f32.mrb[0].mxu0
        %v9961 = vadd.f32 %v8080, %v9960
        %v9962 = vpop.f32.mrb[0].mxu0
        %v9963 = vadd.f32 %v8076, %v9962
        %v9964 = vpop.f32.mrb[0].mxu0
        %v9965 = vadd.f32 %v8080, %v9964
        %9966 = vmatprep.mubr.bf16.mxu0 %v7764
        %9967 = vmatmul.mubr.bf16.gmra.mrb[0].mxu0 %v7763
        %v9968 = vpop.f32.mrb[0].mxu0
        %v9969 = vadd.f32 %v8076, %v9968
        %v9970 = vpop.f32.mrb[0].mxu0
        %v9971 = vadd.f32 %v8080, %v9970
        %v9972 = vpop.f32.mrb[0].mxu0
        %v9973 = vadd.f32 %v8076, %v9972
        %v9974 = vpop.f32.mrb[0].mxu0
        %v9975 = vadd.f32 %v8080, %v9974
        %9976 = vmatprep.mubr.bf16.mxu0 %v7770
        %9977 = vmatmul.mubr.bf16.gmra.mrb[0].mxu0 %v7769
        %v9978 = vpop.f32.mrb[0].mxu0
        %v9979 = vadd.f32 %v8076, %v9978
        %v9980 = vpop.f32.mrb[0].mxu0
        %v9981 = vadd.f32 %v8080, %v9980
        %v9982 = vpop.f32.mrb[0].mxu0
        %v9983 = vadd.f32 %v8076, %v9982
        %v9984 = vpop.f32.mrb[0].mxu0
        %v9985 = vadd.f32 %v8080, %v9984
        %9986 = vdwg.mxu0
        %9987 = vmatprep.subr.bf16.mxu0 %v9058
        %9988 = vmatpush1.bf16.msra.mxu0 %v9057
        %9989 = vmatprep.subr.bf16.mxu0 %v9064
        %9990 = vmatpush1.bf16.msra.mxu0 %v9063
        %9991 = vmatprep.subr.bf16.mxu0 %v9070
        %9992 = vmatpush1.bf16.msra.mxu0 %v9069
        %9993 = vmatprep.subr.bf16.mxu0 %v9076
        %9994 = vmatpush1.bf16.msra.mxu0 %v9075
        %9995 = vmatprep.subr.bf16.mxu0 %v9082
        %9996 = vmatpush1.bf16.msra.mxu0 %v9081
        %9997 = vmatprep.subr.bf16.mxu0 %v9088
        %9998 = vmatpush1.bf16.msra.mxu0 %v9087
        %9999 = vmatprep.subr.bf16.mxu0 %v9094
        %10000 = vmatpush1.bf16.msra.mxu0 %v9093
        %10001 = vmatprep.subr.bf16.mxu0 %v9100
        %10002 = vmatpush1.bf16.msra.mxu0 %v9099
        %10003 = vmatprep.subr.bf16.mxu0 %v9106
        %10004 = vmatpush1.bf16.msra.mxu0 %v9105
        %10005 = vmatprep.subr.bf16.mxu0 %v9112
        %10006 = vmatpush1.bf16.msra.mxu0 %v9111
        %10007 = vmatprep.subr.bf16.mxu0 %v9118
        %10008 = vmatpush1.bf16.msra.mxu0 %v9117
        %10009 = vmatprep.subr.bf16.mxu0 %v9124
        %10010 = vmatpush1.bf16.msra.mxu0 %v9123
        %10011 = vmatprep.subr.bf16.mxu0 %v9130
        %10012 = vmatpush1.bf16.msra.mxu0 %v9129
        %10013 = vmatprep.subr.bf16.mxu0 %v9136
        %10014 = vmatpush1.bf16.msra.mxu0 %v9135
        %10015 = vmatprep.subr.bf16.mxu0 %v9142
        %10016 = vmatpush1.bf16.msra.mxu0 %v9141
        %10017 = vmatprep.subr.bf16.mxu0 %v9148
        %10018 = vmatpush1.bf16.msra.mxu0 %v9147
        %10019 = vmatprep.mubr.bf16.mxu0 %v7730
        %10020 = vmatmul.mubr.bf16.gmra.mrb[0].mxu0 %v7729
        %v10021 = vpop.f32.mrb[0].mxu0
        %v10022 = vadd.f32 %v9909, %v10021
        %v10023 = vpop.f32.mrb[0].mxu0
        %v10024 = vadd.f32 %v9911, %v10023
        %v10025 = vpop.f32.mrb[0].mxu0
        %v10026 = vadd.f32 %v9913, %v10025
        %v10027 = vpop.f32.mrb[0].mxu0
        %v10028 = vadd.f32 %v9915, %v10027
        %10029 = vmatprep.mubr.bf16.mxu0 %v7736
        %10030 = vmatmul.mubr.bf16.gmra.mrb[0].mxu0 %v7735
        %v10031 = vpop.f32.mrb[0].mxu0
        %v10032 = vadd.f32 %v9919, %v10031
        %v10033 = vpop.f32.mrb[0].mxu0
        %v10034 = vadd.f32 %v9921, %v10033
        %v10035 = vpop.f32.mrb[0].mxu0
        %v10036 = vadd.f32 %v9923, %v10035
        %v10037 = vpop.f32.mrb[0].mxu0
        %v10038 = vadd.f32 %v9925, %v10037
        %10039 = vmatprep.mubr.bf16.mxu0 %v7742
        %10040 = vmatmul.mubr.bf16.gmra.mrb[0].mxu0 %v7741
        %v10041 = vpop.f32.mrb[0].mxu0
        %v10042 = vadd.f32 %v9929, %v10041
        %v10043 = vpop.f32.mrb[0].mxu0
        %v10044 = vadd.f32 %v9931, %v10043
        %v10045 = vpop.f32.mrb[0].mxu0
        %v10046 = vadd.f32 %v9933, %v10045
        %v10047 = vpop.f32.mrb[0].mxu0
        %v10048 = vadd.f32 %v9935, %v10047
        %10049 = vmatprep.mubr.bf16.mxu0 %v7748
        %10050 = vmatmul.mubr.bf16.gmra.mrb[0].mxu0 %v7747
        %v10051 = vpop.f32.mrb[0].mxu0
        %v10052 = vadd.f32 %v9939, %v10051
        %v10053 = vpop.f32.mrb[0].mxu0
        %v10054 = vadd.f32 %v9941, %v10053
        %v10055 = vpop.f32.mrb[0].mxu0
        %v10056 = vadd.f32 %v9943, %v10055
        %v10057 = vpop.f32.mrb[0].mxu0
        %v10058 = vadd.f32 %v9945, %v10057
        %10059 = vmatprep.mubr.bf16.mxu0 %v7754
        %10060 = vmatmul.mubr.bf16.gmra.mrb[0].mxu0 %v7753
        %v10061 = vpop.f32.mrb[0].mxu0
        %v10062 = vadd.f32 %v9949, %v10061
        %v10063 = vpop.f32.mrb[0].mxu0
        %v10064 = vadd.f32 %v9951, %v10063
        %v10065 = vpop.f32.mrb[0].mxu0
        %v10066 = vadd.f32 %v9953, %v10065
        %v10067 = vpop.f32.mrb[0].mxu0
        %v10068 = vadd.f32 %v9955, %v10067
        %10069 = vmatprep.mubr.bf16.mxu0 %v7760
        %10070 = vmatmul.mubr.bf16.gmra.mrb[0].mxu0 %v7759
        %v10071 = vpop.f32.mrb[0].mxu0
        %v10072 = vadd.f32 %v9959, %v10071
        %v10073 = vpop.f32.mrb[0].mxu0
        %v10074 = vadd.f32 %v9961, %v10073
        %v10075 = vpop.f32.mrb[0].mxu0
        %v10076 = vadd.f32 %v9963, %v10075
        %v10077 = vpop.f32.mrb[0].mxu0
        %v10078 = vadd.f32 %v9965, %v10077
        %10079 = vmatprep.mubr.bf16.mxu0 %v7766
        %10080 = vmatmul.mubr.bf16.gmra.mrb[0].mxu0 %v7765
        %v10081 = vpop.f32.mrb[0].mxu0
        %v10082 = vadd.f32 %v9969, %v10081
        %v10083 = vpop.f32.mrb[0].mxu0
        %v10084 = vadd.f32 %v9971, %v10083
        %v10085 = vpop.f32.mrb[0].mxu0
        %v10086 = vadd.f32 %v9973, %v10085
        %v10087 = vpop.f32.mrb[0].mxu0
        %v10088 = vadd.f32 %v9975, %v10087
        %10089 = vmatprep.mubr.bf16.mxu0 %v7772
        %10090 = vmatmul.mubr.bf16.gmra.mrb[0].mxu0 %v7771
        %v10091 = vpop.f32.mrb[0].mxu0
        %v10092 = vadd.f32 %v9979, %v10091
        %v10093 = vpop.f32.mrb[0].mxu0
        %v10094 = vadd.f32 %v9981, %v10093
        %v10095 = vpop.f32.mrb[0].mxu0
        %v10096 = vadd.f32 %v9983, %v10095
        %v10097 = vpop.f32.mrb[0].mxu0
        %v10098 = vadd.f32 %v9985, %v10097
        %10099 = vdwg.mxu0
        %10100 = vmatprep.subr.bf16.mxu0 %v9154
        %10101 = vmatpush1.bf16.msra.mxu0 %v9153
        %10102 = vmatprep.subr.bf16.mxu0 %v9160
        %10103 = vmatpush1.bf16.msra.mxu0 %v9159
        %10104 = vmatprep.subr.bf16.mxu0 %v9166
        %10105 = vmatpush1.bf16.msra.mxu0 %v9165
        %10106 = vmatprep.subr.bf16.mxu0 %v9172
        %10107 = vmatpush1.bf16.msra.mxu0 %v9171
        %10108 = vmatprep.subr.bf16.mxu0 %v9178
        %10109 = vmatpush1.bf16.msra.mxu0 %v9177
        %10110 = vmatprep.subr.bf16.mxu0 %v9184
        %10111 = vmatpush1.bf16.msra.mxu0 %v9183
        %10112 = vmatprep.subr.bf16.mxu0 %v9190
        %10113 = vmatpush1.bf16.msra.mxu0 %v9189
        %10114 = vmatprep.subr.bf16.mxu0 %v9196
        %10115 = vmatpush1.bf16.msra.mxu0 %v9195
        %10116 = vmatprep.subr.bf16.mxu0 %v9202
        %10117 = vmatpush1.bf16.msra.mxu0 %v9201
        %10118 = vmatprep.subr.bf16.mxu0 %v9208
        %10119 = vmatpush1.bf16.msra.mxu0 %v9207
        %10120 = vmatprep.subr.bf16.mxu0 %v9214
        %10121 = vmatpush1.bf16.msra.mxu0 %v9213
        %10122 = vmatprep.subr.bf16.mxu0 %v9220
        %10123 = vmatpush1.bf16.msra.mxu0 %v9219
        %10124 = vmatprep.subr.bf16.mxu0 %v9226
        %10125 = vmatpush1.bf16.msra.mxu0 %v9225
        %10126 = vmatprep.subr.bf16.mxu0 %v9232
        %10127 = vmatpush1.bf16.msra.mxu0 %v9231
        %10128 = vmatprep.subr.bf16.mxu0 %v9238
        %10129 = vmatpush1.bf16.msra.mxu0 %v9237
        %10130 = vmatprep.subr.bf16.mxu0 %v9244
        %10131 = vmatpush1.bf16.msra.mxu0 %v9243
        %10132 = vmatprep.mubr.bf16.mxu0 %v7732
        %10133 = vmatmul.mubr.bf16.gmra.mrb[0].mxu0 %v7731
        %v10134 = vpop.f32.mrb[0].mxu0
        %v10135 = vadd.f32 %v10022, %v10134
        %v10136 = vpop.f32.mrb[0].mxu0
        %v10137 = vadd.f32 %v10024, %v10136
        %v10138 = vpop.f32.mrb[0].mxu0
        %v10139 = vadd.f32 %v10026, %v10138
        %v10140 = vpop.f32.mrb[0].mxu0
        %v10141 = vadd.f32 %v10028, %v10140
        %10142 = vmatprep.mubr.bf16.mxu0 %v7738
        %10143 = vmatmul.mubr.bf16.gmra.mrb[0].mxu0 %v7737
        %v10144 = vpop.f32.mrb[0].mxu0
        %v10145 = vadd.f32 %v10032, %v10144
        %v10146 = vpop.f32.mrb[0].mxu0
        %v10147 = vadd.f32 %v10034, %v10146
        %v10148 = vpop.f32.mrb[0].mxu0
        %v10149 = vadd.f32 %v10036, %v10148
        %v10150 = vpop.f32.mrb[0].mxu0
        %v10151 = vadd.f32 %v10038, %v10150
        %10152 = vmatprep.mubr.bf16.mxu0 %v7744
        %10153 = vmatmul.mubr.bf16.gmra.mrb[0].mxu0 %v7743
        %v10154 = vpop.f32.mrb[0].mxu0
        %v10155 = vadd.f32 %v10042, %v10154
        %v10156 = vpop.f32.mrb[0].mxu0
        %v10157 = vadd.f32 %v10044, %v10156
        %v10158 = vpop.f32.mrb[0].mxu0
        %v10159 = vadd.f32 %v10046, %v10158
        %v10160 = vpop.f32.mrb[0].mxu0
        %v10161 = vadd.f32 %v10048, %v10160
        %10162 = vmatprep.mubr.bf16.mxu0 %v7750
        %10163 = vmatmul.mubr.bf16.gmra.mrb[0].mxu0 %v7749
        %v10164 = vpop.f32.mrb[0].mxu0
        %v10165 = vadd.f32 %v10052, %v10164
        %v10166 = vpop.f32.mrb[0].mxu0
        %v10167 = vadd.f32 %v10054, %v10166
        %v10168 = vpop.f32.mrb[0].mxu0
        %v10169 = vadd.f32 %v10056, %v10168
        %v10170 = vpop.f32.mrb[0].mxu0
        %v10171 = vadd.f32 %v10058, %v10170
        %10172 = vmatprep.mubr.bf16.mxu0 %v7756
        %10173 = vmatmul.mubr.bf16.gmra.mrb[0].mxu0 %v7755
        %v10174 = vpop.f32.mrb[0].mxu0
        %v10175 = vadd.f32 %v10062, %v10174
        %v10176 = vpop.f32.mrb[0].mxu0
        %v10177 = vadd.f32 %v10064, %v10176
        %v10178 = vpop.f32.mrb[0].mxu0
        %v10179 = vadd.f32 %v10066, %v10178
        %v10180 = vpop.f32.mrb[0].mxu0
        %v10181 = vadd.f32 %v10068, %v10180
        %10182 = vmatprep.mubr.bf16.mxu0 %v7762
        %10183 = vmatmul.mubr.bf16.gmra.mrb[0].mxu0 %v7761
        %v10184 = vpop.f32.mrb[0].mxu0
        %v10185 = vadd.f32 %v10072, %v10184
        %v10186 = vpop.f32.mrb[0].mxu0
        %v10187 = vadd.f32 %v10074, %v10186
        %v10188 = vpop.f32.mrb[0].mxu0
        %v10189 = vadd.f32 %v10076, %v10188
        %v10190 = vpop.f32.mrb[0].mxu0
        %v10191 = vadd.f32 %v10078, %v10190
        %10192 = vmatprep.mubr.bf16.mxu0 %v7768
        %10193 = vmatmul.mubr.bf16.gmra.mrb[0].mxu0 %v7767
        %v10194 = vpop.f32.mrb[0].mxu0
        %v10195 = vadd.f32 %v10082, %v10194
        %v10196 = vpop.f32.mrb[0].mxu0
        %v10197 = vadd.f32 %v10084, %v10196
        %v10198 = vpop.f32.mrb[0].mxu0
        %v10199 = vadd.f32 %v10086, %v10198
        %v10200 = vpop.f32.mrb[0].mxu0
        %v10201 = vadd.f32 %v10088, %v10200
        %10202 = vmatprep.mubr.bf16.mxu0 %v7774
        %10203 = vmatmul.mubr.bf16.gmra.mrb[0].mxu0 %v7773
        %v10204 = vpop.f32.mrb[0].mxu0
        %v10205 = vadd.f32 %v10092, %v10204
        %v10206 = vpop.f32.mrb[0].mxu0
        %v10207 = vadd.f32 %v10094, %v10206
        %v10208 = vpop.f32.mrb[0].mxu0
        %v10209 = vadd.f32 %v10096, %v10208
        %v10210 = vpop.f32.mrb[0].mxu0
        %v10211 = vadd.f32 %v10098, %v10210
        %10212 = vdwg.mxu0
        %10213 = vmatprep.subr.bf16.mxu0 %v8964
        %10214 = vmatpush1.bf16.msra.mxu0 %v8963
        %10215 = vmatprep.subr.bf16.mxu0 %v8970
        %10216 = vmatpush1.bf16.msra.mxu0 %v8969
        %10217 = vmatprep.subr.bf16.mxu0 %v8976
        %10218 = vmatpush1.bf16.msra.mxu0 %v8975
        %10219 = vmatprep.subr.bf16.mxu0 %v8982
        %10220 = vmatpush1.bf16.msra.mxu0 %v8981
        %10221 = vmatprep.subr.bf16.mxu0 %v8988
        %10222 = vmatpush1.bf16.msra.mxu0 %v8987
        %10223 = vmatprep.subr.bf16.mxu0 %v8994
        %10224 = vmatpush1.bf16.msra.mxu0 %v8993
        %10225 = vmatprep.subr.bf16.mxu0 %v9000
        %10226 = vmatpush1.bf16.msra.mxu0 %v8999
        %10227 = vmatprep.subr.bf16.mxu0 %v9006
        %10228 = vmatpush1.bf16.msra.mxu0 %v9005
        %10229 = vmatprep.subr.bf16.mxu0 %v9012
        %10230 = vmatpush1.bf16.msra.mxu0 %v9011
        %10231 = vmatprep.subr.bf16.mxu0 %v9018
        %10232 = vmatpush1.bf16.msra.mxu0 %v9017
        %10233 = vmatprep.subr.bf16.mxu0 %v9024
        %10234 = vmatpush1.bf16.msra.mxu0 %v9023
        %10235 = vmatprep.subr.bf16.mxu0 %v9030
        %10236 = vmatpush1.bf16.msra.mxu0 %v9029
        %10237 = vmatprep.subr.bf16.mxu0 %v9036
        %10238 = vmatpush1.bf16.msra.mxu0 %v9035
        %10239 = vmatprep.subr.bf16.mxu0 %v9042
        %10240 = vmatpush1.bf16.msra.mxu0 %v9041
        %10241 = vmatprep.subr.bf16.mxu0 %v9048
        %10242 = vmatpush1.bf16.msra.mxu0 %v9047
        %10243 = vmatprep.subr.bf16.mxu0 %v9054
        %10244 = vmatpush1.bf16.msra.mxu0 %v9053
        %10245 = vmatprep.mubr.bf16.mxu0 %v7728
        %10246 = vmatmul.mubr.bf16.gmra.mrb[0].mxu0 %v7727
        %v10247 = vpop.f32.mrb[0].mxu0
        %v10248 = vadd.f32 %v8084, %v10247
        %v10249 = vpop.f32.mrb[0].mxu0
        %v10250 = vadd.f32 %v8088, %v10249
        %v10251 = vpop.f32.mrb[0].mxu0
        %v10252 = vadd.f32 %v8084, %v10251
        %v10253 = vpop.f32.mrb[0].mxu0
        %v10254 = vadd.f32 %v8088, %v10253
        %10255 = vmatprep.mubr.bf16.mxu0 %v7734
        %10256 = vmatmul.mubr.bf16.gmra.mrb[0].mxu0 %v7733
        %v10257 = vpop.f32.mrb[0].mxu0
        %v10258 = vadd.f32 %v8084, %v10257
        %v10259 = vpop.f32.mrb[0].mxu0
        %v10260 = vadd.f32 %v8088, %v10259
        %v10261 = vpop.f32.mrb[0].mxu0
        %v10262 = vadd.f32 %v8084, %v10261
        %v10263 = vpop.f32.mrb[0].mxu0
        %v10264 = vadd.f32 %v8088, %v10263
        %10265 = vmatprep.mubr.bf16.mxu0 %v7740
        %10266 = vmatmul.mubr.bf16.gmra.mrb[0].mxu0 %v7739
        %v10267 = vpop.f32.mrb[0].mxu0
        %v10268 = vadd.f32 %v8084, %v10267
        %v10269 = vpop.f32.mrb[0].mxu0
        %v10270 = vadd.f32 %v8088, %v10269
        %v10271 = vpop.f32.mrb[0].mxu0
        %v10272 = vadd.f32 %v8084, %v10271
        %v10273 = vpop.f32.mrb[0].mxu0
        %v10274 = vadd.f32 %v8088, %v10273
        %10275 = vmatprep.mubr.bf16.mxu0 %v7746
        %10276 = vmatmul.mubr.bf16.gmra.mrb[0].mxu0 %v7745
        %v10277 = vpop.f32.mrb[0].mxu0
        %v10278 = vadd.f32 %v8084, %v10277
        %v10279 = vpop.f32.mrb[0].mxu0
        %v10280 = vadd.f32 %v8088, %v10279
        %v10281 = vpop.f32.mrb[0].mxu0
        %v10282 = vadd.f32 %v8084, %v10281
        %v10283 = vpop.f32.mrb[0].mxu0
        %v10284 = vadd.f32 %v8088, %v10283
        %10285 = vmatprep.mubr.bf16.mxu0 %v7752
        %10286 = vmatmul.mubr.bf16.gmra.mrb[0].mxu0 %v7751
        %v10287 = vpop.f32.mrb[0].mxu0
        %v10288 = vadd.f32 %v8084, %v10287
        %v10289 = vpop.f32.mrb[0].mxu0
        %v10290 = vadd.f32 %v8088, %v10289
        %v10291 = vpop.f32.mrb[0].mxu0
        %v10292 = vadd.f32 %v8084, %v10291
        %v10293 = vpop.f32.mrb[0].mxu0
        %v10294 = vadd.f32 %v8088, %v10293
        %10295 = vmatprep.mubr.bf16.mxu0 %v7758
        %10296 = vmatmul.mubr.bf16.gmra.mrb[0].mxu0 %v7757
        %v10297 = vpop.f32.mrb[0].mxu0
        %v10298 = vadd.f32 %v8084, %v10297
        %v10299 = vpop.f32.mrb[0].mxu0
        %v10300 = vadd.f32 %v8088, %v10299
        %v10301 = vpop.f32.mrb[0].mxu0
        %v10302 = vadd.f32 %v8084, %v10301
        %v10303 = vpop.f32.mrb[0].mxu0
        %v10304 = vadd.f32 %v8088, %v10303
        %10305 = vmatprep.mubr.bf16.mxu0 %v7764
        %10306 = vmatmul.mubr.bf16.gmra.mrb[0].mxu0 %v7763
        %v10307 = vpop.f32.mrb[0].mxu0
        %v10308 = vadd.f32 %v8084, %v10307
        %v10309 = vpop.f32.mrb[0].mxu0
        %v10310 = vadd.f32 %v8088, %v10309
        %v10311 = vpop.f32.mrb[0].mxu0
        %v10312 = vadd.f32 %v8084, %v10311
        %v10313 = vpop.f32.mrb[0].mxu0
        %v10314 = vadd.f32 %v8088, %v10313
        %10315 = vmatprep.mubr.bf16.mxu0 %v7770
        %10316 = vmatmul.mubr.bf16.gmra.mrb[0].mxu0 %v7769
        %v10317 = vpop.f32.mrb[0].mxu0
        %v10318 = vadd.f32 %v8084, %v10317
        %v10319 = vpop.f32.mrb[0].mxu0
        %v10320 = vadd.f32 %v8088, %v10319
        %v10321 = vpop.f32.mrb[0].mxu0
        %v10322 = vadd.f32 %v8084, %v10321
        %v10323 = vpop.f32.mrb[0].mxu0
        %v10324 = vadd.f32 %v8088, %v10323
        %10325 = vdwg.mxu0
        %10326 = vmatprep.subr.bf16.mxu0 %v9060
        %10327 = vmatpush1.bf16.msra.mxu0 %v9059
        %10328 = vmatprep.subr.bf16.mxu0 %v9066
        %10329 = vmatpush1.bf16.msra.mxu0 %v9065
        %10330 = vmatprep.subr.bf16.mxu0 %v9072
        %10331 = vmatpush1.bf16.msra.mxu0 %v9071
        %10332 = vmatprep.subr.bf16.mxu0 %v9078
        %10333 = vmatpush1.bf16.msra.mxu0 %v9077
        %10334 = vmatprep.subr.bf16.mxu0 %v9084
        %10335 = vmatpush1.bf16.msra.mxu0 %v9083
        %10336 = vmatprep.subr.bf16.mxu0 %v9090
        %10337 = vmatpush1.bf16.msra.mxu0 %v9089
        %10338 = vmatprep.subr.bf16.mxu0 %v9096
        %10339 = vmatpush1.bf16.msra.mxu0 %v9095
        %10340 = vmatprep.subr.bf16.mxu0 %v9102
        %10341 = vmatpush1.bf16.msra.mxu0 %v9101
        %10342 = vmatprep.subr.bf16.mxu0 %v9108
        %10343 = vmatpush1.bf16.msra.mxu0 %v9107
        %10344 = vmatprep.subr.bf16.mxu0 %v9114
        %10345 = vmatpush1.bf16.msra.mxu0 %v9113
        %10346 = vmatprep.subr.bf16.mxu0 %v9120
        %10347 = vmatpush1.bf16.msra.mxu0 %v9119
        %10348 = vmatprep.subr.bf16.mxu0 %v9126
        %10349 = vmatpush1.bf16.msra.mxu0 %v9125
        %10350 = vmatprep.subr.bf16.mxu0 %v9132
        %10351 = vmatpush1.bf16.msra.mxu0 %v9131
        %10352 = vmatprep.subr.bf16.mxu0 %v9138
        %10353 = vmatpush1.bf16.msra.mxu0 %v9137
        %10354 = vmatprep.subr.bf16.mxu0 %v9144
        %10355 = vmatpush1.bf16.msra.mxu0 %v9143
        %10356 = vmatprep.subr.bf16.mxu0 %v9150
        %10357 = vmatpush1.bf16.msra.mxu0 %v9149
        %10358 = vmatprep.mubr.bf16.mxu0 %v7730
        %10359 = vmatmul.mubr.bf16.gmra.mrb[0].mxu0 %v7729
        %v10360 = vpop.f32.mrb[0].mxu0
        %v10361 = vadd.f32 %v10248, %v10360
        %v10362 = vpop.f32.mrb[0].mxu0
        %v10363 = vadd.f32 %v10250, %v10362
        %v10364 = vpop.f32.mrb[0].mxu0
        %v10365 = vadd.f32 %v10252, %v10364
        %v10366 = vpop.f32.mrb[0].mxu0
        %v10367 = vadd.f32 %v10254, %v10366
        %10368 = vmatprep.mubr.bf16.mxu0 %v7736
        %10369 = vmatmul.mubr.bf16.gmra.mrb[0].mxu0 %v7735
        %v10370 = vpop.f32.mrb[0].mxu0
        %v10371 = vadd.f32 %v10258, %v10370
        %v10372 = vpop.f32.mrb[0].mxu0
        %v10373 = vadd.f32 %v10260, %v10372
        %v10374 = vpop.f32.mrb[0].mxu0
        %v10375 = vadd.f32 %v10262, %v10374
        %v10376 = vpop.f32.mrb[0].mxu0
        %v10377 = vadd.f32 %v10264, %v10376
        %10378 = vmatprep.mubr.bf16.mxu0 %v7742
        %10379 = vmatmul.mubr.bf16.gmra.mrb[0].mxu0 %v7741
        %v10380 = vpop.f32.mrb[0].mxu0
        %v10381 = vadd.f32 %v10268, %v10380
        %v10382 = vpop.f32.mrb[0].mxu0
        %v10383 = vadd.f32 %v10270, %v10382
        %v10384 = vpop.f32.mrb[0].mxu0
        %v10385 = vadd.f32 %v10272, %v10384
        %v10386 = vpop.f32.mrb[0].mxu0
        %v10387 = vadd.f32 %v10274, %v10386
        %10388 = vmatprep.mubr.bf16.mxu0 %v7748
        %10389 = vmatmul.mubr.bf16.gmra.mrb[0].mxu0 %v7747
        %v10390 = vpop.f32.mrb[0].mxu0
        %v10391 = vadd.f32 %v10278, %v10390
        %v10392 = vpop.f32.mrb[0].mxu0
        %v10393 = vadd.f32 %v10280, %v10392
        %v10394 = vpop.f32.mrb[0].mxu0
        %v10395 = vadd.f32 %v10282, %v10394
        %v10396 = vpop.f32.mrb[0].mxu0
        %v10397 = vadd.f32 %v10284, %v10396
        %10398 = vmatprep.mubr.bf16.mxu0 %v7754
        %10399 = vmatmul.mubr.bf16.gmra.mrb[0].mxu0 %v7753
        %v10400 = vpop.f32.mrb[0].mxu0
        %v10401 = vadd.f32 %v10288, %v10400
        %v10402 = vpop.f32.mrb[0].mxu0
        %v10403 = vadd.f32 %v10290, %v10402
        %v10404 = vpop.f32.mrb[0].mxu0
        %v10405 = vadd.f32 %v10292, %v10404
        %v10406 = vpop.f32.mrb[0].mxu0
        %v10407 = vadd.f32 %v10294, %v10406
        %10408 = vmatprep.mubr.bf16.mxu0 %v7760
        %10409 = vmatmul.mubr.bf16.gmra.mrb[0].mxu0 %v7759
        %v10410 = vpop.f32.mrb[0].mxu0
        %v10411 = vadd.f32 %v10298, %v10410
        %v10412 = vpop.f32.mrb[0].mxu0
        %v10413 = vadd.f32 %v10300, %v10412
        %v10414 = vpop.f32.mrb[0].mxu0
        %v10415 = vadd.f32 %v10302, %v10414
        %v10416 = vpop.f32.mrb[0].mxu0
        %v10417 = vadd.f32 %v10304, %v10416
        %10418 = vmatprep.mubr.bf16.mxu0 %v7766
        %10419 = vmatmul.mubr.bf16.gmra.mrb[0].mxu0 %v7765
        %v10420 = vpop.f32.mrb[0].mxu0
        %v10421 = vadd.f32 %v10308, %v10420
        %v10422 = vpop.f32.mrb[0].mxu0
        %v10423 = vadd.f32 %v10310, %v10422
        %v10424 = vpop.f32.mrb[0].mxu0
        %v10425 = vadd.f32 %v10312, %v10424
        %v10426 = vpop.f32.mrb[0].mxu0
        %v10427 = vadd.f32 %v10314, %v10426
        %10428 = vmatprep.mubr.bf16.mxu0 %v7772
        %10429 = vmatmul.mubr.bf16.gmra.mrb[0].mxu0 %v7771
        %v10430 = vpop.f32.mrb[0].mxu0
        %v10431 = vadd.f32 %v10318, %v10430
        %v10432 = vpop.f32.mrb[0].mxu0
        %v10433 = vadd.f32 %v10320, %v10432
        %v10434 = vpop.f32.mrb[0].mxu0
        %v10435 = vadd.f32 %v10322, %v10434
        %v10436 = vpop.f32.mrb[0].mxu0
        %v10437 = vadd.f32 %v10324, %v10436
        %10438 = vdwg.mxu0
        %10439 = vmatprep.subr.bf16.mxu0 %v9156
        %10440 = vmatpush1.bf16.msra.mxu0 %v9155
        %10441 = vmatprep.subr.bf16.mxu0 %v9162
        %10442 = vmatpush1.bf16.msra.mxu0 %v9161
        %10443 = vmatprep.subr.bf16.mxu0 %v9168
        %10444 = vmatpush1.bf16.msra.mxu0 %v9167
        %10445 = vmatprep.subr.bf16.mxu0 %v9174
        %10446 = vmatpush1.bf16.msra.mxu0 %v9173
        %10447 = vmatprep.subr.bf16.mxu0 %v9180
        %10448 = vmatpush1.bf16.msra.mxu0 %v9179
        %10449 = vmatprep.subr.bf16.mxu0 %v9186
        %10450 = vmatpush1.bf16.msra.mxu0 %v9185
        %10451 = vmatprep.subr.bf16.mxu0 %v9192
        %10452 = vmatpush1.bf16.msra.mxu0 %v9191
        %10453 = vmatprep.subr.bf16.mxu0 %v9198
        %10454 = vmatpush1.bf16.msra.mxu0 %v9197
        %10455 = vmatprep.subr.bf16.mxu0 %v9204
        %10456 = vmatpush1.bf16.msra.mxu0 %v9203
        %10457 = vmatprep.subr.bf16.mxu0 %v9210
        %10458 = vmatpush1.bf16.msra.mxu0 %v9209
        %10459 = vmatprep.subr.bf16.mxu0 %v9216
        %10460 = vmatpush1.bf16.msra.mxu0 %v9215
        %10461 = vmatprep.subr.bf16.mxu0 %v9222
        %10462 = vmatpush1.bf16.msra.mxu0 %v9221
        %10463 = vmatprep.subr.bf16.mxu0 %v9228
        %10464 = vmatpush1.bf16.msra.mxu0 %v9227
        %10465 = vmatprep.subr.bf16.mxu0 %v9234
        %10466 = vmatpush1.bf16.msra.mxu0 %v9233
        %10467 = vmatprep.subr.bf16.mxu0 %v9240
        %10468 = vmatpush1.bf16.msra.mxu0 %v9239
        %10469 = vmatprep.subr.bf16.mxu0 %v9246
        %10470 = vmatpush1.bf16.msra.mxu0 %v9245
        %10471 = vmatprep.mubr.bf16.mxu0 %v7732
        %10472 = vmatmul.mubr.bf16.gmra.mrb[0].mxu0 %v7731
        %v10473 = vpop.f32.mrb[0].mxu0
        %v10474 = vadd.f32 %v10361, %v10473
        %v10475 = vpop.f32.mrb[0].mxu0
        %v10476 = vadd.f32 %v10363, %v10475
        %v10477 = vpop.f32.mrb[0].mxu0
        %v10478 = vadd.f32 %v10365, %v10477
        %v10479 = vpop.f32.mrb[0].mxu0
        %v10480 = vadd.f32 %v10367, %v10479
        %10481 = vmatprep.mubr.bf16.mxu0 %v7738
        %10482 = vmatmul.mubr.bf16.gmra.mrb[0].mxu0 %v7737
        %v10483 = vpop.f32.mrb[0].mxu0
        %v10484 = vadd.f32 %v10371, %v10483
        %v10485 = vpop.f32.mrb[0].mxu0
        %v10486 = vadd.f32 %v10373, %v10485
        %v10487 = vpop.f32.mrb[0].mxu0
        %v10488 = vadd.f32 %v10375, %v10487
        %v10489 = vpop.f32.mrb[0].mxu0
        %v10490 = vadd.f32 %v10377, %v10489
        %10491 = vmatprep.mubr.bf16.mxu0 %v7744
        %10492 = vmatmul.mubr.bf16.gmra.mrb[0].mxu0 %v7743
        %v10493 = vpop.f32.mrb[0].mxu0
        %v10494 = vadd.f32 %v10381, %v10493
        %v10495 = vpop.f32.mrb[0].mxu0
        %v10496 = vadd.f32 %v10383, %v10495
        %v10497 = vpop.f32.mrb[0].mxu0
        %v10498 = vadd.f32 %v10385, %v10497
        %v10499 = vpop.f32.mrb[0].mxu0
        %v10500 = vadd.f32 %v10387, %v10499
        %10501 = vmatprep.mubr.bf16.mxu0 %v7750
        %10502 = vmatmul.mubr.bf16.gmra.mrb[0].mxu0 %v7749
        %v10503 = vpop.f32.mrb[0].mxu0
        %v10504 = vadd.f32 %v10391, %v10503
        %v10505 = vpop.f32.mrb[0].mxu0
        %v10506 = vadd.f32 %v10393, %v10505
        %v10507 = vpop.f32.mrb[0].mxu0
        %v10508 = vadd.f32 %v10395, %v10507
        %v10509 = vpop.f32.mrb[0].mxu0
        %v10510 = vadd.f32 %v10397, %v10509
        %10511 = vmatprep.mubr.bf16.mxu0 %v7756
        %10512 = vmatmul.mubr.bf16.gmra.mrb[0].mxu0 %v7755
        %v10513 = vpop.f32.mrb[0].mxu0
        %v10514 = vadd.f32 %v10401, %v10513
        %v10515 = vpop.f32.mrb[0].mxu0
        %v10516 = vadd.f32 %v10403, %v10515
        %v10517 = vpop.f32.mrb[0].mxu0
        %v10518 = vadd.f32 %v10405, %v10517
        %v10519 = vpop.f32.mrb[0].mxu0
        %v10520 = vadd.f32 %v10407, %v10519
        %10521 = vmatprep.mubr.bf16.mxu0 %v7762
        %10522 = vmatmul.mubr.bf16.gmra.mrb[0].mxu0 %v7761
        %v10523 = vpop.f32.mrb[0].mxu0
        %v10524 = vadd.f32 %v10411, %v10523
        %v10525 = vpop.f32.mrb[0].mxu0
        %v10526 = vadd.f32 %v10413, %v10525
        %v10527 = vpop.f32.mrb[0].mxu0
        %v10528 = vadd.f32 %v10415, %v10527
        %v10529 = vpop.f32.mrb[0].mxu0
        %v10530 = vadd.f32 %v10417, %v10529
        %10531 = vmatprep.mubr.bf16.mxu0 %v7768
        %10532 = vmatmul.mubr.bf16.gmra.mrb[0].mxu0 %v7767
        %v10533 = vpop.f32.mrb[0].mxu0
        %v10534 = vadd.f32 %v10421, %v10533
        %v10535 = vpop.f32.mrb[0].mxu0
        %v10536 = vadd.f32 %v10423, %v10535
        %v10537 = vpop.f32.mrb[0].mxu0
        %v10538 = vadd.f32 %v10425, %v10537
        %v10539 = vpop.f32.mrb[0].mxu0
        %v10540 = vadd.f32 %v10427, %v10539
        %10541 = vmatprep.mubr.bf16.mxu0 %v7774
        %10542 = vmatmul.mubr.bf16.gmra.mrb[0].mxu0 %v7773
        %v10543 = vpop.f32.mrb[0].mxu0
        %v10544 = vadd.f32 %v10431, %v10543
        %v10545 = vpop.f32.mrb[0].mxu0
        %v10546 = vadd.f32 %v10433, %v10545
        %v10547 = vpop.f32.mrb[0].mxu0
        %v10548 = vadd.f32 %v10435, %v10547
        %v10549 = vpop.f32.mrb[0].mxu0
        %v10550 = vadd.f32 %v10437, %v10549
        %10551 = vdwg.mxu0
        %v10552 = vmax.f32 %v9796, 0.0
        %v10553 = vmax.f32 %v9798, 0.0
        %v10554 = vmax.f32 %v10135, 0.0
        %v10555 = vmax.f32 %v10137, 0.0
        %v10556 = vmax.f32 %v10474, 0.0
        %v10557 = vmax.f32 %v10476, 0.0
        %v10558 = vmax.f32 %v9800, 0.0
        %v10559 = vmax.f32 %v9802, 0.0
        %v10560 = vmax.f32 %v10139, 0.0
        %v10561 = vmax.f32 %v10141, 0.0
        %v10562 = vmax.f32 %v10478, 0.0
        %v10563 = vmax.f32 %v10480, 0.0
        %v10564 = vmax.f32 %v9806, 0.0
        %v10565 = vmax.f32 %v9808, 0.0
        %v10566 = vmax.f32 %v10145, 0.0
        %v10567 = vmax.f32 %v10147, 0.0
        %v10568 = vmax.f32 %v10484, 0.0
        %v10569 = vmax.f32 %v10486, 0.0
        %v10570 = vmax.f32 %v9810, 0.0
        %v10571 = vmax.f32 %v9812, 0.0
        %v10572 = vmax.f32 %v10149, 0.0
        %v10573 = vmax.f32 %v10151, 0.0
        %v10574 = vmax.f32 %v10488, 0.0
        %v10575 = vmax.f32 %v10490, 0.0
        %v10576 = vmax.f32 %v9816, 0.0
        %v10577 = vmax.f32 %v9818, 0.0
        %v10578 = vmax.f32 %v10155, 0.0
        %v10579 = vmax.f32 %v10157, 0.0
        %v10580 = vmax.f32 %v10494, 0.0
        %v10581 = vmax.f32 %v10496, 0.0
        %v10582 = vmax.f32 %v9820, 0.0
        %v10583 = vmax.f32 %v9822, 0.0
        %v10584 = vmax.f32 %v10159, 0.0
        %v10585 = vmax.f32 %v10161, 0.0
        %v10586 = vmax.f32 %v10498, 0.0
        %v10587 = vmax.f32 %v10500, 0.0
        %v10588 = vmax.f32 %v9826, 0.0
        %v10589 = vmax.f32 %v9828, 0.0
        %v10590 = vmax.f32 %v10165, 0.0
        %v10591 = vmax.f32 %v10167, 0.0
        %v10592 = vmax.f32 %v10504, 0.0
        %v10593 = vmax.f32 %v10506, 0.0
        %v10594 = vmax.f32 %v9830, 0.0
        %v10595 = vmax.f32 %v9832, 0.0
        %v10596 = vmax.f32 %v10169, 0.0
        %v10597 = vmax.f32 %v10171, 0.0
        %v10598 = vmax.f32 %v10508, 0.0
        %v10599 = vmax.f32 %v10510, 0.0
        %v10600 = vmax.f32 %v9836, 0.0
        %v10601 = vmax.f32 %v9838, 0.0
        %v10602 = vmax.f32 %v10175, 0.0
        %v10603 = vmax.f32 %v10177, 0.0
        %v10604 = vmax.f32 %v10514, 0.0
        %v10605 = vmax.f32 %v10516, 0.0
        %v10606 = vmax.f32 %v9840, 0.0
        %v10607 = vmax.f32 %v9842, 0.0
        %v10608 = vmax.f32 %v10179, 0.0
        %v10609 = vmax.f32 %v10181, 0.0
        %v10610 = vmax.f32 %v10518, 0.0
        %v10611 = vmax.f32 %v10520, 0.0
        %v10612 = vmax.f32 %v9846, 0.0
        %v10613 = vmax.f32 %v9848, 0.0
        %v10614 = vmax.f32 %v10185, 0.0
        %v10615 = vmax.f32 %v10187, 0.0
        %v10616 = vmax.f32 %v10524, 0.0
        %v10617 = vmax.f32 %v10526, 0.0
        %v10618 = vmax.f32 %v9850, 0.0
        %v10619 = vmax.f32 %v9852, 0.0
        %v10620 = vmax.f32 %v10189, 0.0
        %v10621 = vmax.f32 %v10191, 0.0
        %v10622 = vmax.f32 %v10528, 0.0
        %v10623 = vmax.f32 %v10530, 0.0
        %v10624 = vmax.f32 %v9856, 0.0
        %v10625 = vmax.f32 %v9858, 0.0
        %v10626 = vmax.f32 %v10195, 0.0
        %v10627 = vmax.f32 %v10197, 0.0
        %v10628 = vmax.f32 %v10534, 0.0
        %v10629 = vmax.f32 %v10536, 0.0
        %v10630 = vmax.f32 %v9860, 0.0
        %v10631 = vmax.f32 %v9862, 0.0
        %v10632 = vmax.f32 %v10199, 0.0
        %v10633 = vmax.f32 %v10201, 0.0
        %v10634 = vmax.f32 %v10538, 0.0
        %v10635 = vmax.f32 %v10540, 0.0
        %v10636 = vmax.f32 %v9866, 0.0
        %v10637 = vmax.f32 %v9868, 0.0
        %v10638 = vmax.f32 %v10205, 0.0
        %v10639 = vmax.f32 %v10207, 0.0
        %v10640 = vmax.f32 %v10544, 0.0
        %v10641 = vmax.f32 %v10546, 0.0
        %v10642 = vmax.f32 %v9870, 0.0
        %v10643 = vmax.f32 %v9872, 0.0
        %v10644 = vmax.f32 %v10209, 0.0
        %v10645 = vmax.f32 %v10211, 0.0
        %v10646 = vmax.f32 %v10548, 0.0
        %v10647 = vmax.f32 %v10550, 0.0
        %v10648 = vld [vmem:[#allocation31] sm:$0x1]
        %v10649 = vpack.c.bf16 %v10558, %v10552
        %v10650 = vpack.c.bf16 %v10559, %v10553
        %v10651 = vpack.c.bf16 %v10560, %v10554
        %v10652 = vpack.c.bf16 %v10561, %v10555
        %v10653 = vpack.c.bf16 %v10562, %v10556
        %v10654 = vpack.c.bf16 %v10563, %v10557
        %v10655 = vpack.c.bf16 %v10570, %v10564
        %v10656 = vpack.c.bf16 %v10571, %v10565
        %v10657 = vpack.c.bf16 %v10572, %v10566
        %v10658 = vpack.c.bf16 %v10573, %v10567
        %v10659 = vpack.c.bf16 %v10574, %v10568
        %v10660 = vpack.c.bf16 %v10575, %v10569
        %v10661 = vpack.c.bf16 %v10582, %v10576
        %v10662 = vpack.c.bf16 %v10583, %v10577
        %v10663 = vpack.c.bf16 %v10584, %v10578
        %v10664 = vpack.c.bf16 %v10585, %v10579
        %v10665 = vpack.c.bf16 %v10586, %v10580
        %v10666 = vpack.c.bf16 %v10587, %v10581
        %v10667 = vpack.c.bf16 %v10594, %v10588
        %v10668 = vpack.c.bf16 %v10595, %v10589
        %v10669 = vpack.c.bf16 %v10596, %v10590
        %v10670 = vpack.c.bf16 %v10597, %v10591
        %v10671 = vpack.c.bf16 %v10598, %v10592
        %v10672 = vpack.c.bf16 %v10599, %v10593
        %v10673 = vpack.c.bf16 %v10606, %v10600
        %v10674 = vpack.c.bf16 %v10607, %v10601
        %v10675 = vpack.c.bf16 %v10608, %v10602
        %v10676 = vpack.c.bf16 %v10609, %v10603
        %v10677 = vpack.c.bf16 %v10610, %v10604
        %v10678 = vpack.c.bf16 %v10611, %v10605
        %v10679 = vpack.c.bf16 %v10618, %v10612
        %v10680 = vpack.c.bf16 %v10619, %v10613
        %v10681 = vpack.c.bf16 %v10620, %v10614
        %v10682 = vpack.c.bf16 %v10621, %v10615
        %v10683 = vpack.c.bf16 %v10622, %v10616
        %v10684 = vpack.c.bf16 %v10623, %v10617
        %v10685 = vpack.c.bf16 %v10630, %v10624
        %v10686 = vpack.c.bf16 %v10631, %v10625
        %v10687 = vpack.c.bf16 %v10632, %v10626
        %v10688 = vpack.c.bf16 %v10633, %v10627
        %v10689 = vpack.c.bf16 %v10634, %v10628
        %v10690 = vpack.c.bf16 %v10635, %v10629
        %v10691 = vpack.c.bf16 %v10642, %v10636
        %v10692 = vpack.c.bf16 %v10643, %v10637
        %v10693 = vpack.c.bf16 %v10644, %v10638
        %v10694 = vpack.c.bf16 %v10645, %v10639
        %v10695 = vpack.c.bf16 %v10646, %v10640
        %v10696 = vpack.c.bf16 %v10647, %v10641
        %v10697 = vld [vmem:[#allocation28] sm:$0xf]
        %v10698 = vld [vmem:[#allocation28 + $0x4] sm:$0xf]
        %v10699 = vld [vmem:[#allocation28 + $0x8] sm:$0xf]
        %v10700 = vld [vmem:[#allocation28 + $0xc] sm:$0xf]
        %v10701 = vld [vmem:[#allocation28 + $0x10] sm:$0xf]
        %v10702 = vld [vmem:[#allocation28 + $0x14] sm:$0xf]
        %v10703 = vld [vmem:[#allocation28 + $0x18] sm:$0xf]
        %v10704 = vld [vmem:[#allocation28 + $0x1c] sm:$0xf]
        %v10705 = vld [vmem:[#allocation28 + $0x20] sm:$0xf]
        %v10706 = vld [vmem:[#allocation28 + $0x24] sm:$0xf]
        %v10707 = vld [vmem:[#allocation28 + $0x28] sm:$0xf]
        %v10708 = vld [vmem:[#allocation28 + $0x2c] sm:$0xf]
        %v10709 = vld [vmem:[#allocation28 + $0x30] sm:$0xf]
        %v10710 = vld [vmem:[#allocation28 + $0x34] sm:$0xf]
        %v10711 = vld [vmem:[#allocation28 + $0x38] sm:$0xf]
        %v10712 = vld [vmem:[#allocation28 + $0x3c] sm:$0xf]
        %v10713 = vld [vmem:[#allocation28 + $0x40] sm:$0xf]
        %v10714 = vld [vmem:[#allocation28 + $0x44] sm:$0xf]
        %v10715 = vld [vmem:[#allocation28 + $0x48] sm:$0xf]
        %v10716 = vld [vmem:[#allocation28 + $0x4c] sm:$0xf]
        %v10717 = vld [vmem:[#allocation28 + $0x50] sm:$0xf]
        %v10718 = vld [vmem:[#allocation28 + $0x54] sm:$0xf]
        %v10719 = vld [vmem:[#allocation28 + $0x58] sm:$0xf]
        %v10720 = vld [vmem:[#allocation28 + $0x5c] sm:$0xf]
        %v10721 = vld [vmem:[#allocation28 + $0x60] sm:$0xf]
        %v10722 = vld [vmem:[#allocation28 + $0x64] sm:$0xf]
        %v10723 = vld [vmem:[#allocation28 + $0x68] sm:$0xf]
        %v10724 = vld [vmem:[#allocation28 + $0x6c] sm:$0xf]
        %v10725 = vld [vmem:[#allocation28 + $0x70] sm:$0xf]
        %v10726 = vld [vmem:[#allocation28 + $0x74] sm:$0xf]
        %v10727 = vld [vmem:[#allocation28 + $0x78] sm:$0xf]
        %v10728 = vld [vmem:[#allocation28 + $0x7c] sm:$0xf]
        %v10729 = vld [vmem:[#allocation28 + $0x80] sm:$0xf]
        %v10730 = vld [vmem:[#allocation28 + $0x84] sm:$0xf]
        %v10731 = vld [vmem:[#allocation28 + $0x88] sm:$0xf]
        %v10732 = vld [vmem:[#allocation28 + $0x8c] sm:$0xf]
        %v10733 = vld [vmem:[#allocation28 + $0x90] sm:$0xf]
        %v10734 = vld [vmem:[#allocation28 + $0x94] sm:$0xf]
        %v10735 = vld [vmem:[#allocation28 + $0x98] sm:$0xf]
        %v10736 = vld [vmem:[#allocation28 + $0x9c] sm:$0xf]
        %v10737 = vld [vmem:[#allocation28 + $0xa0] sm:$0xf]
        %v10738 = vld [vmem:[#allocation28 + $0xa4] sm:$0xf]
        %v10739 = vld [vmem:[#allocation28 + $0xa8] sm:$0xf]
        %v10740 = vld [vmem:[#allocation28 + $0xac] sm:$0xf]
        %v10741 = vld [vmem:[#allocation28 + $0xb0] sm:$0xf]
        %v10742 = vld [vmem:[#allocation28 + $0xb4] sm:$0xf]
        %v10743 = vld [vmem:[#allocation28 + $0xb8] sm:$0xf]
        %v10744 = vld [vmem:[#allocation28 + $0xbc] sm:$0xf]
        %v10745 = vld [vmem:[#allocation28 + $0xc0] sm:$0xf]
        %v10746 = vld [vmem:[#allocation28 + $0xc4] sm:$0xf]
        %v10747 = vld [vmem:[#allocation28 + $0xc8] sm:$0xf]
        %v10748 = vld [vmem:[#allocation28 + $0xcc] sm:$0xf]
        %v10749 = vld [vmem:[#allocation28 + $0xd0] sm:$0xf]
        %v10750 = vld [vmem:[#allocation28 + $0xd4] sm:$0xf]
        %v10751 = vld [vmem:[#allocation28 + $0xd8] sm:$0xf]
        %v10752 = vld [vmem:[#allocation28 + $0xdc] sm:$0xf]
        %v10753 = vld [vmem:[#allocation28 + $0xe0] sm:$0xf]
        %v10754 = vld [vmem:[#allocation28 + $0xe4] sm:$0xf]
        %v10755 = vld [vmem:[#allocation28 + $0xe8] sm:$0xf]
        %v10756 = vld [vmem:[#allocation28 + $0xec] sm:$0xf]
        %v10757 = vld [vmem:[#allocation28 + $0xf0] sm:$0xf]
        %v10758 = vld [vmem:[#allocation28 + $0xf4] sm:$0xf]
        %v10759 = vld [vmem:[#allocation28 + $0xf8] sm:$0xf]
        %v10760 = vld [vmem:[#allocation28 + $0xfc] sm:$0xf]
        %v10761 = vld [vmem:[#allocation28 + $0x100] sm:$0xf]
        %v10762 = vld [vmem:[#allocation28 + $0x104] sm:$0xf]
        %v10763 = vld [vmem:[#allocation28 + $0x108] sm:$0xf]
        %v10764 = vld [vmem:[#allocation28 + $0x10c] sm:$0xf]
        %v10765 = vld [vmem:[#allocation28 + $0x110] sm:$0xf]
        %v10766 = vld [vmem:[#allocation28 + $0x114] sm:$0xf]
        %v10767 = vld [vmem:[#allocation28 + $0x118] sm:$0xf]
        %v10768 = vld [vmem:[#allocation28 + $0x11c] sm:$0xf]
        %v10769 = vld [vmem:[#allocation28 + $0x120] sm:$0xf]
        %v10770 = vld [vmem:[#allocation28 + $0x124] sm:$0xf]
        %v10771 = vld [vmem:[#allocation28 + $0x128] sm:$0xf]
        %v10772 = vld [vmem:[#allocation28 + $0x12c] sm:$0xf]
        %v10773 = vld [vmem:[#allocation28 + $0x130] sm:$0xf]
        %v10774 = vld [vmem:[#allocation28 + $0x134] sm:$0xf]
        %v10775 = vld [vmem:[#allocation28 + $0x138] sm:$0xf]
        %v10776 = vld [vmem:[#allocation28 + $0x13c] sm:$0xf]
        %v10777 = vld [vmem:[#allocation28 + $0x140] sm:$0xf]
        %v10778 = vld [vmem:[#allocation28 + $0x144] sm:$0xf]
        %v10779 = vld [vmem:[#allocation28 + $0x148] sm:$0xf]
        %v10780 = vld [vmem:[#allocation28 + $0x14c] sm:$0xf]
        %v10781 = vld [vmem:[#allocation28 + $0x150] sm:$0xf]
        %v10782 = vld [vmem:[#allocation28 + $0x154] sm:$0xf]
        %v10783 = vld [vmem:[#allocation28 + $0x158] sm:$0xf]
        %v10784 = vld [vmem:[#allocation28 + $0x15c] sm:$0xf]
        %v10785 = vld [vmem:[#allocation28 + $0x160] sm:$0xf]
        %v10786 = vld [vmem:[#allocation28 + $0x164] sm:$0xf]
        %v10787 = vld [vmem:[#allocation28 + $0x168] sm:$0xf]
        %v10788 = vld [vmem:[#allocation28 + $0x16c] sm:$0xf]
        %v10789 = vld [vmem:[#allocation28 + $0x170] sm:$0xf]
        %v10790 = vld [vmem:[#allocation28 + $0x174] sm:$0xf]
        %v10791 = vld [vmem:[#allocation28 + $0x178] sm:$0xf]
        %v10792 = vld [vmem:[#allocation28 + $0x17c] sm:$0xf]
        %v10793 = vld [vmem:[#allocation29] sm:$0x1]
        %v10795 = vlaneseq
        %v10796 = vshrl.u32 %v10795, 7
        %v10797 = vsub.s32 0, %v10796
        %v10798 = vrot.slane %v10793, %v10797
        %v10896 = vunpack.c.l.b16 %v10697
        %v10897 = vunpack.c.l.b16 %v10698
        %v10898 = vunpack.c.l.b16 %v10699
        %v10899 = vunpack.c.l.b16 %v10700
        %v10900 = vunpack.c.l.b16 %v10701
        %v10901 = vunpack.c.l.b16 %v10702
        %v10902 = vunpack.c.l.b16 %v10703
        %v10903 = vunpack.c.l.b16 %v10704
        %v10904 = vunpack.c.l.b16 %v10705
        %v10905 = vunpack.c.l.b16 %v10706
        %v10906 = vunpack.c.l.b16 %v10707
        %v10907 = vunpack.c.l.b16 %v10708
        %v10908 = vunpack.c.l.b16 %v10709
        %v10909 = vunpack.c.l.b16 %v10710
        %v10910 = vunpack.c.l.b16 %v10711
        %v10911 = vunpack.c.l.b16 %v10712
        %v10912 = vunpack.c.l.b16 %v10713
        %v10913 = vunpack.c.l.b16 %v10714
        %v10914 = vunpack.c.l.b16 %v10715
        %v10915 = vunpack.c.l.b16 %v10716
        %v10916 = vunpack.c.l.b16 %v10717
        %v10917 = vunpack.c.l.b16 %v10718
        %v10918 = vunpack.c.l.b16 %v10719
        %v10919 = vunpack.c.l.b16 %v10720
        %v10920 = vunpack.c.l.b16 %v10721
        %v10921 = vunpack.c.l.b16 %v10722
        %v10922 = vunpack.c.l.b16 %v10723
        %v10923 = vunpack.c.l.b16 %v10724
        %v10924 = vunpack.c.l.b16 %v10725
        %v10925 = vunpack.c.l.b16 %v10726
        %v10926 = vunpack.c.l.b16 %v10727
        %v10927 = vunpack.c.l.b16 %v10728
        %v10928 = vunpack.c.l.b16 %v10729
        %v10929 = vunpack.c.l.b16 %v10730
        %v10930 = vunpack.c.l.b16 %v10731
        %v10931 = vunpack.c.l.b16 %v10732
        %v10932 = vunpack.c.l.b16 %v10733
        %v10933 = vunpack.c.l.b16 %v10734
        %v10934 = vunpack.c.l.b16 %v10735
        %v10935 = vunpack.c.l.b16 %v10736
        %v10936 = vunpack.c.l.b16 %v10737
        %v10937 = vunpack.c.l.b16 %v10738
        %v10938 = vunpack.c.l.b16 %v10739
        %v10939 = vunpack.c.l.b16 %v10740
        %v10940 = vunpack.c.l.b16 %v10741
        %v10941 = vunpack.c.l.b16 %v10742
        %v10942 = vunpack.c.l.b16 %v10743
        %v10943 = vunpack.c.l.b16 %v10744
        %v10944 = vunpack.c.l.b16 %v10745
        %v10945 = vunpack.c.l.b16 %v10746
        %v10946 = vunpack.c.l.b16 %v10747
        %v10947 = vunpack.c.l.b16 %v10748
        %v10948 = vunpack.c.l.b16 %v10749
        %v10949 = vunpack.c.l.b16 %v10750
        %v10950 = vunpack.c.l.b16 %v10751
        %v10951 = vunpack.c.l.b16 %v10752
        %v10952 = vunpack.c.l.b16 %v10753
        %v10953 = vunpack.c.l.b16 %v10754
        %v10954 = vunpack.c.l.b16 %v10755
        %v10955 = vunpack.c.l.b16 %v10756
        %v10956 = vunpack.c.l.b16 %v10757
        %v10957 = vunpack.c.l.b16 %v10758
        %v10958 = vunpack.c.l.b16 %v10759
        %v10959 = vunpack.c.l.b16 %v10760
        %v10960 = vunpack.c.l.b16 %v10761
        %v10961 = vunpack.c.l.b16 %v10762
        %v10962 = vunpack.c.l.b16 %v10763
        %v10963 = vunpack.c.l.b16 %v10764
        %v10964 = vunpack.c.l.b16 %v10765
        %v10965 = vunpack.c.l.b16 %v10766
        %v10966 = vunpack.c.l.b16 %v10767
        %v10967 = vunpack.c.l.b16 %v10768
        %v10968 = vunpack.c.l.b16 %v10769
        %v10969 = vunpack.c.l.b16 %v10770
        %v10970 = vunpack.c.l.b16 %v10771
        %v10971 = vunpack.c.l.b16 %v10772
        %v10972 = vunpack.c.l.b16 %v10773
        %v10973 = vunpack.c.l.b16 %v10774
        %v10974 = vunpack.c.l.b16 %v10775
        %v10975 = vunpack.c.l.b16 %v10776
        %v10976 = vunpack.c.l.b16 %v10777
        %v10977 = vunpack.c.l.b16 %v10778
        %v10978 = vunpack.c.l.b16 %v10779
        %v10979 = vunpack.c.l.b16 %v10780
        %v10980 = vunpack.c.l.b16 %v10781
        %v10981 = vunpack.c.l.b16 %v10782
        %v10982 = vunpack.c.l.b16 %v10783
        %v10983 = vunpack.c.l.b16 %v10784
        %v10984 = vunpack.c.l.b16 %v10785
        %v10985 = vunpack.c.l.b16 %v10786
        %v10986 = vunpack.c.l.b16 %v10787
        %v10987 = vunpack.c.l.b16 %v10788
        %v10988 = vunpack.c.l.b16 %v10789
        %v10989 = vunpack.c.l.b16 %v10790
        %v10990 = vunpack.c.l.b16 %v10791
        %v10991 = vunpack.c.l.b16 %v10792
        %v10992 = vpack.c.b16 %v10897, %v10896
        %v10993 = vpack.c.b16 %v10899, %v10898
        %v10994 = vpack.c.b16 %v10901, %v10900
        %v10995 = vpack.c.b16 %v10903, %v10902
        %v10996 = vpack.c.b16 %v10905, %v10904
        %v10997 = vpack.c.b16 %v10907, %v10906
        %v10998 = vpack.c.b16 %v10909, %v10908
        %v10999 = vpack.c.b16 %v10911, %v10910
        %v11000 = vpack.c.b16 %v10913, %v10912
        %v11001 = vpack.c.b16 %v10915, %v10914
        %v11002 = vpack.c.b16 %v10917, %v10916
        %v11003 = vpack.c.b16 %v10919, %v10918
        %v11004 = vpack.c.b16 %v10921, %v10920
        %v11005 = vpack.c.b16 %v10923, %v10922
        %v11006 = vpack.c.b16 %v10925, %v10924
        %v11007 = vpack.c.b16 %v10927, %v10926
        %v11008 = vpack.c.b16 %v10929, %v10928
        %v11009 = vpack.c.b16 %v10931, %v10930
        %v11010 = vpack.c.b16 %v10933, %v10932
        %v11011 = vpack.c.b16 %v10935, %v10934
        %v11012 = vpack.c.b16 %v10937, %v10936
        %v11013 = vpack.c.b16 %v10939, %v10938
        %v11014 = vpack.c.b16 %v10941, %v10940
        %v11015 = vpack.c.b16 %v10943, %v10942
        %v11016 = vpack.c.b16 %v10945, %v10944
        %v11017 = vpack.c.b16 %v10947, %v10946
        %v11018 = vpack.c.b16 %v10949, %v10948
        %v11019 = vpack.c.b16 %v10951, %v10950
        %v11020 = vpack.c.b16 %v10953, %v10952
        %v11021 = vpack.c.b16 %v10955, %v10954
        %v11022 = vpack.c.b16 %v10957, %v10956
        %v11023 = vpack.c.b16 %v10959, %v10958
        %v11024 = vpack.c.b16 %v10961, %v10960
        %v11025 = vpack.c.b16 %v10963, %v10962
        %v11026 = vpack.c.b16 %v10965, %v10964
        %v11027 = vpack.c.b16 %v10967, %v10966
        %v11028 = vpack.c.b16 %v10969, %v10968
        %v11029 = vpack.c.b16 %v10971, %v10970
        %v11030 = vpack.c.b16 %v10973, %v10972
        %v11031 = vpack.c.b16 %v10975, %v10974
        %v11032 = vpack.c.b16 %v10977, %v10976
        %v11033 = vpack.c.b16 %v10979, %v10978
        %v11034 = vpack.c.b16 %v10981, %v10980
        %v11035 = vpack.c.b16 %v10983, %v10982
        %v11036 = vpack.c.b16 %v10985, %v10984
        %v11037 = vpack.c.b16 %v10987, %v10986
        %v11038 = vpack.c.b16 %v10989, %v10988
        %v11039 = vpack.c.b16 %v10991, %v10990
        %11088 = vmatprep.subr.bf16.mxu0 0
        %11089 = vmatpush1.bf16.msra.mxu0 %v10992
        %11090 = vmatprep.subr.bf16.mxu0 0
        %11091 = vmatpush1.bf16.msra.mxu0 %v10993
        %11092 = vmatprep.subr.bf16.mxu0 0
        %11093 = vmatpush1.bf16.msra.mxu0 %v10994
        %11094 = vmatprep.subr.bf16.mxu0 0
        %11095 = vmatpush1.bf16.msra.mxu0 %v10995
        %11096 = vmatprep.subr.bf16.mxu0 0
        %11097 = vmatpush1.bf16.msra.mxu0 %v10996
        %11098 = vmatprep.subr.bf16.mxu0 0
        %11099 = vmatpush1.bf16.msra.mxu0 %v10997
        %11100 = vmatprep.subr.bf16.mxu0 0
        %11101 = vmatpush1.bf16.msra.mxu0 %v10998
        %11102 = vmatprep.subr.bf16.mxu0 0
        %11103 = vmatpush1.bf16.msra.mxu0 %v10999
        %11104 = vmatprep.subr.bf16.mxu0 0
        %11105 = vmatpush1.bf16.msra.mxu0 %v11000
        %11106 = vmatprep.subr.bf16.mxu0 0
        %11107 = vmatpush1.bf16.msra.mxu0 %v11001
        %11108 = vmatprep.subr.bf16.mxu0 0
        %11109 = vmatpush1.bf16.msra.mxu0 %v11002
        %11110 = vmatprep.subr.bf16.mxu0 0
        %11111 = vmatpush1.bf16.msra.mxu0 %v11003
        %11112 = vmatprep.subr.bf16.mxu0 0
        %11113 = vmatpush1.bf16.msra.mxu0 %v11004
        %11114 = vmatprep.subr.bf16.mxu0 0
        %11115 = vmatpush1.bf16.msra.mxu0 %v11005
        %11116 = vmatprep.subr.bf16.mxu0 0
        %11117 = vmatpush1.bf16.msra.mxu0 %v11006
        %11118 = vmatprep.subr.bf16.mxu0 0
        %11119 = vmatpush1.bf16.msra.mxu0 %v11007
        %11120 = vmatprep.mubr.bf16.mxu0 %v10650
        %11121 = vmatmul.mubr.bf16.gmra.mrb[0].mxu0 %v10649
        %v11122 = vpop.f32.mrb[0].mxu0
        %v11123 = vadd.f32 %v10798, %v11122
        %v11124 = vpop.f32.mrb[0].mxu0
        %v11125 = vpop.f32.mrb[0].mxu0
        %v11126 = vadd.f32 %v10798, %v11125
        %v11127 = vpop.f32.mrb[0].mxu0
        %11128 = vmatprep.mubr.bf16.mxu0 %v10656
        %11129 = vmatmul.mubr.bf16.gmra.mrb[0].mxu0 %v10655
        %v11130 = vpop.f32.mrb[0].mxu0
        %v11131 = vadd.f32 %v10798, %v11130
        %v11132 = vpop.f32.mrb[0].mxu0
        %v11133 = vpop.f32.mrb[0].mxu0
        %v11134 = vadd.f32 %v10798, %v11133
        %v11135 = vpop.f32.mrb[0].mxu0
        %11136 = vmatprep.mubr.bf16.mxu0 %v10662
        %11137 = vmatmul.mubr.bf16.gmra.mrb[0].mxu0 %v10661
        %v11138 = vpop.f32.mrb[0].mxu0
        %v11139 = vadd.f32 %v10798, %v11138
        %v11140 = vpop.f32.mrb[0].mxu0
        %v11141 = vpop.f32.mrb[0].mxu0
        %v11142 = vadd.f32 %v10798, %v11141
        %v11143 = vpop.f32.mrb[0].mxu0
        %11144 = vmatprep.mubr.bf16.mxu0 %v10668
        %11145 = vmatmul.mubr.bf16.gmra.mrb[0].mxu0 %v10667
        %v11146 = vpop.f32.mrb[0].mxu0
        %v11147 = vadd.f32 %v10798, %v11146
        %v11148 = vpop.f32.mrb[0].mxu0
        %v11149 = vpop.f32.mrb[0].mxu0
        %v11150 = vadd.f32 %v10798, %v11149
        %v11151 = vpop.f32.mrb[0].mxu0
        %11152 = vmatprep.mubr.bf16.mxu0 %v10674
        %11153 = vmatmul.mubr.bf16.gmra.mrb[0].mxu0 %v10673
        %v11154 = vpop.f32.mrb[0].mxu0
        %v11155 = vadd.f32 %v10798, %v11154
        %v11156 = vpop.f32.mrb[0].mxu0
        %v11157 = vpop.f32.mrb[0].mxu0
        %v11158 = vadd.f32 %v10798, %v11157
        %v11159 = vpop.f32.mrb[0].mxu0
        %11160 = vmatprep.mubr.bf16.mxu0 %v10680
        %11161 = vmatmul.mubr.bf16.gmra.mrb[0].mxu0 %v10679
        %v11162 = vpop.f32.mrb[0].mxu0
        %v11163 = vadd.f32 %v10798, %v11162
        %v11164 = vpop.f32.mrb[0].mxu0
        %v11165 = vpop.f32.mrb[0].mxu0
        %v11166 = vadd.f32 %v10798, %v11165
        %v11167 = vpop.f32.mrb[0].mxu0
        %11168 = vmatprep.mubr.bf16.mxu0 %v10686
        %11169 = vmatmul.mubr.bf16.gmra.mrb[0].mxu0 %v10685
        %v11170 = vpop.f32.mrb[0].mxu0
        %v11171 = vadd.f32 %v10798, %v11170
        %v11172 = vpop.f32.mrb[0].mxu0
        %v11173 = vpop.f32.mrb[0].mxu0
        %v11174 = vadd.f32 %v10798, %v11173
        %v11175 = vpop.f32.mrb[0].mxu0
        %11176 = vmatprep.mubr.bf16.mxu0 %v10692
        %11177 = vmatmul.mubr.bf16.gmra.mrb[0].mxu0 %v10691
        %v11178 = vpop.f32.mrb[0].mxu0
        %v11179 = vadd.f32 %v10798, %v11178
        %v11180 = vpop.f32.mrb[0].mxu0
        %v11181 = vpop.f32.mrb[0].mxu0
        %v11182 = vadd.f32 %v10798, %v11181
        %v11183 = vpop.f32.mrb[0].mxu0
        %11184 = vdwg.mxu0
        %11185 = vmatprep.subr.bf16.mxu0 0
        %11186 = vmatpush1.bf16.msra.mxu0 %v11008
        %11187 = vmatprep.subr.bf16.mxu0 0
        %11188 = vmatpush1.bf16.msra.mxu0 %v11009
        %11189 = vmatprep.subr.bf16.mxu0 0
        %11190 = vmatpush1.bf16.msra.mxu0 %v11010
        %11191 = vmatprep.subr.bf16.mxu0 0
        %11192 = vmatpush1.bf16.msra.mxu0 %v11011
        %11193 = vmatprep.subr.bf16.mxu0 0
        %11194 = vmatpush1.bf16.msra.mxu0 %v11012
        %11195 = vmatprep.subr.bf16.mxu0 0
        %11196 = vmatpush1.bf16.msra.mxu0 %v11013
        %11197 = vmatprep.subr.bf16.mxu0 0
        %11198 = vmatpush1.bf16.msra.mxu0 %v11014
        %11199 = vmatprep.subr.bf16.mxu0 0
        %11200 = vmatpush1.bf16.msra.mxu0 %v11015
        %11201 = vmatprep.subr.bf16.mxu0 0
        %11202 = vmatpush1.bf16.msra.mxu0 %v11016
        %11203 = vmatprep.subr.bf16.mxu0 0
        %11204 = vmatpush1.bf16.msra.mxu0 %v11017
        %11205 = vmatprep.subr.bf16.mxu0 0
        %11206 = vmatpush1.bf16.msra.mxu0 %v11018
        %11207 = vmatprep.subr.bf16.mxu0 0
        %11208 = vmatpush1.bf16.msra.mxu0 %v11019
        %11209 = vmatprep.subr.bf16.mxu0 0
        %11210 = vmatpush1.bf16.msra.mxu0 %v11020
        %11211 = vmatprep.subr.bf16.mxu0 0
        %11212 = vmatpush1.bf16.msra.mxu0 %v11021
        %11213 = vmatprep.subr.bf16.mxu0 0
        %11214 = vmatpush1.bf16.msra.mxu0 %v11022
        %11215 = vmatprep.subr.bf16.mxu0 0
        %11216 = vmatpush1.bf16.msra.mxu0 %v11023
        %11217 = vmatprep.mubr.bf16.mxu0 %v10652
        %11218 = vmatmul.mubr.bf16.gmra.mrb[0].mxu0 %v10651
        %v11219 = vpop.f32.mrb[0].mxu0
        %v11220 = vadd.f32 %v11123, %v11219
        %v11221 = vpop.f32.mrb[0].mxu0
        %v11222 = vpop.f32.mrb[0].mxu0
        %v11223 = vadd.f32 %v11126, %v11222
        %v11224 = vpop.f32.mrb[0].mxu0
        %11225 = vmatprep.mubr.bf16.mxu0 %v10658
        %11226 = vmatmul.mubr.bf16.gmra.mrb[0].mxu0 %v10657
        %v11227 = vpop.f32.mrb[0].mxu0
        %v11228 = vadd.f32 %v11131, %v11227
        %v11229 = vpop.f32.mrb[0].mxu0
        %v11230 = vpop.f32.mrb[0].mxu0
        %v11231 = vadd.f32 %v11134, %v11230
        %v11232 = vpop.f32.mrb[0].mxu0
        %11233 = vmatprep.mubr.bf16.mxu0 %v10664
        %11234 = vmatmul.mubr.bf16.gmra.mrb[0].mxu0 %v10663
        %v11235 = vpop.f32.mrb[0].mxu0
        %v11236 = vadd.f32 %v11139, %v11235
        %v11237 = vpop.f32.mrb[0].mxu0
        %v11238 = vpop.f32.mrb[0].mxu0
        %v11239 = vadd.f32 %v11142, %v11238
        %v11240 = vpop.f32.mrb[0].mxu0
        %11241 = vmatprep.mubr.bf16.mxu0 %v10670
        %11242 = vmatmul.mubr.bf16.gmra.mrb[0].mxu0 %v10669
        %v11243 = vpop.f32.mrb[0].mxu0
        %v11244 = vadd.f32 %v11147, %v11243
        %v11245 = vpop.f32.mrb[0].mxu0
        %v11246 = vpop.f32.mrb[0].mxu0
        %v11247 = vadd.f32 %v11150, %v11246
        %v11248 = vpop.f32.mrb[0].mxu0
        %11249 = vmatprep.mubr.bf16.mxu0 %v10676
        %11250 = vmatmul.mubr.bf16.gmra.mrb[0].mxu0 %v10675
        %v11251 = vpop.f32.mrb[0].mxu0
        %v11252 = vadd.f32 %v11155, %v11251
        %v11253 = vpop.f32.mrb[0].mxu0
        %v11254 = vpop.f32.mrb[0].mxu0
        %v11255 = vadd.f32 %v11158, %v11254
        %v11256 = vpop.f32.mrb[0].mxu0
        %11257 = vmatprep.mubr.bf16.mxu0 %v10682
        %11258 = vmatmul.mubr.bf16.gmra.mrb[0].mxu0 %v10681
        %v11259 = vpop.f32.mrb[0].mxu0
        %v11260 = vadd.f32 %v11163, %v11259
        %v11261 = vpop.f32.mrb[0].mxu0
        %v11262 = vpop.f32.mrb[0].mxu0
        %v11263 = vadd.f32 %v11166, %v11262
        %v11264 = vpop.f32.mrb[0].mxu0
        %11265 = vmatprep.mubr.bf16.mxu0 %v10688
        %11266 = vmatmul.mubr.bf16.gmra.mrb[0].mxu0 %v10687
        %v11267 = vpop.f32.mrb[0].mxu0
        %v11268 = vadd.f32 %v11171, %v11267
        %v11269 = vpop.f32.mrb[0].mxu0
        %v11270 = vpop.f32.mrb[0].mxu0
        %v11271 = vadd.f32 %v11174, %v11270
        %v11272 = vpop.f32.mrb[0].mxu0
        %11273 = vmatprep.mubr.bf16.mxu0 %v10694
        %11274 = vmatmul.mubr.bf16.gmra.mrb[0].mxu0 %v10693
        %v11275 = vpop.f32.mrb[0].mxu0
        %v11276 = vadd.f32 %v11179, %v11275
        %v11277 = vpop.f32.mrb[0].mxu0
        %v11278 = vpop.f32.mrb[0].mxu0
        %v11279 = vadd.f32 %v11182, %v11278
        %v11280 = vpop.f32.mrb[0].mxu0
        %11281 = vdwg.mxu0
        %11282 = vmatprep.subr.bf16.mxu0 0
        %11283 = vmatpush1.bf16.msra.mxu0 %v11024
        %11284 = vmatprep.subr.bf16.mxu0 0
        %11285 = vmatpush1.bf16.msra.mxu0 %v11025
        %11286 = vmatprep.subr.bf16.mxu0 0
        %11287 = vmatpush1.bf16.msra.mxu0 %v11026
        %11288 = vmatprep.subr.bf16.mxu0 0
        %11289 = vmatpush1.bf16.msra.mxu0 %v11027
        %11290 = vmatprep.subr.bf16.mxu0 0
        %11291 = vmatpush1.bf16.msra.mxu0 %v11028
        %11292 = vmatprep.subr.bf16.mxu0 0
        %11293 = vmatpush1.bf16.msra.mxu0 %v11029
        %11294 = vmatprep.subr.bf16.mxu0 0
        %11295 = vmatpush1.bf16.msra.mxu0 %v11030
        %11296 = vmatprep.subr.bf16.mxu0 0
        %11297 = vmatpush1.bf16.msra.mxu0 %v11031
        %11298 = vmatprep.subr.bf16.mxu0 0
        %11299 = vmatpush1.bf16.msra.mxu0 %v11032
        %11300 = vmatprep.subr.bf16.mxu0 0
        %11301 = vmatpush1.bf16.msra.mxu0 %v11033
        %11302 = vmatprep.subr.bf16.mxu0 0
        %11303 = vmatpush1.bf16.msra.mxu0 %v11034
        %11304 = vmatprep.subr.bf16.mxu0 0
        %11305 = vmatpush1.bf16.msra.mxu0 %v11035
        %11306 = vmatprep.subr.bf16.mxu0 0
        %11307 = vmatpush1.bf16.msra.mxu0 %v11036
        %11308 = vmatprep.subr.bf16.mxu0 0
        %11309 = vmatpush1.bf16.msra.mxu0 %v11037
        %11310 = vmatprep.subr.bf16.mxu0 0
        %11311 = vmatpush1.bf16.msra.mxu0 %v11038
        %11312 = vmatprep.subr.bf16.mxu0 0
        %11313 = vmatpush1.bf16.msra.mxu0 %v11039
        %11314 = vmatprep.mubr.bf16.mxu0 %v10654
        %11315 = vmatmul.mubr.bf16.gmra.mrb[0].mxu0 %v10653
        %v11316 = vpop.f32.mrb[0].mxu0
        %v11317 = vadd.f32 %v11220, %v11316
        %v11318 = vpop.f32.mrb[0].mxu0
        %v11319 = vpop.f32.mrb[0].mxu0
        %v11320 = vadd.f32 %v11223, %v11319
        %v11321 = vpop.f32.mrb[0].mxu0
        %11322 = vmatprep.mubr.bf16.mxu0 %v10660
        %11323 = vmatmul.mubr.bf16.gmra.mrb[0].mxu0 %v10659
        %v11324 = vpop.f32.mrb[0].mxu0
        %v11325 = vadd.f32 %v11228, %v11324
        %v11326 = vpop.f32.mrb[0].mxu0
        %v11327 = vpop.f32.mrb[0].mxu0
        %v11328 = vadd.f32 %v11231, %v11327
        %v11329 = vpop.f32.mrb[0].mxu0
        %11330 = vmatprep.mubr.bf16.mxu0 %v10666
        %11331 = vmatmul.mubr.bf16.gmra.mrb[0].mxu0 %v10665
        %v11332 = vpop.f32.mrb[0].mxu0
        %v11333 = vadd.f32 %v11236, %v11332
        %v11334 = vpop.f32.mrb[0].mxu0
        %v11335 = vpop.f32.mrb[0].mxu0
        %v11336 = vadd.f32 %v11239, %v11335
        %v11337 = vpop.f32.mrb[0].mxu0
        %11338 = vmatprep.mubr.bf16.mxu0 %v10672
        %11339 = vmatmul.mubr.bf16.gmra.mrb[0].mxu0 %v10671
        %v11340 = vpop.f32.mrb[0].mxu0
        %v11341 = vadd.f32 %v11244, %v11340
        %v11342 = vpop.f32.mrb[0].mxu0
        %v11343 = vpop.f32.mrb[0].mxu0
        %v11344 = vadd.f32 %v11247, %v11343
        %v11345 = vpop.f32.mrb[0].mxu0
        %11346 = vmatprep.mubr.bf16.mxu0 %v10678
        %11347 = vmatmul.mubr.bf16.gmra.mrb[0].mxu0 %v10677
        %v11348 = vpop.f32.mrb[0].mxu0
        %v11349 = vadd.f32 %v11252, %v11348
        %v11350 = vpop.f32.mrb[0].mxu0
        %v11351 = vpop.f32.mrb[0].mxu0
        %v11352 = vadd.f32 %v11255, %v11351
        %v11353 = vpop.f32.mrb[0].mxu0
        %11354 = vmatprep.mubr.bf16.mxu0 %v10684
        %11355 = vmatmul.mubr.bf16.gmra.mrb[0].mxu0 %v10683
        %v11356 = vpop.f32.mrb[0].mxu0
        %v11357 = vadd.f32 %v11260, %v11356
        %v11358 = vpop.f32.mrb[0].mxu0
        %v11359 = vpop.f32.mrb[0].mxu0
        %v11360 = vadd.f32 %v11263, %v11359
        %v11361 = vpop.f32.mrb[0].mxu0
        %11362 = vmatprep.mubr.bf16.mxu0 %v10690
        %11363 = vmatmul.mubr.bf16.gmra.mrb[0].mxu0 %v10689
        %v11364 = vpop.f32.mrb[0].mxu0
        %v11365 = vadd.f32 %v11268, %v11364
        %v11366 = vpop.f32.mrb[0].mxu0
        %v11367 = vpop.f32.mrb[0].mxu0
        %v11368 = vadd.f32 %v11271, %v11367
        %v11369 = vpop.f32.mrb[0].mxu0
        %11370 = vmatprep.mubr.bf16.mxu0 %v10696
        %11371 = vmatmul.mubr.bf16.gmra.mrb[0].mxu0 %v10695
        %v11372 = vpop.f32.mrb[0].mxu0
        %v11373 = vadd.f32 %v11276, %v11372
        %v11374 = vpop.f32.mrb[0].mxu0
        %v11375 = vpop.f32.mrb[0].mxu0
        %v11376 = vadd.f32 %v11279, %v11375
        %v11377 = vpop.f32.mrb[0].mxu0
        %11378 = vdwg.mxu0
        %v11379 = vtanh.pop %v11317
        %v11380 = vtanh.pop %v11320
        %v11381 = vtanh.pop %v11325
        %v11382 = vtanh.pop %v11328
        %v11383 = vtanh.pop %v11333
        %v11384 = vtanh.pop %v11336
        %v11385 = vtanh.pop %v11341
        %v11386 = vtanh.pop %v11344
        %v11387 = vtanh.pop %v11349
        %v11388 = vtanh.pop %v11352
        %v11389 = vtanh.pop %v11357
        %v11390 = vtanh.pop %v11360
        %v11391 = vtanh.pop %v11365
        %v11392 = vtanh.pop %v11368
        %v11393 = vtanh.pop %v11373
        %v11394 = vtanh.pop %v11376
        %v11396 = vlaneseq
        %v11397 = vshrl.u32 %v11396, 7
        %v11398 = vsub.s32 0, %v11397
        %v11399 = vrot.slane %v10648, %v11398
        %v11401 = vmul.f32 %v11399, %v11379
        %v11402 = vmul.f32 %v11399, %v11380
        %v11403 = vmul.f32 %v11399, %v11381
        %v11404 = vmul.f32 %v11399, %v11382
        %v11405 = vmul.f32 %v11399, %v11383
        %v11406 = vmul.f32 %v11399, %v11384
        %v11407 = vmul.f32 %v11399, %v11385
        %v11408 = vmul.f32 %v11399, %v11386
        %v11409 = vmul.f32 %v11399, %v11387
        %v11410 = vmul.f32 %v11399, %v11388
        %v11411 = vmul.f32 %v11399, %v11389
        %v11412 = vmul.f32 %v11399, %v11390
        %v11413 = vmul.f32 %v11399, %v11391
        %v11414 = vmul.f32 %v11399, %v11392
        %v11415 = vmul.f32 %v11399, %v11393
        %v11416 = vmul.f32 %v11399, %v11394
        %11417 = vst [vmem:[%s971] sm:$0xff] %v11401
        %11418 = vst [vmem:[%s971 + $0x8] sm:$0xff] %v11402
        %11419 = vst [vmem:[%s971 + $0x10] sm:$0xff] %v11403
        %11420 = vst [vmem:[%s971 + $0x18] sm:$0xff] %v11404
        %11421 = vst [vmem:[%s971 + $0x20] sm:$0xff] %v11405
        %11422 = vst [vmem:[%s971 + $0x28] sm:$0xff] %v11406
        %11423 = vst [vmem:[%s971 + $0x30] sm:$0xff] %v11407
        %11424 = vst [vmem:[%s971 + $0x38] sm:$0xff] %v11408
        %11425 = vst [vmem:[%s971 + $0x40] sm:$0xff] %v11409
        %11426 = vst [vmem:[%s971 + $0x48] sm:$0xff] %v11410
        %11427 = vst [vmem:[%s971 + $0x50] sm:$0xff] %v11411
        %11428 = vst [vmem:[%s971 + $0x58] sm:$0xff] %v11412
        %11429 = vst [vmem:[%s971 + $0x60] sm:$0xff] %v11413
        %11430 = vst [vmem:[%s971 + $0x68] sm:$0xff] %v11414
        %11431 = vst [vmem:[%s971 + $0x70] sm:$0xff] %v11415
        %11432 = vst [vmem:[%s971 + $0x78] sm:$0xff] %v11416
        %11433 = vst [vmem:[%s978] sm:$0xff] %v5377
        %11434 = vst [vmem:[%s978 + $0x8] sm:$0xff] %v5380
        %11435 = vst [vmem:[%s978 + $0x10] sm:$0xff] %v5385
        %11436 = vst [vmem:[%s978 + $0x18] sm:$0xff] %v5388
        %11437 = vst [vmem:[%s978 + $0x20] sm:$0xff] %v5393
        %11438 = vst [vmem:[%s978 + $0x28] sm:$0xff] %v5396
        %11439 = vst [vmem:[%s978 + $0x30] sm:$0xff] %v5401
        %11440 = vst [vmem:[%s978 + $0x38] sm:$0xff] %v5404
        %11441 = vst [vmem:[%s978 + $0x40] sm:$0xff] %v5409
        %11442 = vst [vmem:[%s978 + $0x48] sm:$0xff] %v5412
        %11443 = vst [vmem:[%s978 + $0x50] sm:$0xff] %v5417
        %11444 = vst [vmem:[%s978 + $0x58] sm:$0xff] %v5420
        %11445 = vst [vmem:[%s978 + $0x60] sm:$0xff] %v5425
        %11446 = vst [vmem:[%s978 + $0x68] sm:$0xff] %v5428
        %11447 = vst [vmem:[%s978 + $0x70] sm:$0xff] %v5433
        %11448 = vst [vmem:[%s978 + $0x78] sm:$0xff] %v5436
        %11449 = vst [vmem:[%s985] sm:$0xff] %v6154
        %11450 = vst [vmem:[%s985 + $0x8] sm:$0xff] %v6156
        %11451 = vst [vmem:[%s985 + $0x10] sm:$0xff] %v6158
        %11452 = vst [vmem:[%s985 + $0x18] sm:$0xff] %v6160
        %11453 = vst [vmem:[%s985 + $0x20] sm:$0xff] %v6162
        %11454 = vst [vmem:[%s985 + $0x28] sm:$0xff] %v6164
        %11455 = vst [vmem:[%s985 + $0x30] sm:$0xff] %v6166
        %11456 = vst [vmem:[%s985 + $0x38] sm:$0xff] %v6168
        %11457 = vst [vmem:[%s985 + $0x40] sm:$0xff] %v6170
        %11458 = vst [vmem:[%s985 + $0x48] sm:$0xff] %v6172
        %11459 = vst [vmem:[%s985 + $0x50] sm:$0xff] %v6174
        %11460 = vst [vmem:[%s985 + $0x58] sm:$0xff] %v6176
        %11461 = vst [vmem:[%s985 + $0x60] sm:$0xff] %v6178
        %11462 = vst [vmem:[%s985 + $0x68] sm:$0xff] %v6180
        %11463 = vst [vmem:[%s985 + $0x70] sm:$0xff] %v6182
        %11464 = vst [vmem:[%s985 + $0x78] sm:$0xff] %v6184
        %s11465 = sand.u32 %s475, 1
        %s11466 = scalar_lea.sflag [#allocation4], %s11465
        %s11467 = sand.u32 %s475, 1
        %s11468 = smul.addr %s11467, 128
        %s11469 = scalar_lea.vmem [#allocation32], %s11468
        %s11470 = sand.u32 %s53, 1
        %s11471 = scalar_lea.sflag [#allocation34], %s11470
        %s11472 = sand.u32 %s501, 1
        %s11473 = smul.addr %s11472, 128
        %s11474 = scalar_lea.vmem [#allocation33], %s11473
        %s11475 = sand.u32 %s53, 1
        %s11476 = scalar_lea.sflag [#allocation34], %s11475
        %s11477 = sand.u32 %s527, 1
        %s11478 = smul.addr %s11477, 128
        %s11479 = scalar_lea.vmem [#allocation35], %s11478
        // Predicated region
        $region173: #{tpu_custom_call.1} parent=95 // pred_check
          %p11480 = pneg %p485
        $region174: #{tpu_custom_call.1} parent=95 // pred_check_branch
          %11482 = sbr.rel (%p11480) target = $region176
        $region175: #{tpu_custom_call.1} parent=95 // pred_region
          %s11483 = smul.u32 16, %s53
          %s11485 = ssub.s32 2048, 2048
          %11486 = vsyncadd %s11466, %s11485
          %s11487 = smul.addr %s11483, 128
          %s11488 = scalar_lea.hbm %s19, %s11487
          %s11489 = sshll.u32 %s11469, 4
          %s11490 = int_to_ptr.vmem [resolvable:$true] %s11489
          %11495 = dma.vmem_to_hbm [thread:$0]  %s11490, 2048, %s11488, %s11466, 128, 128, 8
        $region176: #{tpu_custom_call.1} parent=95 // pred_fallthru
          _
        // Predicated region
        $region177: #{tpu_custom_call.1} parent=95 // pred_check
          %p11496 = pneg %p511
        $region178: #{tpu_custom_call.1} parent=95 // pred_check_branch
          %11498 = sbr.rel (%p11496) target = $region180
        $region179: #{tpu_custom_call.1} parent=95 // pred_region
          %s11499 = smul.u32 16, %s53
          %s11501 = ssub.s32 2048, 2048
          %11502 = vsyncadd %s11471, %s11501
          %s11503 = smul.addr %s11499, 128
          %s11504 = scalar_lea.hbm %s20, %s11503
          %s11505 = sshll.u32 %s11474, 4
          %s11506 = int_to_ptr.vmem [resolvable:$true] %s11505
          %11511 = dma.vmem_to_hbm [thread:$0]  %s11506, 2048, %s11504, %s11471, 128, 128, 8
        $region180: #{tpu_custom_call.1} parent=95 // pred_fallthru
          _
        // Predicated region
        $region181: #{tpu_custom_call.1} parent=95 // pred_check
          %p11512 = pneg %p537
        $region182: #{tpu_custom_call.1} parent=95 // pred_check_branch
          %11514 = sbr.rel (%p11512) target = $region184
        $region183: #{tpu_custom_call.1} parent=95 // pred_region
          %s11515 = smul.u32 16, %s53
          %s11517 = ssub.s32 2048, 2048
          %11518 = vsyncadd %s11476, %s11517
          %s11519 = smul.addr %s11515, 128
          %s11520 = scalar_lea.hbm %s21, %s11519
          %s11521 = sshll.u32 %s11479, 4
          %s11522 = int_to_ptr.vmem [resolvable:$true] %s11521
          %11527 = dma.vmem_to_hbm [thread:$0]  %s11522, 2048, %s11520, %s11476, 128, 128, 8
        $region184: #{tpu_custom_call.1} parent=95 // pred_fallthru
          _
      $region96: #{tpu_custom_call.1} parent=5 // pred_fallthru
        _
      %p11528 = scmp.le.s32.totalorder 2, %s48
      // Predicated region
      $region185: #{tpu_custom_call.1} parent=5 // pred_check
        %p11529 = pneg %p11528
      $region186: #{tpu_custom_call.1} parent=5 // pred_check_branch
        %11531 = sbr.rel (%p11529) target = $region188
      $region187: #{tpu_custom_call.1} parent=5 // pred_region
        %s11532 = ssub.s32 %s48, 2
        // Predicated region
        $region189: #{tpu_custom_call.1} parent=187 // pred_check
          %p11533 = pneg %p491
        $region190: #{tpu_custom_call.1} parent=187 // pred_check_branch
          %11535 = sbr.rel (%p11533) target = $region192
        $region191: #{tpu_custom_call.1} parent=187 // pred_region
          %s11536 = sand.u32 %s476, 1
          %s11537 = scalar_lea.sflag [#allocation4], %s11536
          %s11538 = sand.u32 %s476, 1
          %s11539 = smul.addr %s11538, 128
          %s11540 = scalar_lea.vmem [#allocation32], %s11539
          %11541 = dma.done %s11537, 2048
        $region192: #{tpu_custom_call.1} parent=187 // pred_fallthru
          _
        // Predicated region
        $region193: #{tpu_custom_call.1} parent=187 // pred_check
          %p11542 = pneg %p517
        $region194: #{tpu_custom_call.1} parent=187 // pred_check_branch
          %11544 = sbr.rel (%p11542) target = $region196
        $region195: #{tpu_custom_call.1} parent=187 // pred_region
          %s11545 = sand.u32 %s54, 1
          %s11546 = scalar_lea.sflag [#allocation34], %s11545
          %s11547 = sand.u32 %s502, 1
          %s11548 = smul.addr %s11547, 128
          %s11549 = scalar_lea.vmem [#allocation33], %s11548
          %11550 = dma.done %s11546, 2048
        $region196: #{tpu_custom_call.1} parent=187 // pred_fallthru
          _
        // Predicated region
        $region197: #{tpu_custom_call.1} parent=187 // pred_check
          %p11551 = pneg %p543
        $region198: #{tpu_custom_call.1} parent=187 // pred_check_branch
          %11553 = sbr.rel (%p11551) target = $region200
        $region199: #{tpu_custom_call.1} parent=187 // pred_region
          %s11554 = sand.u32 %s54, 1
          %s11555 = scalar_lea.sflag [#allocation34], %s11554
          %s11556 = sand.u32 %s528, 1
          %s11557 = smul.addr %s11556, 128
          %s11558 = scalar_lea.vmem [#allocation35], %s11557
          %11559 = dma.done %s11555, 2048
        $region200: #{tpu_custom_call.1} parent=187 // pred_fallthru
          _
      $region188: #{tpu_custom_call.1} parent=5 // pred_fallthru
        _
    $region6: #{tpu_custom_call.1} parent=1 // loop_footer
      %s52 = sadd.s32 1, %s48
    $region7: #{tpu_custom_call.1} parent=1 // loop_footer_branch
      %47 = sbr.rel target = $region3
    $region8: #{tpu_custom_call.1} parent=1 // loop_exit
      _
    %11560 = vsyncpa [#allocation3], 1
    %s11561 = scalar_lea.sflag [#allocation3], 1
    %11562 = vsyncpa %s11561, 1
    %11563 = vsyncpa [#allocation6], 1
    %s11564 = scalar_lea.sflag [#allocation6], 1
    %11565 = vsyncpa %s11564, 1
    %11566 = vsyncpa [#allocation9], 1
    %11567 = vsyncpa [#allocation12], 1
    %11568 = vsyncpa [#allocation15], 1
    %11569 = vsyncpa [#allocation18], 1
    %11570 = vsyncpa [#allocation21], 1
    %11571 = vsyncpa [#allocation24], 1
    %11572 = vsyncpa [#allocation27], 1
    %11573 = vsyncpa [#allocation30], 1
    %11574 = vsyncpa [#allocation4], 1
    %s11575 = scalar_lea.sflag [#allocation4], 1
    %11576 = vsyncpa %s11575, 1
    %11577 = vsyncpa [#allocation34], 1
    %s11578 = scalar_lea.sflag [#allocation34], 1
    %11579 = vsyncpa %s11578, 1

</llo_original>
